<compile_context>
chip_gen: v5e
topology: v5e:2x2
jax: 0.10.0
libtpu: 0.0.40
codegen_flags: <defaults>
</compile_context>

<pallas_src>
import math

import jax
import jax.numpy as jnp
from jax import lax
from jax.experimental import pallas as pl
from jax.experimental.pallas import tpu as pltpu

BN_EPS = 1e-5

_vmem_cache = None


def _vmem_limit_bytes():
    """Per-call VMEM cap: ~70% of physical (v7x ~45 MiB, v5e/v6e ~90 MiB)."""
    global _vmem_cache
    if _vmem_cache is None:
        cap = 128 * 1024 * 1024
        try:
            info = pltpu.get_tpu_info()
            reported = int(getattr(info, "vmem_capacity_bytes", 0) or 0)
            if reported > 0:
                cap = reported
        except Exception:
            pass
        _vmem_cache = min(int(cap * 0.70), 100 * 1024 * 1024)
    return _vmem_cache


def _pick_m_tile(m, target=2048):
    """Largest multiple-of-16 tile <= target dividing m (else one block)."""
    if m <= target:
        return m
    for t in range(target - target % 16, 15, -16):
        if m % t == 0:
            return t
    return m


# ----------------------------- Pallas kernels -------------------------------

def _mm_kernel(x_ref, w_ref, o_ref):
    # 1x1 conv as a plain matmul: bf16 operands, f32 MXU accumulation, bf16 out.
    o_ref[...] = jnp.dot(x_ref[...].astype(jnp.bfloat16), w_ref[...],
                         preferred_element_type=jnp.float32).astype(o_ref.dtype)


def _conv3x3_relu(x, w9, shift):
    """3x3 'same' conv + shift + relu on one image held in VMEM.

    x: (h, w, cin) bf16; w9: (9*cin, cout) bf16 tap-major (BN scale folded);
    shift: (1, cout) f32.  Returns (h*w, cout) f32.
    Zero padding is built in-kernel (no HBM pad round trip); the conv is a
    single im2col MXU matmul with K = 9*cin.
    """
    h, w, cin = x.shape
    zr = jnp.zeros((1, w, cin), x.dtype)
    xp = jnp.concatenate([zr, x, zr], axis=0)                 # (h+2, w, cin)
    zc = jnp.zeros((h + 2, 1, cin), x.dtype)
    xp = jnp.concatenate([zc, xp, zc], axis=1)                # (h+2, w+2, cin)
    # TODO(synk): the 9-way lane concat relayouts for cin < 128 (conv6/7); a
    # per-tap accumulating-dot variant is preferable on v5e for cin = 128.
    cols = [xp[dy:dy + h, dx:dx + w, :] for dy in range(3) for dx in range(3)]
    patches = jnp.concatenate(cols, axis=-1).reshape(h * w, 9 * cin)
    acc = jnp.dot(patches, w9, preferred_element_type=jnp.float32)
    return jnp.maximum(acc + shift, 0.0)


def _make_fused_scale_kernel(num_3x3, project_next):
    """Fused per-batch kernel for one merge scale.

    y   = relu(skip @ w_bot + res + shift1)          (commuted 1x1-on-concat)
    y   = relu(conv3x3(y) + shift_i)                 (num_3x3 times)
    out = y @ w_next  (projection for the next scale) or y (final scale).
    """
    def kernel(*refs):
        skip_ref, res_ref, wbot_ref, shift1_ref = refs[:4]
        conv_refs = refs[4:4 + 2 * num_3x3]
        wnext_ref = refs[4 + 2 * num_3x3] if project_next else None
        out_ref = refs[-1]

        hs, ws, cs = skip_ref.shape
        c1 = wbot_ref.shape[1]

        skip = skip_ref[...].astype(jnp.bfloat16).reshape(hs * ws, cs)
        acc = jnp.dot(skip, wbot_ref[...], preferred_element_type=jnp.float32)
        acc = acc + res_ref[...].reshape(hs * ws, c1).astype(jnp.float32)
        y = jnp.maximum(acc + shift1_ref[...], 0.0)           # (hs*ws, c1) f32

        for t in range(num_3x3):
            w9 = conv_refs[2 * t][...]
            sh = conv_refs[2 * t + 1][...]
            y = _conv3x3_relu(y.reshape(hs, ws, -1).astype(jnp.bfloat16), w9, sh)

        if project_next:
            y = jnp.dot(y.astype(jnp.bfloat16), wnext_ref[...],
                        preferred_element_type=jnp.float32)
        out_ref[...] = y.reshape(out_ref.shape).astype(out_ref.dtype)

    return kernel


# ------------------------------- wrappers ------------------------------------

def _matmul_bf16(x2d, w):
    """Tiled 1x1-conv matmul (used once, for the deepest low-res projection)."""
    m, cin = x2d.shape
    cout = w.shape[1]
    tm = _pick_m_tile(m)
    return pl.pallas_call(
        _mm_kernel,
        out_shape=jax.ShapeDtypeStruct((m, cout), jnp.bfloat16),
        grid=(m // tm,),
        in_specs=[pl.BlockSpec((tm, cin), lambda i: (i, 0)),
                  pl.BlockSpec((cin, cout), lambda i: (0, 0))],
        out_specs=pl.BlockSpec((tm, cout), lambda i: (i, 0)),
        compiler_params=pltpu.CompilerParams(
            dimension_semantics=("parallel",),
            vmem_limit_bytes=_vmem_limit_bytes()),
    )(x2d, w)


def _fused_scale(skip, res, w_bot, shift1, convs3x3, w_next, out_dtype):
    """One merge scale: commuted 1x1 + N x (3x3) [+ next-scale projection]."""
    n, hs, ws, cs = skip.shape
    c1 = w_bot.shape[1]
    cout = w_next.shape[1] if w_next is not None else convs3x3[-1][0].shape[1]

    operands = [skip, res, w_bot, shift1]
    in_specs = [
        pl.BlockSpec((None, hs, ws, cs), lambda b: (b, 0, 0, 0)),
        pl.BlockSpec((None, hs, ws, c1), lambda b: (b, 0, 0, 0)),
        pl.BlockSpec(w_bot.shape, lambda b: (0, 0)),
        pl.BlockSpec(shift1.shape, lambda b: (0, 0)),
    ]
    for w9, sh in convs3x3:
        operands += [w9, sh]
        in_specs += [pl.BlockSpec(w9.shape, lambda b: (0, 0)),
                     pl.BlockSpec(sh.shape, lambda b: (0, 0))]
    if w_next is not None:
        operands.append(w_next)
        in_specs.append(pl.BlockSpec(w_next.shape, lambda b: (0, 0)))

    return pl.pallas_call(
        _make_fused_scale_kernel(len(convs3x3), w_next is not None),
        out_shape=jax.ShapeDtypeStruct((n, hs, ws, cout), out_dtype),
        grid=(n,),
        in_specs=in_specs,
        out_specs=pl.BlockSpec((None, hs, ws, cout), lambda b: (b, 0, 0, 0)),
        compiler_params=pltpu.CompilerParams(
            dimension_semantics=("parallel",),
            vmem_limit_bytes=_vmem_limit_bytes()),
    )(*operands)


# --------------------------- bilinear upsample -------------------------------

def _lerp_matrix(n_in, n_out):
    # Interpolation matrix for bilinear upsample with align_corners=True.
    if n_in == 1:
        return jnp.ones((n_out, 1), jnp.float32)
    src = jnp.arange(n_out, dtype=jnp.float32) * (n_in - 1) / (n_out - 1)
    lo = jnp.clip(jnp.floor(src).astype(jnp.int32), 0, n_in - 2)
    frac = src - lo.astype(jnp.float32)
    rows = jnp.arange(n_out)
    a = jnp.zeros((n_out, n_in), jnp.float32)
    a = a.at[rows, lo].add(1.0 - frac)
    a = a.at[rows, lo + 1].add(frac)
    return a


def upsample2x(x):
    # F.interpolate(scale_factor=2, mode='bilinear', align_corners=True), NHWC.
    n, h, w, c = x.shape
    ah = _lerp_matrix(h, 2 * h)
    aw = _lerp_matrix(w, 2 * w)
    return jnp.einsum('oh,pw,nhwc->nopc', ah, aw, x.astype(jnp.float32))


# ------------------------------ parameters -----------------------------------

_CONV_DEFS = {
    # name: (cin, cout, kernel, #channels that come from the upsampled branch)
    'conv1': (1024, 128, 1, 512), 'conv2': (128, 128, 3, None),
    'conv3': (384, 64, 1, 128),   'conv4': (64, 64, 3, None),
    'conv5': (192, 32, 1, 64),    'conv6': (32, 32, 3, None),
    'conv7': (32, 32, 3, None),
}


def init_params(key):
    params = {}
    for name, (cin, cout, k, c_up) in _CONV_DEFS.items():
        key, sub = jax.random.split(key)
        # kaiming_normal_, mode='fan_out', nonlinearity='relu'
        std = math.sqrt(2.0 / (cout * k * k))
        w = jax.random.normal(sub, (k, k, cin, cout), jnp.float32) * std   # HWIO
        bias = jnp.zeros((cout,), jnp.float32)
        gamma = jnp.ones((cout,), jnp.float32)
        beta = jnp.zeros((cout,), jnp.float32)
        mean = jnp.zeros((cout,), jnp.float32)
        var = jnp.ones((cout,), jnp.float32)
        scale = gamma / jnp.sqrt(var + BN_EPS)              # eval-mode BN
        shift = (beta + (bias - mean) * scale).reshape(1, cout)
        w_folded = w * scale                                # fold BN scale into W
        p = {'w_hwio': w, 'scale': scale, 'shift': shift}
        if k == 1:
            wm = w_folded.reshape(cin, cout).astype(jnp.bfloat16)
            p['w_top'] = wm[:c_up]        # rows for the upsampled branch
            p['w_bot'] = wm[c_up:]        # rows for the skip branch
        else:
            p['w9'] = w_folded.reshape(9 * cin, cout).astype(jnp.bfloat16)
        params[name] = p
    return params


# -------------------------------- forward ------------------------------------

def merge_forward(params, x0, x1, x2, x3):
    p = params
    n, h3, w3, c3 = x3.shape
    # Projection of the deepest feature through conv1's "upsampled-branch" rows.
    proj1 = _matmul_bf16(x3.reshape(n * h3 * w3, c3), p['conv1']['w_top'])
    res1 = upsample2x(proj1.reshape(n, h3, w3, -1)).astype(jnp.bfloat16)
    # Scale 1: conv1(skip half) -> conv2(3x3) -> projection through conv3's top rows.
    proj2 = _fused_scale(x2, res1, p['conv1']['w_bot'], p['conv1']['shift'],
                         [(p['conv2']['w9'], p['conv2']['shift'])],
                         p['conv3']['w_top'], jnp.bfloat16)
    res2 = upsample2x(proj2).astype(jnp.bfloat16)
    # Scale 2: conv3(skip half) -> conv4(3x3) -> projection through conv5's top rows.
    proj3 = _fused_scale(x1, res2, p['conv3']['w_bot'], p['conv3']['shift'],
                         [(p['conv4']['w9'], p['conv4']['shift'])],
                         p['conv5']['w_top'], jnp.bfloat16)
    res3 = upsample2x(proj3).astype(jnp.bfloat16)
    # Scale 3: conv5(skip half) -> conv6(3x3) -> conv7(3x3).
    return _fused_scale(x0, res3, p['conv5']['w_bot'], p['conv5']['shift'],
                        [(p['conv6']['w9'], p['conv6']['shift']),
                         (p['conv7']['w9'], p['conv7']['shift'])],
                        None, jnp.float32)


# --------------------- pure-JAX reference (module-faithful) ------------------

def _ref_conv_bn_relu(x, p):
    w = p['w_hwio']
    pad = 'VALID' if w.shape[0] == 1 else 'SAME'
    y = lax.conv_general_dilated(x, w, (1, 1), pad,
                                 dimension_numbers=('NHWC', 'HWIO', 'NHWC'))
    return jnp.maximum(y * p['scale'] + p['shift'].reshape(-1), 0.0)


def merge_ref(params, x0, x1, x2, x3):
    y = jnp.concatenate([upsample2x(x3), x2], axis=-1)
    y = _ref_conv_bn_relu(y, params['conv1'])
    y = _ref_conv_bn_relu(y, params['conv2'])
    y = jnp.concatenate([upsample2x(y), x1], axis=-1)
    y = _ref_conv_bn_relu(y, params['conv3'])
    y = _ref_conv_bn_relu(y, params['conv4'])
    y = jnp.concatenate([upsample2x(y), x0], axis=-1)
    y = _ref_conv_bn_relu(y, params['conv5'])
    y = _ref_conv_bn_relu(y, params['conv6'])
    y = _ref_conv_bn_relu(y, params['conv7'])
    return y


if __name__ == "__main__":
    key = jax.random.PRNGKey(0)
    kp, k0, k1, k2, k3 = jax.random.split(key, 5)
    params = init_params(kp)

    # EAST feature pyramid (NHWC): channels 128/256/512/512 at /1, /2, /4, /8.
    N, H, W = 2, 16, 16
    x0 = jax.random.normal(k0, (N, H, W, 128), jnp.float32)
    x1 = jax.random.normal(k1, (N, H // 2, W // 2, 256), jnp.float32)
    x2 = jax.random.normal(k2, (N, H // 4, W // 4, 512), jnp.float32)
    x3 = jax.random.normal(k3, (N, H // 8, W // 8, 512), jnp.float32)

    out = jax.block_until_ready(jax.jit(merge_forward)(params, x0, x1, x2, x3))
    ref = jax.block_until_ready(jax.jit(merge_ref)(params, x0, x1, x2, x3))

    assert out.shape == (N, H, W, 32), out.shape
    # Elementwise check: bf16 matmul operands + bf16 inter-layer tensors vs the
    # all-f32 reference (rtol plus an atol tied to the output scale).
    max_ref = float(jnp.max(jnp.abs(ref)))
    err = jnp.abs(out - ref)
    tol = 4e-2 * max_ref + 4e-2 * jnp.abs(ref)
    n_bad = int(jnp.sum(err > tol))
    assert n_bad == 0, (n_bad, float(jnp.max(err)), max_ref)
    print("KERNEL_OK")
</pallas_src>

<mosaic_0001>
module attributes {stable_mosaic.version = 11 : i64} {
  func.func @_mm_kernel(%arg0: i32, %arg1: memref<8x512xf32, #tpu.memory_space<vmem>>, %arg2: memref<512x128xbf16, #tpu.memory_space<vmem>>, %arg3: memref<8x128xbf16, #tpu.memory_space<vmem>>) attributes {dimension_semantics = [#tpu.dimension_semantics<parallel>], iteration_bounds = array<i64: 1>, scalar_prefetch = 0 : i64, scratch_operands = 0 : i64, tpu.core_type = #tpu.core_type<tc>, window_params = [{transform_indices = @transform_0, window_bounds = array<i64: 8, 512>}, {pipeline_mode = #tpu.pipeline_mode<synchronous>, transform_indices = @transform_1, window_bounds = array<i64: 512, 128>}, {transform_indices = @transform_2, window_bounds = array<i64: 8, 128>}]} {
    %c0 = arith.constant 0 : index
    %c0_0 = arith.constant 0 : index
    %0 = vector.load %arg1[%c0, %c0_0] : memref<8x512xf32, #tpu.memory_space<vmem>>, vector<8x512xf32>
    %1 = arith.truncf %0 : vector<8x512xf32> to vector<8x512xbf16>
    %c0_1 = arith.constant 0 : index
    %c0_2 = arith.constant 0 : index
    %2 = vector.load %arg2[%c0_1, %c0_2] : memref<512x128xbf16, #tpu.memory_space<vmem>>, vector<512x128xbf16>
    %cst = arith.constant dense<0.000000e+00> : vector<8x128xf32>
    %3 = tpu.matmul %1, %2, %cst {dimension_numbers = #tpu.dot_dimension_numbers<[1], [0], [0], [1], [0, 0, 1, 1], [], []>} : vector<8x512xbf16>, vector<512x128xbf16>, vector<8x128xf32> -> vector<8x128xf32>
    %4 = arith.truncf %3 : vector<8x128xf32> to vector<8x128xbf16>
    %c0_3 = arith.constant 0 : index
    %c0_4 = arith.constant 0 : index
    %5 = vector.load %arg3[%c0_3, %c0_4] : memref<8x128xbf16, #tpu.memory_space<vmem>>, vector<8x128xbf16>
    tpu.vector_store %arg3[%c0_3, %c0_4], %4 {strides = array<i32>} : memref<8x128xbf16, #tpu.memory_space<vmem>>, vector<8x128xbf16>,
    return
  }
  func.func @transform_0(%arg0: i32) -> (i32, i32) {
    %c0_i32 = arith.constant 0 : i32
    %c0_i32_0 = arith.constant 0 : i32
    return %arg0, %c0_i32 : i32, i32
  }
  func.func @transform_1(%arg0: i32) -> (i32, i32) {
    %c0_i32 = arith.constant 0 : i32
    %c0_i32_0 = arith.constant 0 : i32
    %c0_i32_1 = arith.constant 0 : i32
    return %c0_i32, %c0_i32_0 : i32, i32
  }
  func.func @transform_2(%arg0: i32) -> (i32, i32) {
    %c0_i32 = arith.constant 0 : i32
    %c0_i32_0 = arith.constant 0 : i32
    return %arg0, %c0_i32 : i32, i32
  }
}

module attributes {stable_mosaic.version = 11 : i64} {
  func.func @kernel(%arg0: i32, %arg1: memref<1x4x4x512xf32, #tpu.memory_space<vmem>>, %arg2: memref<1x4x4x128xbf16, #tpu.memory_space<vmem>>, %arg3: memref<512x128xbf16, #tpu.memory_space<vmem>>, %arg4: memref<1x128xf32, #tpu.memory_space<vmem>>, %arg5: memref<1152x128xbf16, #tpu.memory_space<vmem>>, %arg6: memref<1x128xf32, #tpu.memory_space<vmem>>, %arg7: memref<128x64xbf16, #tpu.memory_space<vmem>>, %arg8: memref<1x4x4x64xbf16, #tpu.memory_space<vmem>>) attributes {dimension_semantics = [#tpu.dimension_semantics<parallel>], iteration_bounds = array<i64: 2>, scalar_prefetch = 0 : i64, scratch_operands = 0 : i64, tpu.core_type = #tpu.core_type<tc>, window_params = [{transform_indices = @transform_0, window_bounds = array<i64: 1, 4, 4, 512>}, {transform_indices = @transform_1, window_bounds = array<i64: 1, 4, 4, 128>}, {pipeline_mode = #tpu.pipeline_mode<synchronous>, transform_indices = @transform_2, window_bounds = array<i64: 512, 128>}, {pipeline_mode = #tpu.pipeline_mode<synchronous>, transform_indices = @transform_3, window_bounds = array<i64: 1, 128>}, {pipeline_mode = #tpu.pipeline_mode<synchronous>, transform_indices = @transform_4, window_bounds = array<i64: 1152, 128>}, {pipeline_mode = #tpu.pipeline_mode<synchronous>, transform_indices = @transform_5, window_bounds = array<i64: 1, 128>}, {pipeline_mode = #tpu.pipeline_mode<synchronous>, transform_indices = @transform_6, window_bounds = array<i64: 128, 64>}, {transform_indices = @transform_7, window_bounds = array<i64: 1, 4, 4, 64>}]} {
    %c0 = arith.constant 0 : index
    %c0_0 = arith.constant 0 : index
    %c0_1 = arith.constant 0 : index
    %c0_2 = arith.constant 0 : index
    %0 = vector.load %arg1[%c0, %c0_0, %c0_1, %c0_2] : memref<1x4x4x512xf32, #tpu.memory_space<vmem>>, vector<1x4x4x512xf32>
    %1 = vector.shape_cast %0 : vector<1x4x4x512xf32> to vector<4x4x512xf32>
    %2 = arith.truncf %1 : vector<4x4x512xf32> to vector<4x4x512xbf16>
    %3 = vector.shape_cast %2 : vector<4x4x512xbf16> to vector<16x512xbf16>
    %c0_3 = arith.constant 0 : index
    %c0_4 = arith.constant 0 : index
    %4 = vector.load %arg3[%c0_3, %c0_4] : memref<512x128xbf16, #tpu.memory_space<vmem>>, vector<512x128xbf16>
    %cst = arith.constant dense<0.000000e+00> : vector<16x128xf32>
    %5 = tpu.matmul %3, %4, %cst {dimension_numbers = #tpu.dot_dimension_numbers<[1], [0], [0], [1], [0, 0, 1, 1], [], []>} : vector<16x512xbf16>, vector<512x128xbf16>, vector<16x128xf32> -> vector<16x128xf32>
    %c0_5 = arith.constant 0 : index
    %c0_6 = arith.constant 0 : index
    %c0_7 = arith.constant 0 : index
    %c0_8 = arith.constant 0 : index
    %6 = vector.load %arg2[%c0_5, %c0_6, %c0_7, %c0_8] : memref<1x4x4x128xbf16, #tpu.memory_space<vmem>>, vector<1x4x4x128xbf16>
    %7 = vector.shape_cast %6 : vector<1x4x4x128xbf16> to vector<4x4x128xbf16>
    %8 = vector.shape_cast %7 : vector<4x4x128xbf16> to vector<16x128xbf16>
    %9 = arith.extf %8 : vector<16x128xbf16> to vector<16x128xf32>
    %10 = arith.addf %5, %9 : vector<16x128xf32>
    %c0_9 = arith.constant 0 : index
    %c0_10 = arith.constant 0 : index
    %11 = vector.load %arg4[%c0_9, %c0_10] : memref<1x128xf32, #tpu.memory_space<vmem>>, vector<1x128xf32>
    %12 = vector.broadcast %11 : vector<1x128xf32> to vector<16x128xf32>
    %13 = arith.addf %10, %12 : vector<16x128xf32>
    %cst_11 = arith.constant 0.000000e+00 : f32
    %14 = vector.broadcast %cst_11 : f32 to vector<16x128xf32>
    %15 = arith.maximumf %13, %14 : vector<16x128xf32>
    %c0_12 = arith.constant 0 : index
    %c0_13 = arith.constant 0 : index
    %16 = vector.load %arg5[%c0_12, %c0_13] : memref<1152x128xbf16, #tpu.memory_space<vmem>>, vector<1152x128xbf16>
    %c0_14 = arith.constant 0 : index
    %c0_15 = arith.constant 0 : index
    %17 = vector.load %arg6[%c0_14, %c0_15] : memref<1x128xf32, #tpu.memory_space<vmem>>, vector<1x128xf32>
    %18 = vector.shape_cast %15 : vector<16x128xf32> to vector<4x4x128xf32>
    %19 = arith.truncf %18 : vector<4x4x128xf32> to vector<4x4x128xbf16>
    %cst_16 = arith.constant 0.000000e+00 : bf16
    %20 = vector.broadcast %cst_16 : bf16 to vector<1x4x128xbf16>
    %21 = tpu.concatenate %20, %19, %20 in 0 : vector<1x4x128xbf16>, vector<4x4x128xbf16>, vector<1x4x128xbf16> -> vector<6x4x128xbf16>
    %cst_17 = arith.constant 0.000000e+00 : bf16
    %22 = vector.broadcast %cst_17 : bf16 to vector<6x1x128xbf16>
    %23 = tpu.concatenate %22, %21, %22 in 1 : vector<6x1x128xbf16>, vector<6x4x128xbf16>, vector<6x1x128xbf16> -> vector<6x6x128xbf16>
    %24 = vector.extract_strided_slice %23 {offsets = [0, 0, 0], sizes = [4, 4, 128], strides = [1, 1, 1]} : vector<6x6x128xbf16> to vector<4x4x128xbf16>
    %25 = vector.extract_strided_slice %23 {offsets = [0, 1, 0], sizes = [4, 4, 128], strides = [1, 1, 1]} : vector<6x6x128xbf16> to vector<4x4x128xbf16>
    %26 = vector.extract_strided_slice %23 {offsets = [0, 2, 0], sizes = [4, 4, 128], strides = [1, 1, 1]} : vector<6x6x128xbf16> to vector<4x4x128xbf16>
    %27 = vector.extract_strided_slice %23 {offsets = [1, 0, 0], sizes = [4, 4, 128], strides = [1, 1, 1]} : vector<6x6x128xbf16> to vector<4x4x128xbf16>
    %28 = vector.extract_strided_slice %23 {offsets = [1, 1, 0], sizes = [4, 4, 128], strides = [1, 1, 1]} : vector<6x6x128xbf16> to vector<4x4x128xbf16>
    %29 = vector.extract_strided_slice %23 {offsets = [1, 2, 0], sizes = [4, 4, 128], strides = [1, 1, 1]} : vector<6x6x128xbf16> to vector<4x4x128xbf16>
    %30 = vector.extract_strided_slice %23 {offsets = [2, 0, 0], sizes = [4, 4, 128], strides = [1, 1, 1]} : vector<6x6x128xbf16> to vector<4x4x128xbf16>
    %31 = vector.extract_strided_slice %23 {offsets = [2, 1, 0], sizes = [4, 4, 128], strides = [1, 1, 1]} : vector<6x6x128xbf16> to vector<4x4x128xbf16>
    %32 = vector.extract_strided_slice %23 {offsets = [2, 2, 0], sizes = [4, 4, 128], strides = [1, 1, 1]} : vector<6x6x128xbf16> to vector<4x4x128xbf16>
    %33 = tpu.concatenate %24, %25, %26, %27, %28, %29, %30, %31, %32 in 2 : vector<4x4x128xbf16>, vector<4x4x128xbf16>, vector<4x4x128xbf16>, vector<4x4x128xbf16>, vector<4x4x128xbf16>, vector<4x4x128xbf16>, vector<4x4x128xbf16>, vector<4x4x128xbf16>, vector<4x4x128xbf16> -> vector<4x4x1152xbf16>
    %34 = vector.shape_cast %33 : vector<4x4x1152xbf16> to vector<16x1152xbf16>
    %cst_18 = arith.constant dense<0.000000e+00> : vector<16x128xf32>
    %35 = tpu.matmul %34, %16, %cst_18 {dimension_numbers = #tpu.dot_dimension_numbers<[1], [0], [0], [1], [0, 0, 1, 1], [], []>} : vector<16x1152xbf16>, vector<1152x128xbf16>, vector<16x128xf32> -> vector<16x128xf32>
    %36 = vector.broadcast %17 : vector<1x128xf32> to vector<16x128xf32>
    %37 = arith.addf %35, %36 : vector<16x128xf32>
    %cst_19 = arith.constant 0.000000e+00 : f32
    %38 = vector.broadcast %cst_19 : f32 to vector<16x128xf32>
    %39 = arith.maximumf %37, %38 : vector<16x128xf32>
    %40 = arith.truncf %39 : vector<16x128xf32> to vector<16x128xbf16>
    %c0_20 = arith.constant 0 : index
    %c0_21 = arith.constant 0 : index
    %41 = vector.load %arg7[%c0_20, %c0_21] : memref<128x64xbf16, #tpu.memory_space<vmem>>, vector<128x64xbf16>
    %cst_22 = arith.constant dense<0.000000e+00> : vector<16x64xf32>
    %42 = tpu.matmul %40, %41, %cst_22 {dimension_numbers = #tpu.dot_dimension_numbers<[1], [0], [0], [1], [0, 0, 1, 1], [], []>} : vector<16x128xbf16>, vector<128x64xbf16>, vector<16x64xf32> -> vector<16x64xf32>
    %43 = vector.shape_cast %42 : vector<16x64xf32> to vector<4x4x64xf32>
    %44 = arith.truncf %43 : vector<4x4x64xf32> to vector<4x4x64xbf16>
    %c0_23 = arith.constant 0 : index
    %c0_24 = arith.constant 0 : index
    %c0_25 = arith.constant 0 : index
    %c0_26 = arith.constant 0 : index
    %45 = vector.load %arg8[%c0_23, %c0_24, %c0_25, %c0_26] : memref<1x4x4x64xbf16, #tpu.memory_space<vmem>>, vector<1x4x4x64xbf16>
    %46 = vector.shape_cast %45 : vector<1x4x4x64xbf16> to vector<4x4x64xbf16>
    %47 = vector.shape_cast %44 : vector<4x4x64xbf16> to vector<1x4x4x64xbf16>
    tpu.vector_store %arg8[%c0_23, %c0_24, %c0_25, %c0_26], %47 {strides = array<i32>} : memref<1x4x4x64xbf16, #tpu.memory_space<vmem>>, vector<1x4x4x64xbf16>,
    return
  }
  func.func @transform_0(%arg0: i32) -> (i32, i32, i32, i32) {
    %c0_i32 = arith.constant 0 : i32
    %c0_i32_0 = arith.constant 0 : i32
    %c0_i32_1 = arith.constant 0 : i32
    %c0_i32_2 = arith.constant 0 : i32
    return %arg0, %c0_i32, %c0_i32_0, %c0_i32_1 : i32, i32, i32, i32
  }
  func.func @transform_1(%arg0: i32) -> (i32, i32, i32, i32) {
    %c0_i32 = arith.constant 0 : i32
    %c0_i32_0 = arith.constant 0 : i32
    %c0_i32_1 = arith.constant 0 : i32
    %c0_i32_2 = arith.constant 0 : i32
    return %arg0, %c0_i32, %c0_i32_0, %c0_i32_1 : i32, i32, i32, i32
  }
  func.func @transform_2(%arg0: i32) -> (i32, i32) {
    %c0_i32 = arith.constant 0 : i32
    %c0_i32_0 = arith.constant 0 : i32
    %c0_i32_1 = arith.constant 0 : i32
    return %c0_i32, %c0_i32_0 : i32, i32
  }
  func.func @transform_3(%arg0: i32) -> (i32, i32) {
    %c0_i32 = arith.constant 0 : i32
    %c0_i32_0 = arith.constant 0 : i32
    %c0_i32_1 = arith.constant 0 : i32
    return %c0_i32, %c0_i32_0 : i32, i32
  }
  func.func @transform_4(%arg0: i32) -> (i32, i32) {
    %c0_i32 = arith.constant 0 : i32
    %c0_i32_0 = arith.constant 0 : i32
    %c0_i32_1 = arith.constant 0 : i32
    return %c0_i32, %c0_i32_0 : i32, i32
  }
  func.func @transform_5(%arg0: i32) -> (i32, i32) {
    %c0_i32 = arith.constant 0 : i32
    %c0_i32_0 = arith.constant 0 : i32
    %c0_i32_1 = arith.constant 0 : i32
    return %c0_i32, %c0_i32_0 : i32, i32
  }
  func.func @transform_6(%arg0: i32) -> (i32, i32) {
    %c0_i32 = arith.constant 0 : i32
    %c0_i32_0 = arith.constant 0 : i32
    %c0_i32_1 = arith.constant 0 : i32
    return %c0_i32, %c0_i32_0 : i32, i32
  }
  func.func @transform_7(%arg0: i32) -> (i32, i32, i32, i32) {
    %c0_i32 = arith.constant 0 : i32
    %c0_i32_0 = arith.constant 0 : i32
    %c0_i32_1 = arith.constant 0 : i32
    %c0_i32_2 = arith.constant 0 : i32
    return %arg0, %c0_i32, %c0_i32_0, %c0_i32_1 : i32, i32, i32, i32
  }
}

module attributes {stable_mosaic.version = 11 : i64} {
  func.func @kernel(%arg0: i32, %arg1: memref<1x8x8x256xf32, #tpu.memory_space<vmem>>, %arg2: memref<1x8x8x64xbf16, #tpu.memory_space<vmem>>, %arg3: memref<256x64xbf16, #tpu.memory_space<vmem>>, %arg4: memref<1x64xf32, #tpu.memory_space<vmem>>, %arg5: memref<576x64xbf16, #tpu.memory_space<vmem>>, %arg6: memref<1x64xf32, #tpu.memory_space<vmem>>, %arg7: memref<64x32xbf16, #tpu.memory_space<vmem>>, %arg8: memref<1x8x8x32xbf16, #tpu.memory_space<vmem>>) attributes {dimension_semantics = [#tpu.dimension_semantics<parallel>], iteration_bounds = array<i64: 2>, scalar_prefetch = 0 : i64, scratch_operands = 0 : i64, tpu.core_type = #tpu.core_type<tc>, window_params = [{transform_indices = @transform_0, window_bounds = array<i64: 1, 8, 8, 256>}, {transform_indices = @transform_1, window_bounds = array<i64: 1, 8, 8, 64>}, {pipeline_mode = #tpu.pipeline_mode<synchronous>, transform_indices = @transform_2, window_bounds = array<i64: 256, 64>}, {pipeline_mode = #tpu.pipeline_mode<synchronous>, transform_indices = @transform_3, window_bounds = array<i64: 1, 64>}, {pipeline_mode = #tpu.pipeline_mode<synchronous>, transform_indices = @transform_4, window_bounds = array<i64: 576, 64>}, {pipeline_mode = #tpu.pipeline_mode<synchronous>, transform_indices = @transform_5, window_bounds = array<i64: 1, 64>}, {pipeline_mode = #tpu.pipeline_mode<synchronous>, transform_indices = @transform_6, window_bounds = array<i64: 64, 32>}, {transform_indices = @transform_7, window_bounds = array<i64: 1, 8, 8, 32>}]} {
    %c0 = arith.constant 0 : index
    %c0_0 = arith.constant 0 : index
    %c0_1 = arith.constant 0 : index
    %c0_2 = arith.constant 0 : index
    %0 = vector.load %arg1[%c0, %c0_0, %c0_1, %c0_2] : memref<1x8x8x256xf32, #tpu.memory_space<vmem>>, vector<1x8x8x256xf32>
    %1 = vector.shape_cast %0 : vector<1x8x8x256xf32> to vector<8x8x256xf32>
    %2 = arith.truncf %1 : vector<8x8x256xf32> to vector<8x8x256xbf16>
    %3 = vector.shape_cast %2 : vector<8x8x256xbf16> to vector<64x256xbf16>
    %c0_3 = arith.constant 0 : index
    %c0_4 = arith.constant 0 : index
    %4 = vector.load %arg3[%c0_3, %c0_4] : memref<256x64xbf16, #tpu.memory_space<vmem>>, vector<256x64xbf16>
    %cst = arith.constant dense<0.000000e+00> : vector<64x64xf32>
    %5 = tpu.matmul %3, %4, %cst {dimension_numbers = #tpu.dot_dimension_numbers<[1], [0], [0], [1], [0, 0, 1, 1], [], []>} : vector<64x256xbf16>, vector<256x64xbf16>, vector<64x64xf32> -> vector<64x64xf32>
    %c0_5 = arith.constant 0 : index
    %c0_6 = arith.constant 0 : index
    %c0_7 = arith.constant 0 : index
    %c0_8 = arith.constant 0 : index
    %6 = vector.load %arg2[%c0_5, %c0_6, %c0_7, %c0_8] : memref<1x8x8x64xbf16, #tpu.memory_space<vmem>>, vector<1x8x8x64xbf16>
    %7 = vector.shape_cast %6 : vector<1x8x8x64xbf16> to vector<8x8x64xbf16>
    %8 = vector.shape_cast %7 : vector<8x8x64xbf16> to vector<64x64xbf16>
    %9 = arith.extf %8 : vector<64x64xbf16> to vector<64x64xf32>
    %10 = arith.addf %5, %9 : vector<64x64xf32>
    %c0_9 = arith.constant 0 : index
    %c0_10 = arith.constant 0 : index
    %11 = vector.load %arg4[%c0_9, %c0_10] : memref<1x64xf32, #tpu.memory_space<vmem>>, vector<1x64xf32>
    %12 = vector.broadcast %11 : vector<1x64xf32> to vector<64x64xf32>
    %13 = arith.addf %10, %12 : vector<64x64xf32>
    %cst_11 = arith.constant 0.000000e+00 : f32
    %14 = vector.broadcast %cst_11 : f32 to vector<64x64xf32>
    %15 = arith.maximumf %13, %14 : vector<64x64xf32>
    %c0_12 = arith.constant 0 : index
    %c0_13 = arith.constant 0 : index
    %16 = vector.load %arg5[%c0_12, %c0_13] : memref<576x64xbf16, #tpu.memory_space<vmem>>, vector<576x64xbf16>
    %c0_14 = arith.constant 0 : index
    %c0_15 = arith.constant 0 : index
    %17 = vector.load %arg6[%c0_14, %c0_15] : memref<1x64xf32, #tpu.memory_space<vmem>>, vector<1x64xf32>
    %18 = vector.shape_cast %15 : vector<64x64xf32> to vector<8x8x64xf32>
    %19 = arith.truncf %18 : vector<8x8x64xf32> to vector<8x8x64xbf16>
    %cst_16 = arith.constant 0.000000e+00 : bf16
    %20 = vector.broadcast %cst_16 : bf16 to vector<1x8x64xbf16>
    %21 = tpu.concatenate %20, %19, %20 in 0 : vector<1x8x64xbf16>, vector<8x8x64xbf16>, vector<1x8x64xbf16> -> vector<10x8x64xbf16>
    %cst_17 = arith.constant 0.000000e+00 : bf16
    %22 = vector.broadcast %cst_17 : bf16 to vector<10x1x64xbf16>
    %23 = tpu.concatenate %22, %21, %22 in 1 : vector<10x1x64xbf16>, vector<10x8x64xbf16>, vector<10x1x64xbf16> -> vector<10x10x64xbf16>
    %24 = vector.extract_strided_slice %23 {offsets = [0, 0, 0], sizes = [8, 8, 64], strides = [1, 1, 1]} : vector<10x10x64xbf16> to vector<8x8x64xbf16>
    %25 = vector.extract_strided_slice %23 {offsets = [0, 1, 0], sizes = [8, 8, 64], strides = [1, 1, 1]} : vector<10x10x64xbf16> to vector<8x8x64xbf16>
    %26 = vector.extract_strided_slice %23 {offsets = [0, 2, 0], sizes = [8, 8, 64], strides = [1, 1, 1]} : vector<10x10x64xbf16> to vector<8x8x64xbf16>
    %27 = vector.extract_strided_slice %23 {offsets = [1, 0, 0], sizes = [8, 8, 64], strides = [1, 1, 1]} : vector<10x10x64xbf16> to vector<8x8x64xbf16>
    %28 = vector.extract_strided_slice %23 {offsets = [1, 1, 0], sizes = [8, 8, 64], strides = [1, 1, 1]} : vector<10x10x64xbf16> to vector<8x8x64xbf16>
    %29 = vector.extract_strided_slice %23 {offsets = [1, 2, 0], sizes = [8, 8, 64], strides = [1, 1, 1]} : vector<10x10x64xbf16> to vector<8x8x64xbf16>
    %30 = vector.extract_strided_slice %23 {offsets = [2, 0, 0], sizes = [8, 8, 64], strides = [1, 1, 1]} : vector<10x10x64xbf16> to vector<8x8x64xbf16>
    %31 = vector.extract_strided_slice %23 {offsets = [2, 1, 0], sizes = [8, 8, 64], strides = [1, 1, 1]} : vector<10x10x64xbf16> to vector<8x8x64xbf16>
    %32 = vector.extract_strided_slice %23 {offsets = [2, 2, 0], sizes = [8, 8, 64], strides = [1, 1, 1]} : vector<10x10x64xbf16> to vector<8x8x64xbf16>
    %33 = tpu.concatenate %24, %25, %26, %27, %28, %29, %30, %31, %32 in 2 : vector<8x8x64xbf16>, vector<8x8x64xbf16>, vector<8x8x64xbf16>, vector<8x8x64xbf16>, vector<8x8x64xbf16>, vector<8x8x64xbf16>, vector<8x8x64xbf16>, vector<8x8x64xbf16>, vector<8x8x64xbf16> -> vector<8x8x576xbf16>
    %34 = vector.shape_cast %33 : vector<8x8x576xbf16> to vector<64x576xbf16>
    %cst_18 = arith.constant dense<0.000000e+00> : vector<64x64xf32>
    %35 = tpu.matmul %34, %16, %cst_18 {dimension_numbers = #tpu.dot_dimension_numbers<[1], [0], [0], [1], [0, 0, 1, 1], [], []>} : vector<64x576xbf16>, vector<576x64xbf16>, vector<64x64xf32> -> vector<64x64xf32>
    %36 = vector.broadcast %17 : vector<1x64xf32> to vector<64x64xf32>
    %37 = arith.addf %35, %36 : vector<64x64xf32>
    %cst_19 = arith.constant 0.000000e+00 : f32
    %38 = vector.broadcast %cst_19 : f32 to vector<64x64xf32>
    %39 = arith.maximumf %37, %38 : vector<64x64xf32>
    %40 = arith.truncf %39 : vector<64x64xf32> to vector<64x64xbf16>
    %c0_20 = arith.constant 0 : index
    %c0_21 = arith.constant 0 : index
    %41 = vector.load %arg7[%c0_20, %c0_21] : memref<64x32xbf16, #tpu.memory_space<vmem>>, vector<64x32xbf16>
    %cst_22 = arith.constant dense<0.000000e+00> : vector<64x32xf32>
    %42 = tpu.matmul %40, %41, %cst_22 {dimension_numbers = #tpu.dot_dimension_numbers<[1], [0], [0], [1], [0, 0, 1, 1], [], []>} : vector<64x64xbf16>, vector<64x32xbf16>, vector<64x32xf32> -> vector<64x32xf32>
    %43 = vector.shape_cast %42 : vector<64x32xf32> to vector<8x8x32xf32>
    %44 = arith.truncf %43 : vector<8x8x32xf32> to vector<8x8x32xbf16>
    %c0_23 = arith.constant 0 : index
    %c0_24 = arith.constant 0 : index
    %c0_25 = arith.constant 0 : index
    %c0_26 = arith.constant 0 : index
    %45 = vector.load %arg8[%c0_23, %c0_24, %c0_25, %c0_26] : memref<1x8x8x32xbf16, #tpu.memory_space<vmem>>, vector<1x8x8x32xbf16>
    %46 = vector.shape_cast %45 : vector<1x8x8x32xbf16> to vector<8x8x32xbf16>
    %47 = vector.shape_cast %44 : vector<8x8x32xbf16> to vector<1x8x8x32xbf16>
    tpu.vector_store %arg8[%c0_23, %c0_24, %c0_25, %c0_26], %47 {strides = array<i32>} : memref<1x8x8x32xbf16, #tpu.memory_space<vmem>>, vector<1x8x8x32xbf16>,
    return
  }
  func.func @transform_0(%arg0: i32) -> (i32, i32, i32, i32) {
    %c0_i32 = arith.constant 0 : i32
    %c0_i32_0 = arith.constant 0 : i32
    %c0_i32_1 = arith.constant 0 : i32
    %c0_i32_2 = arith.constant 0 : i32
    return %arg0, %c0_i32, %c0_i32_0, %c0_i32_1 : i32, i32, i32, i32
  }
  func.func @transform_1(%arg0: i32) -> (i32, i32, i32, i32) {
    %c0_i32 = arith.constant 0 : i32
    %c0_i32_0 = arith.constant 0 : i32
    %c0_i32_1 = arith.constant 0 : i32
    %c0_i32_2 = arith.constant 0 : i32
    return %arg0, %c0_i32, %c0_i32_0, %c0_i32_1 : i32, i32, i32, i32
  }
  func.func @transform_2(%arg0: i32) -> (i32, i32) {
    %c0_i32 = arith.constant 0 : i32
    %c0_i32_0 = arith.constant 0 : i32
    %c0_i32_1 = arith.constant 0 : i32
    return %c0_i32, %c0_i32_0 : i32, i32
  }
  func.func @transform_3(%arg0: i32) -> (i32, i32) {
    %c0_i32 = arith.constant 0 : i32
    %c0_i32_0 = arith.constant 0 : i32
    %c0_i32_1 = arith.constant 0 : i32
    return %c0_i32, %c0_i32_0 : i32, i32
  }
  func.func @transform_4(%arg0: i32) -> (i32, i32) {
    %c0_i32 = arith.constant 0 : i32
    %c0_i32_0 = arith.constant 0 : i32
    %c0_i32_1 = arith.constant 0 : i32
    return %c0_i32, %c0_i32_0 : i32, i32
  }
  func.func @transform_5(%arg0: i32) -> (i32, i32) {
    %c0_i32 = arith.constant 0 : i32
    %c0_i32_0 = arith.constant 0 : i32
    %c0_i32_1 = arith.constant 0 : i32
    return %c0_i32, %c0_i32_0 : i32, i32
  }
  func.func @transform_6(%arg0: i32) -> (i32, i32) {
    %c0_i32 = arith.constant 0 : i32
    %c0_i32_0 = arith.constant 0 : i32
    %c0_i32_1 = arith.constant 0 : i32
    return %c0_i32, %c0_i32_0 : i32, i32
  }
  func.func @transform_7(%arg0: i32) -> (i32, i32, i32, i32) {
    %c0_i32 = arith.constant 0 : i32
    %c0_i32_0 = arith.constant 0 : i32
    %c0_i32_1 = arith.constant 0 : i32
    %c0_i32_2 = arith.constant 0 : i32
    return %arg0, %c0_i32, %c0_i32_0, %c0_i32_1 : i32, i32, i32, i32
  }
}

module attributes {stable_mosaic.version = 11 : i64} {
  func.func @kernel(%arg0: i32, %arg1: memref<1x16x16x128xf32, #tpu.memory_space<vmem>>, %arg2: memref<1x16x16x32xbf16, #tpu.memory_space<vmem>>, %arg3: memref<128x32xbf16, #tpu.memory_space<vmem>>, %arg4: memref<1x32xf32, #tpu.memory_space<vmem>>, %arg5: memref<288x32xbf16, #tpu.memory_space<vmem>>, %arg6: memref<1x32xf32, #tpu.memory_space<vmem>>, %arg7: memref<288x32xbf16, #tpu.memory_space<vmem>>, %arg8: memref<1x32xf32, #tpu.memory_space<vmem>>, %arg9: memref<1x16x16x32xf32, #tpu.memory_space<vmem>>) attributes {dimension_semantics = [#tpu.dimension_semantics<parallel>], iteration_bounds = array<i64: 2>, scalar_prefetch = 0 : i64, scratch_operands = 0 : i64, tpu.core_type = #tpu.core_type<tc>, window_params = [{transform_indices = @transform_0, window_bounds = array<i64: 1, 16, 16, 128>}, {transform_indices = @transform_1, window_bounds = array<i64: 1, 16, 16, 32>}, {pipeline_mode = #tpu.pipeline_mode<synchronous>, transform_indices = @transform_2, window_bounds = array<i64: 128, 32>}, {pipeline_mode = #tpu.pipeline_mode<synchronous>, transform_indices = @transform_3, window_bounds = array<i64: 1, 32>}, {pipeline_mode = #tpu.pipeline_mode<synchronous>, transform_indices = @transform_4, window_bounds = array<i64: 288, 32>}, {pipeline_mode = #tpu.pipeline_mode<synchronous>, transform_indices = @transform_5, window_bounds = array<i64: 1, 32>}, {pipeline_mode = #tpu.pipeline_mode<synchronous>, transform_indices = @transform_6, window_bounds = array<i64: 288, 32>}, {pipeline_mode = #tpu.pipeline_mode<synchronous>, transform_indices = @transform_7, window_bounds = array<i64: 1, 32>}, {transform_indices = @transform_8, window_bounds = array<i64: 1, 16, 16, 32>}]} {
    %c0 = arith.constant 0 : index
    %c0_0 = arith.constant 0 : index
    %c0_1 = arith.constant 0 : index
    %c0_2 = arith.constant 0 : index
    %0 = vector.load %arg1[%c0, %c0_0, %c0_1, %c0_2] : memref<1x16x16x128xf32, #tpu.memory_space<vmem>>, vector<1x16x16x128xf32>
    %1 = vector.shape_cast %0 : vector<1x16x16x128xf32> to vector<16x16x128xf32>
    %2 = arith.truncf %1 : vector<16x16x128xf32> to vector<16x16x128xbf16>
    %3 = vector.shape_cast %2 : vector<16x16x128xbf16> to vector<256x128xbf16>
    %c0_3 = arith.constant 0 : index
    %c0_4 = arith.constant 0 : index
    %4 = vector.load %arg3[%c0_3, %c0_4] : memref<128x32xbf16, #tpu.memory_space<vmem>>, vector<128x32xbf16>
    %cst = arith.constant dense<0.000000e+00> : vector<256x32xf32>
    %5 = tpu.matmul %3, %4, %cst {dimension_numbers = #tpu.dot_dimension_numbers<[1], [0], [0], [1], [0, 0, 1, 1], [], []>} : vector<256x128xbf16>, vector<128x32xbf16>, vector<256x32xf32> -> vector<256x32xf32>
    %c0_5 = arith.constant 0 : index
    %c0_6 = arith.constant 0 : index
    %c0_7 = arith.constant 0 : index
    %c0_8 = arith.constant 0 : index
    %6 = vector.load %arg2[%c0_5, %c0_6, %c0_7, %c0_8] : memref<1x16x16x32xbf16, #tpu.memory_space<vmem>>, vector<1x16x16x32xbf16>
    %7 = vector.shape_cast %6 : vector<1x16x16x32xbf16> to vector<16x16x32xbf16>
    %8 = vector.shape_cast %7 : vector<16x16x32xbf16> to vector<256x32xbf16>
    %9 = arith.extf %8 : vector<256x32xbf16> to vector<256x32xf32>
    %10 = arith.addf %5, %9 : vector<256x32xf32>
    %c0_9 = arith.constant 0 : index
    %c0_10 = arith.constant 0 : index
    %11 = vector.load %arg4[%c0_9, %c0_10] : memref<1x32xf32, #tpu.memory_space<vmem>>, vector<1x32xf32>
    %12 = vector.broadcast %11 : vector<1x32xf32> to vector<256x32xf32>
    %13 = arith.addf %10, %12 : vector<256x32xf32>
    %cst_11 = arith.constant 0.000000e+00 : f32
    %14 = vector.broadcast %cst_11 : f32 to vector<256x32xf32>
    %15 = arith.maximumf %13, %14 : vector<256x32xf32>
    %c0_12 = arith.constant 0 : index
    %c0_13 = arith.constant 0 : index
    %16 = vector.load %arg5[%c0_12, %c0_13] : memref<288x32xbf16, #tpu.memory_space<vmem>>, vector<288x32xbf16>
    %c0_14 = arith.constant 0 : index
    %c0_15 = arith.constant 0 : index
    %17 = vector.load %arg6[%c0_14, %c0_15] : memref<1x32xf32, #tpu.memory_space<vmem>>, vector<1x32xf32>
    %18 = vector.shape_cast %15 : vector<256x32xf32> to vector<16x16x32xf32>
    %19 = arith.truncf %18 : vector<16x16x32xf32> to vector<16x16x32xbf16>
    %cst_16 = arith.constant 0.000000e+00 : bf16
    %20 = vector.broadcast %cst_16 : bf16 to vector<1x16x32xbf16>
    %21 = tpu.concatenate %20, %19, %20 in 0 : vector<1x16x32xbf16>, vector<16x16x32xbf16>, vector<1x16x32xbf16> -> vector<18x16x32xbf16>
    %cst_17 = arith.constant 0.000000e+00 : bf16
    %22 = vector.broadcast %cst_17 : bf16 to vector<18x1x32xbf16>
    %23 = tpu.concatenate %22, %21, %22 in 1 : vector<18x1x32xbf16>, vector<18x16x32xbf16>, vector<18x1x32xbf16> -> vector<18x18x32xbf16>
    %24 = vector.extract_strided_slice %23 {offsets = [0, 0, 0], sizes = [16, 16, 32], strides = [1, 1, 1]} : vector<18x18x32xbf16> to vector<16x16x32xbf16>
    %25 = vector.extract_strided_slice %23 {offsets = [0, 1, 0], sizes = [16, 16, 32], strides = [1, 1, 1]} : vector<18x18x32xbf16> to vector<16x16x32xbf16>
    %26 = vector.extract_strided_slice %23 {offsets = [0, 2, 0], sizes = [16, 16, 32], strides = [1, 1, 1]} : vector<18x18x32xbf16> to vector<16x16x32xbf16>
    %27 = vector.extract_strided_slice %23 {offsets = [1, 0, 0], sizes = [16, 16, 32], strides = [1, 1, 1]} : vector<18x18x32xbf16> to vector<16x16x32xbf16>
    %28 = vector.extract_strided_slice %23 {offsets = [1, 1, 0], sizes = [16, 16, 32], strides = [1, 1, 1]} : vector<18x18x32xbf16> to vector<16x16x32xbf16>
    %29 = vector.extract_strided_slice %23 {offsets = [1, 2, 0], sizes = [16, 16, 32], strides = [1, 1, 1]} : vector<18x18x32xbf16> to vector<16x16x32xbf16>
    %30 = vector.extract_strided_slice %23 {offsets = [2, 0, 0], sizes = [16, 16, 32], strides = [1, 1, 1]} : vector<18x18x32xbf16> to vector<16x16x32xbf16>
    %31 = vector.extract_strided_slice %23 {offsets = [2, 1, 0], sizes = [16, 16, 32], strides = [1, 1, 1]} : vector<18x18x32xbf16> to vector<16x16x32xbf16>
    %32 = vector.extract_strided_slice %23 {offsets = [2, 2, 0], sizes = [16, 16, 32], strides = [1, 1, 1]} : vector<18x18x32xbf16> to vector<16x16x32xbf16>
    %33 = tpu.concatenate %24, %25, %26, %27, %28, %29, %30, %31, %32 in 2 : vector<16x16x32xbf16>, vector<16x16x32xbf16>, vector<16x16x32xbf16>, vector<16x16x32xbf16>, vector<16x16x32xbf16>, vector<16x16x32xbf16>, vector<16x16x32xbf16>, vector<16x16x32xbf16>, vector<16x16x32xbf16> -> vector<16x16x288xbf16>
    %34 = vector.shape_cast %33 : vector<16x16x288xbf16> to vector<256x288xbf16>
    %cst_18 = arith.constant dense<0.000000e+00> : vector<256x32xf32>
    %35 = tpu.matmul %34, %16, %cst_18 {dimension_numbers = #tpu.dot_dimension_numbers<[1], [0], [0], [1], [0, 0, 1, 1], [], []>} : vector<256x288xbf16>, vector<288x32xbf16>, vector<256x32xf32> -> vector<256x32xf32>
    %36 = vector.broadcast %17 : vector<1x32xf32> to vector<256x32xf32>
    %37 = arith.addf %35, %36 : vector<256x32xf32>
    %cst_19 = arith.constant 0.000000e+00 : f32
    %38 = vector.broadcast %cst_19 : f32 to vector<256x32xf32>
    %39 = arith.maximumf %37, %38 : vector<256x32xf32>
    %c0_20 = arith.constant 0 : index
    %c0_21 = arith.constant 0 : index
    %40 = vector.load %arg7[%c0_20, %c0_21] : memref<288x32xbf16, #tpu.memory_space<vmem>>, vector<288x32xbf16>
    %c0_22 = arith.constant 0 : index
    %c0_23 = arith.constant 0 : index
    %41 = vector.load %arg8[%c0_22, %c0_23] : memref<1x32xf32, #tpu.memory_space<vmem>>, vector<1x32xf32>
    %42 = vector.shape_cast %39 : vector<256x32xf32> to vector<16x16x32xf32>
    %43 = arith.truncf %42 : vector<16x16x32xf32> to vector<16x16x32xbf16>
    %cst_24 = arith.constant 0.000000e+00 : bf16
    %44 = vector.broadcast %cst_24 : bf16 to vector<1x16x32xbf16>
    %45 = tpu.concatenate %44, %43, %44 in 0 : vector<1x16x32xbf16>, vector<16x16x32xbf16>, vector<1x16x32xbf16> -> vector<18x16x32xbf16>
    %cst_25 = arith.constant 0.000000e+00 : bf16
    %46 = vector.broadcast %cst_25 : bf16 to vector<18x1x32xbf16>
    %47 = tpu.concatenate %46, %45, %46 in 1 : vector<18x1x32xbf16>, vector<18x16x32xbf16>, vector<18x1x32xbf16> -> vector<18x18x32xbf16>
    %48 = vector.extract_strided_slice %47 {offsets = [0, 0, 0], sizes = [16, 16, 32], strides = [1, 1, 1]} : vector<18x18x32xbf16> to vector<16x16x32xbf16>
    %49 = vector.extract_strided_slice %47 {offsets = [0, 1, 0], sizes = [16, 16, 32], strides = [1, 1, 1]} : vector<18x18x32xbf16> to vector<16x16x32xbf16>
    %50 = vector.extract_strided_slice %47 {offsets = [0, 2, 0], sizes = [16, 16, 32], strides = [1, 1, 1]} : vector<18x18x32xbf16> to vector<16x16x32xbf16>
    %51 = vector.extract_strided_slice %47 {offsets = [1, 0, 0], sizes = [16, 16, 32], strides = [1, 1, 1]} : vector<18x18x32xbf16> to vector<16x16x32xbf16>
    %52 = vector.extract_strided_slice %47 {offsets = [1, 1, 0], sizes = [16, 16, 32], strides = [1, 1, 1]} : vector<18x18x32xbf16> to vector<16x16x32xbf16>
    %53 = vector.extract_strided_slice %47 {offsets = [1, 2, 0], sizes = [16, 16, 32], strides = [1, 1, 1]} : vector<18x18x32xbf16> to vector<16x16x32xbf16>
    %54 = vector.extract_strided_slice %47 {offsets = [2, 0, 0], sizes = [16, 16, 32], strides = [1, 1, 1]} : vector<18x18x32xbf16> to vector<16x16x32xbf16>
    %55 = vector.extract_strided_slice %47 {offsets = [2, 1, 0], sizes = [16, 16, 32], strides = [1, 1, 1]} : vector<18x18x32xbf16> to vector<16x16x32xbf16>
    %56 = vector.extract_strided_slice %47 {offsets = [2, 2, 0], sizes = [16, 16, 32], strides = [1, 1, 1]} : vector<18x18x32xbf16> to vector<16x16x32xbf16>
    %57 = tpu.concatenate %48, %49, %50, %51, %52, %53, %54, %55, %56 in 2 : vector<16x16x32xbf16>, vector<16x16x32xbf16>, vector<16x16x32xbf16>, vector<16x16x32xbf16>, vector<16x16x32xbf16>, vector<16x16x32xbf16>, vector<16x16x32xbf16>, vector<16x16x32xbf16>, vector<16x16x32xbf16> -> vector<16x16x288xbf16>
    %58 = vector.shape_cast %57 : vector<16x16x288xbf16> to vector<256x288xbf16>
    %cst_26 = arith.constant dense<0.000000e+00> : vector<256x32xf32>
    %59 = tpu.matmul %58, %40, %cst_26 {dimension_numbers = #tpu.dot_dimension_numbers<[1], [0], [0], [1], [0, 0, 1, 1], [], []>} : vector<256x288xbf16>, vector<288x32xbf16>, vector<256x32xf32> -> vector<256x32xf32>
    %60 = vector.broadcast %41 : vector<1x32xf32> to vector<256x32xf32>
    %61 = arith.addf %59, %60 : vector<256x32xf32>
    %cst_27 = arith.constant 0.000000e+00 : f32
    %62 = vector.broadcast %cst_27 : f32 to vector<256x32xf32>
    %63 = arith.maximumf %61, %62 : vector<256x32xf32>
    %64 = vector.shape_cast %63 : vector<256x32xf32> to vector<16x16x32xf32>
    %c0_28 = arith.constant 0 : index
    %c0_29 = arith.constant 0 : index
    %c0_30 = arith.constant 0 : index
    %c0_31 = arith.constant 0 : index
    %65 = vector.load %arg9[%c0_28, %c0_29, %c0_30, %c0_31] : memref<1x16x16x32xf32, #tpu.memory_space<vmem>>, vector<1x16x16x32xf32>
    %66 = vector.shape_cast %65 : vector<1x16x16x32xf32> to vector<16x16x32xf32>
    %67 = vector.shape_cast %64 : vector<16x16x32xf32> to vector<1x16x16x32xf32>
    tpu.vector_store %arg9[%c0_28, %c0_29, %c0_30, %c0_31], %67 {strides = array<i32>} : memref<1x16x16x32xf32, #tpu.memory_space<vmem>>, vector<1x16x16x32xf32>,
    return
  }
  func.func @transform_0(%arg0: i32) -> (i32, i32, i32, i32) {
    %c0_i32 = arith.constant 0 : i32
    %c0_i32_0 = arith.constant 0 : i32
    %c0_i32_1 = arith.constant 0 : i32
    %c0_i32_2 = arith.constant 0 : i32
    return %arg0, %c0_i32, %c0_i32_0, %c0_i32_1 : i32, i32, i32, i32
  }
  func.func @transform_1(%arg0: i32) -> (i32, i32, i32, i32) {
    %c0_i32 = arith.constant 0 : i32
    %c0_i32_0 = arith.constant 0 : i32
    %c0_i32_1 = arith.constant 0 : i32
    %c0_i32_2 = arith.constant 0 : i32
    return %arg0, %c0_i32, %c0_i32_0, %c0_i32_1 : i32, i32, i32, i32
  }
  func.func @transform_2(%arg0: i32) -> (i32, i32) {
    %c0_i32 = arith.constant 0 : i32
    %c0_i32_0 = arith.constant 0 : i32
    %c0_i32_1 = arith.constant 0 : i32
    return %c0_i32, %c0_i32_0 : i32, i32
  }
  func.func @transform_3(%arg0: i32) -> (i32, i32) {
    %c0_i32 = arith.constant 0 : i32
    %c0_i32_0 = arith.constant 0 : i32
    %c0_i32_1 = arith.constant 0 : i32
    return %c0_i32, %c0_i32_0 : i32, i32
  }
  func.func @transform_4(%arg0: i32) -> (i32, i32) {
    %c0_i32 = arith.constant 0 : i32
    %c0_i32_0 = arith.constant 0 : i32
    %c0_i32_1 = arith.constant 0 : i32
    return %c0_i32, %c0_i32_0 : i32, i32
  }
  func.func @transform_5(%arg0: i32) -> (i32, i32) {
    %c0_i32 = arith.constant 0 : i32
    %c0_i32_0 = arith.constant 0 : i32
    %c0_i32_1 = arith.constant 0 : i32
    return %c0_i32, %c0_i32_0 : i32, i32
  }
  func.func @transform_6(%arg0: i32) -> (i32, i32) {
    %c0_i32 = arith.constant 0 : i32
    %c0_i32_0 = arith.constant 0 : i32
    %c0_i32_1 = arith.constant 0 : i32
    return %c0_i32, %c0_i32_0 : i32, i32
  }
  func.func @transform_7(%arg0: i32) -> (i32, i32) {
    %c0_i32 = arith.constant 0 : i32
    %c0_i32_0 = arith.constant 0 : i32
    %c0_i32_1 = arith.constant 0 : i32
    return %c0_i32, %c0_i32_0 : i32, i32
  }
  func.func @transform_8(%arg0: i32) -> (i32, i32, i32, i32) {
    %c0_i32 = arith.constant 0 : i32
    %c0_i32_0 = arith.constant 0 : i32
    %c0_i32_1 = arith.constant 0 : i32
    %c0_i32_2 = arith.constant 0 : i32
    return %arg0, %c0_i32, %c0_i32_0, %c0_i32_1 : i32, i32, i32, i32
  }
}

</mosaic_0001>

<llo_original>
// kernel: merge_forward.4
$region0: #{merge_forward.4}
  #allocation0 [shape = 'u32[]', space=smem, size = 0x4, offset = 0x4, fixed_abs, tag = 'smem constant byte address 0x4 - core index']
  #allocation1 [shape = 'u32[72,128]{1,0:T(1,128)}', space=vmem, size = 0x9000, scoped, tag = 'internal scratch']
  %s0 = inlined_call_operand.vmem [shape: f32[8,512], index: 0, kind: input, shape index: {}]
  %s1 = inlined_call_operand.vmem [shape: bf16[512,128], index: 1, kind: input, shape index: {}]
  %s2 = inlined_call_operand.vmem [shape: bf16[8,128], index: 2, kind: output, shape index: {}]
  %s3 = sld [smem:[#allocation0]]
  $region18: #{merge_forward.4} parent=0
    _
  %s5 = ssub.s32 1, %s3
  %s6 = scalar_select 0, %s5, %s3
  // Predicated region
  $region2: #{merge_forward.4} parent=0 // pred_check
    _
  $region3: #{merge_forward.4} parent=0 // pred_check_branch
    %8 = sbr.rel (0) target = $region5
  $region4: #{merge_forward.4} parent=0 // pred_region
    _
  $region5: #{merge_forward.4} parent=0 // pred_fallthru
    _
  // Predicated region
  $region6: #{merge_forward.4} parent=0 // pred_check
    _
  $region7: #{merge_forward.4} parent=0 // pred_check_branch
    %10 = sbr.rel (0) target = $region9
  $region8: #{merge_forward.4} parent=0 // pred_region
    _
  $region9: #{merge_forward.4} parent=0 // pred_fallthru
    _
  %v11 = vld [vmem:[%s0] sm:$0xff]
  %v12 = vld [vmem:[%s0 + $0x8] sm:$0xff]
  %v13 = vld [vmem:[%s0 + $0x10] sm:$0xff]
  %v14 = vld [vmem:[%s0 + $0x18] sm:$0xff]
  %v15 = vpack.c.bf16 %v11, %v11
  %v16 = vpack.c.bf16 %v12, %v12
  %v17 = vpack.c.bf16 %v13, %v13
  %v18 = vpack.c.bf16 %v14, %v14
  %v19 = vld [vmem:[%s1] sm:$0xf]
  %v20 = vld [vmem:[%s1 + $0x4] sm:$0xf]
  %v21 = vld [vmem:[%s1 + $0x8] sm:$0xf]
  %v22 = vld [vmem:[%s1 + $0xc] sm:$0xf]
  %v23 = vld [vmem:[%s1 + $0x10] sm:$0xf]
  %v24 = vld [vmem:[%s1 + $0x14] sm:$0xf]
  %v25 = vld [vmem:[%s1 + $0x18] sm:$0xf]
  %v26 = vld [vmem:[%s1 + $0x1c] sm:$0xf]
  %v27 = vld [vmem:[%s1 + $0x20] sm:$0xf]
  %v28 = vld [vmem:[%s1 + $0x24] sm:$0xf]
  %v29 = vld [vmem:[%s1 + $0x28] sm:$0xf]
  %v30 = vld [vmem:[%s1 + $0x2c] sm:$0xf]
  %v31 = vld [vmem:[%s1 + $0x30] sm:$0xf]
  %v32 = vld [vmem:[%s1 + $0x34] sm:$0xf]
  %v33 = vld [vmem:[%s1 + $0x38] sm:$0xf]
  %v34 = vld [vmem:[%s1 + $0x3c] sm:$0xf]
  %v35 = vld [vmem:[%s1 + $0x40] sm:$0xf]
  %v36 = vld [vmem:[%s1 + $0x44] sm:$0xf]
  %v37 = vld [vmem:[%s1 + $0x48] sm:$0xf]
  %v38 = vld [vmem:[%s1 + $0x4c] sm:$0xf]
  %v39 = vld [vmem:[%s1 + $0x50] sm:$0xf]
  %v40 = vld [vmem:[%s1 + $0x54] sm:$0xf]
  %v41 = vld [vmem:[%s1 + $0x58] sm:$0xf]
  %v42 = vld [vmem:[%s1 + $0x5c] sm:$0xf]
  %v43 = vld [vmem:[%s1 + $0x60] sm:$0xf]
  %v44 = vld [vmem:[%s1 + $0x64] sm:$0xf]
  %v45 = vld [vmem:[%s1 + $0x68] sm:$0xf]
  %v46 = vld [vmem:[%s1 + $0x6c] sm:$0xf]
  %v47 = vld [vmem:[%s1 + $0x70] sm:$0xf]
  %v48 = vld [vmem:[%s1 + $0x74] sm:$0xf]
  %v49 = vld [vmem:[%s1 + $0x78] sm:$0xf]
  %v50 = vld [vmem:[%s1 + $0x7c] sm:$0xf]
  %v51 = vld [vmem:[%s1 + $0x80] sm:$0xf]
  %v52 = vld [vmem:[%s1 + $0x84] sm:$0xf]
  %v53 = vld [vmem:[%s1 + $0x88] sm:$0xf]
  %v54 = vld [vmem:[%s1 + $0x8c] sm:$0xf]
  %v55 = vld [vmem:[%s1 + $0x90] sm:$0xf]
  %v56 = vld [vmem:[%s1 + $0x94] sm:$0xf]
  %v57 = vld [vmem:[%s1 + $0x98] sm:$0xf]
  %v58 = vld [vmem:[%s1 + $0x9c] sm:$0xf]
  %v59 = vld [vmem:[%s1 + $0xa0] sm:$0xf]
  %v60 = vld [vmem:[%s1 + $0xa4] sm:$0xf]
  %v61 = vld [vmem:[%s1 + $0xa8] sm:$0xf]
  %v62 = vld [vmem:[%s1 + $0xac] sm:$0xf]
  %v63 = vld [vmem:[%s1 + $0xb0] sm:$0xf]
  %v64 = vld [vmem:[%s1 + $0xb4] sm:$0xf]
  %v65 = vld [vmem:[%s1 + $0xb8] sm:$0xf]
  %v66 = vld [vmem:[%s1 + $0xbc] sm:$0xf]
  %v67 = vld [vmem:[%s1 + $0xc0] sm:$0xf]
  %v68 = vld [vmem:[%s1 + $0xc4] sm:$0xf]
  %v69 = vld [vmem:[%s1 + $0xc8] sm:$0xf]
  %v70 = vld [vmem:[%s1 + $0xcc] sm:$0xf]
  %v71 = vld [vmem:[%s1 + $0xd0] sm:$0xf]
  %v72 = vld [vmem:[%s1 + $0xd4] sm:$0xf]
  %v73 = vld [vmem:[%s1 + $0xd8] sm:$0xf]
  %v74 = vld [vmem:[%s1 + $0xdc] sm:$0xf]
  %v75 = vld [vmem:[%s1 + $0xe0] sm:$0xf]
  %v76 = vld [vmem:[%s1 + $0xe4] sm:$0xf]
  %v77 = vld [vmem:[%s1 + $0xe8] sm:$0xf]
  %v78 = vld [vmem:[%s1 + $0xec] sm:$0xf]
  %v79 = vld [vmem:[%s1 + $0xf0] sm:$0xf]
  %v80 = vld [vmem:[%s1 + $0xf4] sm:$0xf]
  %v81 = vld [vmem:[%s1 + $0xf8] sm:$0xf]
  %v82 = vld [vmem:[%s1 + $0xfc] sm:$0xf]
  %v147 = vunpack.c.l.b16 %v19
  %v148 = vunpack.c.l.b16 %v20
  %v149 = vunpack.c.l.b16 %v21
  %v150 = vunpack.c.l.b16 %v22
  %v151 = vunpack.c.l.b16 %v23
  %v152 = vunpack.c.l.b16 %v24
  %v153 = vunpack.c.l.b16 %v25
  %v154 = vunpack.c.l.b16 %v26
  %v155 = vunpack.c.l.b16 %v27
  %v156 = vunpack.c.l.b16 %v28
  %v157 = vunpack.c.l.b16 %v29
  %v158 = vunpack.c.l.b16 %v30
  %v159 = vunpack.c.l.b16 %v31
  %v160 = vunpack.c.l.b16 %v32
  %v161 = vunpack.c.l.b16 %v33
  %v162 = vunpack.c.l.b16 %v34
  %v163 = vunpack.c.l.b16 %v35
  %v164 = vunpack.c.l.b16 %v36
  %v165 = vunpack.c.l.b16 %v37
  %v166 = vunpack.c.l.b16 %v38
  %v167 = vunpack.c.l.b16 %v39
  %v168 = vunpack.c.l.b16 %v40
  %v169 = vunpack.c.l.b16 %v41
  %v170 = vunpack.c.l.b16 %v42
  %v171 = vunpack.c.l.b16 %v43
  %v172 = vunpack.c.l.b16 %v44
  %v173 = vunpack.c.l.b16 %v45
  %v174 = vunpack.c.l.b16 %v46
  %v175 = vunpack.c.l.b16 %v47
  %v176 = vunpack.c.l.b16 %v48
  %v177 = vunpack.c.l.b16 %v49
  %v178 = vunpack.c.l.b16 %v50
  %v179 = vunpack.c.l.b16 %v51
  %v180 = vunpack.c.l.b16 %v52
  %v181 = vunpack.c.l.b16 %v53
  %v182 = vunpack.c.l.b16 %v54
  %v183 = vunpack.c.l.b16 %v55
  %v184 = vunpack.c.l.b16 %v56
  %v185 = vunpack.c.l.b16 %v57
  %v186 = vunpack.c.l.b16 %v58
  %v187 = vunpack.c.l.b16 %v59
  %v188 = vunpack.c.l.b16 %v60
  %v189 = vunpack.c.l.b16 %v61
  %v190 = vunpack.c.l.b16 %v62
  %v191 = vunpack.c.l.b16 %v63
  %v192 = vunpack.c.l.b16 %v64
  %v193 = vunpack.c.l.b16 %v65
  %v194 = vunpack.c.l.b16 %v66
  %v195 = vunpack.c.l.b16 %v67
  %v196 = vunpack.c.l.b16 %v68
  %v197 = vunpack.c.l.b16 %v69
  %v198 = vunpack.c.l.b16 %v70
  %v199 = vunpack.c.l.b16 %v71
  %v200 = vunpack.c.l.b16 %v72
  %v201 = vunpack.c.l.b16 %v73
  %v202 = vunpack.c.l.b16 %v74
  %v203 = vunpack.c.l.b16 %v75
  %v204 = vunpack.c.l.b16 %v76
  %v205 = vunpack.c.l.b16 %v77
  %v206 = vunpack.c.l.b16 %v78
  %v207 = vunpack.c.l.b16 %v79
  %v208 = vunpack.c.l.b16 %v80
  %v209 = vunpack.c.l.b16 %v81
  %v210 = vunpack.c.l.b16 %v82
  %v211 = vpack.c.b16 %v148, %v147
  %v212 = vpack.c.b16 %v150, %v149
  %v213 = vpack.c.b16 %v152, %v151
  %v214 = vpack.c.b16 %v154, %v153
  %v215 = vpack.c.b16 %v156, %v155
  %v216 = vpack.c.b16 %v158, %v157
  %v217 = vpack.c.b16 %v160, %v159
  %v218 = vpack.c.b16 %v162, %v161
  %v219 = vpack.c.b16 %v164, %v163
  %v220 = vpack.c.b16 %v166, %v165
  %v221 = vpack.c.b16 %v168, %v167
  %v222 = vpack.c.b16 %v170, %v169
  %v223 = vpack.c.b16 %v172, %v171
  %v224 = vpack.c.b16 %v174, %v173
  %v225 = vpack.c.b16 %v176, %v175
  %v226 = vpack.c.b16 %v178, %v177
  %v227 = vpack.c.b16 %v180, %v179
  %v228 = vpack.c.b16 %v182, %v181
  %v229 = vpack.c.b16 %v184, %v183
  %v230 = vpack.c.b16 %v186, %v185
  %v231 = vpack.c.b16 %v188, %v187
  %v232 = vpack.c.b16 %v190, %v189
  %v233 = vpack.c.b16 %v192, %v191
  %v234 = vpack.c.b16 %v194, %v193
  %v235 = vpack.c.b16 %v196, %v195
  %v236 = vpack.c.b16 %v198, %v197
  %v237 = vpack.c.b16 %v200, %v199
  %v238 = vpack.c.b16 %v202, %v201
  %v239 = vpack.c.b16 %v204, %v203
  %v240 = vpack.c.b16 %v206, %v205
  %v241 = vpack.c.b16 %v208, %v207
  %v242 = vpack.c.b16 %v210, %v209
  %275 = vmatpush.bf16.msra.mxu0 %v218
  %276 = vmatpush.bf16.msra.mxu0 %v217
  %277 = vmatpush.bf16.msra.mxu0 %v216
  %278 = vmatpush.bf16.msra.mxu0 %v215
  %279 = vmatpush.bf16.msra.mxu0 %v214
  %280 = vmatpush.bf16.msra.mxu0 %v213
  %281 = vmatpush.bf16.msra.mxu0 %v212
  %282 = vmatpush.bf16.msra.mxu0 %v211
  %283 = vmatmul.bf16.gmra.mxu0 %v15
  %v284 = vpop.f32.mrf.mxu0
  %v285 = vadd.f32 0.0, %v284
  %v286 = vpop.f32.mrf.mxu0
  %287 = vdwg.mxu0
  %288 = vmatpush.bf16.msra.mxu0 %v226
  %289 = vmatpush.bf16.msra.mxu0 %v225
  %290 = vmatpush.bf16.msra.mxu0 %v224
  %291 = vmatpush.bf16.msra.mxu0 %v223
  %292 = vmatpush.bf16.msra.mxu0 %v222
  %293 = vmatpush.bf16.msra.mxu0 %v221
  %294 = vmatpush.bf16.msra.mxu0 %v220
  %295 = vmatpush.bf16.msra.mxu0 %v219
  %296 = vmatmul.bf16.gmra.mxu0 %v16
  %v297 = vpop.f32.mrf.mxu0
  %v298 = vadd.f32 %v285, %v297
  %v299 = vpop.f32.mrf.mxu0
  %300 = vdwg.mxu0
  %301 = vmatpush.bf16.msra.mxu0 %v234
  %302 = vmatpush.bf16.msra.mxu0 %v233
  %303 = vmatpush.bf16.msra.mxu0 %v232
  %304 = vmatpush.bf16.msra.mxu0 %v231
  %305 = vmatpush.bf16.msra.mxu0 %v230
  %306 = vmatpush.bf16.msra.mxu0 %v229
  %307 = vmatpush.bf16.msra.mxu0 %v228
  %308 = vmatpush.bf16.msra.mxu0 %v227
  %309 = vmatmul.bf16.gmra.mxu0 %v17
  %v310 = vpop.f32.mrf.mxu0
  %v311 = vadd.f32 %v298, %v310
  %v312 = vpop.f32.mrf.mxu0
  %313 = vdwg.mxu0
  %314 = vmatpush.bf16.msra.mxu0 %v242
  %315 = vmatpush.bf16.msra.mxu0 %v241
  %316 = vmatpush.bf16.msra.mxu0 %v240
  %317 = vmatpush.bf16.msra.mxu0 %v239
  %318 = vmatpush.bf16.msra.mxu0 %v238
  %319 = vmatpush.bf16.msra.mxu0 %v237
  %320 = vmatpush.bf16.msra.mxu0 %v236
  %321 = vmatpush.bf16.msra.mxu0 %v235
  %322 = vmatmul.bf16.gmra.mxu0 %v18
  %v323 = vpop.f32.mrf.mxu0
  %v324 = vadd.f32 %v311, %v323
  %v325 = vpop.f32.mrf.mxu0
  %326 = vdwg.mxu0
  %v327 = vpack.c.bf16 %v324, %v324
  %328 = vst [vmem:[%s2] sm:$0xf] %v327
  // Predicated region
  $region10: #{merge_forward.4} parent=0 // pred_check
    _
  $region11: #{merge_forward.4} parent=0 // pred_check_branch
    %330 = sbr.rel (0) target = $region13
  $region12: #{merge_forward.4} parent=0 // pred_region
    _
  $region13: #{merge_forward.4} parent=0 // pred_fallthru
    _
  // Predicated region
  $region14: #{merge_forward.4} parent=0 // pred_check
    _
  $region15: #{merge_forward.4} parent=0 // pred_check_branch
    %332 = sbr.rel (0) target = $region17
  $region16: #{merge_forward.4} parent=0 // pred_region
    _
  $region17: #{merge_forward.4} parent=0 // pred_fallthru
    _

// kernel: merge_forward.5
$region0: #{merge_forward.5}
  #allocation0 [shape = 'u32[]', space=smem, size = 0x4, offset = 0x4, fixed_abs, tag = 'smem constant byte address 0x4 - core index']
  #allocation1 [shape = 'u32[72,128]{1,0:T(1,128)}', space=vmem, size = 0x9000, scoped, tag = 'internal scratch']
  %s0 = inlined_call_operand.vmem [shape: f32[2,4,4,512], index: 0, kind: input, shape index: {}]
  %s1 = inlined_call_operand.vmem [shape: bf16[2,4,4,128], index: 1, kind: input, shape index: {}]
  %s2 = inlined_call_operand.vmem [shape: bf16[512,128], index: 2, kind: input, shape index: {}]
  %s3 = inlined_call_operand.vmem [shape: f32[1,128], index: 3, kind: input, shape index: {}]
  %s4 = inlined_call_operand.vmem [shape: bf16[1152,128], index: 4, kind: input, shape index: {}]
  %s5 = inlined_call_operand.vmem [shape: f32[1,128], index: 5, kind: input, shape index: {}]
  %s6 = inlined_call_operand.vmem [shape: bf16[128,64], index: 6, kind: input, shape index: {}]
  %s7 = inlined_call_operand.vmem [shape: bf16[2,4,4,64], index: 7, kind: output, shape index: {}]
  %s8 = sld [smem:[#allocation0]]
  $region61: #{merge_forward.5} parent=0
    _
  %s10 = ssub.s32 1, %s8
  %s11 = scalar_select 0, %s10, %s8
  loop: start=0, step=1, limit=4
  $region2: #{merge_forward.5} parent=0 // loop_pre_header
    _
  $region3: #{merge_forward.5} parent=0 // loop_header
    %s13 = sphi 0, %s17
    %p14 = scmp.ge.s32.totalorder %s13, 4
    %s23 = sphi 0, %s25
    %s26 = sphi 0, %s23
    %s27 = sphi 0, %s26
    %s43 = sphi 0, %s27
    %s49 = sphi 0, %s51
    %s52 = sphi 0, %s49
    %s53 = sphi 0, %s52
    %s69 = sphi 0, %s53
    %s73 = sphi 0, %s73
    %s75 = sphi 0, %s73
    %s76 = sphi 0, %s75
    %s90 = sphi 0, %s76
    %s94 = sphi 0, %s94
    %s96 = sphi 0, %s94
    %s97 = sphi 0, %s96
    %s111 = sphi 0, %s97
    %s115 = sphi 0, %s115
    %s117 = sphi 0, %s115
    %s118 = sphi 0, %s117
    %s132 = sphi 0, %s118
    %s136 = sphi 0, %s136
    %s138 = sphi 0, %s136
    %s139 = sphi 0, %s138
    %s153 = sphi 0, %s139
    %s157 = sphi 0, %s157
    %s159 = sphi 0, %s157
    %s160 = sphi 0, %s159
    %s174 = sphi 0, %s160
    %s180 = sphi 0, %s182
    %s183 = sphi 0, %s180
    %s184 = sphi 0, %s183
    %s200 = sphi 0, %s184
  $region4: #{merge_forward.5} parent=0 // loop_header_branch
    %16 = sbr.rel (%p14) target = $region8
  $region5: #{merge_forward.5} parent=0 // loop_body
    %s18 = ssub.s32 %s13, 1
    %s19 = ssub.s32 %s13, 2
    %s20 = sadd.s32 %s13, 1
    %s21 = ssub.s32 %s13, %s20
    %p22 = scmp.eq.s32.totalorder %s21, 0
    %s24 = sadd.s32 %s23, 1
    %s25 = scalar_select %p22, %s23, %s24
    %p28 = pneg %p22
    %p29 = scmp.eq.s32.totalorder %s13, 1
    %p30 = por %p28, %p29
    %p31 = scmp.ne.s32.totalorder %s23, %s26
    %p32 = scmp.eq.s32.totalorder %s13, 0
    %p33 = por %p31, %p32
    %p34 = scmp.ne.s32.totalorder %s23, %s26
    %p35 = scmp.eq.s32.totalorder %s18, 1
    %p36 = por %p34, %p35
    %p37 = scmp.ne.s32.totalorder %s26, %s27
    %p38 = scmp.eq.s32.totalorder %s18, 0
    %p39 = por %p37, %p38
    %p40 = scmp.ne.s32.totalorder %s26, %s27
    %p41 = scmp.eq.s32.totalorder %s19, 1
    %p42 = por %p40, %p41
    %p44 = scmp.ne.s32.totalorder %s27, %s43
    %p45 = scmp.eq.s32.totalorder %s19, 0
    %p46 = por %p44, %p45
    %s47 = ssub.s32 %s13, %s20
    %p48 = scmp.eq.s32.totalorder %s47, 0
    %s50 = sadd.s32 %s49, 1
    %s51 = scalar_select %p48, %s49, %s50
    %p54 = pneg %p48
    %p55 = scmp.eq.s32.totalorder %s13, 1
    %p56 = por %p54, %p55
    %p57 = scmp.ne.s32.totalorder %s49, %s52
    %p58 = scmp.eq.s32.totalorder %s13, 0
    %p59 = por %p57, %p58
    %p60 = scmp.ne.s32.totalorder %s49, %s52
    %p61 = scmp.eq.s32.totalorder %s18, 1
    %p62 = por %p60, %p61
    %p63 = scmp.ne.s32.totalorder %s52, %s53
    %p64 = scmp.eq.s32.totalorder %s18, 0
    %p65 = por %p63, %p64
    %p66 = scmp.ne.s32.totalorder %s52, %s53
    %p67 = scmp.eq.s32.totalorder %s19, 1
    %p68 = por %p66, %p67
    %p70 = scmp.ne.s32.totalorder %s53, %s69
    %p71 = scmp.eq.s32.totalorder %s19, 0
    %p72 = por %p70, %p71
    %s74 = sadd.s32 %s73, 1
    %p77 = scmp.eq.s32.totalorder %s13, 1
    %p78 = scmp.ne.s32.totalorder %s73, %s75
    %p79 = scmp.eq.s32.totalorder %s13, 0
    %p80 = por %p78, %p79
    %p81 = scmp.ne.s32.totalorder %s73, %s75
    %p82 = scmp.eq.s32.totalorder %s18, 1
    %p83 = por %p81, %p82
    %p84 = scmp.ne.s32.totalorder %s75, %s76
    %p85 = scmp.eq.s32.totalorder %s18, 0
    %p86 = por %p84, %p85
    %p87 = scmp.ne.s32.totalorder %s75, %s76
    %p88 = scmp.eq.s32.totalorder %s19, 1
    %p89 = por %p87, %p88
    %p91 = scmp.ne.s32.totalorder %s76, %s90
    %p92 = scmp.eq.s32.totalorder %s19, 0
    %p93 = por %p91, %p92
    %s95 = sadd.s32 %s94, 1
    %p98 = scmp.eq.s32.totalorder %s13, 1
    %p99 = scmp.ne.s32.totalorder %s94, %s96
    %p100 = scmp.eq.s32.totalorder %s13, 0
    %p101 = por %p99, %p100
    %p102 = scmp.ne.s32.totalorder %s94, %s96
    %p103 = scmp.eq.s32.totalorder %s18, 1
    %p104 = por %p102, %p103
    %p105 = scmp.ne.s32.totalorder %s96, %s97
    %p106 = scmp.eq.s32.totalorder %s18, 0
    %p107 = por %p105, %p106
    %p108 = scmp.ne.s32.totalorder %s96, %s97
    %p109 = scmp.eq.s32.totalorder %s19, 1
    %p110 = por %p108, %p109
    %p112 = scmp.ne.s32.totalorder %s97, %s111
    %p113 = scmp.eq.s32.totalorder %s19, 0
    %p114 = por %p112, %p113
    %s116 = sadd.s32 %s115, 1
    %p119 = scmp.eq.s32.totalorder %s13, 1
    %p120 = scmp.ne.s32.totalorder %s115, %s117
    %p121 = scmp.eq.s32.totalorder %s13, 0
    %p122 = por %p120, %p121
    %p123 = scmp.ne.s32.totalorder %s115, %s117
    %p124 = scmp.eq.s32.totalorder %s18, 1
    %p125 = por %p123, %p124
    %p126 = scmp.ne.s32.totalorder %s117, %s118
    %p127 = scmp.eq.s32.totalorder %s18, 0
    %p128 = por %p126, %p127
    %p129 = scmp.ne.s32.totalorder %s117, %s118
    %p130 = scmp.eq.s32.totalorder %s19, 1
    %p131 = por %p129, %p130
    %p133 = scmp.ne.s32.totalorder %s118, %s132
    %p134 = scmp.eq.s32.totalorder %s19, 0
    %p135 = por %p133, %p134
    %s137 = sadd.s32 %s136, 1
    %p140 = scmp.eq.s32.totalorder %s13, 1
    %p141 = scmp.ne.s32.totalorder %s136, %s138
    %p142 = scmp.eq.s32.totalorder %s13, 0
    %p143 = por %p141, %p142
    %p144 = scmp.ne.s32.totalorder %s136, %s138
    %p145 = scmp.eq.s32.totalorder %s18, 1
    %p146 = por %p144, %p145
    %p147 = scmp.ne.s32.totalorder %s138, %s139
    %p148 = scmp.eq.s32.totalorder %s18, 0
    %p149 = por %p147, %p148
    %p150 = scmp.ne.s32.totalorder %s138, %s139
    %p151 = scmp.eq.s32.totalorder %s19, 1
    %p152 = por %p150, %p151
    %p154 = scmp.ne.s32.totalorder %s139, %s153
    %p155 = scmp.eq.s32.totalorder %s19, 0
    %p156 = por %p154, %p155
    %s158 = sadd.s32 %s157, 1
    %p161 = scmp.eq.s32.totalorder %s13, 1
    %p162 = scmp.ne.s32.totalorder %s157, %s159
    %p163 = scmp.eq.s32.totalorder %s13, 0
    %p164 = por %p162, %p163
    %p165 = scmp.ne.s32.totalorder %s157, %s159
    %p166 = scmp.eq.s32.totalorder %s18, 1
    %p167 = por %p165, %p166
    %p168 = scmp.ne.s32.totalorder %s159, %s160
    %p169 = scmp.eq.s32.totalorder %s18, 0
    %p170 = por %p168, %p169
    %p171 = scmp.ne.s32.totalorder %s159, %s160
    %p172 = scmp.eq.s32.totalorder %s19, 1
    %p173 = por %p171, %p172
    %p175 = scmp.ne.s32.totalorder %s160, %s174
    %p176 = scmp.eq.s32.totalorder %s19, 0
    %p177 = por %p175, %p176
    %s178 = ssub.s32 %s13, %s20
    %p179 = scmp.eq.s32.totalorder %s178, 0
    %s181 = sadd.s32 %s180, 1
    %s182 = scalar_select %p179, %s180, %s181
    %p185 = pneg %p179
    %p186 = scmp.eq.s32.totalorder %s13, 1
    %p187 = por %p185, %p186
    %p188 = scmp.ne.s32.totalorder %s180, %s183
    %p189 = scmp.eq.s32.totalorder %s13, 0
    %p190 = por %p188, %p189
    %p191 = scmp.ne.s32.totalorder %s180, %s183
    %p192 = scmp.eq.s32.totalorder %s18, 1
    %p193 = por %p191, %p192
    %p194 = scmp.ne.s32.totalorder %s183, %s184
    %p195 = scmp.eq.s32.totalorder %s18, 0
    %p196 = por %p194, %p195
    %p197 = scmp.ne.s32.totalorder %s183, %s184
    %p198 = scmp.eq.s32.totalorder %s19, 1
    %p199 = por %p197, %p198
    %p201 = scmp.ne.s32.totalorder %s184, %s200
    %p202 = scmp.eq.s32.totalorder %s19, 0
    %p203 = por %p201, %p202
    %p204 = scmp.le.s32.totalorder 1, %s13
    %p205 = scmp.lt.s32.totalorder %s13, 3
    %p206 = pnand %p204, %p205
    %p207 = pneg %p206
    // Predicated region
    $region9: #{merge_forward.5} parent=5 // pred_check
      _
    $region10: #{merge_forward.5} parent=5 // pred_check_branch
      %209 = sbr.rel (%p206) target = $region12
    $region11: #{merge_forward.5} parent=5 // pred_region
      %s210 = ssub.s32 %s13, 1
      // Predicated region
      $region13: #{merge_forward.5} parent=11 // pred_check
        %p211 = pneg %p86
      $region14: #{merge_forward.5} parent=11 // pred_check_branch
        %213 = sbr.rel (%p211) target = $region16
      $region15: #{merge_forward.5} parent=11 // pred_region
        _
      $region16: #{merge_forward.5} parent=11 // pred_fallthru
        _
      // Predicated region
      $region17: #{merge_forward.5} parent=11 // pred_check
        %p214 = pneg %p107
      $region18: #{merge_forward.5} parent=11 // pred_check_branch
        %216 = sbr.rel (%p214) target = $region20
      $region19: #{merge_forward.5} parent=11 // pred_region
        _
      $region20: #{merge_forward.5} parent=11 // pred_fallthru
        _
      // Predicated region
      $region21: #{merge_forward.5} parent=11 // pred_check
        %p217 = pneg %p128
      $region22: #{merge_forward.5} parent=11 // pred_check_branch
        %219 = sbr.rel (%p217) target = $region24
      $region23: #{merge_forward.5} parent=11 // pred_region
        _
      $region24: #{merge_forward.5} parent=11 // pred_fallthru
        _
      // Predicated region
      $region25: #{merge_forward.5} parent=11 // pred_check
        %p220 = pneg %p149
      $region26: #{merge_forward.5} parent=11 // pred_check_branch
        %222 = sbr.rel (%p220) target = $region28
      $region27: #{merge_forward.5} parent=11 // pred_region
        _
      $region28: #{merge_forward.5} parent=11 // pred_fallthru
        _
      // Predicated region
      $region29: #{merge_forward.5} parent=11 // pred_check
        %p223 = pneg %p170
      $region30: #{merge_forward.5} parent=11 // pred_check_branch
        %225 = sbr.rel (%p223) target = $region32
      $region31: #{merge_forward.5} parent=11 // pred_region
        _
      $region32: #{merge_forward.5} parent=11 // pred_fallthru
        _
    $region12: #{merge_forward.5} parent=5 // pred_fallthru
      _
    %p226 = scmp.lt.s32.totalorder %s13, 2
    // Predicated region
    $region33: #{merge_forward.5} parent=5 // pred_check
      %p227 = pneg %p226
    $region34: #{merge_forward.5} parent=5 // pred_check_branch
      %229 = sbr.rel (%p227) target = $region36
    $region35: #{merge_forward.5} parent=5 // pred_region
      // Predicated region
      $region37: #{merge_forward.5} parent=35 // pred_check
        %p230 = pneg %p33
      $region38: #{merge_forward.5} parent=35 // pred_check_branch
        %232 = sbr.rel (%p230) target = $region40
      $region39: #{merge_forward.5} parent=35 // pred_region
        %p233 = scmp.lt.s32.totalorder %s13, 1
        %s234 = scalar_select %p233, %s13, 1
        %s235 = smul.addr %s234, 16
        %s236 = smul.addr %s235, 4
        %s237 = scalar_lea.vmem %s0, %s236
      $region40: #{merge_forward.5} parent=35 // pred_fallthru
        _
      // Predicated region
      $region41: #{merge_forward.5} parent=35 // pred_check
        %p238 = pneg %p59
      $region42: #{merge_forward.5} parent=35 // pred_check_branch
        %240 = sbr.rel (%p238) target = $region44
      $region43: #{merge_forward.5} parent=35 // pred_region
        %p241 = scmp.lt.s32.totalorder %s13, 1
        %s242 = scalar_select %p241, %s13, 1
        %s243 = smul.addr %s242, 4
        %s244 = smul.addr %s243, 2
        %s245 = scalar_lea.vmem %s1, %s244
      $region44: #{merge_forward.5} parent=35 // pred_fallthru
        _
    $region36: #{merge_forward.5} parent=5 // pred_fallthru
      _
    %p246 = scmp.le.s32.totalorder 1, %s13
    %p247 = scmp.lt.s32.totalorder %s13, 3
    %p248 = pnand %p246, %p247
    %p249 = pneg %p248
    // Predicated region
    $region45: #{merge_forward.5} parent=5 // pred_check
      _
    $region46: #{merge_forward.5} parent=5 // pred_check_branch
      %251 = sbr.rel (%p248) target = $region48
    $region47: #{merge_forward.5} parent=5 // pred_region
      %s252 = ssub.s32 %s13, 1
      %p253 = scmp.lt.s32.totalorder %s18, 1
      %s254 = scalar_select %p253, %s18, 1
      %s255 = smul.addr %s254, 16
      %s256 = smul.addr %s255, 4
      %s257 = scalar_lea.vmem %s0, %s256
      %p258 = pneg %p39
      %p259 = pneg %p36
      %p260 = scmp.lt.s32.totalorder %s18, 1
      %s261 = scalar_select %p260, %s18, 1
      %s262 = smul.addr %s261, 4
      %s263 = smul.addr %s262, 2
      %s264 = scalar_lea.vmem %s1, %s263
      %p265 = pneg %p65
      %p266 = pneg %p62
      %p267 = pneg %p86
      %p268 = pneg %p83
      %p269 = pneg %p107
      %p270 = pneg %p104
      %p271 = pneg %p128
      %p272 = pneg %p125
      %p273 = pneg %p149
      %p274 = pneg %p146
      %p275 = pneg %p170
      %p276 = pneg %p167
      %p277 = pneg %p196
      %p278 = pneg %p193
      %p279 = scmp.lt.s32.totalorder %s18, 1
      %s280 = scalar_select %p279, %s18, 1
      %s281 = smul.addr %s280, 4
      %s282 = smul.addr %s281, 2
      %s283 = scalar_lea.vmem %s7, %s282
      %p284 = scmp.lt.s32.totalorder %s18, 1
      %s285 = scalar_select %p284, %s18, 1
      %s286 = smul.addr %s285, 16
      %s287 = smul.addr %s286, 4
      %s288 = scalar_lea.vmem %s0, %s287
      %p289 = scmp.lt.s32.totalorder %s18, 1
      %s290 = scalar_select %p289, %s18, 1
      %s291 = smul.addr %s290, 4
      %s292 = smul.addr %s291, 2
      %s293 = scalar_lea.vmem %s1, %s292
      %p294 = scmp.lt.s32.totalorder %s18, 1
      %s295 = scalar_select %p294, %s18, 1
      %s296 = smul.addr %s295, 4
      %s297 = smul.addr %s296, 2
      %s298 = scalar_lea.vmem %s7, %s297
      %v300 = vld [vmem:[%s288] sm:$0xff]
      %v301 = vld [vmem:[%s288 + $0x8] sm:$0xff]
      %v302 = vld [vmem:[%s288 + $0x10] sm:$0xff]
      %v303 = vld [vmem:[%s288 + $0x18] sm:$0xff]
      %v304 = vld [vmem:[%s288 + $0x20] sm:$0xff]
      %v305 = vld [vmem:[%s288 + $0x28] sm:$0xff]
      %v306 = vld [vmem:[%s288 + $0x30] sm:$0xff]
      %v307 = vld [vmem:[%s288 + $0x38] sm:$0xff]
      %316 = vst [vmem:[#allocation1] ss:$2 sm:$0xff] %v300
      %s317 = scalar_lea.vmem [#allocation1], 16
      %318 = vst [vmem:[%s317] ss:$2 sm:$0xff] %v301
      %v319 = vld.sshfl [vmem:[#allocation1] sm:$0xff pattern:$0x75316420]
      %v320 = vld.sshfl [vmem:[#allocation1 + $0x8] sm:$0xff pattern:$0x75316420]
      %v321 = vld.sshfl [vmem:[#allocation1 + $0x10] sm:$0xff pattern:$0x75316420]
      %v322 = vld.sshfl [vmem:[#allocation1 + $0x18] sm:$0xff pattern:$0x75316420]
      %s323 = scalar_lea.vmem [#allocation1], 32
      %324 = vst [vmem:[%s323] ss:$2 sm:$0xff] %v302
      %s325 = scalar_lea.vmem [#allocation1], 48
      %326 = vst [vmem:[%s325] ss:$2 sm:$0xff] %v303
      %v327 = vld.sshfl [vmem:[#allocation1 + $0x20] sm:$0xff pattern:$0x75316420]
      %v328 = vld.sshfl [vmem:[#allocation1 + $0x28] sm:$0xff pattern:$0x75316420]
      %v329 = vld.sshfl [vmem:[#allocation1 + $0x30] sm:$0xff pattern:$0x75316420]
      %v330 = vld.sshfl [vmem:[#allocation1 + $0x38] sm:$0xff pattern:$0x75316420]
      %331 = vst [vmem:[#allocation1] ss:$2 sm:$0xff] %v304
      %332 = vst [vmem:[%s317] ss:$2 sm:$0xff] %v305
      %v333 = vld.sshfl [vmem:[#allocation1] sm:$0xff pattern:$0x75316420]
      %v334 = vld.sshfl [vmem:[#allocation1 + $0x8] sm:$0xff pattern:$0x75316420]
      %v335 = vld.sshfl [vmem:[#allocation1 + $0x10] sm:$0xff pattern:$0x75316420]
      %v336 = vld.sshfl [vmem:[#allocation1 + $0x18] sm:$0xff pattern:$0x75316420]
      %337 = vst [vmem:[%s323] ss:$2 sm:$0xff] %v306
      %338 = vst [vmem:[%s325] ss:$2 sm:$0xff] %v307
      %v339 = vld.sshfl [vmem:[#allocation1 + $0x20] sm:$0xff pattern:$0x75316420]
      %v340 = vld.sshfl [vmem:[#allocation1 + $0x28] sm:$0xff pattern:$0x75316420]
      %v341 = vld.sshfl [vmem:[#allocation1 + $0x30] sm:$0xff pattern:$0x75316420]
      %v342 = vld.sshfl [vmem:[#allocation1 + $0x38] sm:$0xff pattern:$0x75316420]
      %v359 = vpack.c.bf16 %v320, %v319
      %v360 = vpack.c.bf16 %v322, %v321
      %v361 = vpack.c.bf16 %v328, %v327
      %v362 = vpack.c.bf16 %v330, %v329
      %v363 = vpack.c.bf16 %v334, %v333
      %v364 = vpack.c.bf16 %v336, %v335
      %v365 = vpack.c.bf16 %v340, %v339
      %v366 = vpack.c.bf16 %v342, %v341
      %v375 = vrot.slane %v359, 2
      %v376 = vrot.slane %v360, 4
      %v377 = vrot.slane %v360, 6
      %v378 = vrot.slane %v361, 2
      %v379 = vrot.slane %v362, 4
      %v380 = vrot.slane %v362, 6
      %v381 = vrot.slane %v363, 2
      %v382 = vrot.slane %v364, 4
      %v383 = vrot.slane %v364, 6
      %v384 = vrot.slane %v365, 2
      %v385 = vrot.slane %v366, 4
      %v386 = vrot.slane %v366, 6
      %vm387 = vcmask 1041408
      %v390 = vsel %vm387, %v359, %v375
      %vm391 = vcmask 1045508
      %v394 = vsel %vm391, %v376, %v377
      %vm395 = vcmask 1043456
      %v396 = vsel %vm395, %v390, %v394
      %v399 = vsel %vm387, %v361, %v378
      %v402 = vsel %vm391, %v379, %v380
      %v403 = vsel %vm395, %v399, %v402
      %v406 = vsel %vm387, %v363, %v381
      %v409 = vsel %vm391, %v382, %v383
      %v410 = vsel %vm395, %v406, %v409
      %v413 = vsel %vm387, %v365, %v384
      %v416 = vsel %vm391, %v385, %v386
      %v417 = vsel %vm395, %v413, %v416
      %v418 = vld [vmem:[%s2] sm:$0xf]
      %v419 = vld [vmem:[%s2 + $0x4] sm:$0xf]
      %v420 = vld [vmem:[%s2 + $0x8] sm:$0xf]
      %v421 = vld [vmem:[%s2 + $0xc] sm:$0xf]
      %v422 = vld [vmem:[%s2 + $0x10] sm:$0xf]
      %v423 = vld [vmem:[%s2 + $0x14] sm:$0xf]
      %v424 = vld [vmem:[%s2 + $0x18] sm:$0xf]
      %v425 = vld [vmem:[%s2 + $0x1c] sm:$0xf]
      %v426 = vld [vmem:[%s2 + $0x20] sm:$0xf]
      %v427 = vld [vmem:[%s2 + $0x24] sm:$0xf]
      %v428 = vld [vmem:[%s2 + $0x28] sm:$0xf]
      %v429 = vld [vmem:[%s2 + $0x2c] sm:$0xf]
      %v430 = vld [vmem:[%s2 + $0x30] sm:$0xf]
      %v431 = vld [vmem:[%s2 + $0x34] sm:$0xf]
      %v432 = vld [vmem:[%s2 + $0x38] sm:$0xf]
      %v433 = vld [vmem:[%s2 + $0x3c] sm:$0xf]
      %v434 = vld [vmem:[%s2 + $0x40] sm:$0xf]
      %v435 = vld [vmem:[%s2 + $0x44] sm:$0xf]
      %v436 = vld [vmem:[%s2 + $0x48] sm:$0xf]
      %v437 = vld [vmem:[%s2 + $0x4c] sm:$0xf]
      %v438 = vld [vmem:[%s2 + $0x50] sm:$0xf]
      %v439 = vld [vmem:[%s2 + $0x54] sm:$0xf]
      %v440 = vld [vmem:[%s2 + $0x58] sm:$0xf]
      %v441 = vld [vmem:[%s2 + $0x5c] sm:$0xf]
      %v442 = vld [vmem:[%s2 + $0x60] sm:$0xf]
      %v443 = vld [vmem:[%s2 + $0x64] sm:$0xf]
      %v444 = vld [vmem:[%s2 + $0x68] sm:$0xf]
      %v445 = vld [vmem:[%s2 + $0x6c] sm:$0xf]
      %v446 = vld [vmem:[%s2 + $0x70] sm:$0xf]
      %v447 = vld [vmem:[%s2 + $0x74] sm:$0xf]
      %v448 = vld [vmem:[%s2 + $0x78] sm:$0xf]
      %v449 = vld [vmem:[%s2 + $0x7c] sm:$0xf]
      %v450 = vld [vmem:[%s2 + $0x80] sm:$0xf]
      %v451 = vld [vmem:[%s2 + $0x84] sm:$0xf]
      %v452 = vld [vmem:[%s2 + $0x88] sm:$0xf]
      %v453 = vld [vmem:[%s2 + $0x8c] sm:$0xf]
      %v454 = vld [vmem:[%s2 + $0x90] sm:$0xf]
      %v455 = vld [vmem:[%s2 + $0x94] sm:$0xf]
      %v456 = vld [vmem:[%s2 + $0x98] sm:$0xf]
      %v457 = vld [vmem:[%s2 + $0x9c] sm:$0xf]
      %v458 = vld [vmem:[%s2 + $0xa0] sm:$0xf]
      %v459 = vld [vmem:[%s2 + $0xa4] sm:$0xf]
      %v460 = vld [vmem:[%s2 + $0xa8] sm:$0xf]
      %v461 = vld [vmem:[%s2 + $0xac] sm:$0xf]
      %v462 = vld [vmem:[%s2 + $0xb0] sm:$0xf]
      %v463 = vld [vmem:[%s2 + $0xb4] sm:$0xf]
      %v464 = vld [vmem:[%s2 + $0xb8] sm:$0xf]
      %v465 = vld [vmem:[%s2 + $0xbc] sm:$0xf]
      %v466 = vld [vmem:[%s2 + $0xc0] sm:$0xf]
      %v467 = vld [vmem:[%s2 + $0xc4] sm:$0xf]
      %v468 = vld [vmem:[%s2 + $0xc8] sm:$0xf]
      %v469 = vld [vmem:[%s2 + $0xcc] sm:$0xf]
      %v470 = vld [vmem:[%s2 + $0xd0] sm:$0xf]
      %v471 = vld [vmem:[%s2 + $0xd4] sm:$0xf]
      %v472 = vld [vmem:[%s2 + $0xd8] sm:$0xf]
      %v473 = vld [vmem:[%s2 + $0xdc] sm:$0xf]
      %v474 = vld [vmem:[%s2 + $0xe0] sm:$0xf]
      %v475 = vld [vmem:[%s2 + $0xe4] sm:$0xf]
      %v476 = vld [vmem:[%s2 + $0xe8] sm:$0xf]
      %v477 = vld [vmem:[%s2 + $0xec] sm:$0xf]
      %v478 = vld [vmem:[%s2 + $0xf0] sm:$0xf]
      %v479 = vld [vmem:[%s2 + $0xf4] sm:$0xf]
      %v480 = vld [vmem:[%s2 + $0xf8] sm:$0xf]
      %v481 = vld [vmem:[%s2 + $0xfc] sm:$0xf]
      %v482 = vld [vmem:[%s293] sm:$0x3]
      %v483 = vld [vmem:[%s293 + $0x2] sm:$0x3]
      %v484 = vld [vmem:[%s293 + $0x4] sm:$0x3]
      %v485 = vld [vmem:[%s293 + $0x6] sm:$0x3]
      %v486 = vunpack.c.l.bf16 %v482
      %v487 = vunpack.c.l.bf16 %v483
      %v488 = vunpack.c.l.bf16 %v484
      %v489 = vunpack.c.l.bf16 %v485
      %490 = vst [vmem:[#allocation1] ss:$4 sm:$0xff] %v396
      %s491 = scalar_lea.vmem [#allocation1], 1
      %492 = vst [vmem:[%s491] ss:$4 sm:$0xff] %v403
      %s493 = scalar_lea.vmem [#allocation1], 2
      %494 = vst [vmem:[%s493] ss:$4 sm:$0xff] %v410
      %s495 = scalar_lea.vmem [#allocation1], 3
      %496 = vst [vmem:[%s495] ss:$4 sm:$0xff] %v417
      %v497 = vld.sshfl [vmem:[#allocation1] sm:$0xff pattern:$0x73625140]
      %v498 = vld.sshfl [vmem:[#allocation1 + $0x8] sm:$0xff pattern:$0x73625140]
      %v499 = vld.sshfl [vmem:[#allocation1 + $0x10] sm:$0xff pattern:$0x73625140]
      %v500 = vld.sshfl [vmem:[#allocation1 + $0x18] sm:$0xff pattern:$0x73625140]
      %v569 = vunpack.c.l.b16 %v418
      %v570 = vunpack.c.l.b16 %v419
      %v571 = vunpack.c.l.b16 %v420
      %v572 = vunpack.c.l.b16 %v421
      %v573 = vunpack.c.l.b16 %v422
      %v574 = vunpack.c.l.b16 %v423
      %v575 = vunpack.c.l.b16 %v424
      %v576 = vunpack.c.l.b16 %v425
      %v577 = vunpack.c.l.b16 %v426
      %v578 = vunpack.c.l.b16 %v427
      %v579 = vunpack.c.l.b16 %v428
      %v580 = vunpack.c.l.b16 %v429
      %v581 = vunpack.c.l.b16 %v430
      %v582 = vunpack.c.l.b16 %v431
      %v583 = vunpack.c.l.b16 %v432
      %v584 = vunpack.c.l.b16 %v433
      %v585 = vunpack.c.l.b16 %v434
      %v586 = vunpack.c.l.b16 %v435
      %v587 = vunpack.c.l.b16 %v436
      %v588 = vunpack.c.l.b16 %v437
      %v589 = vunpack.c.l.b16 %v438
      %v590 = vunpack.c.l.b16 %v439
      %v591 = vunpack.c.l.b16 %v440
      %v592 = vunpack.c.l.b16 %v441
      %v593 = vunpack.c.l.b16 %v442
      %v594 = vunpack.c.l.b16 %v443
      %v595 = vunpack.c.l.b16 %v444
      %v596 = vunpack.c.l.b16 %v445
      %v597 = vunpack.c.l.b16 %v446
      %v598 = vunpack.c.l.b16 %v447
      %v599 = vunpack.c.l.b16 %v448
      %v600 = vunpack.c.l.b16 %v449
      %v601 = vunpack.c.l.b16 %v450
      %v602 = vunpack.c.l.b16 %v451
      %v603 = vunpack.c.l.b16 %v452
      %v604 = vunpack.c.l.b16 %v453
      %v605 = vunpack.c.l.b16 %v454
      %v606 = vunpack.c.l.b16 %v455
      %v607 = vunpack.c.l.b16 %v456
      %v608 = vunpack.c.l.b16 %v457
      %v609 = vunpack.c.l.b16 %v458
      %v610 = vunpack.c.l.b16 %v459
      %v611 = vunpack.c.l.b16 %v460
      %v612 = vunpack.c.l.b16 %v461
      %v613 = vunpack.c.l.b16 %v462
      %v614 = vunpack.c.l.b16 %v463
      %v615 = vunpack.c.l.b16 %v464
      %v616 = vunpack.c.l.b16 %v465
      %v617 = vunpack.c.l.b16 %v466
      %v618 = vunpack.c.l.b16 %v467
      %v619 = vunpack.c.l.b16 %v468
      %v620 = vunpack.c.l.b16 %v469
      %v621 = vunpack.c.l.b16 %v470
      %v622 = vunpack.c.l.b16 %v471
      %v623 = vunpack.c.l.b16 %v472
      %v624 = vunpack.c.l.b16 %v473
      %v625 = vunpack.c.l.b16 %v474
      %v626 = vunpack.c.l.b16 %v475
      %v627 = vunpack.c.l.b16 %v476
      %v628 = vunpack.c.l.b16 %v477
      %v629 = vunpack.c.l.b16 %v478
      %v630 = vunpack.c.l.b16 %v479
      %v631 = vunpack.c.l.b16 %v480
      %v632 = vunpack.c.l.b16 %v481
      %v633 = vpack.c.b16 %v570, %v569
      %v634 = vpack.c.b16 %v572, %v571
      %v635 = vpack.c.b16 %v574, %v573
      %v636 = vpack.c.b16 %v576, %v575
      %v637 = vpack.c.b16 %v578, %v577
      %v638 = vpack.c.b16 %v580, %v579
      %v639 = vpack.c.b16 %v582, %v581
      %v640 = vpack.c.b16 %v584, %v583
      %v641 = vpack.c.b16 %v586, %v585
      %v642 = vpack.c.b16 %v588, %v587
      %v643 = vpack.c.b16 %v590, %v589
      %v644 = vpack.c.b16 %v592, %v591
      %v645 = vpack.c.b16 %v594, %v593
      %v646 = vpack.c.b16 %v596, %v595
      %v647 = vpack.c.b16 %v598, %v597
      %v648 = vpack.c.b16 %v600, %v599
      %v649 = vpack.c.b16 %v602, %v601
      %v650 = vpack.c.b16 %v604, %v603
      %v651 = vpack.c.b16 %v606, %v605
      %v652 = vpack.c.b16 %v608, %v607
      %v653 = vpack.c.b16 %v610, %v609
      %v654 = vpack.c.b16 %v612, %v611
      %v655 = vpack.c.b16 %v614, %v613
      %v656 = vpack.c.b16 %v616, %v615
      %v657 = vpack.c.b16 %v618, %v617
      %v658 = vpack.c.b16 %v620, %v619
      %v659 = vpack.c.b16 %v622, %v621
      %v660 = vpack.c.b16 %v624, %v623
      %v661 = vpack.c.b16 %v626, %v625
      %v662 = vpack.c.b16 %v628, %v627
      %v663 = vpack.c.b16 %v630, %v629
      %v664 = vpack.c.b16 %v632, %v631
      %701 = vst [vmem:[#allocation1] ss:$2 sm:$0xff] %v486
      %s702 = scalar_lea.vmem [#allocation1], 1
      %703 = vst [vmem:[%s702] ss:$2 sm:$0xff] %v487
      %s704 = scalar_lea.vmem [#allocation1], 16
      %705 = vst [vmem:[%s704] ss:$2 sm:$0xff] %v488
      %s706 = scalar_lea.vmem [#allocation1], 17
      %707 = vst [vmem:[%s706] ss:$2 sm:$0xff] %v489
      %v708 = vld.sshfl [vmem:[#allocation1] sm:$0xff pattern:$0x75316420]
      %v709 = vld.sshfl [vmem:[#allocation1 + $0x10] sm:$0xff pattern:$0x75316420]
      %712 = vmatpush.bf16.msra.mxu0 %v640
      %713 = vmatpush.bf16.msra.mxu0 %v639
      %714 = vmatpush.bf16.msra.mxu0 %v638
      %715 = vmatpush.bf16.msra.mxu0 %v637
      %716 = vmatpush.bf16.msra.mxu0 %v636
      %717 = vmatpush.bf16.msra.mxu0 %v635
      %718 = vmatpush.bf16.msra.mxu0 %v634
      %719 = vmatpush.bf16.msra.mxu0 %v633
      %720 = vmatmul.bf16.gmra.mxu0 %v497
      %v721 = vpop.f32.mrf.mxu0
      %v722 = vadd.f32 %v708, %v721
      %v723 = vpop.f32.mrf.mxu0
      %v724 = vadd.f32 %v709, %v723
      %725 = vdwg.mxu0
      %726 = vmatpush.bf16.msra.mxu0 %v648
      %727 = vmatpush.bf16.msra.mxu0 %v647
      %728 = vmatpush.bf16.msra.mxu0 %v646
      %729 = vmatpush.bf16.msra.mxu0 %v645
      %730 = vmatpush.bf16.msra.mxu0 %v644
      %731 = vmatpush.bf16.msra.mxu0 %v643
      %732 = vmatpush.bf16.msra.mxu0 %v642
      %733 = vmatpush.bf16.msra.mxu0 %v641
      %734 = vmatmul.bf16.gmra.mxu0 %v498
      %v735 = vpop.f32.mrf.mxu0
      %v736 = vadd.f32 %v722, %v735
      %v737 = vpop.f32.mrf.mxu0
      %v738 = vadd.f32 %v724, %v737
      %739 = vdwg.mxu0
      %740 = vmatpush.bf16.msra.mxu0 %v656
      %741 = vmatpush.bf16.msra.mxu0 %v655
      %742 = vmatpush.bf16.msra.mxu0 %v654
      %743 = vmatpush.bf16.msra.mxu0 %v653
      %744 = vmatpush.bf16.msra.mxu0 %v652
      %745 = vmatpush.bf16.msra.mxu0 %v651
      %746 = vmatpush.bf16.msra.mxu0 %v650
      %747 = vmatpush.bf16.msra.mxu0 %v649
      %748 = vmatmul.bf16.gmra.mxu0 %v499
      %v749 = vpop.f32.mrf.mxu0
      %v750 = vadd.f32 %v736, %v749
      %v751 = vpop.f32.mrf.mxu0
      %v752 = vadd.f32 %v738, %v751
      %753 = vdwg.mxu0
      %754 = vmatpush.bf16.msra.mxu0 %v664
      %755 = vmatpush.bf16.msra.mxu0 %v663
      %756 = vmatpush.bf16.msra.mxu0 %v662
      %757 = vmatpush.bf16.msra.mxu0 %v661
      %758 = vmatpush.bf16.msra.mxu0 %v660
      %759 = vmatpush.bf16.msra.mxu0 %v659
      %760 = vmatpush.bf16.msra.mxu0 %v658
      %761 = vmatpush.bf16.msra.mxu0 %v657
      %762 = vmatmul.bf16.gmra.mxu0 %v500
      %v763 = vpop.f32.mrf.mxu0
      %v764 = vadd.f32 %v750, %v763
      %v765 = vpop.f32.mrf.mxu0
      %v766 = vadd.f32 %v752, %v765
      %767 = vdwg.mxu0
      %v768 = vld [vmem:[%s3] sm:$0x1]
      %v770 = vperm.slane %v768, 0
      %v772 = vadd.f32 %v764, %v770
      %v773 = vadd.f32 %v766, %v770
      %v774 = vmax.f32 %v772, 0.0
      %v775 = vmax.f32 %v773, 0.0
      %v776 = vld [vmem:[%s4] sm:$0xf]
      %v777 = vld [vmem:[%s4 + $0x4] sm:$0xf]
      %v778 = vld [vmem:[%s4 + $0x8] sm:$0xf]
      %v779 = vld [vmem:[%s4 + $0xc] sm:$0xf]
      %v780 = vld [vmem:[%s4 + $0x10] sm:$0xf]
      %v781 = vld [vmem:[%s4 + $0x14] sm:$0xf]
      %v782 = vld [vmem:[%s4 + $0x18] sm:$0xf]
      %v783 = vld [vmem:[%s4 + $0x1c] sm:$0xf]
      %v784 = vld [vmem:[%s4 + $0x20] sm:$0xf]
      %v785 = vld [vmem:[%s4 + $0x24] sm:$0xf]
      %v786 = vld [vmem:[%s4 + $0x28] sm:$0xf]
      %v787 = vld [vmem:[%s4 + $0x2c] sm:$0xf]
      %v788 = vld [vmem:[%s4 + $0x30] sm:$0xf]
      %v789 = vld [vmem:[%s4 + $0x34] sm:$0xf]
      %v790 = vld [vmem:[%s4 + $0x38] sm:$0xf]
      %v791 = vld [vmem:[%s4 + $0x3c] sm:$0xf]
      %v792 = vld [vmem:[%s4 + $0x40] sm:$0xf]
      %v793 = vld [vmem:[%s4 + $0x44] sm:$0xf]
      %v794 = vld [vmem:[%s4 + $0x48] sm:$0xf]
      %v795 = vld [vmem:[%s4 + $0x4c] sm:$0xf]
      %v796 = vld [vmem:[%s4 + $0x50] sm:$0xf]
      %v797 = vld [vmem:[%s4 + $0x54] sm:$0xf]
      %v798 = vld [vmem:[%s4 + $0x58] sm:$0xf]
      %v799 = vld [vmem:[%s4 + $0x5c] sm:$0xf]
      %v800 = vld [vmem:[%s4 + $0x60] sm:$0xf]
      %v801 = vld [vmem:[%s4 + $0x64] sm:$0xf]
      %v802 = vld [vmem:[%s4 + $0x68] sm:$0xf]
      %v803 = vld [vmem:[%s4 + $0x6c] sm:$0xf]
      %v804 = vld [vmem:[%s4 + $0x70] sm:$0xf]
      %v805 = vld [vmem:[%s4 + $0x74] sm:$0xf]
      %v806 = vld [vmem:[%s4 + $0x78] sm:$0xf]
      %v807 = vld [vmem:[%s4 + $0x7c] sm:$0xf]
      %v808 = vld [vmem:[%s4 + $0x80] sm:$0xf]
      %v809 = vld [vmem:[%s4 + $0x84] sm:$0xf]
      %v810 = vld [vmem:[%s4 + $0x88] sm:$0xf]
      %v811 = vld [vmem:[%s4 + $0x8c] sm:$0xf]
      %v812 = vld [vmem:[%s4 + $0x90] sm:$0xf]
      %v813 = vld [vmem:[%s4 + $0x94] sm:$0xf]
      %v814 = vld [vmem:[%s4 + $0x98] sm:$0xf]
      %v815 = vld [vmem:[%s4 + $0x9c] sm:$0xf]
      %v816 = vld [vmem:[%s4 + $0xa0] sm:$0xf]
      %v817 = vld [vmem:[%s4 + $0xa4] sm:$0xf]
      %v818 = vld [vmem:[%s4 + $0xa8] sm:$0xf]
      %v819 = vld [vmem:[%s4 + $0xac] sm:$0xf]
      %v820 = vld [vmem:[%s4 + $0xb0] sm:$0xf]
      %v821 = vld [vmem:[%s4 + $0xb4] sm:$0xf]
      %v822 = vld [vmem:[%s4 + $0xb8] sm:$0xf]
      %v823 = vld [vmem:[%s4 + $0xbc] sm:$0xf]
      %v824 = vld [vmem:[%s4 + $0xc0] sm:$0xf]
      %v825 = vld [vmem:[%s4 + $0xc4] sm:$0xf]
      %v826 = vld [vmem:[%s4 + $0xc8] sm:$0xf]
      %v827 = vld [vmem:[%s4 + $0xcc] sm:$0xf]
      %v828 = vld [vmem:[%s4 + $0xd0] sm:$0xf]
      %v829 = vld [vmem:[%s4 + $0xd4] sm:$0xf]
      %v830 = vld [vmem:[%s4 + $0xd8] sm:$0xf]
      %v831 = vld [vmem:[%s4 + $0xdc] sm:$0xf]
      %v832 = vld [vmem:[%s4 + $0xe0] sm:$0xf]
      %v833 = vld [vmem:[%s4 + $0xe4] sm:$0xf]
      %v834 = vld [vmem:[%s4 + $0xe8] sm:$0xf]
      %v835 = vld [vmem:[%s4 + $0xec] sm:$0xf]
      %v836 = vld [vmem:[%s4 + $0xf0] sm:$0xf]
      %v837 = vld [vmem:[%s4 + $0xf4] sm:$0xf]
      %v838 = vld [vmem:[%s4 + $0xf8] sm:$0xf]
      %v839 = vld [vmem:[%s4 + $0xfc] sm:$0xf]
      %v840 = vld [vmem:[%s4 + $0x100] sm:$0xf]
      %v841 = vld [vmem:[%s4 + $0x104] sm:$0xf]
      %v842 = vld [vmem:[%s4 + $0x108] sm:$0xf]
      %v843 = vld [vmem:[%s4 + $0x10c] sm:$0xf]
      %v844 = vld [vmem:[%s4 + $0x110] sm:$0xf]
      %v845 = vld [vmem:[%s4 + $0x114] sm:$0xf]
      %v846 = vld [vmem:[%s4 + $0x118] sm:$0xf]
      %v847 = vld [vmem:[%s4 + $0x11c] sm:$0xf]
      %v848 = vld [vmem:[%s4 + $0x120] sm:$0xf]
      %v849 = vld [vmem:[%s4 + $0x124] sm:$0xf]
      %v850 = vld [vmem:[%s4 + $0x128] sm:$0xf]
      %v851 = vld [vmem:[%s4 + $0x12c] sm:$0xf]
      %v852 = vld [vmem:[%s4 + $0x130] sm:$0xf]
      %v853 = vld [vmem:[%s4 + $0x134] sm:$0xf]
      %v854 = vld [vmem:[%s4 + $0x138] sm:$0xf]
      %v855 = vld [vmem:[%s4 + $0x13c] sm:$0xf]
      %v856 = vld [vmem:[%s4 + $0x140] sm:$0xf]
      %v857 = vld [vmem:[%s4 + $0x144] sm:$0xf]
      %v858 = vld [vmem:[%s4 + $0x148] sm:$0xf]
      %v859 = vld [vmem:[%s4 + $0x14c] sm:$0xf]
      %v860 = vld [vmem:[%s4 + $0x150] sm:$0xf]
      %v861 = vld [vmem:[%s4 + $0x154] sm:$0xf]
      %v862 = vld [vmem:[%s4 + $0x158] sm:$0xf]
      %v863 = vld [vmem:[%s4 + $0x15c] sm:$0xf]
      %v864 = vld [vmem:[%s4 + $0x160] sm:$0xf]
      %v865 = vld [vmem:[%s4 + $0x164] sm:$0xf]
      %v866 = vld [vmem:[%s4 + $0x168] sm:$0xf]
      %v867 = vld [vmem:[%s4 + $0x16c] sm:$0xf]
      %v868 = vld [vmem:[%s4 + $0x170] sm:$0xf]
      %v869 = vld [vmem:[%s4 + $0x174] sm:$0xf]
      %v870 = vld [vmem:[%s4 + $0x178] sm:$0xf]
      %v871 = vld [vmem:[%s4 + $0x17c] sm:$0xf]
      %v872 = vld [vmem:[%s4 + $0x180] sm:$0xf]
      %v873 = vld [vmem:[%s4 + $0x184] sm:$0xf]
      %v874 = vld [vmem:[%s4 + $0x188] sm:$0xf]
      %v875 = vld [vmem:[%s4 + $0x18c] sm:$0xf]
      %v876 = vld [vmem:[%s4 + $0x190] sm:$0xf]
      %v877 = vld [vmem:[%s4 + $0x194] sm:$0xf]
      %v878 = vld [vmem:[%s4 + $0x198] sm:$0xf]
      %v879 = vld [vmem:[%s4 + $0x19c] sm:$0xf]
      %v880 = vld [vmem:[%s4 + $0x1a0] sm:$0xf]
      %v881 = vld [vmem:[%s4 + $0x1a4] sm:$0xf]
      %v882 = vld [vmem:[%s4 + $0x1a8] sm:$0xf]
      %v883 = vld [vmem:[%s4 + $0x1ac] sm:$0xf]
      %v884 = vld [vmem:[%s4 + $0x1b0] sm:$0xf]
      %v885 = vld [vmem:[%s4 + $0x1b4] sm:$0xf]
      %v886 = vld [vmem:[%s4 + $0x1b8] sm:$0xf]
      %v887 = vld [vmem:[%s4 + $0x1bc] sm:$0xf]
      %v888 = vld [vmem:[%s4 + $0x1c0] sm:$0xf]
      %v889 = vld [vmem:[%s4 + $0x1c4] sm:$0xf]
      %v890 = vld [vmem:[%s4 + $0x1c8] sm:$0xf]
      %v891 = vld [vmem:[%s4 + $0x1cc] sm:$0xf]
      %v892 = vld [vmem:[%s4 + $0x1d0] sm:$0xf]
      %v893 = vld [vmem:[%s4 + $0x1d4] sm:$0xf]
      %v894 = vld [vmem:[%s4 + $0x1d8] sm:$0xf]
      %v895 = vld [vmem:[%s4 + $0x1dc] sm:$0xf]
      %v896 = vld [vmem:[%s4 + $0x1e0] sm:$0xf]
      %v897 = vld [vmem:[%s4 + $0x1e4] sm:$0xf]
      %v898 = vld [vmem:[%s4 + $0x1e8] sm:$0xf]
      %v899 = vld [vmem:[%s4 + $0x1ec] sm:$0xf]
      %v900 = vld [vmem:[%s4 + $0x1f0] sm:$0xf]
      %v901 = vld [vmem:[%s4 + $0x1f4] sm:$0xf]
      %v902 = vld [vmem:[%s4 + $0x1f8] sm:$0xf]
      %v903 = vld [vmem:[%s4 + $0x1fc] sm:$0xf]
      %v904 = vld [vmem:[%s4 + $0x200] sm:$0xf]
      %v905 = vld [vmem:[%s4 + $0x204] sm:$0xf]
      %v906 = vld [vmem:[%s4 + $0x208] sm:$0xf]
      %v907 = vld [vmem:[%s4 + $0x20c] sm:$0xf]
      %v908 = vld [vmem:[%s4 + $0x210] sm:$0xf]
      %v909 = vld [vmem:[%s4 + $0x214] sm:$0xf]
      %v910 = vld [vmem:[%s4 + $0x218] sm:$0xf]
      %v911 = vld [vmem:[%s4 + $0x21c] sm:$0xf]
      %v912 = vld [vmem:[%s4 + $0x220] sm:$0xf]
      %v913 = vld [vmem:[%s4 + $0x224] sm:$0xf]
      %v914 = vld [vmem:[%s4 + $0x228] sm:$0xf]
      %v915 = vld [vmem:[%s4 + $0x22c] sm:$0xf]
      %v916 = vld [vmem:[%s4 + $0x230] sm:$0xf]
      %v917 = vld [vmem:[%s4 + $0x234] sm:$0xf]
      %v918 = vld [vmem:[%s4 + $0x238] sm:$0xf]
      %v919 = vld [vmem:[%s4 + $0x23c] sm:$0xf]
      %v920 = vld [vmem:[%s5] sm:$0x1]
      %v923 = vrot.slane %v774, 4
      %v924 = vrot.slane %v775, 4
      %v927 = vpack.c.bf16 %v774, %v774
      %v928 = vpack.c.bf16 %v923, %v923
      %v929 = vpack.c.bf16 %v775, %v775
      %v930 = vpack.c.bf16 %v924, %v924
      %v932 = vshrl.u32 0, 16
      %v934 = vrot.slane %v932, 7
      %v935 = vshll.u32 0, 16
      %v937 = vor.u32 %v934, %v935
      %v939 = vshrl.u32 %v927, 16
      %v941 = vrot.slane %v939, 7
      %v942 = vshll.u32 %v927, 16
      %v944 = vor.u32 %v941, %v942
      %v946 = vshrl.u32 %v928, 16
      %v948 = vrot.slane %v946, 7
      %v949 = vshll.u32 %v928, 16
      %v951 = vor.u32 %v948, %v949
      %v953 = vshrl.u32 %v929, 16
      %v955 = vrot.slane %v953, 7
      %v956 = vshll.u32 %v929, 16
      %v958 = vor.u32 %v955, %v956
      %v960 = vshrl.u32 %v930, 16
      %v962 = vrot.slane %v960, 7
      %v963 = vshll.u32 %v930, 16
      %v965 = vor.u32 %v962, %v963
      %vm971 = vcmask 1040384
      %vm972 = vsmask.f32 256
      %vm973 = vmand %vm971, %vm972
      %v974 = vsel %vm973, 0, %v937
      %v975 = vsel %vm973, 0, %v944
      %v976 = vsel %vm973, 0, %v951
      %v977 = vsel %vm973, 0, %v958
      %v978 = vsel %vm973, 0, %v965
      %vm979 = vcmask 1042432
      %vm980 = vsmask.f32 2304
      %vm981 = vmand %vm979, %vm980
      %v982 = vsel %vm981, %v974, 0
      %v983 = vsel %vm981, %v975, 0
      %v984 = vsel %vm981, %v976, 0
      %v985 = vsel %vm981, %v977, 0
      %v986 = vsel %vm981, %v978, 0
      %v988 = vshrl.u32 %v982, 16
      %v990 = vshll.u32 %v982, 16
      %v992 = vrot.slane %v990, 1
      %v993 = vor.u32 %v988, %v992
      %v995 = vshrl.u32 %v983, 16
      %v997 = vshll.u32 %v983, 16
      %v999 = vrot.slane %v997, 1
      %v1000 = vor.u32 %v995, %v999
      %v1002 = vshrl.u32 %v984, 16
      %v1004 = vshll.u32 %v984, 16
      %v1006 = vrot.slane %v1004, 1
      %v1007 = vor.u32 %v1002, %v1006
      %v1009 = vshrl.u32 %v985, 16
      %v1011 = vshll.u32 %v985, 16
      %v1013 = vrot.slane %v1011, 1
      %v1014 = vor.u32 %v1009, %v1013
      %v1019 = vrot.slane %v982, 1
      %v1020 = vrot.slane %v983, 1
      %v1021 = vrot.slane %v984, 1
      %v1022 = vrot.slane %v985, 1
      %v1024 = vshrl.u32 %v986, 16
      %v1026 = vshll.u32 %v986, 16
      %v1028 = vrot.slane %v1026, 1
      %v1029 = vor.u32 %v1024, %v1028
      %v1031 = vrot.slane %v986, 1
      %v1032 = vrot.slane %v993, 6
      %v1033 = vrot.slane %v1019, 4
      %v1034 = vrot.slane %v983, 2
      %v1035 = vrot.slane %v1020, 6
      %v1036 = vrot.slane %v984, 4
      %v1037 = vrot.slane %v1007, 2
      %v1038 = vrot.slane %v1000, 6
      %v1039 = vrot.slane %v1020, 4
      %v1040 = vrot.slane %v984, 2
      %v1041 = vrot.slane %v1021, 6
      %v1042 = vrot.slane %v985, 4
      %v1043 = vrot.slane %v1014, 2
      %v1044 = vrot.slane %v1007, 6
      %v1045 = vrot.slane %v1021, 4
      %v1046 = vrot.slane %v985, 2
      %v1047 = vrot.slane %v1022, 6
      %v1048 = vrot.slane %v986, 4
      %v1049 = vrot.slane %v1029, 2
      %v1050 = vrot.slane %v1014, 6
      %v1051 = vrot.slane %v1022, 4
      %v1052 = vrot.slane %v986, 2
      %v1053 = vrot.slane %v1031, 6
      %v1054 = vrot.slane %v982, 4
      %v1055 = vrot.slane %v993, 2
      %v1057 = vsel %vm387, %v982, %v1032
      %v1060 = vsel %vm391, %v1033, %v1034
      %v1061 = vsel %vm395, %v1057, %v1060
      %v1064 = vsel %vm387, %v1000, %v1035
      %v1067 = vsel %vm391, %v1036, %v1037
      %v1068 = vsel %vm395, %v1064, %v1067
      %v1070 = vsel %vm387, %v983, %v1038
      %v1073 = vsel %vm391, %v1039, %v1040
      %v1074 = vsel %vm395, %v1070, %v1073
      %v1077 = vsel %vm387, %v1007, %v1041
      %v1080 = vsel %vm391, %v1042, %v1043
      %v1081 = vsel %vm395, %v1077, %v1080
      %v1083 = vsel %vm387, %v984, %v1044
      %v1086 = vsel %vm391, %v1045, %v1046
      %v1087 = vsel %vm395, %v1083, %v1086
      %v1090 = vsel %vm387, %v1014, %v1047
      %v1093 = vsel %vm391, %v1048, %v1049
      %v1094 = vsel %vm395, %v1090, %v1093
      %v1096 = vsel %vm387, %v985, %v1050
      %v1099 = vsel %vm391, %v1051, %v1052
      %v1100 = vsel %vm395, %v1096, %v1099
      %v1103 = vsel %vm387, %v1029, %v1053
      %v1106 = vsel %vm391, %v1054, %v1055
      %v1107 = vsel %vm395, %v1103, %v1106
      %v1109 = vperm.slane %v920, 0
      %1111 = vst [vmem:[#allocation1] ss:$4 sm:$0xff] %v1061
      %s1112 = scalar_lea.vmem [#allocation1], 1
      %1113 = vst [vmem:[%s1112] ss:$4 sm:$0xff] %v1074
      %s1114 = scalar_lea.vmem [#allocation1], 2
      %1115 = vst [vmem:[%s1114] ss:$4 sm:$0xff] %v1087
      %s1116 = scalar_lea.vmem [#allocation1], 3
      %1117 = vst [vmem:[%s1116] ss:$4 sm:$0xff] %v1100
      %s1118 = scalar_lea.vmem [#allocation1], 32
      %1119 = vst [vmem:[%s1118] ss:$4 sm:$0xff] %v1068
      %s1120 = scalar_lea.vmem [#allocation1], 33
      %1121 = vst [vmem:[%s1120] ss:$4 sm:$0xff] %v1081
      %s1122 = scalar_lea.vmem [#allocation1], 34
      %1123 = vst [vmem:[%s1122] ss:$4 sm:$0xff] %v1094
      %s1124 = scalar_lea.vmem [#allocation1], 35
      %1125 = vst [vmem:[%s1124] ss:$4 sm:$0xff] %v1107
      %v1126 = vld.sshfl [vmem:[#allocation1] sm:$0xff pattern:$0x73625140]
      %v1127 = vld.sshfl [vmem:[#allocation1 + $0x8] sm:$0xff pattern:$0x73625140]
      %v1128 = vld.sshfl [vmem:[#allocation1 + $0x10] sm:$0xff pattern:$0x73625140]
      %v1129 = vld.sshfl [vmem:[#allocation1 + $0x18] sm:$0xff pattern:$0x73625140]
      %v1130 = vld.sshfl [vmem:[#allocation1 + $0x20] sm:$0xff pattern:$0x73625140]
      %v1131 = vld.sshfl [vmem:[#allocation1 + $0x28] sm:$0xff pattern:$0x73625140]
      %v1132 = vld.sshfl [vmem:[#allocation1 + $0x30] sm:$0xff pattern:$0x73625140]
      %v1133 = vld.sshfl [vmem:[#allocation1 + $0x38] sm:$0xff pattern:$0x73625140]
      %1135 = vst [vmem:[#allocation1] ss:$4 sm:$0xff] %v1021
      %1137 = vst [vmem:[%s1112] ss:$4 sm:$0xff] %v1022
      %1139 = vst [vmem:[%s1114] ss:$4 sm:$0xff] %v1031
      %1141 = vst [vmem:[%s1116] ss:$4 sm:$0xff] %v1019
      %v1142 = vld.sshfl [vmem:[#allocation1] sm:$0xff pattern:$0x73625140]
      %v1296 = vunpack.c.l.b16 %v776
      %v1297 = vunpack.c.l.b16 %v777
      %v1298 = vunpack.c.l.b16 %v778
      %v1299 = vunpack.c.l.b16 %v779
      %v1300 = vunpack.c.l.b16 %v780
      %v1301 = vunpack.c.l.b16 %v781
      %v1302 = vunpack.c.l.b16 %v782
      %v1303 = vunpack.c.l.b16 %v783
      %v1304 = vunpack.c.l.b16 %v784
      %v1305 = vunpack.c.l.b16 %v785
      %v1306 = vunpack.c.l.b16 %v786
      %v1307 = vunpack.c.l.b16 %v787
      %v1308 = vunpack.c.l.b16 %v788
      %v1309 = vunpack.c.l.b16 %v789
      %v1310 = vunpack.c.l.b16 %v790
      %v1311 = vunpack.c.l.b16 %v791
      %v1312 = vunpack.c.l.b16 %v792
      %v1313 = vunpack.c.l.b16 %v793
      %v1314 = vunpack.c.l.b16 %v794
      %v1315 = vunpack.c.l.b16 %v795
      %v1316 = vunpack.c.l.b16 %v796
      %v1317 = vunpack.c.l.b16 %v797
      %v1318 = vunpack.c.l.b16 %v798
      %v1319 = vunpack.c.l.b16 %v799
      %v1320 = vunpack.c.l.b16 %v800
      %v1321 = vunpack.c.l.b16 %v801
      %v1322 = vunpack.c.l.b16 %v802
      %v1323 = vunpack.c.l.b16 %v803
      %v1324 = vunpack.c.l.b16 %v804
      %v1325 = vunpack.c.l.b16 %v805
      %v1326 = vunpack.c.l.b16 %v806
      %v1327 = vunpack.c.l.b16 %v807
      %v1328 = vunpack.c.l.b16 %v808
      %v1329 = vunpack.c.l.b16 %v809
      %v1330 = vunpack.c.l.b16 %v810
      %v1331 = vunpack.c.l.b16 %v811
      %v1332 = vunpack.c.l.b16 %v812
      %v1333 = vunpack.c.l.b16 %v813
      %v1334 = vunpack.c.l.b16 %v814
      %v1335 = vunpack.c.l.b16 %v815
      %v1336 = vunpack.c.l.b16 %v816
      %v1337 = vunpack.c.l.b16 %v817
      %v1338 = vunpack.c.l.b16 %v818
      %v1339 = vunpack.c.l.b16 %v819
      %v1340 = vunpack.c.l.b16 %v820
      %v1341 = vunpack.c.l.b16 %v821
      %v1342 = vunpack.c.l.b16 %v822
      %v1343 = vunpack.c.l.b16 %v823
      %v1344 = vunpack.c.l.b16 %v824
      %v1345 = vunpack.c.l.b16 %v825
      %v1346 = vunpack.c.l.b16 %v826
      %v1347 = vunpack.c.l.b16 %v827
      %v1348 = vunpack.c.l.b16 %v828
      %v1349 = vunpack.c.l.b16 %v829
      %v1350 = vunpack.c.l.b16 %v830
      %v1351 = vunpack.c.l.b16 %v831
      %v1352 = vunpack.c.l.b16 %v832
      %v1353 = vunpack.c.l.b16 %v833
      %v1354 = vunpack.c.l.b16 %v834
      %v1355 = vunpack.c.l.b16 %v835
      %v1356 = vunpack.c.l.b16 %v836
      %v1357 = vunpack.c.l.b16 %v837
      %v1358 = vunpack.c.l.b16 %v838
      %v1359 = vunpack.c.l.b16 %v839
      %v1360 = vunpack.c.l.b16 %v840
      %v1361 = vunpack.c.l.b16 %v841
      %v1362 = vunpack.c.l.b16 %v842
      %v1363 = vunpack.c.l.b16 %v843
      %v1364 = vunpack.c.l.b16 %v844
      %v1365 = vunpack.c.l.b16 %v845
      %v1366 = vunpack.c.l.b16 %v846
      %v1367 = vunpack.c.l.b16 %v847
      %v1368 = vunpack.c.l.b16 %v848
      %v1369 = vunpack.c.l.b16 %v849
      %v1370 = vunpack.c.l.b16 %v850
      %v1371 = vunpack.c.l.b16 %v851
      %v1372 = vunpack.c.l.b16 %v852
      %v1373 = vunpack.c.l.b16 %v853
      %v1374 = vunpack.c.l.b16 %v854
      %v1375 = vunpack.c.l.b16 %v855
      %v1376 = vunpack.c.l.b16 %v856
      %v1377 = vunpack.c.l.b16 %v857
      %v1378 = vunpack.c.l.b16 %v858
      %v1379 = vunpack.c.l.b16 %v859
      %v1380 = vunpack.c.l.b16 %v860
      %v1381 = vunpack.c.l.b16 %v861
      %v1382 = vunpack.c.l.b16 %v862
      %v1383 = vunpack.c.l.b16 %v863
      %v1384 = vunpack.c.l.b16 %v864
      %v1385 = vunpack.c.l.b16 %v865
      %v1386 = vunpack.c.l.b16 %v866
      %v1387 = vunpack.c.l.b16 %v867
      %v1388 = vunpack.c.l.b16 %v868
      %v1389 = vunpack.c.l.b16 %v869
      %v1390 = vunpack.c.l.b16 %v870
      %v1391 = vunpack.c.l.b16 %v871
      %v1392 = vunpack.c.l.b16 %v872
      %v1393 = vunpack.c.l.b16 %v873
      %v1394 = vunpack.c.l.b16 %v874
      %v1395 = vunpack.c.l.b16 %v875
      %v1396 = vunpack.c.l.b16 %v876
      %v1397 = vunpack.c.l.b16 %v877
      %v1398 = vunpack.c.l.b16 %v878
      %v1399 = vunpack.c.l.b16 %v879
      %v1400 = vunpack.c.l.b16 %v880
      %v1401 = vunpack.c.l.b16 %v881
      %v1402 = vunpack.c.l.b16 %v882
      %v1403 = vunpack.c.l.b16 %v883
      %v1404 = vunpack.c.l.b16 %v884
      %v1405 = vunpack.c.l.b16 %v885
      %v1406 = vunpack.c.l.b16 %v886
      %v1407 = vunpack.c.l.b16 %v887
      %v1408 = vunpack.c.l.b16 %v888
      %v1409 = vunpack.c.l.b16 %v889
      %v1410 = vunpack.c.l.b16 %v890
      %v1411 = vunpack.c.l.b16 %v891
      %v1412 = vunpack.c.l.b16 %v892
      %v1413 = vunpack.c.l.b16 %v893
      %v1414 = vunpack.c.l.b16 %v894
      %v1415 = vunpack.c.l.b16 %v895
      %v1416 = vunpack.c.l.b16 %v896
      %v1417 = vunpack.c.l.b16 %v897
      %v1418 = vunpack.c.l.b16 %v898
      %v1419 = vunpack.c.l.b16 %v899
      %v1420 = vunpack.c.l.b16 %v900
      %v1421 = vunpack.c.l.b16 %v901
      %v1422 = vunpack.c.l.b16 %v902
      %v1423 = vunpack.c.l.b16 %v903
      %v1424 = vunpack.c.l.b16 %v904
      %v1425 = vunpack.c.l.b16 %v905
      %v1426 = vunpack.c.l.b16 %v906
      %v1427 = vunpack.c.l.b16 %v907
      %v1428 = vunpack.c.l.b16 %v908
      %v1429 = vunpack.c.l.b16 %v909
      %v1430 = vunpack.c.l.b16 %v910
      %v1431 = vunpack.c.l.b16 %v911
      %v1432 = vunpack.c.l.b16 %v912
      %v1433 = vunpack.c.l.b16 %v913
      %v1434 = vunpack.c.l.b16 %v914
      %v1435 = vunpack.c.l.b16 %v915
      %v1436 = vunpack.c.l.b16 %v916
      %v1437 = vunpack.c.l.b16 %v917
      %v1438 = vunpack.c.l.b16 %v918
      %v1439 = vunpack.c.l.b16 %v919
      %v1440 = vpack.c.b16 %v1297, %v1296
      %v1441 = vpack.c.b16 %v1299, %v1298
      %v1442 = vpack.c.b16 %v1301, %v1300
      %v1443 = vpack.c.b16 %v1303, %v1302
      %v1444 = vpack.c.b16 %v1305, %v1304
      %v1445 = vpack.c.b16 %v1307, %v1306
      %v1446 = vpack.c.b16 %v1309, %v1308
      %v1447 = vpack.c.b16 %v1311, %v1310
      %v1448 = vpack.c.b16 %v1313, %v1312
      %v1449 = vpack.c.b16 %v1315, %v1314
      %v1450 = vpack.c.b16 %v1317, %v1316
      %v1451 = vpack.c.b16 %v1319, %v1318
      %v1452 = vpack.c.b16 %v1321, %v1320
      %v1453 = vpack.c.b16 %v1323, %v1322
      %v1454 = vpack.c.b16 %v1325, %v1324
      %v1455 = vpack.c.b16 %v1327, %v1326
      %v1456 = vpack.c.b16 %v1329, %v1328
      %v1457 = vpack.c.b16 %v1331, %v1330
      %v1458 = vpack.c.b16 %v1333, %v1332
      %v1459 = vpack.c.b16 %v1335, %v1334
      %v1460 = vpack.c.b16 %v1337, %v1336
      %v1461 = vpack.c.b16 %v1339, %v1338
      %v1462 = vpack.c.b16 %v1341, %v1340
      %v1463 = vpack.c.b16 %v1343, %v1342
      %v1464 = vpack.c.b16 %v1345, %v1344
      %v1465 = vpack.c.b16 %v1347, %v1346
      %v1466 = vpack.c.b16 %v1349, %v1348
      %v1467 = vpack.c.b16 %v1351, %v1350
      %v1468 = vpack.c.b16 %v1353, %v1352
      %v1469 = vpack.c.b16 %v1355, %v1354
      %v1470 = vpack.c.b16 %v1357, %v1356
      %v1471 = vpack.c.b16 %v1359, %v1358
      %v1472 = vpack.c.b16 %v1361, %v1360
      %v1473 = vpack.c.b16 %v1363, %v1362
      %v1474 = vpack.c.b16 %v1365, %v1364
      %v1475 = vpack.c.b16 %v1367, %v1366
      %v1476 = vpack.c.b16 %v1369, %v1368
      %v1477 = vpack.c.b16 %v1371, %v1370
      %v1478 = vpack.c.b16 %v1373, %v1372
      %v1479 = vpack.c.b16 %v1375, %v1374
      %v1480 = vpack.c.b16 %v1377, %v1376
      %v1481 = vpack.c.b16 %v1379, %v1378
      %v1482 = vpack.c.b16 %v1381, %v1380
      %v1483 = vpack.c.b16 %v1383, %v1382
      %v1484 = vpack.c.b16 %v1385, %v1384
      %v1485 = vpack.c.b16 %v1387, %v1386
      %v1486 = vpack.c.b16 %v1389, %v1388
      %v1487 = vpack.c.b16 %v1391, %v1390
      %v1488 = vpack.c.b16 %v1393, %v1392
      %v1489 = vpack.c.b16 %v1395, %v1394
      %v1490 = vpack.c.b16 %v1397, %v1396
      %v1491 = vpack.c.b16 %v1399, %v1398
      %v1492 = vpack.c.b16 %v1401, %v1400
      %v1493 = vpack.c.b16 %v1403, %v1402
      %v1494 = vpack.c.b16 %v1405, %v1404
      %v1495 = vpack.c.b16 %v1407, %v1406
      %v1496 = vpack.c.b16 %v1409, %v1408
      %v1497 = vpack.c.b16 %v1411, %v1410
      %v1498 = vpack.c.b16 %v1413, %v1412
      %v1499 = vpack.c.b16 %v1415, %v1414
      %v1500 = vpack.c.b16 %v1417, %v1416
      %v1501 = vpack.c.b16 %v1419, %v1418
      %v1502 = vpack.c.b16 %v1421, %v1420
      %v1503 = vpack.c.b16 %v1423, %v1422
      %v1504 = vpack.c.b16 %v1425, %v1424
      %v1505 = vpack.c.b16 %v1427, %v1426
      %v1506 = vpack.c.b16 %v1429, %v1428
      %v1507 = vpack.c.b16 %v1431, %v1430
      %v1508 = vpack.c.b16 %v1433, %v1432
      %v1509 = vpack.c.b16 %v1435, %v1434
      %v1510 = vpack.c.b16 %v1437, %v1436
      %v1511 = vpack.c.b16 %v1439, %v1438
      %1584 = vmatpush.bf16.msra.mxu0 %v1447
      %1585 = vmatpush.bf16.msra.mxu0 %v1446
      %1586 = vmatpush.bf16.msra.mxu0 %v1445
      %1587 = vmatpush.bf16.msra.mxu0 %v1444
      %1588 = vmatpush.bf16.msra.mxu0 %v1443
      %1589 = vmatpush.bf16.msra.mxu0 %v1442
      %1590 = vmatpush.bf16.msra.mxu0 %v1441
      %1591 = vmatpush.bf16.msra.mxu0 %v1440
      %1592 = vmatmul.bf16.gmra.mxu0 %v1126
      %v1593 = vpop.f32.mrf.mxu0
      %v1594 = vadd.f32 %v1109, %v1593
      %v1595 = vpop.f32.mrf.mxu0
      %v1596 = vadd.f32 %v1109, %v1595
      %1597 = vdwg.mxu0
      %1598 = vmatpush.bf16.msra.mxu0 %v1455
      %1599 = vmatpush.bf16.msra.mxu0 %v1454
      %1600 = vmatpush.bf16.msra.mxu0 %v1453
      %1601 = vmatpush.bf16.msra.mxu0 %v1452
      %1602 = vmatpush.bf16.msra.mxu0 %v1451
      %1603 = vmatpush.bf16.msra.mxu0 %v1450
      %1604 = vmatpush.bf16.msra.mxu0 %v1449
      %1605 = vmatpush.bf16.msra.mxu0 %v1448
      %1606 = vmatmul.bf16.gmra.mxu0 %v1127
      %v1607 = vpop.f32.mrf.mxu0
      %v1608 = vadd.f32 %v1594, %v1607
      %v1609 = vpop.f32.mrf.mxu0
      %v1610 = vadd.f32 %v1596, %v1609
      %1611 = vdwg.mxu0
      %1612 = vmatpush.bf16.msra.mxu0 %v1463
      %1613 = vmatpush.bf16.msra.mxu0 %v1462
      %1614 = vmatpush.bf16.msra.mxu0 %v1461
      %1615 = vmatpush.bf16.msra.mxu0 %v1460
      %1616 = vmatpush.bf16.msra.mxu0 %v1459
      %1617 = vmatpush.bf16.msra.mxu0 %v1458
      %1618 = vmatpush.bf16.msra.mxu0 %v1457
      %1619 = vmatpush.bf16.msra.mxu0 %v1456
      %1620 = vmatmul.bf16.gmra.mxu0 %v1128
      %v1621 = vpop.f32.mrf.mxu0
      %v1622 = vadd.f32 %v1608, %v1621
      %v1623 = vpop.f32.mrf.mxu0
      %v1624 = vadd.f32 %v1610, %v1623
      %1625 = vdwg.mxu0
      %1626 = vmatpush.bf16.msra.mxu0 %v1471
      %1627 = vmatpush.bf16.msra.mxu0 %v1470
      %1628 = vmatpush.bf16.msra.mxu0 %v1469
      %1629 = vmatpush.bf16.msra.mxu0 %v1468
      %1630 = vmatpush.bf16.msra.mxu0 %v1467
      %1631 = vmatpush.bf16.msra.mxu0 %v1466
      %1632 = vmatpush.bf16.msra.mxu0 %v1465
      %1633 = vmatpush.bf16.msra.mxu0 %v1464
      %1634 = vmatmul.bf16.gmra.mxu0 %v1129
      %v1635 = vpop.f32.mrf.mxu0
      %v1636 = vadd.f32 %v1622, %v1635
      %v1637 = vpop.f32.mrf.mxu0
      %v1638 = vadd.f32 %v1624, %v1637
      %1639 = vdwg.mxu0
      %1640 = vmatpush.bf16.msra.mxu0 %v1479
      %1641 = vmatpush.bf16.msra.mxu0 %v1478
      %1642 = vmatpush.bf16.msra.mxu0 %v1477
      %1643 = vmatpush.bf16.msra.mxu0 %v1476
      %1644 = vmatpush.bf16.msra.mxu0 %v1475
      %1645 = vmatpush.bf16.msra.mxu0 %v1474
      %1646 = vmatpush.bf16.msra.mxu0 %v1473
      %1647 = vmatpush.bf16.msra.mxu0 %v1472
      %1648 = vmatmul.bf16.gmra.mxu0 %v1130
      %v1649 = vpop.f32.mrf.mxu0
      %v1650 = vadd.f32 %v1636, %v1649
      %v1651 = vpop.f32.mrf.mxu0
      %v1652 = vadd.f32 %v1638, %v1651
      %1653 = vdwg.mxu0
      %1654 = vmatpush.bf16.msra.mxu0 %v1487
      %1655 = vmatpush.bf16.msra.mxu0 %v1486
      %1656 = vmatpush.bf16.msra.mxu0 %v1485
      %1657 = vmatpush.bf16.msra.mxu0 %v1484
      %1658 = vmatpush.bf16.msra.mxu0 %v1483
      %1659 = vmatpush.bf16.msra.mxu0 %v1482
      %1660 = vmatpush.bf16.msra.mxu0 %v1481
      %1661 = vmatpush.bf16.msra.mxu0 %v1480
      %1662 = vmatmul.bf16.gmra.mxu0 %v1131
      %v1663 = vpop.f32.mrf.mxu0
      %v1664 = vadd.f32 %v1650, %v1663
      %v1665 = vpop.f32.mrf.mxu0
      %v1666 = vadd.f32 %v1652, %v1665
      %1667 = vdwg.mxu0
      %1668 = vmatpush.bf16.msra.mxu0 %v1495
      %1669 = vmatpush.bf16.msra.mxu0 %v1494
      %1670 = vmatpush.bf16.msra.mxu0 %v1493
      %1671 = vmatpush.bf16.msra.mxu0 %v1492
      %1672 = vmatpush.bf16.msra.mxu0 %v1491
      %1673 = vmatpush.bf16.msra.mxu0 %v1490
      %1674 = vmatpush.bf16.msra.mxu0 %v1489
      %1675 = vmatpush.bf16.msra.mxu0 %v1488
      %1676 = vmatmul.bf16.gmra.mxu0 %v1132
      %v1677 = vpop.f32.mrf.mxu0
      %v1678 = vadd.f32 %v1664, %v1677
      %v1679 = vpop.f32.mrf.mxu0
      %v1680 = vadd.f32 %v1666, %v1679
      %1681 = vdwg.mxu0
      %1682 = vmatpush.bf16.msra.mxu0 %v1503
      %1683 = vmatpush.bf16.msra.mxu0 %v1502
      %1684 = vmatpush.bf16.msra.mxu0 %v1501
      %1685 = vmatpush.bf16.msra.mxu0 %v1500
      %1686 = vmatpush.bf16.msra.mxu0 %v1499
      %1687 = vmatpush.bf16.msra.mxu0 %v1498
      %1688 = vmatpush.bf16.msra.mxu0 %v1497
      %1689 = vmatpush.bf16.msra.mxu0 %v1496
      %1690 = vmatmul.bf16.gmra.mxu0 %v1133
      %v1691 = vpop.f32.mrf.mxu0
      %v1692 = vadd.f32 %v1678, %v1691
      %v1693 = vpop.f32.mrf.mxu0
      %v1694 = vadd.f32 %v1680, %v1693
      %1695 = vdwg.mxu0
      %1696 = vmatpush.bf16.msra.mxu0 %v1511
      %1697 = vmatpush.bf16.msra.mxu0 %v1510
      %1698 = vmatpush.bf16.msra.mxu0 %v1509
      %1699 = vmatpush.bf16.msra.mxu0 %v1508
      %1700 = vmatpush.bf16.msra.mxu0 %v1507
      %1701 = vmatpush.bf16.msra.mxu0 %v1506
      %1702 = vmatpush.bf16.msra.mxu0 %v1505
      %1703 = vmatpush.bf16.msra.mxu0 %v1504
      %1704 = vmatmul.bf16.gmra.mxu0 %v1142
      %v1705 = vpop.f32.mrf.mxu0
      %v1706 = vadd.f32 %v1692, %v1705
      %v1707 = vpop.f32.mrf.mxu0
      %v1708 = vadd.f32 %v1694, %v1707
      %1709 = vdwg.mxu0
      %v1710 = vmax.f32 %v1706, 0.0
      %v1711 = vmax.f32 %v1708, 0.0
      %v1712 = vpack.c.bf16 %v1711, %v1710
      %v1713 = vld [vmem:[%s6] sm:$0xf]
      %v1714 = vld [vmem:[%s6 + $0x4] sm:$0xf]
      %v1715 = vld [vmem:[%s6 + $0x8] sm:$0xf]
      %v1716 = vld [vmem:[%s6 + $0xc] sm:$0xf]
      %v1717 = vld [vmem:[%s6 + $0x10] sm:$0xf]
      %v1718 = vld [vmem:[%s6 + $0x14] sm:$0xf]
      %v1719 = vld [vmem:[%s6 + $0x18] sm:$0xf]
      %v1720 = vld [vmem:[%s6 + $0x1c] sm:$0xf]
      %v1721 = vld [vmem:[%s6 + $0x20] sm:$0xf]
      %v1722 = vld [vmem:[%s6 + $0x24] sm:$0xf]
      %v1723 = vld [vmem:[%s6 + $0x28] sm:$0xf]
      %v1724 = vld [vmem:[%s6 + $0x2c] sm:$0xf]
      %v1725 = vld [vmem:[%s6 + $0x30] sm:$0xf]
      %v1726 = vld [vmem:[%s6 + $0x34] sm:$0xf]
      %v1727 = vld [vmem:[%s6 + $0x38] sm:$0xf]
      %v1728 = vld [vmem:[%s6 + $0x3c] sm:$0xf]
      %v1745 = vunpack.c.l.b16 %v1713
      %v1746 = vunpack.c.l.b16 %v1714
      %v1747 = vunpack.c.l.b16 %v1715
      %v1748 = vunpack.c.l.b16 %v1716
      %v1749 = vunpack.c.l.b16 %v1717
      %v1750 = vunpack.c.l.b16 %v1718
      %v1751 = vunpack.c.l.b16 %v1719
      %v1752 = vunpack.c.l.b16 %v1720
      %v1753 = vunpack.c.l.b16 %v1721
      %v1754 = vunpack.c.l.b16 %v1722
      %v1755 = vunpack.c.l.b16 %v1723
      %v1756 = vunpack.c.l.b16 %v1724
      %v1757 = vunpack.c.l.b16 %v1725
      %v1758 = vunpack.c.l.b16 %v1726
      %v1759 = vunpack.c.l.b16 %v1727
      %v1760 = vunpack.c.l.b16 %v1728
      %v1761 = vpack.c.b16 %v1746, %v1745
      %v1762 = vpack.c.b16 %v1748, %v1747
      %v1763 = vpack.c.b16 %v1750, %v1749
      %v1764 = vpack.c.b16 %v1752, %v1751
      %v1765 = vpack.c.b16 %v1754, %v1753
      %v1766 = vpack.c.b16 %v1756, %v1755
      %v1767 = vpack.c.b16 %v1758, %v1757
      %v1768 = vpack.c.b16 %v1760, %v1759
      %1777 = vmatpush.bf16.msra.mxu0 %v1768
      %1778 = vmatpush.bf16.msra.mxu0 %v1767
      %1779 = vmatpush.bf16.msra.mxu0 %v1766
      %1780 = vmatpush.bf16.msra.mxu0 %v1765
      %1781 = vmatpush.bf16.msra.mxu0 %v1764
      %1782 = vmatpush.bf16.msra.mxu0 %v1763
      %1783 = vmatpush.bf16.msra.mxu0 %v1762
      %1784 = vmatpush.bf16.msra.mxu0 %v1761
      %1785 = vmatmul.bf16.gmra.mxu0 %v1712
      %v1786 = vpop.f32.mrf.mxu0
      %v1787 = vadd.f32 0.0, %v1786
      %v1788 = vpop.f32.mrf.mxu0
      %v1789 = vadd.f32 0.0, %v1788
      %1790 = vdwg.mxu0
      %v1793 = vrot.slane %v1787, 4
      %v1794 = vrot.slane %v1789, 4
      %v1797 = vpack.c.bf16 %v1787, %v1787
      %v1798 = vpack.c.bf16 %v1793, %v1793
      %v1799 = vpack.c.bf16 %v1789, %v1789
      %v1800 = vpack.c.bf16 %v1794, %v1794
      %vm1801 = vcmask 517120
      %1802 = vst.msk [vmem:[%s298] sm:$0x3] %vm1801, %v1797
      %1803 = vst.msk [vmem:[%s298 + $0x2] sm:$0x3] %vm1801, %v1798
      %1804 = vst.msk [vmem:[%s298 + $0x4] sm:$0x3] %vm1801, %v1799
      %1805 = vst.msk [vmem:[%s298 + $0x6] sm:$0x3] %vm1801, %v1800
      %p1806 = scmp.lt.s32.totalorder %s18, 1
      %s1807 = scalar_select %p1806, %s18, 1
      %s1808 = smul.addr %s1807, 4
      %s1809 = smul.addr %s1808, 2
      %s1810 = scalar_lea.vmem %s7, %s1809
      // Predicated region
      $region49: #{merge_forward.5} parent=47 // pred_check
        %p1811 = pneg %p193
      $region50: #{merge_forward.5} parent=47 // pred_check_branch
        %1813 = sbr.rel (%p1811) target = $region52
      $region51: #{merge_forward.5} parent=47 // pred_region
        _
      $region52: #{merge_forward.5} parent=47 // pred_fallthru
        _
    $region48: #{merge_forward.5} parent=5 // pred_fallthru
      _
    %p1814 = scmp.le.s32.totalorder 2, %s13
    // Predicated region
    $region53: #{merge_forward.5} parent=5 // pred_check
      %p1815 = pneg %p1814
    $region54: #{merge_forward.5} parent=5 // pred_check_branch
      %1817 = sbr.rel (%p1815) target = $region56
    $region55: #{merge_forward.5} parent=5 // pred_region
      %s1818 = ssub.s32 %s13, 2
      // Predicated region
      $region57: #{merge_forward.5} parent=55 // pred_check
        %p1819 = pneg %p199
      $region58: #{merge_forward.5} parent=55 // pred_check_branch
        %1821 = sbr.rel (%p1819) target = $region60
      $region59: #{merge_forward.5} parent=55 // pred_region
        %p1822 = scmp.lt.s32.totalorder %s19, 1
        %s1823 = scalar_select %p1822, %s19, 1
        %s1824 = smul.addr %s1823, 4
        %s1825 = smul.addr %s1824, 2
        %s1826 = scalar_lea.vmem %s7, %s1825
      $region60: #{merge_forward.5} parent=55 // pred_fallthru
        _
    $region56: #{merge_forward.5} parent=5 // pred_fallthru
      _
  $region6: #{merge_forward.5} parent=0 // loop_footer
    %s17 = sadd.s32 1, %s13
  $region7: #{merge_forward.5} parent=0 // loop_footer_branch
    %12 = sbr.rel target = $region3
  $region8: #{merge_forward.5} parent=0 // loop_exit
    _

// kernel: merge_forward.6
$region0: #{merge_forward.6}
  #allocation0 [shape = 'u32[]', space=smem, size = 0x4, offset = 0x4, fixed_abs, tag = 'smem constant byte address 0x4 - core index']
  #allocation1 [shape = 'u32[72,128]{1,0:T(1,128)}', space=vmem, size = 0x9000, scoped, tag = 'internal scratch']
  %s0 = inlined_call_operand.vmem [shape: f32[2,8,8,256], index: 0, kind: input, shape index: {}]
  %s1 = inlined_call_operand.vmem [shape: bf16[2,8,8,64], index: 1, kind: input, shape index: {}]
  %s2 = inlined_call_operand.vmem [shape: bf16[256,64], index: 2, kind: input, shape index: {}]
  %s3 = inlined_call_operand.vmem [shape: f32[1,64], index: 3, kind: input, shape index: {}]
  %s4 = inlined_call_operand.vmem [shape: bf16[576,64], index: 4, kind: input, shape index: {}]
  %s5 = inlined_call_operand.vmem [shape: f32[1,64], index: 5, kind: input, shape index: {}]
  %s6 = inlined_call_operand.vmem [shape: bf16[64,32], index: 6, kind: input, shape index: {}]
  %s7 = inlined_call_operand.vmem [shape: bf16[2,8,8,32], index: 7, kind: output, shape index: {}]
  %s8 = sld [smem:[#allocation0]]
  $region61: #{merge_forward.6} parent=0
    _
  %s10 = ssub.s32 1, %s8
  %s11 = scalar_select 0, %s10, %s8
  loop: start=0, step=1, limit=4
  $region2: #{merge_forward.6} parent=0 // loop_pre_header
    _
  $region3: #{merge_forward.6} parent=0 // loop_header
    %s13 = sphi 0, %s17
    %p14 = scmp.ge.s32.totalorder %s13, 4
    %s23 = sphi 0, %s25
    %s26 = sphi 0, %s23
    %s27 = sphi 0, %s26
    %s43 = sphi 0, %s27
    %s49 = sphi 0, %s51
    %s52 = sphi 0, %s49
    %s53 = sphi 0, %s52
    %s69 = sphi 0, %s53
    %s73 = sphi 0, %s73
    %s75 = sphi 0, %s73
    %s76 = sphi 0, %s75
    %s90 = sphi 0, %s76
    %s94 = sphi 0, %s94
    %s96 = sphi 0, %s94
    %s97 = sphi 0, %s96
    %s111 = sphi 0, %s97
    %s115 = sphi 0, %s115
    %s117 = sphi 0, %s115
    %s118 = sphi 0, %s117
    %s132 = sphi 0, %s118
    %s136 = sphi 0, %s136
    %s138 = sphi 0, %s136
    %s139 = sphi 0, %s138
    %s153 = sphi 0, %s139
    %s157 = sphi 0, %s157
    %s159 = sphi 0, %s157
    %s160 = sphi 0, %s159
    %s174 = sphi 0, %s160
    %s180 = sphi 0, %s182
    %s183 = sphi 0, %s180
    %s184 = sphi 0, %s183
    %s200 = sphi 0, %s184
  $region4: #{merge_forward.6} parent=0 // loop_header_branch
    %16 = sbr.rel (%p14) target = $region8
  $region5: #{merge_forward.6} parent=0 // loop_body
    %s18 = ssub.s32 %s13, 1
    %s19 = ssub.s32 %s13, 2
    %s20 = sadd.s32 %s13, 1
    %s21 = ssub.s32 %s13, %s20
    %p22 = scmp.eq.s32.totalorder %s21, 0
    %s24 = sadd.s32 %s23, 1
    %s25 = scalar_select %p22, %s23, %s24
    %p28 = pneg %p22
    %p29 = scmp.eq.s32.totalorder %s13, 1
    %p30 = por %p28, %p29
    %p31 = scmp.ne.s32.totalorder %s23, %s26
    %p32 = scmp.eq.s32.totalorder %s13, 0
    %p33 = por %p31, %p32
    %p34 = scmp.ne.s32.totalorder %s23, %s26
    %p35 = scmp.eq.s32.totalorder %s18, 1
    %p36 = por %p34, %p35
    %p37 = scmp.ne.s32.totalorder %s26, %s27
    %p38 = scmp.eq.s32.totalorder %s18, 0
    %p39 = por %p37, %p38
    %p40 = scmp.ne.s32.totalorder %s26, %s27
    %p41 = scmp.eq.s32.totalorder %s19, 1
    %p42 = por %p40, %p41
    %p44 = scmp.ne.s32.totalorder %s27, %s43
    %p45 = scmp.eq.s32.totalorder %s19, 0
    %p46 = por %p44, %p45
    %s47 = ssub.s32 %s13, %s20
    %p48 = scmp.eq.s32.totalorder %s47, 0
    %s50 = sadd.s32 %s49, 1
    %s51 = scalar_select %p48, %s49, %s50
    %p54 = pneg %p48
    %p55 = scmp.eq.s32.totalorder %s13, 1
    %p56 = por %p54, %p55
    %p57 = scmp.ne.s32.totalorder %s49, %s52
    %p58 = scmp.eq.s32.totalorder %s13, 0
    %p59 = por %p57, %p58
    %p60 = scmp.ne.s32.totalorder %s49, %s52
    %p61 = scmp.eq.s32.totalorder %s18, 1
    %p62 = por %p60, %p61
    %p63 = scmp.ne.s32.totalorder %s52, %s53
    %p64 = scmp.eq.s32.totalorder %s18, 0
    %p65 = por %p63, %p64
    %p66 = scmp.ne.s32.totalorder %s52, %s53
    %p67 = scmp.eq.s32.totalorder %s19, 1
    %p68 = por %p66, %p67
    %p70 = scmp.ne.s32.totalorder %s53, %s69
    %p71 = scmp.eq.s32.totalorder %s19, 0
    %p72 = por %p70, %p71
    %s74 = sadd.s32 %s73, 1
    %p77 = scmp.eq.s32.totalorder %s13, 1
    %p78 = scmp.ne.s32.totalorder %s73, %s75
    %p79 = scmp.eq.s32.totalorder %s13, 0
    %p80 = por %p78, %p79
    %p81 = scmp.ne.s32.totalorder %s73, %s75
    %p82 = scmp.eq.s32.totalorder %s18, 1
    %p83 = por %p81, %p82
    %p84 = scmp.ne.s32.totalorder %s75, %s76
    %p85 = scmp.eq.s32.totalorder %s18, 0
    %p86 = por %p84, %p85
    %p87 = scmp.ne.s32.totalorder %s75, %s76
    %p88 = scmp.eq.s32.totalorder %s19, 1
    %p89 = por %p87, %p88
    %p91 = scmp.ne.s32.totalorder %s76, %s90
    %p92 = scmp.eq.s32.totalorder %s19, 0
    %p93 = por %p91, %p92
    %s95 = sadd.s32 %s94, 1
    %p98 = scmp.eq.s32.totalorder %s13, 1
    %p99 = scmp.ne.s32.totalorder %s94, %s96
    %p100 = scmp.eq.s32.totalorder %s13, 0
    %p101 = por %p99, %p100
    %p102 = scmp.ne.s32.totalorder %s94, %s96
    %p103 = scmp.eq.s32.totalorder %s18, 1
    %p104 = por %p102, %p103
    %p105 = scmp.ne.s32.totalorder %s96, %s97
    %p106 = scmp.eq.s32.totalorder %s18, 0
    %p107 = por %p105, %p106
    %p108 = scmp.ne.s32.totalorder %s96, %s97
    %p109 = scmp.eq.s32.totalorder %s19, 1
    %p110 = por %p108, %p109
    %p112 = scmp.ne.s32.totalorder %s97, %s111
    %p113 = scmp.eq.s32.totalorder %s19, 0
    %p114 = por %p112, %p113
    %s116 = sadd.s32 %s115, 1
    %p119 = scmp.eq.s32.totalorder %s13, 1
    %p120 = scmp.ne.s32.totalorder %s115, %s117
    %p121 = scmp.eq.s32.totalorder %s13, 0
    %p122 = por %p120, %p121
    %p123 = scmp.ne.s32.totalorder %s115, %s117
    %p124 = scmp.eq.s32.totalorder %s18, 1
    %p125 = por %p123, %p124
    %p126 = scmp.ne.s32.totalorder %s117, %s118
    %p127 = scmp.eq.s32.totalorder %s18, 0
    %p128 = por %p126, %p127
    %p129 = scmp.ne.s32.totalorder %s117, %s118
    %p130 = scmp.eq.s32.totalorder %s19, 1
    %p131 = por %p129, %p130
    %p133 = scmp.ne.s32.totalorder %s118, %s132
    %p134 = scmp.eq.s32.totalorder %s19, 0
    %p135 = por %p133, %p134
    %s137 = sadd.s32 %s136, 1
    %p140 = scmp.eq.s32.totalorder %s13, 1
    %p141 = scmp.ne.s32.totalorder %s136, %s138
    %p142 = scmp.eq.s32.totalorder %s13, 0
    %p143 = por %p141, %p142
    %p144 = scmp.ne.s32.totalorder %s136, %s138
    %p145 = scmp.eq.s32.totalorder %s18, 1
    %p146 = por %p144, %p145
    %p147 = scmp.ne.s32.totalorder %s138, %s139
    %p148 = scmp.eq.s32.totalorder %s18, 0
    %p149 = por %p147, %p148
    %p150 = scmp.ne.s32.totalorder %s138, %s139
    %p151 = scmp.eq.s32.totalorder %s19, 1
    %p152 = por %p150, %p151
    %p154 = scmp.ne.s32.totalorder %s139, %s153
    %p155 = scmp.eq.s32.totalorder %s19, 0
    %p156 = por %p154, %p155
    %s158 = sadd.s32 %s157, 1
    %p161 = scmp.eq.s32.totalorder %s13, 1
    %p162 = scmp.ne.s32.totalorder %s157, %s159
    %p163 = scmp.eq.s32.totalorder %s13, 0
    %p164 = por %p162, %p163
    %p165 = scmp.ne.s32.totalorder %s157, %s159
    %p166 = scmp.eq.s32.totalorder %s18, 1
    %p167 = por %p165, %p166
    %p168 = scmp.ne.s32.totalorder %s159, %s160
    %p169 = scmp.eq.s32.totalorder %s18, 0
    %p170 = por %p168, %p169
    %p171 = scmp.ne.s32.totalorder %s159, %s160
    %p172 = scmp.eq.s32.totalorder %s19, 1
    %p173 = por %p171, %p172
    %p175 = scmp.ne.s32.totalorder %s160, %s174
    %p176 = scmp.eq.s32.totalorder %s19, 0
    %p177 = por %p175, %p176
    %s178 = ssub.s32 %s13, %s20
    %p179 = scmp.eq.s32.totalorder %s178, 0
    %s181 = sadd.s32 %s180, 1
    %s182 = scalar_select %p179, %s180, %s181
    %p185 = pneg %p179
    %p186 = scmp.eq.s32.totalorder %s13, 1
    %p187 = por %p185, %p186
    %p188 = scmp.ne.s32.totalorder %s180, %s183
    %p189 = scmp.eq.s32.totalorder %s13, 0
    %p190 = por %p188, %p189
    %p191 = scmp.ne.s32.totalorder %s180, %s183
    %p192 = scmp.eq.s32.totalorder %s18, 1
    %p193 = por %p191, %p192
    %p194 = scmp.ne.s32.totalorder %s183, %s184
    %p195 = scmp.eq.s32.totalorder %s18, 0
    %p196 = por %p194, %p195
    %p197 = scmp.ne.s32.totalorder %s183, %s184
    %p198 = scmp.eq.s32.totalorder %s19, 1
    %p199 = por %p197, %p198
    %p201 = scmp.ne.s32.totalorder %s184, %s200
    %p202 = scmp.eq.s32.totalorder %s19, 0
    %p203 = por %p201, %p202
    %p204 = scmp.le.s32.totalorder 1, %s13
    %p205 = scmp.lt.s32.totalorder %s13, 3
    %p206 = pnand %p204, %p205
    %p207 = pneg %p206
    // Predicated region
    $region9: #{merge_forward.6} parent=5 // pred_check
      _
    $region10: #{merge_forward.6} parent=5 // pred_check_branch
      %209 = sbr.rel (%p206) target = $region12
    $region11: #{merge_forward.6} parent=5 // pred_region
      %s210 = ssub.s32 %s13, 1
      // Predicated region
      $region13: #{merge_forward.6} parent=11 // pred_check
        %p211 = pneg %p86
      $region14: #{merge_forward.6} parent=11 // pred_check_branch
        %213 = sbr.rel (%p211) target = $region16
      $region15: #{merge_forward.6} parent=11 // pred_region
        _
      $region16: #{merge_forward.6} parent=11 // pred_fallthru
        _
      // Predicated region
      $region17: #{merge_forward.6} parent=11 // pred_check
        %p214 = pneg %p107
      $region18: #{merge_forward.6} parent=11 // pred_check_branch
        %216 = sbr.rel (%p214) target = $region20
      $region19: #{merge_forward.6} parent=11 // pred_region
        _
      $region20: #{merge_forward.6} parent=11 // pred_fallthru
        _
      // Predicated region
      $region21: #{merge_forward.6} parent=11 // pred_check
        %p217 = pneg %p128
      $region22: #{merge_forward.6} parent=11 // pred_check_branch
        %219 = sbr.rel (%p217) target = $region24
      $region23: #{merge_forward.6} parent=11 // pred_region
        _
      $region24: #{merge_forward.6} parent=11 // pred_fallthru
        _
      // Predicated region
      $region25: #{merge_forward.6} parent=11 // pred_check
        %p220 = pneg %p149
      $region26: #{merge_forward.6} parent=11 // pred_check_branch
        %222 = sbr.rel (%p220) target = $region28
      $region27: #{merge_forward.6} parent=11 // pred_region
        _
      $region28: #{merge_forward.6} parent=11 // pred_fallthru
        _
      // Predicated region
      $region29: #{merge_forward.6} parent=11 // pred_check
        %p223 = pneg %p170
      $region30: #{merge_forward.6} parent=11 // pred_check_branch
        %225 = sbr.rel (%p223) target = $region32
      $region31: #{merge_forward.6} parent=11 // pred_region
        _
      $region32: #{merge_forward.6} parent=11 // pred_fallthru
        _
    $region12: #{merge_forward.6} parent=5 // pred_fallthru
      _
    %p226 = scmp.lt.s32.totalorder %s13, 2
    // Predicated region
    $region33: #{merge_forward.6} parent=5 // pred_check
      %p227 = pneg %p226
    $region34: #{merge_forward.6} parent=5 // pred_check_branch
      %229 = sbr.rel (%p227) target = $region36
    $region35: #{merge_forward.6} parent=5 // pred_region
      // Predicated region
      $region37: #{merge_forward.6} parent=35 // pred_check
        %p230 = pneg %p33
      $region38: #{merge_forward.6} parent=35 // pred_check_branch
        %232 = sbr.rel (%p230) target = $region40
      $region39: #{merge_forward.6} parent=35 // pred_region
        %p233 = scmp.lt.s32.totalorder %s13, 1
        %s234 = scalar_select %p233, %s13, 1
        %s235 = smul.addr %s234, 16
        %s236 = smul.addr %s235, 8
        %s237 = scalar_lea.vmem %s0, %s236
      $region40: #{merge_forward.6} parent=35 // pred_fallthru
        _
      // Predicated region
      $region41: #{merge_forward.6} parent=35 // pred_check
        %p238 = pneg %p59
      $region42: #{merge_forward.6} parent=35 // pred_check_branch
        %240 = sbr.rel (%p238) target = $region44
      $region43: #{merge_forward.6} parent=35 // pred_region
        %p241 = scmp.lt.s32.totalorder %s13, 1
        %s242 = scalar_select %p241, %s13, 1
        %s243 = smul.addr %s242, 8
        %s244 = smul.addr %s243, 4
        %s245 = scalar_lea.vmem %s1, %s244
      $region44: #{merge_forward.6} parent=35 // pred_fallthru
        _
    $region36: #{merge_forward.6} parent=5 // pred_fallthru
      _
    %p246 = scmp.le.s32.totalorder 1, %s13
    %p247 = scmp.lt.s32.totalorder %s13, 3
    %p248 = pnand %p246, %p247
    %p249 = pneg %p248
    // Predicated region
    $region45: #{merge_forward.6} parent=5 // pred_check
      _
    $region46: #{merge_forward.6} parent=5 // pred_check_branch
      %251 = sbr.rel (%p248) target = $region48
    $region47: #{merge_forward.6} parent=5 // pred_region
      %s252 = ssub.s32 %s13, 1
      %p253 = scmp.lt.s32.totalorder %s18, 1
      %s254 = scalar_select %p253, %s18, 1
      %s255 = smul.addr %s254, 16
      %s256 = smul.addr %s255, 8
      %s257 = scalar_lea.vmem %s0, %s256
      %p258 = pneg %p39
      %p259 = pneg %p36
      %p260 = scmp.lt.s32.totalorder %s18, 1
      %s261 = scalar_select %p260, %s18, 1
      %s262 = smul.addr %s261, 8
      %s263 = smul.addr %s262, 4
      %s264 = scalar_lea.vmem %s1, %s263
      %p265 = pneg %p65
      %p266 = pneg %p62
      %p267 = pneg %p86
      %p268 = pneg %p83
      %p269 = pneg %p107
      %p270 = pneg %p104
      %p271 = pneg %p128
      %p272 = pneg %p125
      %p273 = pneg %p149
      %p274 = pneg %p146
      %p275 = pneg %p170
      %p276 = pneg %p167
      %p277 = pneg %p196
      %p278 = pneg %p193
      %p279 = scmp.lt.s32.totalorder %s18, 1
      %s280 = scalar_select %p279, %s18, 1
      %s281 = smul.addr %s280, 8
      %s282 = smul.addr %s281, 4
      %s283 = scalar_lea.vmem %s7, %s282
      %p284 = scmp.lt.s32.totalorder %s18, 1
      %s285 = scalar_select %p284, %s18, 1
      %s286 = smul.addr %s285, 16
      %s287 = smul.addr %s286, 8
      %s288 = scalar_lea.vmem %s0, %s287
      %p289 = scmp.lt.s32.totalorder %s18, 1
      %s290 = scalar_select %p289, %s18, 1
      %s291 = smul.addr %s290, 8
      %s292 = smul.addr %s291, 4
      %s293 = scalar_lea.vmem %s1, %s292
      %p294 = scmp.lt.s32.totalorder %s18, 1
      %s295 = scalar_select %p294, %s18, 1
      %s296 = smul.addr %s295, 8
      %s297 = smul.addr %s296, 4
      %s298 = scalar_lea.vmem %s7, %s297
      %v300 = vld [vmem:[%s288] sm:$0xff]
      %v301 = vld [vmem:[%s288 + $0x8] sm:$0xff]
      %v302 = vld [vmem:[%s288 + $0x10] sm:$0xff]
      %v303 = vld [vmem:[%s288 + $0x18] sm:$0xff]
      %v304 = vld [vmem:[%s288 + $0x20] sm:$0xff]
      %v305 = vld [vmem:[%s288 + $0x28] sm:$0xff]
      %v306 = vld [vmem:[%s288 + $0x30] sm:$0xff]
      %v307 = vld [vmem:[%s288 + $0x38] sm:$0xff]
      %v308 = vld [vmem:[%s288 + $0x40] sm:$0xff]
      %v309 = vld [vmem:[%s288 + $0x48] sm:$0xff]
      %v310 = vld [vmem:[%s288 + $0x50] sm:$0xff]
      %v311 = vld [vmem:[%s288 + $0x58] sm:$0xff]
      %v312 = vld [vmem:[%s288 + $0x60] sm:$0xff]
      %v313 = vld [vmem:[%s288 + $0x68] sm:$0xff]
      %v314 = vld [vmem:[%s288 + $0x70] sm:$0xff]
      %v315 = vld [vmem:[%s288 + $0x78] sm:$0xff]
      %v316 = vpack.c.bf16 %v301, %v300
      %v317 = vpack.c.bf16 %v303, %v302
      %v318 = vpack.c.bf16 %v305, %v304
      %v319 = vpack.c.bf16 %v307, %v306
      %v320 = vpack.c.bf16 %v309, %v308
      %v321 = vpack.c.bf16 %v311, %v310
      %v322 = vpack.c.bf16 %v313, %v312
      %v323 = vpack.c.bf16 %v315, %v314
      %v324 = vld [vmem:[%s2] sm:$0xf]
      %v325 = vld [vmem:[%s2 + $0x4] sm:$0xf]
      %v326 = vld [vmem:[%s2 + $0x8] sm:$0xf]
      %v327 = vld [vmem:[%s2 + $0xc] sm:$0xf]
      %v328 = vld [vmem:[%s2 + $0x10] sm:$0xf]
      %v329 = vld [vmem:[%s2 + $0x14] sm:$0xf]
      %v330 = vld [vmem:[%s2 + $0x18] sm:$0xf]
      %v331 = vld [vmem:[%s2 + $0x1c] sm:$0xf]
      %v332 = vld [vmem:[%s2 + $0x20] sm:$0xf]
      %v333 = vld [vmem:[%s2 + $0x24] sm:$0xf]
      %v334 = vld [vmem:[%s2 + $0x28] sm:$0xf]
      %v335 = vld [vmem:[%s2 + $0x2c] sm:$0xf]
      %v336 = vld [vmem:[%s2 + $0x30] sm:$0xf]
      %v337 = vld [vmem:[%s2 + $0x34] sm:$0xf]
      %v338 = vld [vmem:[%s2 + $0x38] sm:$0xf]
      %v339 = vld [vmem:[%s2 + $0x3c] sm:$0xf]
      %v340 = vld [vmem:[%s2 + $0x40] sm:$0xf]
      %v341 = vld [vmem:[%s2 + $0x44] sm:$0xf]
      %v342 = vld [vmem:[%s2 + $0x48] sm:$0xf]
      %v343 = vld [vmem:[%s2 + $0x4c] sm:$0xf]
      %v344 = vld [vmem:[%s2 + $0x50] sm:$0xf]
      %v345 = vld [vmem:[%s2 + $0x54] sm:$0xf]
      %v346 = vld [vmem:[%s2 + $0x58] sm:$0xf]
      %v347 = vld [vmem:[%s2 + $0x5c] sm:$0xf]
      %v348 = vld [vmem:[%s2 + $0x60] sm:$0xf]
      %v349 = vld [vmem:[%s2 + $0x64] sm:$0xf]
      %v350 = vld [vmem:[%s2 + $0x68] sm:$0xf]
      %v351 = vld [vmem:[%s2 + $0x6c] sm:$0xf]
      %v352 = vld [vmem:[%s2 + $0x70] sm:$0xf]
      %v353 = vld [vmem:[%s2 + $0x74] sm:$0xf]
      %v354 = vld [vmem:[%s2 + $0x78] sm:$0xf]
      %v355 = vld [vmem:[%s2 + $0x7c] sm:$0xf]
      %v356 = vld [vmem:[%s293] sm:$0xf]
      %v357 = vld [vmem:[%s293 + $0x4] sm:$0xf]
      %v358 = vld [vmem:[%s293 + $0x8] sm:$0xf]
      %v359 = vld [vmem:[%s293 + $0xc] sm:$0xf]
      %v360 = vld [vmem:[%s293 + $0x10] sm:$0xf]
      %v361 = vld [vmem:[%s293 + $0x14] sm:$0xf]
      %v362 = vld [vmem:[%s293 + $0x18] sm:$0xf]
      %v363 = vld [vmem:[%s293 + $0x1c] sm:$0xf]
      %v364 = vunpack.c.l.bf16 %v356
      %v365 = vunpack.c.l.bf16 %v357
      %v366 = vunpack.c.l.bf16 %v358
      %v367 = vunpack.c.l.bf16 %v359
      %v368 = vunpack.c.l.bf16 %v360
      %v369 = vunpack.c.l.bf16 %v361
      %v370 = vunpack.c.l.bf16 %v362
      %v371 = vunpack.c.l.bf16 %v363
      %v380 = vunpack.c.l.b16 %v316
      %v381 = vunpack.c.h.b16 %v316
      %v382 = vunpack.c.l.b16 %v317
      %v383 = vunpack.c.h.b16 %v317
      %v384 = vunpack.c.l.b16 %v318
      %v385 = vunpack.c.h.b16 %v318
      %v386 = vunpack.c.l.b16 %v319
      %v387 = vunpack.c.h.b16 %v319
      %v388 = vunpack.c.l.b16 %v320
      %v389 = vunpack.c.h.b16 %v320
      %v390 = vunpack.c.l.b16 %v321
      %v391 = vunpack.c.h.b16 %v321
      %v392 = vunpack.c.l.b16 %v322
      %v393 = vunpack.c.h.b16 %v322
      %v394 = vunpack.c.l.b16 %v323
      %v395 = vunpack.c.h.b16 %v323
      %v396 = vpack.c.b16 %v382, %v380
      %v397 = vpack.c.b16 %v383, %v381
      %v398 = vpack.c.b16 %v386, %v384
      %v399 = vpack.c.b16 %v387, %v385
      %v400 = vpack.c.b16 %v390, %v388
      %v401 = vpack.c.b16 %v391, %v389
      %v402 = vpack.c.b16 %v394, %v392
      %v403 = vpack.c.b16 %v395, %v393
      %v444 = vunpack.c.l.b16 %v324
      %v445 = vunpack.c.l.b16 %v325
      %v446 = vunpack.c.l.b16 %v326
      %v447 = vunpack.c.l.b16 %v327
      %v448 = vunpack.c.l.b16 %v328
      %v449 = vunpack.c.l.b16 %v329
      %v450 = vunpack.c.l.b16 %v330
      %v451 = vunpack.c.l.b16 %v331
      %v452 = vunpack.c.l.b16 %v332
      %v453 = vunpack.c.l.b16 %v333
      %v454 = vunpack.c.l.b16 %v334
      %v455 = vunpack.c.l.b16 %v335
      %v456 = vunpack.c.l.b16 %v336
      %v457 = vunpack.c.l.b16 %v337
      %v458 = vunpack.c.l.b16 %v338
      %v459 = vunpack.c.l.b16 %v339
      %v460 = vunpack.c.l.b16 %v340
      %v461 = vunpack.c.l.b16 %v341
      %v462 = vunpack.c.l.b16 %v342
      %v463 = vunpack.c.l.b16 %v343
      %v464 = vunpack.c.l.b16 %v344
      %v465 = vunpack.c.l.b16 %v345
      %v466 = vunpack.c.l.b16 %v346
      %v467 = vunpack.c.l.b16 %v347
      %v468 = vunpack.c.l.b16 %v348
      %v469 = vunpack.c.l.b16 %v349
      %v470 = vunpack.c.l.b16 %v350
      %v471 = vunpack.c.l.b16 %v351
      %v472 = vunpack.c.l.b16 %v352
      %v473 = vunpack.c.l.b16 %v353
      %v474 = vunpack.c.l.b16 %v354
      %v475 = vunpack.c.l.b16 %v355
      %v476 = vpack.c.b16 %v445, %v444
      %v477 = vpack.c.b16 %v447, %v446
      %v478 = vpack.c.b16 %v449, %v448
      %v479 = vpack.c.b16 %v451, %v450
      %v480 = vpack.c.b16 %v453, %v452
      %v481 = vpack.c.b16 %v455, %v454
      %v482 = vpack.c.b16 %v457, %v456
      %v483 = vpack.c.b16 %v459, %v458
      %v484 = vpack.c.b16 %v461, %v460
      %v485 = vpack.c.b16 %v463, %v462
      %v486 = vpack.c.b16 %v465, %v464
      %v487 = vpack.c.b16 %v467, %v466
      %v488 = vpack.c.b16 %v469, %v468
      %v489 = vpack.c.b16 %v471, %v470
      %v490 = vpack.c.b16 %v473, %v472
      %v491 = vpack.c.b16 %v475, %v474
      %508 = vmatpush.bf16.msra.mxu0 %v483
      %509 = vmatpush.bf16.msra.mxu0 %v482
      %510 = vmatpush.bf16.msra.mxu0 %v481
      %511 = vmatpush.bf16.msra.mxu0 %v480
      %512 = vmatpush.bf16.msra.mxu0 %v479
      %513 = vmatpush.bf16.msra.mxu0 %v478
      %514 = vmatpush.bf16.msra.mxu0 %v477
      %515 = vmatpush.bf16.msra.mxu0 %v476
      %516 = vmatmul.bf16.gmra.mxu0 %v396
      %v517 = vpop.f32.mrf.mxu0
      %v518 = vadd.f32 %v364, %v517
      %v519 = vpop.f32.mrf.mxu0
      %v520 = vadd.f32 %v365, %v519
      %521 = vmatmul.bf16.gmra.mxu0 %v398
      %v522 = vpop.f32.mrf.mxu0
      %v523 = vadd.f32 %v366, %v522
      %v524 = vpop.f32.mrf.mxu0
      %v525 = vadd.f32 %v367, %v524
      %526 = vmatmul.bf16.gmra.mxu0 %v400
      %v527 = vpop.f32.mrf.mxu0
      %v528 = vadd.f32 %v368, %v527
      %v529 = vpop.f32.mrf.mxu0
      %v530 = vadd.f32 %v369, %v529
      %531 = vmatmul.bf16.gmra.mxu0 %v402
      %v532 = vpop.f32.mrf.mxu0
      %v533 = vadd.f32 %v370, %v532
      %v534 = vpop.f32.mrf.mxu0
      %v535 = vadd.f32 %v371, %v534
      %536 = vdwg.mxu0
      %537 = vmatpush.bf16.msra.mxu0 %v491
      %538 = vmatpush.bf16.msra.mxu0 %v490
      %539 = vmatpush.bf16.msra.mxu0 %v489
      %540 = vmatpush.bf16.msra.mxu0 %v488
      %541 = vmatpush.bf16.msra.mxu0 %v487
      %542 = vmatpush.bf16.msra.mxu0 %v486
      %543 = vmatpush.bf16.msra.mxu0 %v485
      %544 = vmatpush.bf16.msra.mxu0 %v484
      %545 = vmatmul.bf16.gmra.mxu0 %v397
      %v546 = vpop.f32.mrf.mxu0
      %v547 = vadd.f32 %v518, %v546
      %v548 = vpop.f32.mrf.mxu0
      %v549 = vadd.f32 %v520, %v548
      %550 = vmatmul.bf16.gmra.mxu0 %v399
      %v551 = vpop.f32.mrf.mxu0
      %v552 = vadd.f32 %v523, %v551
      %v553 = vpop.f32.mrf.mxu0
      %v554 = vadd.f32 %v525, %v553
      %555 = vmatmul.bf16.gmra.mxu0 %v401
      %v556 = vpop.f32.mrf.mxu0
      %v557 = vadd.f32 %v528, %v556
      %v558 = vpop.f32.mrf.mxu0
      %v559 = vadd.f32 %v530, %v558
      %560 = vmatmul.bf16.gmra.mxu0 %v403
      %v561 = vpop.f32.mrf.mxu0
      %v562 = vadd.f32 %v533, %v561
      %v563 = vpop.f32.mrf.mxu0
      %v564 = vadd.f32 %v535, %v563
      %565 = vdwg.mxu0
      %v566 = vld [vmem:[%s3] sm:$0x1]
      %v568 = vperm.slane %v566, 0
      %v570 = vadd.f32 %v547, %v568
      %v571 = vadd.f32 %v549, %v568
      %v572 = vadd.f32 %v552, %v568
      %v573 = vadd.f32 %v554, %v568
      %v574 = vadd.f32 %v557, %v568
      %v575 = vadd.f32 %v559, %v568
      %v576 = vadd.f32 %v562, %v568
      %v577 = vadd.f32 %v564, %v568
      %v578 = vmax.f32 %v570, 0.0
      %v579 = vmax.f32 %v571, 0.0
      %v580 = vmax.f32 %v572, 0.0
      %v581 = vmax.f32 %v573, 0.0
      %v582 = vmax.f32 %v574, 0.0
      %v583 = vmax.f32 %v575, 0.0
      %v584 = vmax.f32 %v576, 0.0
      %v585 = vmax.f32 %v577, 0.0
      %v586 = vld [vmem:[%s4] sm:$0xf]
      %v587 = vld [vmem:[%s4 + $0x4] sm:$0xf]
      %v588 = vld [vmem:[%s4 + $0x8] sm:$0xf]
      %v589 = vld [vmem:[%s4 + $0xc] sm:$0xf]
      %v590 = vld [vmem:[%s4 + $0x10] sm:$0xf]
      %v591 = vld [vmem:[%s4 + $0x14] sm:$0xf]
      %v592 = vld [vmem:[%s4 + $0x18] sm:$0xf]
      %v593 = vld [vmem:[%s4 + $0x1c] sm:$0xf]
      %v594 = vld [vmem:[%s4 + $0x20] sm:$0xf]
      %v595 = vld [vmem:[%s4 + $0x24] sm:$0xf]
      %v596 = vld [vmem:[%s4 + $0x28] sm:$0xf]
      %v597 = vld [vmem:[%s4 + $0x2c] sm:$0xf]
      %v598 = vld [vmem:[%s4 + $0x30] sm:$0xf]
      %v599 = vld [vmem:[%s4 + $0x34] sm:$0xf]
      %v600 = vld [vmem:[%s4 + $0x38] sm:$0xf]
      %v601 = vld [vmem:[%s4 + $0x3c] sm:$0xf]
      %v602 = vld [vmem:[%s4 + $0x40] sm:$0xf]
      %v603 = vld [vmem:[%s4 + $0x44] sm:$0xf]
      %v604 = vld [vmem:[%s4 + $0x48] sm:$0xf]
      %v605 = vld [vmem:[%s4 + $0x4c] sm:$0xf]
      %v606 = vld [vmem:[%s4 + $0x50] sm:$0xf]
      %v607 = vld [vmem:[%s4 + $0x54] sm:$0xf]
      %v608 = vld [vmem:[%s4 + $0x58] sm:$0xf]
      %v609 = vld [vmem:[%s4 + $0x5c] sm:$0xf]
      %v610 = vld [vmem:[%s4 + $0x60] sm:$0xf]
      %v611 = vld [vmem:[%s4 + $0x64] sm:$0xf]
      %v612 = vld [vmem:[%s4 + $0x68] sm:$0xf]
      %v613 = vld [vmem:[%s4 + $0x6c] sm:$0xf]
      %v614 = vld [vmem:[%s4 + $0x70] sm:$0xf]
      %v615 = vld [vmem:[%s4 + $0x74] sm:$0xf]
      %v616 = vld [vmem:[%s4 + $0x78] sm:$0xf]
      %v617 = vld [vmem:[%s4 + $0x7c] sm:$0xf]
      %v618 = vld [vmem:[%s4 + $0x80] sm:$0xf]
      %v619 = vld [vmem:[%s4 + $0x84] sm:$0xf]
      %v620 = vld [vmem:[%s4 + $0x88] sm:$0xf]
      %v621 = vld [vmem:[%s4 + $0x8c] sm:$0xf]
      %v622 = vld [vmem:[%s4 + $0x90] sm:$0xf]
      %v623 = vld [vmem:[%s4 + $0x94] sm:$0xf]
      %v624 = vld [vmem:[%s4 + $0x98] sm:$0xf]
      %v625 = vld [vmem:[%s4 + $0x9c] sm:$0xf]
      %v626 = vld [vmem:[%s4 + $0xa0] sm:$0xf]
      %v627 = vld [vmem:[%s4 + $0xa4] sm:$0xf]
      %v628 = vld [vmem:[%s4 + $0xa8] sm:$0xf]
      %v629 = vld [vmem:[%s4 + $0xac] sm:$0xf]
      %v630 = vld [vmem:[%s4 + $0xb0] sm:$0xf]
      %v631 = vld [vmem:[%s4 + $0xb4] sm:$0xf]
      %v632 = vld [vmem:[%s4 + $0xb8] sm:$0xf]
      %v633 = vld [vmem:[%s4 + $0xbc] sm:$0xf]
      %v634 = vld [vmem:[%s4 + $0xc0] sm:$0xf]
      %v635 = vld [vmem:[%s4 + $0xc4] sm:$0xf]
      %v636 = vld [vmem:[%s4 + $0xc8] sm:$0xf]
      %v637 = vld [vmem:[%s4 + $0xcc] sm:$0xf]
      %v638 = vld [vmem:[%s4 + $0xd0] sm:$0xf]
      %v639 = vld [vmem:[%s4 + $0xd4] sm:$0xf]
      %v640 = vld [vmem:[%s4 + $0xd8] sm:$0xf]
      %v641 = vld [vmem:[%s4 + $0xdc] sm:$0xf]
      %v642 = vld [vmem:[%s4 + $0xe0] sm:$0xf]
      %v643 = vld [vmem:[%s4 + $0xe4] sm:$0xf]
      %v644 = vld [vmem:[%s4 + $0xe8] sm:$0xf]
      %v645 = vld [vmem:[%s4 + $0xec] sm:$0xf]
      %v646 = vld [vmem:[%s4 + $0xf0] sm:$0xf]
      %v647 = vld [vmem:[%s4 + $0xf4] sm:$0xf]
      %v648 = vld [vmem:[%s4 + $0xf8] sm:$0xf]
      %v649 = vld [vmem:[%s4 + $0xfc] sm:$0xf]
      %v650 = vld [vmem:[%s4 + $0x100] sm:$0xf]
      %v651 = vld [vmem:[%s4 + $0x104] sm:$0xf]
      %v652 = vld [vmem:[%s4 + $0x108] sm:$0xf]
      %v653 = vld [vmem:[%s4 + $0x10c] sm:$0xf]
      %v654 = vld [vmem:[%s4 + $0x110] sm:$0xf]
      %v655 = vld [vmem:[%s4 + $0x114] sm:$0xf]
      %v656 = vld [vmem:[%s4 + $0x118] sm:$0xf]
      %v657 = vld [vmem:[%s4 + $0x11c] sm:$0xf]
      %v658 = vld [vmem:[%s5] sm:$0x1]
      %v659 = vpack.c.bf16 %v578, %v578
      %v660 = vpack.c.bf16 %v579, %v579
      %v661 = vpack.c.bf16 %v580, %v580
      %v662 = vpack.c.bf16 %v581, %v581
      %v663 = vpack.c.bf16 %v582, %v582
      %v664 = vpack.c.bf16 %v583, %v583
      %v665 = vpack.c.bf16 %v584, %v584
      %v666 = vpack.c.bf16 %v585, %v585
      %v668 = vshrl.u32 0, 16
      %v670 = vrot.slane %v668, 7
      %v671 = vshll.u32 0, 16
      %v673 = vor.u32 %v670, %v671
      %v675 = vshrl.u32 %v659, 16
      %v677 = vrot.slane %v675, 7
      %v678 = vshll.u32 %v659, 16
      %v680 = vor.u32 %v677, %v678
      %v682 = vshrl.u32 %v660, 16
      %v684 = vrot.slane %v682, 7
      %v685 = vshll.u32 %v660, 16
      %v687 = vor.u32 %v684, %v685
      %v689 = vshrl.u32 %v661, 16
      %v691 = vrot.slane %v689, 7
      %v692 = vshll.u32 %v661, 16
      %v694 = vor.u32 %v691, %v692
      %v696 = vshrl.u32 %v662, 16
      %v698 = vrot.slane %v696, 7
      %v699 = vshll.u32 %v662, 16
      %v701 = vor.u32 %v698, %v699
      %v703 = vshrl.u32 %v663, 16
      %v705 = vrot.slane %v703, 7
      %v706 = vshll.u32 %v663, 16
      %v708 = vor.u32 %v705, %v706
      %v710 = vshrl.u32 %v664, 16
      %v712 = vrot.slane %v710, 7
      %v713 = vshll.u32 %v664, 16
      %v715 = vor.u32 %v712, %v713
      %v717 = vshrl.u32 %v665, 16
      %v719 = vrot.slane %v717, 7
      %v720 = vshll.u32 %v665, 16
      %v722 = vor.u32 %v719, %v720
      %v724 = vshrl.u32 %v666, 16
      %v726 = vrot.slane %v724, 7
      %v727 = vshll.u32 %v666, 16
      %v729 = vor.u32 %v726, %v727
      %vm739 = vcmask 1040384
      %vm740 = vsmask.f32 256
      %vm741 = vmand %vm739, %vm740
      %v742 = vsel %vm741, 0, %v673
      %v743 = vsel %vm741, 0, %v680
      %v744 = vsel %vm741, 0, %v687
      %v745 = vsel %vm741, 0, %v694
      %v746 = vsel %vm741, 0, %v701
      %v747 = vsel %vm741, 0, %v708
      %v748 = vsel %vm741, 0, %v715
      %v749 = vsel %vm741, 0, %v722
      %v750 = vsel %vm741, 0, %v729
      %vm751 = vcmask 1044480
      %vm752 = vsmask.f32 4352
      %vm753 = vmand %vm751, %vm752
      %v754 = vsel %vm753, %v742, 0
      %v755 = vsel %vm753, %v743, 0
      %v756 = vsel %vm753, %v744, 0
      %v757 = vsel %vm753, %v745, 0
      %v758 = vsel %vm753, %v746, 0
      %v759 = vsel %vm753, %v747, 0
      %v760 = vsel %vm753, %v748, 0
      %v761 = vsel %vm753, %v749, 0
      %v762 = vsel %vm753, %v750, 0
      %v764 = vshrl.u32 %v754, 16
      %v766 = vshll.u32 %v754, 16
      %v768 = vrot.slane %v766, 1
      %v769 = vor.u32 %v764, %v768
      %v771 = vshrl.u32 %v755, 16
      %v773 = vshll.u32 %v755, 16
      %v775 = vrot.slane %v773, 1
      %v776 = vor.u32 %v771, %v775
      %v778 = vshrl.u32 %v756, 16
      %v780 = vshll.u32 %v756, 16
      %v782 = vrot.slane %v780, 1
      %v783 = vor.u32 %v778, %v782
      %v785 = vshrl.u32 %v757, 16
      %v787 = vshll.u32 %v757, 16
      %v789 = vrot.slane %v787, 1
      %v790 = vor.u32 %v785, %v789
      %v792 = vshrl.u32 %v758, 16
      %v794 = vshll.u32 %v758, 16
      %v796 = vrot.slane %v794, 1
      %v797 = vor.u32 %v792, %v796
      %v799 = vshrl.u32 %v759, 16
      %v801 = vshll.u32 %v759, 16
      %v803 = vrot.slane %v801, 1
      %v804 = vor.u32 %v799, %v803
      %v806 = vshrl.u32 %v760, 16
      %v808 = vshll.u32 %v760, 16
      %v810 = vrot.slane %v808, 1
      %v811 = vor.u32 %v806, %v810
      %v813 = vshrl.u32 %v761, 16
      %v815 = vshll.u32 %v761, 16
      %v817 = vrot.slane %v815, 1
      %v818 = vor.u32 %v813, %v817
      %819 = vrot.lane.b32.xlu0 %v769, 64
      %v820 = vpop.permute.xlu0 %819
      %821 = vrot.lane.b32.xlu0 %v776, 64
      %v822 = vpop.permute.xlu0 %821
      %823 = vrot.lane.b32.xlu0 %v783, 64
      %v824 = vpop.permute.xlu0 %823
      %825 = vrot.lane.b32.xlu0 %v790, 64
      %v826 = vpop.permute.xlu0 %825
      %827 = vrot.lane.b32.xlu0 %v797, 64
      %v828 = vpop.permute.xlu0 %827
      %829 = vrot.lane.b32.xlu0 %v804, 64
      %v830 = vpop.permute.xlu0 %829
      %831 = vrot.lane.b32.xlu0 %v811, 64
      %v832 = vpop.permute.xlu0 %831
      %833 = vrot.lane.b32.xlu0 %v818, 64
      %v834 = vpop.permute.xlu0 %833
      %v843 = vrot.slane %v754, 1
      %v844 = vrot.slane %v755, 1
      %v845 = vrot.slane %v756, 1
      %v846 = vrot.slane %v757, 1
      %v847 = vrot.slane %v758, 1
      %v848 = vrot.slane %v759, 1
      %v849 = vrot.slane %v760, 1
      %v850 = vrot.slane %v761, 1
      %852 = vrot.lane.b32.xlu0 %v755, 64
      %v853 = vpop.permute.xlu0 %852
      %854 = vrot.lane.b32.xlu0 %v756, 64
      %v855 = vpop.permute.xlu0 %854
      %856 = vrot.lane.b32.xlu0 %v757, 64
      %v857 = vpop.permute.xlu0 %856
      %858 = vrot.lane.b32.xlu0 %v758, 64
      %v859 = vpop.permute.xlu0 %858
      %860 = vrot.lane.b32.xlu0 %v759, 64
      %v861 = vpop.permute.xlu0 %860
      %862 = vrot.lane.b32.xlu0 %v760, 64
      %v863 = vpop.permute.xlu0 %862
      %864 = vrot.lane.b32.xlu0 %v761, 64
      %v865 = vpop.permute.xlu0 %864
      %866 = vrot.lane.b32.xlu0 %v762, 64
      %v867 = vpop.permute.xlu0 %866
      %v869 = vshrl.u32 %v762, 16
      %v871 = vshll.u32 %v762, 16
      %v873 = vrot.slane %v871, 1
      %v874 = vor.u32 %v869, %v873
      %v875 = vrot.slane %v762, 1
      %876 = vrot.lane.b32.xlu0 %v844, 64
      %v877 = vpop.permute.xlu0 %876
      %878 = vrot.lane.b32.xlu0 %v845, 64
      %v879 = vpop.permute.xlu0 %878
      %880 = vrot.lane.b32.xlu0 %v846, 64
      %v881 = vpop.permute.xlu0 %880
      %882 = vrot.lane.b32.xlu0 %v847, 64
      %v883 = vpop.permute.xlu0 %882
      %884 = vrot.lane.b32.xlu0 %v848, 64
      %v885 = vpop.permute.xlu0 %884
      %886 = vrot.lane.b32.xlu0 %v849, 64
      %v887 = vpop.permute.xlu0 %886
      %888 = vrot.lane.b32.xlu0 %v850, 64
      %v889 = vpop.permute.xlu0 %888
      %890 = vrot.lane.b32.xlu0 %v875, 64
      %v891 = vpop.permute.xlu0 %890
      %892 = vrot.lane.b32.xlu0 %v874, 64
      %v893 = vpop.permute.xlu0 %892
      %vm894 = vcmask 523264
      %v896 = vsel %vm894, %v754, %v820
      %v898 = vsel %vm894, %v755, %v822
      %v900 = vsel %vm894, %v756, %v824
      %v902 = vsel %vm894, %v757, %v826
      %v904 = vsel %vm894, %v758, %v828
      %v906 = vsel %vm894, %v759, %v830
      %v908 = vsel %vm894, %v760, %v832
      %v910 = vsel %vm894, %v761, %v834
      %v913 = vsel %vm894, %v843, %v853
      %v916 = vsel %vm894, %v844, %v855
      %v919 = vsel %vm894, %v845, %v857
      %v922 = vsel %vm894, %v846, %v859
      %v925 = vsel %vm894, %v847, %v861
      %v928 = vsel %vm894, %v848, %v863
      %v931 = vsel %vm894, %v849, %v865
      %v934 = vsel %vm894, %v850, %v867
      %v937 = vsel %vm894, %v776, %v877
      %v940 = vsel %vm894, %v783, %v879
      %v943 = vsel %vm894, %v790, %v881
      %v946 = vsel %vm894, %v797, %v883
      %v949 = vsel %vm894, %v804, %v885
      %v952 = vsel %vm894, %v811, %v887
      %v955 = vsel %vm894, %v818, %v889
      %v958 = vsel %vm894, %v874, %v891
      %v960 = vsel %vm894, %v762, %v893
      %v986 = vunpack.c.l.b16 %v896
      %v987 = vunpack.c.l.b16 %v913
      %v988 = vunpack.c.l.b16 %v937
      %v989 = vunpack.c.l.b16 %v900
      %v990 = vunpack.c.l.b16 %v845
      %v991 = vunpack.c.l.b16 %v898
      %v992 = vunpack.c.l.b16 %v916
      %v993 = vunpack.c.l.b16 %v940
      %v994 = vunpack.c.l.b16 %v902
      %v995 = vunpack.c.l.b16 %v846
      %v996 = vunpack.c.l.b16 %v919
      %v997 = vunpack.c.l.b16 %v943
      %v998 = vunpack.c.l.b16 %v904
      %v999 = vunpack.c.l.b16 %v847
      %v1000 = vunpack.c.l.b16 %v922
      %v1001 = vunpack.c.l.b16 %v946
      %v1002 = vunpack.c.l.b16 %v906
      %v1003 = vunpack.c.l.b16 %v848
      %v1004 = vunpack.c.l.b16 %v925
      %v1005 = vunpack.c.l.b16 %v949
      %v1006 = vunpack.c.l.b16 %v908
      %v1007 = vunpack.c.l.b16 %v849
      %v1008 = vunpack.c.l.b16 %v928
      %v1009 = vunpack.c.l.b16 %v952
      %v1010 = vunpack.c.l.b16 %v910
      %v1011 = vunpack.c.l.b16 %v850
      %v1012 = vunpack.c.l.b16 %v931
      %v1013 = vunpack.c.l.b16 %v955
      %v1014 = vunpack.c.l.b16 %v960
      %v1015 = vunpack.c.l.b16 %v875
      %v1016 = vunpack.c.l.b16 %v934
      %v1017 = vunpack.c.l.b16 %v958
      %v1018 = vunpack.c.l.b16 %v843
      %v1020 = vperm.slane %v658, 0
      %v1022 = vpack.c.b16 %v991, %v986
      %v1023 = vpack.c.b16 %v992, %v987
      %v1024 = vpack.c.b16 %v993, %v988
      %v1025 = vpack.c.b16 %v994, %v989
      %v1026 = vpack.c.b16 %v995, %v990
      %v1027 = vpack.c.b16 %v1000, %v996
      %v1028 = vpack.c.b16 %v1001, %v997
      %v1029 = vpack.c.b16 %v1002, %v998
      %v1030 = vpack.c.b16 %v1003, %v999
      %v1031 = vpack.c.b16 %v1008, %v1004
      %v1032 = vpack.c.b16 %v1009, %v1005
      %v1033 = vpack.c.b16 %v1010, %v1006
      %v1034 = vpack.c.b16 %v1011, %v1007
      %v1035 = vpack.c.b16 %v1016, %v1012
      %v1036 = vpack.c.b16 %v1017, %v1013
      %v1037 = vpack.c.b16 %v986, %v1014
      %v1038 = vpack.c.b16 %v1018, %v1015
      %v1124 = vunpack.c.l.b16 %v586
      %v1125 = vunpack.c.l.b16 %v587
      %v1126 = vunpack.c.l.b16 %v588
      %v1127 = vunpack.c.l.b16 %v589
      %v1128 = vunpack.c.l.b16 %v590
      %v1129 = vunpack.c.l.b16 %v591
      %v1130 = vunpack.c.l.b16 %v592
      %v1131 = vunpack.c.l.b16 %v593
      %v1132 = vunpack.c.l.b16 %v594
      %v1133 = vunpack.c.l.b16 %v595
      %v1134 = vunpack.c.l.b16 %v596
      %v1135 = vunpack.c.l.b16 %v597
      %v1136 = vunpack.c.l.b16 %v598
      %v1137 = vunpack.c.l.b16 %v599
      %v1138 = vunpack.c.l.b16 %v600
      %v1139 = vunpack.c.l.b16 %v601
      %v1140 = vunpack.c.l.b16 %v602
      %v1141 = vunpack.c.l.b16 %v603
      %v1142 = vunpack.c.l.b16 %v604
      %v1143 = vunpack.c.l.b16 %v605
      %v1144 = vunpack.c.l.b16 %v606
      %v1145 = vunpack.c.l.b16 %v607
      %v1146 = vunpack.c.l.b16 %v608
      %v1147 = vunpack.c.l.b16 %v609
      %v1148 = vunpack.c.l.b16 %v610
      %v1149 = vunpack.c.l.b16 %v611
      %v1150 = vunpack.c.l.b16 %v612
      %v1151 = vunpack.c.l.b16 %v613
      %v1152 = vunpack.c.l.b16 %v614
      %v1153 = vunpack.c.l.b16 %v615
      %v1154 = vunpack.c.l.b16 %v616
      %v1155 = vunpack.c.l.b16 %v617
      %v1156 = vunpack.c.l.b16 %v618
      %v1157 = vunpack.c.l.b16 %v619
      %v1158 = vunpack.c.l.b16 %v620
      %v1159 = vunpack.c.l.b16 %v621
      %v1160 = vunpack.c.l.b16 %v622
      %v1161 = vunpack.c.l.b16 %v623
      %v1162 = vunpack.c.l.b16 %v624
      %v1163 = vunpack.c.l.b16 %v625
      %v1164 = vunpack.c.l.b16 %v626
      %v1165 = vunpack.c.l.b16 %v627
      %v1166 = vunpack.c.l.b16 %v628
      %v1167 = vunpack.c.l.b16 %v629
      %v1168 = vunpack.c.l.b16 %v630
      %v1169 = vunpack.c.l.b16 %v631
      %v1170 = vunpack.c.l.b16 %v632
      %v1171 = vunpack.c.l.b16 %v633
      %v1172 = vunpack.c.l.b16 %v634
      %v1173 = vunpack.c.l.b16 %v635
      %v1174 = vunpack.c.l.b16 %v636
      %v1175 = vunpack.c.l.b16 %v637
      %v1176 = vunpack.c.l.b16 %v638
      %v1177 = vunpack.c.l.b16 %v639
      %v1178 = vunpack.c.l.b16 %v640
      %v1179 = vunpack.c.l.b16 %v641
      %v1180 = vunpack.c.l.b16 %v642
      %v1181 = vunpack.c.l.b16 %v643
      %v1182 = vunpack.c.l.b16 %v644
      %v1183 = vunpack.c.l.b16 %v645
      %v1184 = vunpack.c.l.b16 %v646
      %v1185 = vunpack.c.l.b16 %v647
      %v1186 = vunpack.c.l.b16 %v648
      %v1187 = vunpack.c.l.b16 %v649
      %v1188 = vunpack.c.l.b16 %v650
      %v1189 = vunpack.c.l.b16 %v651
      %v1190 = vunpack.c.l.b16 %v652
      %v1191 = vunpack.c.l.b16 %v653
      %v1192 = vunpack.c.l.b16 %v654
      %v1193 = vunpack.c.l.b16 %v655
      %v1194 = vunpack.c.l.b16 %v656
      %v1195 = vunpack.c.l.b16 %v657
      %v1196 = vpack.c.b16 %v1125, %v1124
      %v1197 = vpack.c.b16 %v1127, %v1126
      %v1198 = vpack.c.b16 %v1129, %v1128
      %v1199 = vpack.c.b16 %v1131, %v1130
      %v1200 = vpack.c.b16 %v1133, %v1132
      %v1201 = vpack.c.b16 %v1135, %v1134
      %v1202 = vpack.c.b16 %v1137, %v1136
      %v1203 = vpack.c.b16 %v1139, %v1138
      %v1204 = vpack.c.b16 %v1141, %v1140
      %v1205 = vpack.c.b16 %v1143, %v1142
      %v1206 = vpack.c.b16 %v1145, %v1144
      %v1207 = vpack.c.b16 %v1147, %v1146
      %v1208 = vpack.c.b16 %v1149, %v1148
      %v1209 = vpack.c.b16 %v1151, %v1150
      %v1210 = vpack.c.b16 %v1153, %v1152
      %v1211 = vpack.c.b16 %v1155, %v1154
      %v1212 = vpack.c.b16 %v1157, %v1156
      %v1213 = vpack.c.b16 %v1159, %v1158
      %v1214 = vpack.c.b16 %v1161, %v1160
      %v1215 = vpack.c.b16 %v1163, %v1162
      %v1216 = vpack.c.b16 %v1165, %v1164
      %v1217 = vpack.c.b16 %v1167, %v1166
      %v1218 = vpack.c.b16 %v1169, %v1168
      %v1219 = vpack.c.b16 %v1171, %v1170
      %v1220 = vpack.c.b16 %v1173, %v1172
      %v1221 = vpack.c.b16 %v1175, %v1174
      %v1222 = vpack.c.b16 %v1177, %v1176
      %v1223 = vpack.c.b16 %v1179, %v1178
      %v1224 = vpack.c.b16 %v1181, %v1180
      %v1225 = vpack.c.b16 %v1183, %v1182
      %v1226 = vpack.c.b16 %v1185, %v1184
      %v1227 = vpack.c.b16 %v1187, %v1186
      %v1228 = vpack.c.b16 %v1189, %v1188
      %v1229 = vpack.c.b16 %v1191, %v1190
      %v1230 = vpack.c.b16 %v1193, %v1192
      %v1231 = vpack.c.b16 %v1195, %v1194
      %v1269 = vsel %vm894, %v1026, 0
      %v1272 = vsel %vm894, %v1030, 0
      %v1275 = vsel %vm894, %v1034, 0
      %v1278 = vsel %vm894, %v1038, 0
      %1280 = vmatpush.bf16.msra.mxu0 %v1203
      %1281 = vmatpush.bf16.msra.mxu0 %v1202
      %1282 = vmatpush.bf16.msra.mxu0 %v1201
      %1283 = vmatpush.bf16.msra.mxu0 %v1200
      %1284 = vmatpush.bf16.msra.mxu0 %v1199
      %1285 = vmatpush.bf16.msra.mxu0 %v1198
      %1286 = vmatpush.bf16.msra.mxu0 %v1197
      %1287 = vmatpush.bf16.msra.mxu0 %v1196
      %1288 = vmatmul.bf16.gmra.mxu0 %v1022
      %v1289 = vpop.f32.mrf.mxu0
      %v1290 = vadd.f32 %v1020, %v1289
      %v1291 = vpop.f32.mrf.mxu0
      %v1292 = vadd.f32 %v1020, %v1291
      %1293 = vmatmul.bf16.gmra.mxu0 %v1025
      %v1294 = vpop.f32.mrf.mxu0
      %v1295 = vadd.f32 %v1020, %v1294
      %v1296 = vpop.f32.mrf.mxu0
      %v1297 = vadd.f32 %v1020, %v1296
      %1298 = vmatmul.bf16.gmra.mxu0 %v1029
      %v1299 = vpop.f32.mrf.mxu0
      %v1300 = vadd.f32 %v1020, %v1299
      %v1301 = vpop.f32.mrf.mxu0
      %v1302 = vadd.f32 %v1020, %v1301
      %1303 = vmatmul.bf16.gmra.mxu0 %v1033
      %v1304 = vpop.f32.mrf.mxu0
      %v1305 = vadd.f32 %v1020, %v1304
      %v1306 = vpop.f32.mrf.mxu0
      %v1307 = vadd.f32 %v1020, %v1306
      %1308 = vdwg.mxu0
      %1309 = vmatpush.bf16.msra.mxu0 %v1211
      %1310 = vmatpush.bf16.msra.mxu0 %v1210
      %1311 = vmatpush.bf16.msra.mxu0 %v1209
      %1312 = vmatpush.bf16.msra.mxu0 %v1208
      %1313 = vmatpush.bf16.msra.mxu0 %v1207
      %1314 = vmatpush.bf16.msra.mxu0 %v1206
      %1315 = vmatpush.bf16.msra.mxu0 %v1205
      %1316 = vmatpush.bf16.msra.mxu0 %v1204
      %1317 = vmatmul.bf16.gmra.mxu0 %v1023
      %v1318 = vpop.f32.mrf.mxu0
      %v1319 = vadd.f32 %v1290, %v1318
      %v1320 = vpop.f32.mrf.mxu0
      %v1321 = vadd.f32 %v1292, %v1320
      %1322 = vmatmul.bf16.gmra.mxu0 %v1027
      %v1323 = vpop.f32.mrf.mxu0
      %v1324 = vadd.f32 %v1295, %v1323
      %v1325 = vpop.f32.mrf.mxu0
      %v1326 = vadd.f32 %v1297, %v1325
      %1327 = vmatmul.bf16.gmra.mxu0 %v1031
      %v1328 = vpop.f32.mrf.mxu0
      %v1329 = vadd.f32 %v1300, %v1328
      %v1330 = vpop.f32.mrf.mxu0
      %v1331 = vadd.f32 %v1302, %v1330
      %1332 = vmatmul.bf16.gmra.mxu0 %v1035
      %v1333 = vpop.f32.mrf.mxu0
      %v1334 = vadd.f32 %v1305, %v1333
      %v1335 = vpop.f32.mrf.mxu0
      %v1336 = vadd.f32 %v1307, %v1335
      %1337 = vdwg.mxu0
      %1338 = vmatpush.bf16.msra.mxu0 %v1219
      %1339 = vmatpush.bf16.msra.mxu0 %v1218
      %1340 = vmatpush.bf16.msra.mxu0 %v1217
      %1341 = vmatpush.bf16.msra.mxu0 %v1216
      %1342 = vmatpush.bf16.msra.mxu0 %v1215
      %1343 = vmatpush.bf16.msra.mxu0 %v1214
      %1344 = vmatpush.bf16.msra.mxu0 %v1213
      %1345 = vmatpush.bf16.msra.mxu0 %v1212
      %1346 = vmatmul.bf16.gmra.mxu0 %v1024
      %v1347 = vpop.f32.mrf.mxu0
      %v1348 = vadd.f32 %v1319, %v1347
      %v1349 = vpop.f32.mrf.mxu0
      %v1350 = vadd.f32 %v1321, %v1349
      %1351 = vmatmul.bf16.gmra.mxu0 %v1028
      %v1352 = vpop.f32.mrf.mxu0
      %v1353 = vadd.f32 %v1324, %v1352
      %v1354 = vpop.f32.mrf.mxu0
      %v1355 = vadd.f32 %v1326, %v1354
      %1356 = vmatmul.bf16.gmra.mxu0 %v1032
      %v1357 = vpop.f32.mrf.mxu0
      %v1358 = vadd.f32 %v1329, %v1357
      %v1359 = vpop.f32.mrf.mxu0
      %v1360 = vadd.f32 %v1331, %v1359
      %1361 = vmatmul.bf16.gmra.mxu0 %v1036
      %v1362 = vpop.f32.mrf.mxu0
      %v1363 = vadd.f32 %v1334, %v1362
      %v1364 = vpop.f32.mrf.mxu0
      %v1365 = vadd.f32 %v1336, %v1364
      %1366 = vdwg.mxu0
      %1367 = vmatpush.bf16.msra.mxu0 %v1227
      %1368 = vmatpush.bf16.msra.mxu0 %v1226
      %1369 = vmatpush.bf16.msra.mxu0 %v1225
      %1370 = vmatpush.bf16.msra.mxu0 %v1224
      %1371 = vmatpush.bf16.msra.mxu0 %v1223
      %1372 = vmatpush.bf16.msra.mxu0 %v1222
      %1373 = vmatpush.bf16.msra.mxu0 %v1221
      %1374 = vmatpush.bf16.msra.mxu0 %v1220
      %1375 = vmatmul.bf16.gmra.mxu0 %v1025
      %v1376 = vpop.f32.mrf.mxu0
      %v1377 = vadd.f32 %v1348, %v1376
      %v1378 = vpop.f32.mrf.mxu0
      %v1379 = vadd.f32 %v1350, %v1378
      %1380 = vmatmul.bf16.gmra.mxu0 %v1029
      %v1381 = vpop.f32.mrf.mxu0
      %v1382 = vadd.f32 %v1353, %v1381
      %v1383 = vpop.f32.mrf.mxu0
      %v1384 = vadd.f32 %v1355, %v1383
      %1385 = vmatmul.bf16.gmra.mxu0 %v1033
      %v1386 = vpop.f32.mrf.mxu0
      %v1387 = vadd.f32 %v1358, %v1386
      %v1388 = vpop.f32.mrf.mxu0
      %v1389 = vadd.f32 %v1360, %v1388
      %1390 = vmatmul.bf16.gmra.mxu0 %v1037
      %v1391 = vpop.f32.mrf.mxu0
      %v1392 = vadd.f32 %v1363, %v1391
      %v1393 = vpop.f32.mrf.mxu0
      %v1394 = vadd.f32 %v1365, %v1393
      %1395 = vdwg.mxu0
      %1396 = vmatpush.bf16.msra.mxu0 0
      %1397 = vmatpush.bf16.msra.mxu0 0
      %1398 = vmatpush.bf16.msra.mxu0 0
      %1399 = vmatpush.bf16.msra.mxu0 0
      %1400 = vmatpush.bf16.msra.mxu0 %v1231
      %1401 = vmatpush.bf16.msra.mxu0 %v1230
      %1402 = vmatpush.bf16.msra.mxu0 %v1229
      %1403 = vmatpush.bf16.msra.mxu0 %v1228
      %1404 = vmatmul.bf16.gmra.mxu0 %v1269
      %v1405 = vpop.f32.mrf.mxu0
      %v1406 = vadd.f32 %v1377, %v1405
      %v1407 = vpop.f32.mrf.mxu0
      %v1408 = vadd.f32 %v1379, %v1407
      %1409 = vmatmul.bf16.gmra.mxu0 %v1272
      %v1410 = vpop.f32.mrf.mxu0
      %v1411 = vadd.f32 %v1382, %v1410
      %v1412 = vpop.f32.mrf.mxu0
      %v1413 = vadd.f32 %v1384, %v1412
      %1414 = vmatmul.bf16.gmra.mxu0 %v1275
      %v1415 = vpop.f32.mrf.mxu0
      %v1416 = vadd.f32 %v1387, %v1415
      %v1417 = vpop.f32.mrf.mxu0
      %v1418 = vadd.f32 %v1389, %v1417
      %1419 = vmatmul.bf16.gmra.mxu0 %v1278
      %v1420 = vpop.f32.mrf.mxu0
      %v1421 = vadd.f32 %v1392, %v1420
      %v1422 = vpop.f32.mrf.mxu0
      %v1423 = vadd.f32 %v1394, %v1422
      %1424 = vdwg.mxu0
      %v1425 = vmax.f32 %v1406, 0.0
      %v1426 = vmax.f32 %v1408, 0.0
      %v1427 = vmax.f32 %v1411, 0.0
      %v1428 = vmax.f32 %v1413, 0.0
      %v1429 = vmax.f32 %v1416, 0.0
      %v1430 = vmax.f32 %v1418, 0.0
      %v1431 = vmax.f32 %v1421, 0.0
      %v1432 = vmax.f32 %v1423, 0.0
      %v1433 = vpack.c.bf16 %v1426, %v1425
      %v1434 = vpack.c.bf16 %v1428, %v1427
      %v1435 = vpack.c.bf16 %v1430, %v1429
      %v1436 = vpack.c.bf16 %v1432, %v1431
      %v1437 = vld [vmem:[%s6] sm:$0xf]
      %v1438 = vld [vmem:[%s6 + $0x4] sm:$0xf]
      %v1439 = vld [vmem:[%s6 + $0x8] sm:$0xf]
      %v1440 = vld [vmem:[%s6 + $0xc] sm:$0xf]
      %v1441 = vld [vmem:[%s6 + $0x10] sm:$0xf]
      %v1442 = vld [vmem:[%s6 + $0x14] sm:$0xf]
      %v1443 = vld [vmem:[%s6 + $0x18] sm:$0xf]
      %v1444 = vld [vmem:[%s6 + $0x1c] sm:$0xf]
      %v1453 = vunpack.c.l.b16 %v1437
      %v1454 = vunpack.c.l.b16 %v1438
      %v1455 = vunpack.c.l.b16 %v1439
      %v1456 = vunpack.c.l.b16 %v1440
      %v1457 = vunpack.c.l.b16 %v1441
      %v1458 = vunpack.c.l.b16 %v1442
      %v1459 = vunpack.c.l.b16 %v1443
      %v1460 = vunpack.c.l.b16 %v1444
      %v1461 = vpack.c.b16 %v1454, %v1453
      %v1462 = vpack.c.b16 %v1456, %v1455
      %v1463 = vpack.c.b16 %v1458, %v1457
      %v1464 = vpack.c.b16 %v1460, %v1459
      %v1470 = vsel %vm894, %v1433, 0
      %v1473 = vsel %vm894, %v1434, 0
      %v1476 = vsel %vm894, %v1435, 0
      %v1479 = vsel %vm894, %v1436, 0
      %1481 = vmatpush.bf16.msra.mxu0 0
      %1482 = vmatpush.bf16.msra.mxu0 0
      %1483 = vmatpush.bf16.msra.mxu0 0
      %1484 = vmatpush.bf16.msra.mxu0 0
      %1485 = vmatpush.bf16.msra.mxu0 %v1464
      %1486 = vmatpush.bf16.msra.mxu0 %v1463
      %1487 = vmatpush.bf16.msra.mxu0 %v1462
      %1488 = vmatpush.bf16.msra.mxu0 %v1461
      %1489 = vmatmul.bf16.gmra.mxu0 %v1470
      %v1490 = vpop.f32.mrf.mxu0
      %v1491 = vadd.f32 0.0, %v1490
      %v1492 = vpop.f32.mrf.mxu0
      %v1493 = vadd.f32 0.0, %v1492
      %1494 = vmatmul.bf16.gmra.mxu0 %v1473
      %v1495 = vpop.f32.mrf.mxu0
      %v1496 = vadd.f32 0.0, %v1495
      %v1497 = vpop.f32.mrf.mxu0
      %v1498 = vadd.f32 0.0, %v1497
      %1499 = vmatmul.bf16.gmra.mxu0 %v1476
      %v1500 = vpop.f32.mrf.mxu0
      %v1501 = vadd.f32 0.0, %v1500
      %v1502 = vpop.f32.mrf.mxu0
      %v1503 = vadd.f32 0.0, %v1502
      %1504 = vmatmul.bf16.gmra.mxu0 %v1479
      %v1505 = vpop.f32.mrf.mxu0
      %v1506 = vadd.f32 0.0, %v1505
      %v1507 = vpop.f32.mrf.mxu0
      %v1508 = vadd.f32 0.0, %v1507
      %1509 = vdwg.mxu0
      %v1510 = vpack.c.bf16 %v1491, %v1491
      %v1511 = vpack.c.bf16 %v1493, %v1493
      %v1512 = vpack.c.bf16 %v1496, %v1496
      %v1513 = vpack.c.bf16 %v1498, %v1498
      %v1514 = vpack.c.bf16 %v1501, %v1501
      %v1515 = vpack.c.bf16 %v1503, %v1503
      %v1516 = vpack.c.bf16 %v1506, %v1506
      %v1517 = vpack.c.bf16 %v1508, %v1508
      %vm1518 = vcmask 257024
      %1519 = vst.msk [vmem:[%s298] sm:$0xf] %vm1518, %v1510
      %1520 = vst.msk [vmem:[%s298 + $0x4] sm:$0xf] %vm1518, %v1511
      %1521 = vst.msk [vmem:[%s298 + $0x8] sm:$0xf] %vm1518, %v1512
      %1522 = vst.msk [vmem:[%s298 + $0xc] sm:$0xf] %vm1518, %v1513
      %1523 = vst.msk [vmem:[%s298 + $0x10] sm:$0xf] %vm1518, %v1514
      %1524 = vst.msk [vmem:[%s298 + $0x14] sm:$0xf] %vm1518, %v1515
      %1525 = vst.msk [vmem:[%s298 + $0x18] sm:$0xf] %vm1518, %v1516
      %1526 = vst.msk [vmem:[%s298 + $0x1c] sm:$0xf] %vm1518, %v1517
      %p1527 = scmp.lt.s32.totalorder %s18, 1
      %s1528 = scalar_select %p1527, %s18, 1
      %s1529 = smul.addr %s1528, 8
      %s1530 = smul.addr %s1529, 4
      %s1531 = scalar_lea.vmem %s7, %s1530
      // Predicated region
      $region49: #{merge_forward.6} parent=47 // pred_check
        %p1532 = pneg %p193
      $region50: #{merge_forward.6} parent=47 // pred_check_branch
        %1534 = sbr.rel (%p1532) target = $region52
      $region51: #{merge_forward.6} parent=47 // pred_region
        _
      $region52: #{merge_forward.6} parent=47 // pred_fallthru
        _
    $region48: #{merge_forward.6} parent=5 // pred_fallthru
      _
    %p1535 = scmp.le.s32.totalorder 2, %s13
    // Predicated region
    $region53: #{merge_forward.6} parent=5 // pred_check
      %p1536 = pneg %p1535
    $region54: #{merge_forward.6} parent=5 // pred_check_branch
      %1538 = sbr.rel (%p1536) target = $region56
    $region55: #{merge_forward.6} parent=5 // pred_region
      %s1539 = ssub.s32 %s13, 2
      // Predicated region
      $region57: #{merge_forward.6} parent=55 // pred_check
        %p1540 = pneg %p199
      $region58: #{merge_forward.6} parent=55 // pred_check_branch
        %1542 = sbr.rel (%p1540) target = $region60
      $region59: #{merge_forward.6} parent=55 // pred_region
        %p1543 = scmp.lt.s32.totalorder %s19, 1
        %s1544 = scalar_select %p1543, %s19, 1
        %s1545 = smul.addr %s1544, 8
        %s1546 = smul.addr %s1545, 4
        %s1547 = scalar_lea.vmem %s7, %s1546
      $region60: #{merge_forward.6} parent=55 // pred_fallthru
        _
    $region56: #{merge_forward.6} parent=5 // pred_fallthru
      _
  $region6: #{merge_forward.6} parent=0 // loop_footer
    %s17 = sadd.s32 1, %s13
  $region7: #{merge_forward.6} parent=0 // loop_footer_branch
    %12 = sbr.rel target = $region3
  $region8: #{merge_forward.6} parent=0 // loop_exit
    _

// kernel: merge_forward.7
$region0: #{merge_forward.7}
  #allocation0 [shape = 'u32[]', space=smem, size = 0x4, offset = 0x4, fixed_abs, tag = 'smem constant byte address 0x4 - core index']
  #allocation1 [shape = 'u32[72,128]{1,0:T(1,128)}', space=vmem, size = 0x9000, scoped, tag = 'internal scratch']
  %s0 = inlined_call_operand.vmem [shape: f32[2,16,16,128], index: 0, kind: input, shape index: {}]
  %s1 = inlined_call_operand.vmem [shape: bf16[2,16,16,32], index: 1, kind: input, shape index: {}]
  %s2 = inlined_call_operand.vmem [shape: bf16[128,32], index: 2, kind: input, shape index: {}]
  %s3 = inlined_call_operand.vmem [shape: f32[1,32], index: 3, kind: input, shape index: {}]
  %s4 = inlined_call_operand.vmem [shape: bf16[288,32], index: 4, kind: input, shape index: {}]
  %s5 = inlined_call_operand.vmem [shape: f32[1,32], index: 5, kind: input, shape index: {}]
  %s6 = inlined_call_operand.vmem [shape: bf16[288,32], index: 6, kind: input, shape index: {}]
  %s7 = inlined_call_operand.vmem [shape: f32[1,32], index: 7, kind: input, shape index: {}]
  %s8 = inlined_call_operand.hbm [shape: f32[2,16,16,32], index: 8, kind: output, shape index: {}]
  %s9 = sld [smem:[#allocation0]]
  $region65: #{merge_forward.7} parent=0
    _
  %s11 = ssub.s32 1, %s9
  %s12 = scalar_select 0, %s11, %s9
  $region1: #{merge_forward.7} parent=0
    #allocation2 [shape = 'u8[262144]{0}', space=vmem, size = 0x40000, scoped, tag = 'output window, operand 0']
    #allocation3 [shape = 's32[2]{0}', space=sflag, size = 0x8, scoped, tag = 'scoped memory for merge_forward.7']
    %13 = vsyncpa [#allocation3], 0
    %s14 = scalar_lea.sflag [#allocation3], 1
    %15 = vsyncpa %s14, 0
    loop: start=0, step=1, limit=4
    $region2: #{merge_forward.7} parent=1 // loop_pre_header
      _
    $region3: #{merge_forward.7} parent=1 // loop_header
      %s17 = sphi 0, %s21
      %p18 = scmp.ge.s32.totalorder %s17, 4
      %s27 = sphi 0, %s29
      %s30 = sphi 0, %s27
      %s31 = sphi 0, %s30
      %s47 = sphi 0, %s31
      %s53 = sphi 0, %s55
      %s56 = sphi 0, %s53
      %s57 = sphi 0, %s56
      %s73 = sphi 0, %s57
      %s77 = sphi 0, %s77
      %s79 = sphi 0, %s77
      %s80 = sphi 0, %s79
      %s94 = sphi 0, %s80
      %s98 = sphi 0, %s98
      %s100 = sphi 0, %s98
      %s101 = sphi 0, %s100
      %s115 = sphi 0, %s101
      %s119 = sphi 0, %s119
      %s121 = sphi 0, %s119
      %s122 = sphi 0, %s121
      %s136 = sphi 0, %s122
      %s140 = sphi 0, %s140
      %s142 = sphi 0, %s140
      %s143 = sphi 0, %s142
      %s157 = sphi 0, %s143
      %s161 = sphi 0, %s161
      %s163 = sphi 0, %s161
      %s164 = sphi 0, %s163
      %s178 = sphi 0, %s164
      %s182 = sphi 0, %s182
      %s184 = sphi 0, %s182
      %s185 = sphi 0, %s184
      %s199 = sphi 0, %s185
      %s205 = sphi 0, %s207
      %s208 = sphi 0, %s205
      %s209 = sphi 0, %s208
      %s225 = sphi 0, %s209
    $region4: #{merge_forward.7} parent=1 // loop_header_branch
      %20 = sbr.rel (%p18) target = $region8
    $region5: #{merge_forward.7} parent=1 // loop_body
      %s22 = ssub.s32 %s17, 1
      %s23 = ssub.s32 %s17, 2
      %s24 = sadd.s32 %s17, 1
      %s25 = ssub.s32 %s17, %s24
      %p26 = scmp.eq.s32.totalorder %s25, 0
      %s28 = sadd.s32 %s27, 1
      %s29 = scalar_select %p26, %s27, %s28
      %p32 = pneg %p26
      %p33 = scmp.eq.s32.totalorder %s17, 1
      %p34 = por %p32, %p33
      %p35 = scmp.ne.s32.totalorder %s27, %s30
      %p36 = scmp.eq.s32.totalorder %s17, 0
      %p37 = por %p35, %p36
      %p38 = scmp.ne.s32.totalorder %s27, %s30
      %p39 = scmp.eq.s32.totalorder %s22, 1
      %p40 = por %p38, %p39
      %p41 = scmp.ne.s32.totalorder %s30, %s31
      %p42 = scmp.eq.s32.totalorder %s22, 0
      %p43 = por %p41, %p42
      %p44 = scmp.ne.s32.totalorder %s30, %s31
      %p45 = scmp.eq.s32.totalorder %s23, 1
      %p46 = por %p44, %p45
      %p48 = scmp.ne.s32.totalorder %s31, %s47
      %p49 = scmp.eq.s32.totalorder %s23, 0
      %p50 = por %p48, %p49
      %s51 = ssub.s32 %s17, %s24
      %p52 = scmp.eq.s32.totalorder %s51, 0
      %s54 = sadd.s32 %s53, 1
      %s55 = scalar_select %p52, %s53, %s54
      %p58 = pneg %p52
      %p59 = scmp.eq.s32.totalorder %s17, 1
      %p60 = por %p58, %p59
      %p61 = scmp.ne.s32.totalorder %s53, %s56
      %p62 = scmp.eq.s32.totalorder %s17, 0
      %p63 = por %p61, %p62
      %p64 = scmp.ne.s32.totalorder %s53, %s56
      %p65 = scmp.eq.s32.totalorder %s22, 1
      %p66 = por %p64, %p65
      %p67 = scmp.ne.s32.totalorder %s56, %s57
      %p68 = scmp.eq.s32.totalorder %s22, 0
      %p69 = por %p67, %p68
      %p70 = scmp.ne.s32.totalorder %s56, %s57
      %p71 = scmp.eq.s32.totalorder %s23, 1
      %p72 = por %p70, %p71
      %p74 = scmp.ne.s32.totalorder %s57, %s73
      %p75 = scmp.eq.s32.totalorder %s23, 0
      %p76 = por %p74, %p75
      %s78 = sadd.s32 %s77, 1
      %p81 = scmp.eq.s32.totalorder %s17, 1
      %p82 = scmp.ne.s32.totalorder %s77, %s79
      %p83 = scmp.eq.s32.totalorder %s17, 0
      %p84 = por %p82, %p83
      %p85 = scmp.ne.s32.totalorder %s77, %s79
      %p86 = scmp.eq.s32.totalorder %s22, 1
      %p87 = por %p85, %p86
      %p88 = scmp.ne.s32.totalorder %s79, %s80
      %p89 = scmp.eq.s32.totalorder %s22, 0
      %p90 = por %p88, %p89
      %p91 = scmp.ne.s32.totalorder %s79, %s80
      %p92 = scmp.eq.s32.totalorder %s23, 1
      %p93 = por %p91, %p92
      %p95 = scmp.ne.s32.totalorder %s80, %s94
      %p96 = scmp.eq.s32.totalorder %s23, 0
      %p97 = por %p95, %p96
      %s99 = sadd.s32 %s98, 1
      %p102 = scmp.eq.s32.totalorder %s17, 1
      %p103 = scmp.ne.s32.totalorder %s98, %s100
      %p104 = scmp.eq.s32.totalorder %s17, 0
      %p105 = por %p103, %p104
      %p106 = scmp.ne.s32.totalorder %s98, %s100
      %p107 = scmp.eq.s32.totalorder %s22, 1
      %p108 = por %p106, %p107
      %p109 = scmp.ne.s32.totalorder %s100, %s101
      %p110 = scmp.eq.s32.totalorder %s22, 0
      %p111 = por %p109, %p110
      %p112 = scmp.ne.s32.totalorder %s100, %s101
      %p113 = scmp.eq.s32.totalorder %s23, 1
      %p114 = por %p112, %p113
      %p116 = scmp.ne.s32.totalorder %s101, %s115
      %p117 = scmp.eq.s32.totalorder %s23, 0
      %p118 = por %p116, %p117
      %s120 = sadd.s32 %s119, 1
      %p123 = scmp.eq.s32.totalorder %s17, 1
      %p124 = scmp.ne.s32.totalorder %s119, %s121
      %p125 = scmp.eq.s32.totalorder %s17, 0
      %p126 = por %p124, %p125
      %p127 = scmp.ne.s32.totalorder %s119, %s121
      %p128 = scmp.eq.s32.totalorder %s22, 1
      %p129 = por %p127, %p128
      %p130 = scmp.ne.s32.totalorder %s121, %s122
      %p131 = scmp.eq.s32.totalorder %s22, 0
      %p132 = por %p130, %p131
      %p133 = scmp.ne.s32.totalorder %s121, %s122
      %p134 = scmp.eq.s32.totalorder %s23, 1
      %p135 = por %p133, %p134
      %p137 = scmp.ne.s32.totalorder %s122, %s136
      %p138 = scmp.eq.s32.totalorder %s23, 0
      %p139 = por %p137, %p138
      %s141 = sadd.s32 %s140, 1
      %p144 = scmp.eq.s32.totalorder %s17, 1
      %p145 = scmp.ne.s32.totalorder %s140, %s142
      %p146 = scmp.eq.s32.totalorder %s17, 0
      %p147 = por %p145, %p146
      %p148 = scmp.ne.s32.totalorder %s140, %s142
      %p149 = scmp.eq.s32.totalorder %s22, 1
      %p150 = por %p148, %p149
      %p151 = scmp.ne.s32.totalorder %s142, %s143
      %p152 = scmp.eq.s32.totalorder %s22, 0
      %p153 = por %p151, %p152
      %p154 = scmp.ne.s32.totalorder %s142, %s143
      %p155 = scmp.eq.s32.totalorder %s23, 1
      %p156 = por %p154, %p155
      %p158 = scmp.ne.s32.totalorder %s143, %s157
      %p159 = scmp.eq.s32.totalorder %s23, 0
      %p160 = por %p158, %p159
      %s162 = sadd.s32 %s161, 1
      %p165 = scmp.eq.s32.totalorder %s17, 1
      %p166 = scmp.ne.s32.totalorder %s161, %s163
      %p167 = scmp.eq.s32.totalorder %s17, 0
      %p168 = por %p166, %p167
      %p169 = scmp.ne.s32.totalorder %s161, %s163
      %p170 = scmp.eq.s32.totalorder %s22, 1
      %p171 = por %p169, %p170
      %p172 = scmp.ne.s32.totalorder %s163, %s164
      %p173 = scmp.eq.s32.totalorder %s22, 0
      %p174 = por %p172, %p173
      %p175 = scmp.ne.s32.totalorder %s163, %s164
      %p176 = scmp.eq.s32.totalorder %s23, 1
      %p177 = por %p175, %p176
      %p179 = scmp.ne.s32.totalorder %s164, %s178
      %p180 = scmp.eq.s32.totalorder %s23, 0
      %p181 = por %p179, %p180
      %s183 = sadd.s32 %s182, 1
      %p186 = scmp.eq.s32.totalorder %s17, 1
      %p187 = scmp.ne.s32.totalorder %s182, %s184
      %p188 = scmp.eq.s32.totalorder %s17, 0
      %p189 = por %p187, %p188
      %p190 = scmp.ne.s32.totalorder %s182, %s184
      %p191 = scmp.eq.s32.totalorder %s22, 1
      %p192 = por %p190, %p191
      %p193 = scmp.ne.s32.totalorder %s184, %s185
      %p194 = scmp.eq.s32.totalorder %s22, 0
      %p195 = por %p193, %p194
      %p196 = scmp.ne.s32.totalorder %s184, %s185
      %p197 = scmp.eq.s32.totalorder %s23, 1
      %p198 = por %p196, %p197
      %p200 = scmp.ne.s32.totalorder %s185, %s199
      %p201 = scmp.eq.s32.totalorder %s23, 0
      %p202 = por %p200, %p201
      %s203 = ssub.s32 %s17, %s24
      %p204 = scmp.eq.s32.totalorder %s203, 0
      %s206 = sadd.s32 %s205, 1
      %s207 = scalar_select %p204, %s205, %s206
      %p210 = pneg %p204
      %p211 = scmp.eq.s32.totalorder %s17, 1
      %p212 = por %p210, %p211
      %p213 = scmp.ne.s32.totalorder %s205, %s208
      %p214 = scmp.eq.s32.totalorder %s17, 0
      %p215 = por %p213, %p214
      %p216 = scmp.ne.s32.totalorder %s205, %s208
      %p217 = scmp.eq.s32.totalorder %s22, 1
      %p218 = por %p216, %p217
      %p219 = scmp.ne.s32.totalorder %s208, %s209
      %p220 = scmp.eq.s32.totalorder %s22, 0
      %p221 = por %p219, %p220
      %p222 = scmp.ne.s32.totalorder %s208, %s209
      %p223 = scmp.eq.s32.totalorder %s23, 1
      %p224 = por %p222, %p223
      %p226 = scmp.ne.s32.totalorder %s209, %s225
      %p227 = scmp.eq.s32.totalorder %s23, 0
      %p228 = por %p226, %p227
      %p229 = scmp.le.s32.totalorder 1, %s17
      %p230 = scmp.lt.s32.totalorder %s17, 3
      %p231 = pnand %p229, %p230
      %p232 = pneg %p231
      // Predicated region
      $region9: #{merge_forward.7} parent=5 // pred_check
        _
      $region10: #{merge_forward.7} parent=5 // pred_check_branch
        %234 = sbr.rel (%p231) target = $region12
      $region11: #{merge_forward.7} parent=5 // pred_region
        %s235 = ssub.s32 %s17, 1
        // Predicated region
        $region13: #{merge_forward.7} parent=11 // pred_check
          %p236 = pneg %p90
        $region14: #{merge_forward.7} parent=11 // pred_check_branch
          %238 = sbr.rel (%p236) target = $region16
        $region15: #{merge_forward.7} parent=11 // pred_region
          _
        $region16: #{merge_forward.7} parent=11 // pred_fallthru
          _
        // Predicated region
        $region17: #{merge_forward.7} parent=11 // pred_check
          %p239 = pneg %p111
        $region18: #{merge_forward.7} parent=11 // pred_check_branch
          %241 = sbr.rel (%p239) target = $region20
        $region19: #{merge_forward.7} parent=11 // pred_region
          _
        $region20: #{merge_forward.7} parent=11 // pred_fallthru
          _
        // Predicated region
        $region21: #{merge_forward.7} parent=11 // pred_check
          %p242 = pneg %p132
        $region22: #{merge_forward.7} parent=11 // pred_check_branch
          %244 = sbr.rel (%p242) target = $region24
        $region23: #{merge_forward.7} parent=11 // pred_region
          _
        $region24: #{merge_forward.7} parent=11 // pred_fallthru
          _
        // Predicated region
        $region25: #{merge_forward.7} parent=11 // pred_check
          %p245 = pneg %p153
        $region26: #{merge_forward.7} parent=11 // pred_check_branch
          %247 = sbr.rel (%p245) target = $region28
        $region27: #{merge_forward.7} parent=11 // pred_region
          _
        $region28: #{merge_forward.7} parent=11 // pred_fallthru
          _
        // Predicated region
        $region29: #{merge_forward.7} parent=11 // pred_check
          %p248 = pneg %p174
        $region30: #{merge_forward.7} parent=11 // pred_check_branch
          %250 = sbr.rel (%p248) target = $region32
        $region31: #{merge_forward.7} parent=11 // pred_region
          _
        $region32: #{merge_forward.7} parent=11 // pred_fallthru
          _
        // Predicated region
        $region33: #{merge_forward.7} parent=11 // pred_check
          %p251 = pneg %p195
        $region34: #{merge_forward.7} parent=11 // pred_check_branch
          %253 = sbr.rel (%p251) target = $region36
        $region35: #{merge_forward.7} parent=11 // pred_region
          _
        $region36: #{merge_forward.7} parent=11 // pred_fallthru
          _
      $region12: #{merge_forward.7} parent=5 // pred_fallthru
        _
      %p254 = scmp.lt.s32.totalorder %s17, 2
      // Predicated region
      $region37: #{merge_forward.7} parent=5 // pred_check
        %p255 = pneg %p254
      $region38: #{merge_forward.7} parent=5 // pred_check_branch
        %257 = sbr.rel (%p255) target = $region40
      $region39: #{merge_forward.7} parent=5 // pred_region
        // Predicated region
        $region41: #{merge_forward.7} parent=39 // pred_check
          %p258 = pneg %p37
        $region42: #{merge_forward.7} parent=39 // pred_check_branch
          %260 = sbr.rel (%p258) target = $region44
        $region43: #{merge_forward.7} parent=39 // pred_region
          %p261 = scmp.lt.s32.totalorder %s17, 1
          %s262 = scalar_select %p261, %s17, 1
          %s263 = smul.addr %s262, 32
          %s264 = smul.addr %s263, 8
          %s265 = scalar_lea.vmem %s0, %s264
        $region44: #{merge_forward.7} parent=39 // pred_fallthru
          _
        // Predicated region
        $region45: #{merge_forward.7} parent=39 // pred_check
          %p266 = pneg %p63
        $region46: #{merge_forward.7} parent=39 // pred_check_branch
          %268 = sbr.rel (%p266) target = $region48
        $region47: #{merge_forward.7} parent=39 // pred_region
          %p269 = scmp.lt.s32.totalorder %s17, 1
          %s270 = scalar_select %p269, %s17, 1
          %s271 = smul.addr %s270, 32
          %s272 = smul.addr %s271, 4
          %s273 = scalar_lea.vmem %s1, %s272
        $region48: #{merge_forward.7} parent=39 // pred_fallthru
          _
      $region40: #{merge_forward.7} parent=5 // pred_fallthru
        _
      %p274 = scmp.le.s32.totalorder 1, %s17
      %p275 = scmp.lt.s32.totalorder %s17, 3
      %p276 = pnand %p274, %p275
      %p277 = pneg %p276
      // Predicated region
      $region49: #{merge_forward.7} parent=5 // pred_check
        _
      $region50: #{merge_forward.7} parent=5 // pred_check_branch
        %279 = sbr.rel (%p276) target = $region52
      $region51: #{merge_forward.7} parent=5 // pred_region
        %s280 = ssub.s32 %s17, 1
        %p281 = scmp.lt.s32.totalorder %s22, 1
        %s282 = scalar_select %p281, %s22, 1
        %s283 = smul.addr %s282, 32
        %s284 = smul.addr %s283, 8
        %s285 = scalar_lea.vmem %s0, %s284
        %p286 = pneg %p43
        %p287 = pneg %p40
        %p288 = scmp.lt.s32.totalorder %s22, 1
        %s289 = scalar_select %p288, %s22, 1
        %s290 = smul.addr %s289, 32
        %s291 = smul.addr %s290, 4
        %s292 = scalar_lea.vmem %s1, %s291
        %p293 = pneg %p69
        %p294 = pneg %p66
        %p295 = pneg %p90
        %p296 = pneg %p87
        %p297 = pneg %p111
        %p298 = pneg %p108
        %p299 = pneg %p132
        %p300 = pneg %p129
        %p301 = pneg %p153
        %p302 = pneg %p150
        %p303 = pneg %p174
        %p304 = pneg %p171
        %p305 = pneg %p195
        %p306 = pneg %p192
        %p307 = pneg %p221
        %p308 = pneg %p218
        %s309 = sand.u32 %s208, 1
        %s310 = scalar_lea.sflag [#allocation3], %s309
        %s311 = sand.u32 %s208, 1
        %s312 = smul.addr %s311, 256
        %s313 = scalar_lea.vmem [#allocation2], %s312
        %p314 = scmp.lt.s32.totalorder %s22, 1
        %s315 = scalar_select %p314, %s22, 1
        %s316 = smul.addr %s315, 32
        %s317 = smul.addr %s316, 8
        %s318 = scalar_lea.vmem %s0, %s317
        %p319 = scmp.lt.s32.totalorder %s22, 1
        %s320 = scalar_select %p319, %s22, 1
        %s321 = smul.addr %s320, 32
        %s322 = smul.addr %s321, 4
        %s323 = scalar_lea.vmem %s1, %s322
        %v325 = vld [vmem:[%s318] sm:$0xff]
        %v326 = vld [vmem:[%s318 + $0x8] sm:$0xff]
        %v327 = vld [vmem:[%s318 + $0x10] sm:$0xff]
        %v328 = vld [vmem:[%s318 + $0x18] sm:$0xff]
        %v329 = vld [vmem:[%s318 + $0x20] sm:$0xff]
        %v330 = vld [vmem:[%s318 + $0x28] sm:$0xff]
        %v331 = vld [vmem:[%s318 + $0x30] sm:$0xff]
        %v332 = vld [vmem:[%s318 + $0x38] sm:$0xff]
        %v333 = vld [vmem:[%s318 + $0x40] sm:$0xff]
        %v334 = vld [vmem:[%s318 + $0x48] sm:$0xff]
        %v335 = vld [vmem:[%s318 + $0x50] sm:$0xff]
        %v336 = vld [vmem:[%s318 + $0x58] sm:$0xff]
        %v337 = vld [vmem:[%s318 + $0x60] sm:$0xff]
        %v338 = vld [vmem:[%s318 + $0x68] sm:$0xff]
        %v339 = vld [vmem:[%s318 + $0x70] sm:$0xff]
        %v340 = vld [vmem:[%s318 + $0x78] sm:$0xff]
        %v341 = vld [vmem:[%s318 + $0x80] sm:$0xff]
        %v342 = vld [vmem:[%s318 + $0x88] sm:$0xff]
        %v343 = vld [vmem:[%s318 + $0x90] sm:$0xff]
        %v344 = vld [vmem:[%s318 + $0x98] sm:$0xff]
        %v345 = vld [vmem:[%s318 + $0xa0] sm:$0xff]
        %v346 = vld [vmem:[%s318 + $0xa8] sm:$0xff]
        %v347 = vld [vmem:[%s318 + $0xb0] sm:$0xff]
        %v348 = vld [vmem:[%s318 + $0xb8] sm:$0xff]
        %v349 = vld [vmem:[%s318 + $0xc0] sm:$0xff]
        %v350 = vld [vmem:[%s318 + $0xc8] sm:$0xff]
        %v351 = vld [vmem:[%s318 + $0xd0] sm:$0xff]
        %v352 = vld [vmem:[%s318 + $0xd8] sm:$0xff]
        %v353 = vld [vmem:[%s318 + $0xe0] sm:$0xff]
        %v354 = vld [vmem:[%s318 + $0xe8] sm:$0xff]
        %v355 = vld [vmem:[%s318 + $0xf0] sm:$0xff]
        %v356 = vld [vmem:[%s318 + $0xf8] sm:$0xff]
        %v357 = vpack.c.bf16 %v325, %v325
        %v358 = vpack.c.bf16 %v326, %v326
        %v359 = vpack.c.bf16 %v327, %v327
        %v360 = vpack.c.bf16 %v328, %v328
        %v361 = vpack.c.bf16 %v329, %v329
        %v362 = vpack.c.bf16 %v330, %v330
        %v363 = vpack.c.bf16 %v331, %v331
        %v364 = vpack.c.bf16 %v332, %v332
        %v365 = vpack.c.bf16 %v333, %v333
        %v366 = vpack.c.bf16 %v334, %v334
        %v367 = vpack.c.bf16 %v335, %v335
        %v368 = vpack.c.bf16 %v336, %v336
        %v369 = vpack.c.bf16 %v337, %v337
        %v370 = vpack.c.bf16 %v338, %v338
        %v371 = vpack.c.bf16 %v339, %v339
        %v372 = vpack.c.bf16 %v340, %v340
        %v373 = vpack.c.bf16 %v341, %v341
        %v374 = vpack.c.bf16 %v342, %v342
        %v375 = vpack.c.bf16 %v343, %v343
        %v376 = vpack.c.bf16 %v344, %v344
        %v377 = vpack.c.bf16 %v345, %v345
        %v378 = vpack.c.bf16 %v346, %v346
        %v379 = vpack.c.bf16 %v347, %v347
        %v380 = vpack.c.bf16 %v348, %v348
        %v381 = vpack.c.bf16 %v349, %v349
        %v382 = vpack.c.bf16 %v350, %v350
        %v383 = vpack.c.bf16 %v351, %v351
        %v384 = vpack.c.bf16 %v352, %v352
        %v385 = vpack.c.bf16 %v353, %v353
        %v386 = vpack.c.bf16 %v354, %v354
        %v387 = vpack.c.bf16 %v355, %v355
        %v388 = vpack.c.bf16 %v356, %v356
        %v389 = vld [vmem:[%s2] sm:$0xf]
        %v390 = vld [vmem:[%s2 + $0x4] sm:$0xf]
        %v391 = vld [vmem:[%s2 + $0x8] sm:$0xf]
        %v392 = vld [vmem:[%s2 + $0xc] sm:$0xf]
        %v393 = vld [vmem:[%s2 + $0x10] sm:$0xf]
        %v394 = vld [vmem:[%s2 + $0x14] sm:$0xf]
        %v395 = vld [vmem:[%s2 + $0x18] sm:$0xf]
        %v396 = vld [vmem:[%s2 + $0x1c] sm:$0xf]
        %v397 = vld [vmem:[%s2 + $0x20] sm:$0xf]
        %v398 = vld [vmem:[%s2 + $0x24] sm:$0xf]
        %v399 = vld [vmem:[%s2 + $0x28] sm:$0xf]
        %v400 = vld [vmem:[%s2 + $0x2c] sm:$0xf]
        %v401 = vld [vmem:[%s2 + $0x30] sm:$0xf]
        %v402 = vld [vmem:[%s2 + $0x34] sm:$0xf]
        %v403 = vld [vmem:[%s2 + $0x38] sm:$0xf]
        %v404 = vld [vmem:[%s2 + $0x3c] sm:$0xf]
        %v405 = vld [vmem:[%s323] sm:$0xf]
        %v406 = vld [vmem:[%s323 + $0x4] sm:$0xf]
        %v407 = vld [vmem:[%s323 + $0x8] sm:$0xf]
        %v408 = vld [vmem:[%s323 + $0xc] sm:$0xf]
        %v409 = vld [vmem:[%s323 + $0x10] sm:$0xf]
        %v410 = vld [vmem:[%s323 + $0x14] sm:$0xf]
        %v411 = vld [vmem:[%s323 + $0x18] sm:$0xf]
        %v412 = vld [vmem:[%s323 + $0x1c] sm:$0xf]
        %v413 = vld [vmem:[%s323 + $0x20] sm:$0xf]
        %v414 = vld [vmem:[%s323 + $0x24] sm:$0xf]
        %v415 = vld [vmem:[%s323 + $0x28] sm:$0xf]
        %v416 = vld [vmem:[%s323 + $0x2c] sm:$0xf]
        %v417 = vld [vmem:[%s323 + $0x30] sm:$0xf]
        %v418 = vld [vmem:[%s323 + $0x34] sm:$0xf]
        %v419 = vld [vmem:[%s323 + $0x38] sm:$0xf]
        %v420 = vld [vmem:[%s323 + $0x3c] sm:$0xf]
        %v421 = vld [vmem:[%s323 + $0x40] sm:$0xf]
        %v422 = vld [vmem:[%s323 + $0x44] sm:$0xf]
        %v423 = vld [vmem:[%s323 + $0x48] sm:$0xf]
        %v424 = vld [vmem:[%s323 + $0x4c] sm:$0xf]
        %v425 = vld [vmem:[%s323 + $0x50] sm:$0xf]
        %v426 = vld [vmem:[%s323 + $0x54] sm:$0xf]
        %v427 = vld [vmem:[%s323 + $0x58] sm:$0xf]
        %v428 = vld [vmem:[%s323 + $0x5c] sm:$0xf]
        %v429 = vld [vmem:[%s323 + $0x60] sm:$0xf]
        %v430 = vld [vmem:[%s323 + $0x64] sm:$0xf]
        %v431 = vld [vmem:[%s323 + $0x68] sm:$0xf]
        %v432 = vld [vmem:[%s323 + $0x6c] sm:$0xf]
        %v433 = vld [vmem:[%s323 + $0x70] sm:$0xf]
        %v434 = vld [vmem:[%s323 + $0x74] sm:$0xf]
        %v435 = vld [vmem:[%s323 + $0x78] sm:$0xf]
        %v436 = vld [vmem:[%s323 + $0x7c] sm:$0xf]
        %v437 = vunpack.c.l.bf16 %v405
        %v438 = vunpack.c.l.bf16 %v406
        %v439 = vunpack.c.l.bf16 %v407
        %v440 = vunpack.c.l.bf16 %v408
        %v441 = vunpack.c.l.bf16 %v409
        %v442 = vunpack.c.l.bf16 %v410
        %v443 = vunpack.c.l.bf16 %v411
        %v444 = vunpack.c.l.bf16 %v412
        %v445 = vunpack.c.l.bf16 %v413
        %v446 = vunpack.c.l.bf16 %v414
        %v447 = vunpack.c.l.bf16 %v415
        %v448 = vunpack.c.l.bf16 %v416
        %v449 = vunpack.c.l.bf16 %v417
        %v450 = vunpack.c.l.bf16 %v418
        %v451 = vunpack.c.l.bf16 %v419
        %v452 = vunpack.c.l.bf16 %v420
        %v453 = vunpack.c.l.bf16 %v421
        %v454 = vunpack.c.l.bf16 %v422
        %v455 = vunpack.c.l.bf16 %v423
        %v456 = vunpack.c.l.bf16 %v424
        %v457 = vunpack.c.l.bf16 %v425
        %v458 = vunpack.c.l.bf16 %v426
        %v459 = vunpack.c.l.bf16 %v427
        %v460 = vunpack.c.l.bf16 %v428
        %v461 = vunpack.c.l.bf16 %v429
        %v462 = vunpack.c.l.bf16 %v430
        %v463 = vunpack.c.l.bf16 %v431
        %v464 = vunpack.c.l.bf16 %v432
        %v465 = vunpack.c.l.bf16 %v433
        %v466 = vunpack.c.l.bf16 %v434
        %v467 = vunpack.c.l.bf16 %v435
        %v468 = vunpack.c.l.bf16 %v436
        %v501 = vunpack.c.l.b16 %v357
        %v502 = vunpack.c.l.b16 %v358
        %v503 = vunpack.c.l.b16 %v359
        %v504 = vunpack.c.l.b16 %v360
        %v505 = vunpack.c.l.b16 %v361
        %v506 = vunpack.c.l.b16 %v362
        %v507 = vunpack.c.l.b16 %v363
        %v508 = vunpack.c.l.b16 %v364
        %v509 = vunpack.c.l.b16 %v365
        %v510 = vunpack.c.l.b16 %v366
        %v511 = vunpack.c.l.b16 %v367
        %v512 = vunpack.c.l.b16 %v368
        %v513 = vunpack.c.l.b16 %v369
        %v514 = vunpack.c.l.b16 %v370
        %v515 = vunpack.c.l.b16 %v371
        %v516 = vunpack.c.l.b16 %v372
        %v517 = vunpack.c.l.b16 %v373
        %v518 = vunpack.c.l.b16 %v374
        %v519 = vunpack.c.l.b16 %v375
        %v520 = vunpack.c.l.b16 %v376
        %v521 = vunpack.c.l.b16 %v377
        %v522 = vunpack.c.l.b16 %v378
        %v523 = vunpack.c.l.b16 %v379
        %v524 = vunpack.c.l.b16 %v380
        %v525 = vunpack.c.l.b16 %v381
        %v526 = vunpack.c.l.b16 %v382
        %v527 = vunpack.c.l.b16 %v383
        %v528 = vunpack.c.l.b16 %v384
        %v529 = vunpack.c.l.b16 %v385
        %v530 = vunpack.c.l.b16 %v386
        %v531 = vunpack.c.l.b16 %v387
        %v532 = vunpack.c.l.b16 %v388
        %v533 = vpack.c.b16 %v502, %v501
        %v534 = vpack.c.b16 %v504, %v503
        %v535 = vpack.c.b16 %v506, %v505
        %v536 = vpack.c.b16 %v508, %v507
        %v537 = vpack.c.b16 %v510, %v509
        %v538 = vpack.c.b16 %v512, %v511
        %v539 = vpack.c.b16 %v514, %v513
        %v540 = vpack.c.b16 %v516, %v515
        %v541 = vpack.c.b16 %v518, %v517
        %v542 = vpack.c.b16 %v520, %v519
        %v543 = vpack.c.b16 %v522, %v521
        %v544 = vpack.c.b16 %v524, %v523
        %v545 = vpack.c.b16 %v526, %v525
        %v546 = vpack.c.b16 %v528, %v527
        %v547 = vpack.c.b16 %v530, %v529
        %v548 = vpack.c.b16 %v532, %v531
        %v581 = vunpack.c.l.b16 %v389
        %v582 = vunpack.c.l.b16 %v390
        %v583 = vunpack.c.l.b16 %v391
        %v584 = vunpack.c.l.b16 %v392
        %v585 = vunpack.c.l.b16 %v393
        %v586 = vunpack.c.l.b16 %v394
        %v587 = vunpack.c.l.b16 %v395
        %v588 = vunpack.c.l.b16 %v396
        %v589 = vunpack.c.l.b16 %v397
        %v590 = vunpack.c.l.b16 %v398
        %v591 = vunpack.c.l.b16 %v399
        %v592 = vunpack.c.l.b16 %v400
        %v593 = vunpack.c.l.b16 %v401
        %v594 = vunpack.c.l.b16 %v402
        %v595 = vunpack.c.l.b16 %v403
        %v596 = vunpack.c.l.b16 %v404
        %v597 = vpack.c.b16 %v582, %v581
        %v598 = vpack.c.b16 %v584, %v583
        %v599 = vpack.c.b16 %v586, %v585
        %v600 = vpack.c.b16 %v588, %v587
        %v601 = vpack.c.b16 %v590, %v589
        %v602 = vpack.c.b16 %v592, %v591
        %v603 = vpack.c.b16 %v594, %v593
        %v604 = vpack.c.b16 %v596, %v595
        %613 = vmatpush.bf16.msra.mxu0 %v604
        %614 = vmatpush.bf16.msra.mxu0 %v603
        %615 = vmatpush.bf16.msra.mxu0 %v602
        %616 = vmatpush.bf16.msra.mxu0 %v601
        %617 = vmatpush.bf16.msra.mxu0 %v600
        %618 = vmatpush.bf16.msra.mxu0 %v599
        %619 = vmatpush.bf16.msra.mxu0 %v598
        %620 = vmatpush.bf16.msra.mxu0 %v597
        %621 = vmatmul.bf16.gmra.mxu0 %v533
        %v622 = vpop.f32.mrf.mxu0
        %v623 = vadd.f32 %v437, %v622
        %v624 = vpop.f32.mrf.mxu0
        %v625 = vadd.f32 %v438, %v624
        %626 = vmatmul.bf16.gmra.mxu0 %v534
        %v627 = vpop.f32.mrf.mxu0
        %v628 = vadd.f32 %v439, %v627
        %v629 = vpop.f32.mrf.mxu0
        %v630 = vadd.f32 %v440, %v629
        %631 = vmatmul.bf16.gmra.mxu0 %v535
        %v632 = vpop.f32.mrf.mxu0
        %v633 = vadd.f32 %v441, %v632
        %v634 = vpop.f32.mrf.mxu0
        %v635 = vadd.f32 %v442, %v634
        %636 = vmatmul.bf16.gmra.mxu0 %v536
        %v637 = vpop.f32.mrf.mxu0
        %v638 = vadd.f32 %v443, %v637
        %v639 = vpop.f32.mrf.mxu0
        %v640 = vadd.f32 %v444, %v639
        %641 = vmatmul.bf16.gmra.mxu0 %v537
        %v642 = vpop.f32.mrf.mxu0
        %v643 = vadd.f32 %v445, %v642
        %v644 = vpop.f32.mrf.mxu0
        %v645 = vadd.f32 %v446, %v644
        %646 = vmatmul.bf16.gmra.mxu0 %v538
        %v647 = vpop.f32.mrf.mxu0
        %v648 = vadd.f32 %v447, %v647
        %v649 = vpop.f32.mrf.mxu0
        %v650 = vadd.f32 %v448, %v649
        %651 = vmatmul.bf16.gmra.mxu0 %v539
        %v652 = vpop.f32.mrf.mxu0
        %v653 = vadd.f32 %v449, %v652
        %v654 = vpop.f32.mrf.mxu0
        %v655 = vadd.f32 %v450, %v654
        %656 = vmatmul.bf16.gmra.mxu0 %v540
        %v657 = vpop.f32.mrf.mxu0
        %v658 = vadd.f32 %v451, %v657
        %v659 = vpop.f32.mrf.mxu0
        %v660 = vadd.f32 %v452, %v659
        %661 = vmatmul.bf16.gmra.mxu0 %v541
        %v662 = vpop.f32.mrf.mxu0
        %v663 = vadd.f32 %v453, %v662
        %v664 = vpop.f32.mrf.mxu0
        %v665 = vadd.f32 %v454, %v664
        %666 = vmatmul.bf16.gmra.mxu0 %v542
        %v667 = vpop.f32.mrf.mxu0
        %v668 = vadd.f32 %v455, %v667
        %v669 = vpop.f32.mrf.mxu0
        %v670 = vadd.f32 %v456, %v669
        %671 = vmatmul.bf16.gmra.mxu0 %v543
        %v672 = vpop.f32.mrf.mxu0
        %v673 = vadd.f32 %v457, %v672
        %v674 = vpop.f32.mrf.mxu0
        %v675 = vadd.f32 %v458, %v674
        %676 = vmatmul.bf16.gmra.mxu0 %v544
        %v677 = vpop.f32.mrf.mxu0
        %v678 = vadd.f32 %v459, %v677
        %v679 = vpop.f32.mrf.mxu0
        %v680 = vadd.f32 %v460, %v679
        %681 = vmatmul.bf16.gmra.mxu0 %v545
        %v682 = vpop.f32.mrf.mxu0
        %v683 = vadd.f32 %v461, %v682
        %v684 = vpop.f32.mrf.mxu0
        %v685 = vadd.f32 %v462, %v684
        %686 = vmatmul.bf16.gmra.mxu0 %v546
        %v687 = vpop.f32.mrf.mxu0
        %v688 = vadd.f32 %v463, %v687
        %v689 = vpop.f32.mrf.mxu0
        %v690 = vadd.f32 %v464, %v689
        %691 = vmatmul.bf16.gmra.mxu0 %v547
        %v692 = vpop.f32.mrf.mxu0
        %v693 = vadd.f32 %v465, %v692
        %v694 = vpop.f32.mrf.mxu0
        %v695 = vadd.f32 %v466, %v694
        %696 = vmatmul.bf16.gmra.mxu0 %v548
        %v697 = vpop.f32.mrf.mxu0
        %v698 = vadd.f32 %v467, %v697
        %v699 = vpop.f32.mrf.mxu0
        %v700 = vadd.f32 %v468, %v699
        %701 = vdwg.mxu0
        %v702 = vld [vmem:[%s3] sm:$0x1]
        %v704 = vperm.slane %v702, 0
        %v706 = vadd.f32 %v623, %v704
        %v707 = vadd.f32 %v625, %v704
        %v708 = vadd.f32 %v628, %v704
        %v709 = vadd.f32 %v630, %v704
        %v710 = vadd.f32 %v633, %v704
        %v711 = vadd.f32 %v635, %v704
        %v712 = vadd.f32 %v638, %v704
        %v713 = vadd.f32 %v640, %v704
        %v714 = vadd.f32 %v643, %v704
        %v715 = vadd.f32 %v645, %v704
        %v716 = vadd.f32 %v648, %v704
        %v717 = vadd.f32 %v650, %v704
        %v718 = vadd.f32 %v653, %v704
        %v719 = vadd.f32 %v655, %v704
        %v720 = vadd.f32 %v658, %v704
        %v721 = vadd.f32 %v660, %v704
        %v722 = vadd.f32 %v663, %v704
        %v723 = vadd.f32 %v665, %v704
        %v724 = vadd.f32 %v668, %v704
        %v725 = vadd.f32 %v670, %v704
        %v726 = vadd.f32 %v673, %v704
        %v727 = vadd.f32 %v675, %v704
        %v728 = vadd.f32 %v678, %v704
        %v729 = vadd.f32 %v680, %v704
        %v730 = vadd.f32 %v683, %v704
        %v731 = vadd.f32 %v685, %v704
        %v732 = vadd.f32 %v688, %v704
        %v733 = vadd.f32 %v690, %v704
        %v734 = vadd.f32 %v693, %v704
        %v735 = vadd.f32 %v695, %v704
        %v736 = vadd.f32 %v698, %v704
        %v737 = vadd.f32 %v700, %v704
        %v738 = vmax.f32 %v706, 0.0
        %v739 = vmax.f32 %v707, 0.0
        %v740 = vmax.f32 %v708, 0.0
        %v741 = vmax.f32 %v709, 0.0
        %v742 = vmax.f32 %v710, 0.0
        %v743 = vmax.f32 %v711, 0.0
        %v744 = vmax.f32 %v712, 0.0
        %v745 = vmax.f32 %v713, 0.0
        %v746 = vmax.f32 %v714, 0.0
        %v747 = vmax.f32 %v715, 0.0
        %v748 = vmax.f32 %v716, 0.0
        %v749 = vmax.f32 %v717, 0.0
        %v750 = vmax.f32 %v718, 0.0
        %v751 = vmax.f32 %v719, 0.0
        %v752 = vmax.f32 %v720, 0.0
        %v753 = vmax.f32 %v721, 0.0
        %v754 = vmax.f32 %v722, 0.0
        %v755 = vmax.f32 %v723, 0.0
        %v756 = vmax.f32 %v724, 0.0
        %v757 = vmax.f32 %v725, 0.0
        %v758 = vmax.f32 %v726, 0.0
        %v759 = vmax.f32 %v727, 0.0
        %v760 = vmax.f32 %v728, 0.0
        %v761 = vmax.f32 %v729, 0.0
        %v762 = vmax.f32 %v730, 0.0
        %v763 = vmax.f32 %v731, 0.0
        %v764 = vmax.f32 %v732, 0.0
        %v765 = vmax.f32 %v733, 0.0
        %v766 = vmax.f32 %v734, 0.0
        %v767 = vmax.f32 %v735, 0.0
        %v768 = vmax.f32 %v736, 0.0
        %v769 = vmax.f32 %v737, 0.0
        %v770 = vld [vmem:[%s4] sm:$0xf]
        %v771 = vld [vmem:[%s4 + $0x4] sm:$0xf]
        %v772 = vld [vmem:[%s4 + $0x8] sm:$0xf]
        %v773 = vld [vmem:[%s4 + $0xc] sm:$0xf]
        %v774 = vld [vmem:[%s4 + $0x10] sm:$0xf]
        %v775 = vld [vmem:[%s4 + $0x14] sm:$0xf]
        %v776 = vld [vmem:[%s4 + $0x18] sm:$0xf]
        %v777 = vld [vmem:[%s4 + $0x1c] sm:$0xf]
        %v778 = vld [vmem:[%s4 + $0x20] sm:$0xf]
        %v779 = vld [vmem:[%s4 + $0x24] sm:$0xf]
        %v780 = vld [vmem:[%s4 + $0x28] sm:$0xf]
        %v781 = vld [vmem:[%s4 + $0x2c] sm:$0xf]
        %v782 = vld [vmem:[%s4 + $0x30] sm:$0xf]
        %v783 = vld [vmem:[%s4 + $0x34] sm:$0xf]
        %v784 = vld [vmem:[%s4 + $0x38] sm:$0xf]
        %v785 = vld [vmem:[%s4 + $0x3c] sm:$0xf]
        %v786 = vld [vmem:[%s4 + $0x40] sm:$0xf]
        %v787 = vld [vmem:[%s4 + $0x44] sm:$0xf]
        %v788 = vld [vmem:[%s4 + $0x48] sm:$0xf]
        %v789 = vld [vmem:[%s4 + $0x4c] sm:$0xf]
        %v790 = vld [vmem:[%s4 + $0x50] sm:$0xf]
        %v791 = vld [vmem:[%s4 + $0x54] sm:$0xf]
        %v792 = vld [vmem:[%s4 + $0x58] sm:$0xf]
        %v793 = vld [vmem:[%s4 + $0x5c] sm:$0xf]
        %v794 = vld [vmem:[%s4 + $0x60] sm:$0xf]
        %v795 = vld [vmem:[%s4 + $0x64] sm:$0xf]
        %v796 = vld [vmem:[%s4 + $0x68] sm:$0xf]
        %v797 = vld [vmem:[%s4 + $0x6c] sm:$0xf]
        %v798 = vld [vmem:[%s4 + $0x70] sm:$0xf]
        %v799 = vld [vmem:[%s4 + $0x74] sm:$0xf]
        %v800 = vld [vmem:[%s4 + $0x78] sm:$0xf]
        %v801 = vld [vmem:[%s4 + $0x7c] sm:$0xf]
        %v802 = vld [vmem:[%s4 + $0x80] sm:$0xf]
        %v803 = vld [vmem:[%s4 + $0x84] sm:$0xf]
        %v804 = vld [vmem:[%s4 + $0x88] sm:$0xf]
        %v805 = vld [vmem:[%s4 + $0x8c] sm:$0xf]
        %v806 = vld [vmem:[%s5] sm:$0x1]
        %v807 = vpack.c.bf16 %v738, %v738
        %v808 = vpack.c.bf16 %v739, %v739
        %v809 = vpack.c.bf16 %v740, %v740
        %v810 = vpack.c.bf16 %v741, %v741
        %v811 = vpack.c.bf16 %v742, %v742
        %v812 = vpack.c.bf16 %v743, %v743
        %v813 = vpack.c.bf16 %v744, %v744
        %v814 = vpack.c.bf16 %v745, %v745
        %v815 = vpack.c.bf16 %v746, %v746
        %v816 = vpack.c.bf16 %v747, %v747
        %v817 = vpack.c.bf16 %v748, %v748
        %v818 = vpack.c.bf16 %v749, %v749
        %v819 = vpack.c.bf16 %v750, %v750
        %v820 = vpack.c.bf16 %v751, %v751
        %v821 = vpack.c.bf16 %v752, %v752
        %v822 = vpack.c.bf16 %v753, %v753
        %v823 = vpack.c.bf16 %v754, %v754
        %v824 = vpack.c.bf16 %v755, %v755
        %v825 = vpack.c.bf16 %v756, %v756
        %v826 = vpack.c.bf16 %v757, %v757
        %v827 = vpack.c.bf16 %v758, %v758
        %v828 = vpack.c.bf16 %v759, %v759
        %v829 = vpack.c.bf16 %v760, %v760
        %v830 = vpack.c.bf16 %v761, %v761
        %v831 = vpack.c.bf16 %v762, %v762
        %v832 = vpack.c.bf16 %v763, %v763
        %v833 = vpack.c.bf16 %v764, %v764
        %v834 = vpack.c.bf16 %v765, %v765
        %v835 = vpack.c.bf16 %v766, %v766
        %v836 = vpack.c.bf16 %v767, %v767
        %v837 = vpack.c.bf16 %v768, %v768
        %v838 = vpack.c.bf16 %v769, %v769
        %v871 = vunpack.c.l.b16 %v807
        %v872 = vunpack.c.l.b16 %v808
        %v873 = vunpack.c.l.b16 %v809
        %v874 = vunpack.c.l.b16 %v810
        %v875 = vunpack.c.l.b16 %v811
        %v876 = vunpack.c.l.b16 %v812
        %v877 = vunpack.c.l.b16 %v813
        %v878 = vunpack.c.l.b16 %v814
        %v879 = vunpack.c.l.b16 %v815
        %v880 = vunpack.c.l.b16 %v816
        %v881 = vunpack.c.l.b16 %v817
        %v882 = vunpack.c.l.b16 %v818
        %v883 = vunpack.c.l.b16 %v819
        %v884 = vunpack.c.l.b16 %v820
        %v885 = vunpack.c.l.b16 %v821
        %v886 = vunpack.c.l.b16 %v822
        %v887 = vunpack.c.l.b16 %v823
        %v888 = vunpack.c.l.b16 %v824
        %v889 = vunpack.c.l.b16 %v825
        %v890 = vunpack.c.l.b16 %v826
        %v891 = vunpack.c.l.b16 %v827
        %v892 = vunpack.c.l.b16 %v828
        %v893 = vunpack.c.l.b16 %v829
        %v894 = vunpack.c.l.b16 %v830
        %v895 = vunpack.c.l.b16 %v831
        %v896 = vunpack.c.l.b16 %v832
        %v897 = vunpack.c.l.b16 %v833
        %v898 = vunpack.c.l.b16 %v834
        %v899 = vunpack.c.l.b16 %v835
        %v900 = vunpack.c.l.b16 %v836
        %v901 = vunpack.c.l.b16 %v837
        %v902 = vunpack.c.l.b16 %v838
        %v903 = vpack.c.b16 %v872, %v871
        %v904 = vpack.c.b16 %v874, %v873
        %v905 = vpack.c.b16 %v876, %v875
        %v906 = vpack.c.b16 %v878, %v877
        %v907 = vpack.c.b16 %v880, %v879
        %v908 = vpack.c.b16 %v882, %v881
        %v909 = vpack.c.b16 %v884, %v883
        %v910 = vpack.c.b16 %v886, %v885
        %v911 = vpack.c.b16 %v888, %v887
        %v912 = vpack.c.b16 %v890, %v889
        %v913 = vpack.c.b16 %v892, %v891
        %v914 = vpack.c.b16 %v894, %v893
        %v915 = vpack.c.b16 %v896, %v895
        %v916 = vpack.c.b16 %v898, %v897
        %v917 = vpack.c.b16 %v900, %v899
        %v918 = vpack.c.b16 %v902, %v901
        %v920 = vshrl.u32 0, 16
        %v922 = vrot.slane %v920, 7
        %v923 = vshll.u32 0, 16
        %v925 = vor.u32 %v922, %v923
        %v927 = vshrl.u32 %v903, 16
        %v929 = vrot.slane %v927, 7
        %v930 = vshll.u32 %v903, 16
        %v932 = vor.u32 %v929, %v930
        %v934 = vshrl.u32 %v904, 16
        %v936 = vrot.slane %v934, 7
        %v937 = vshll.u32 %v904, 16
        %v939 = vor.u32 %v936, %v937
        %v941 = vshrl.u32 %v905, 16
        %v943 = vrot.slane %v941, 7
        %v944 = vshll.u32 %v905, 16
        %v946 = vor.u32 %v943, %v944
        %v948 = vshrl.u32 %v906, 16
        %v950 = vrot.slane %v948, 7
        %v951 = vshll.u32 %v906, 16
        %v953 = vor.u32 %v950, %v951
        %v955 = vshrl.u32 %v907, 16
        %v957 = vrot.slane %v955, 7
        %v958 = vshll.u32 %v907, 16
        %v960 = vor.u32 %v957, %v958
        %v962 = vshrl.u32 %v908, 16
        %v964 = vrot.slane %v962, 7
        %v965 = vshll.u32 %v908, 16
        %v967 = vor.u32 %v964, %v965
        %v969 = vshrl.u32 %v909, 16
        %v971 = vrot.slane %v969, 7
        %v972 = vshll.u32 %v909, 16
        %v974 = vor.u32 %v971, %v972
        %v976 = vshrl.u32 %v910, 16
        %v978 = vrot.slane %v976, 7
        %v979 = vshll.u32 %v910, 16
        %v981 = vor.u32 %v978, %v979
        %v983 = vshrl.u32 %v911, 16
        %v985 = vrot.slane %v983, 7
        %v986 = vshll.u32 %v911, 16
        %v988 = vor.u32 %v985, %v986
        %v990 = vshrl.u32 %v912, 16
        %v992 = vrot.slane %v990, 7
        %v993 = vshll.u32 %v912, 16
        %v995 = vor.u32 %v992, %v993
        %v997 = vshrl.u32 %v913, 16
        %v999 = vrot.slane %v997, 7
        %v1000 = vshll.u32 %v913, 16
        %v1002 = vor.u32 %v999, %v1000
        %v1004 = vshrl.u32 %v914, 16
        %v1006 = vrot.slane %v1004, 7
        %v1007 = vshll.u32 %v914, 16
        %v1009 = vor.u32 %v1006, %v1007
        %v1011 = vshrl.u32 %v915, 16
        %v1013 = vrot.slane %v1011, 7
        %v1014 = vshll.u32 %v915, 16
        %v1016 = vor.u32 %v1013, %v1014
        %v1018 = vshrl.u32 %v916, 16
        %v1020 = vrot.slane %v1018, 7
        %v1021 = vshll.u32 %v916, 16
        %v1023 = vor.u32 %v1020, %v1021
        %v1025 = vshrl.u32 %v917, 16
        %v1027 = vrot.slane %v1025, 7
        %v1028 = vshll.u32 %v917, 16
        %v1030 = vor.u32 %v1027, %v1028
        %v1032 = vshrl.u32 %v918, 16
        %v1034 = vrot.slane %v1032, 7
        %v1035 = vshll.u32 %v918, 16
        %v1037 = vor.u32 %v1034, %v1035
        %vm1072 = vcmask 1040384
        %vm1073 = vsmask.f32 256
        %vm1074 = vmand %vm1072, %vm1073
        %v1075 = vsel %vm1074, 0, %v925
        %v1076 = vsel %vm1074, 0, %v932
        %v1077 = vsel %vm1074, 0, %v939
        %v1078 = vsel %vm1074, 0, %v946
        %v1079 = vsel %vm1074, 0, %v953
        %v1080 = vsel %vm1074, 0, %v960
        %v1081 = vsel %vm1074, 0, %v967
        %v1082 = vsel %vm1074, 0, %v974
        %v1083 = vsel %vm1074, 0, %v981
        %v1084 = vsel %vm1074, 0, %v988
        %v1085 = vsel %vm1074, 0, %v995
        %v1086 = vsel %vm1074, 0, %v1002
        %v1087 = vsel %vm1074, 0, %v1009
        %v1088 = vsel %vm1074, 0, %v1016
        %v1089 = vsel %vm1074, 0, %v1023
        %v1090 = vsel %vm1074, 0, %v1030
        %v1091 = vsel %vm1074, 0, %v1037
        %v1092 = vsel %vm1074, %v922, 0
        %v1093 = vsel %vm1074, %v929, 0
        %v1094 = vsel %vm1074, %v936, 0
        %v1095 = vsel %vm1074, %v943, 0
        %v1096 = vsel %vm1074, %v950, 0
        %v1097 = vsel %vm1074, %v957, 0
        %v1098 = vsel %vm1074, %v964, 0
        %v1099 = vsel %vm1074, %v971, 0
        %v1100 = vsel %vm1074, %v978, 0
        %v1101 = vsel %vm1074, %v985, 0
        %v1102 = vsel %vm1074, %v992, 0
        %v1103 = vsel %vm1074, %v999, 0
        %v1104 = vsel %vm1074, %v1006, 0
        %v1105 = vsel %vm1074, %v1013, 0
        %v1106 = vsel %vm1074, %v1020, 0
        %v1107 = vsel %vm1074, %v1027, 0
        %v1108 = vsel %vm1074, %v1034, 0
        %vm1109 = vsmask.f32 7424
        %v1111 = vshrl.u32 %v1075, 16
        %v1113 = vshll.u32 %v1075, 16
        %v1115 = vrot.slane %v1113, 1
        %v1116 = vor.u32 %v1111, %v1115
        %v1118 = vshll.u32 %v1092, 16
        %v1120 = vrot.slane %v1118, 1
        %v1121 = vsel %vm1109, %v1116, %v1120
        %v1123 = vshrl.u32 %v1076, 16
        %v1125 = vshll.u32 %v1076, 16
        %v1127 = vrot.slane %v1125, 1
        %v1128 = vor.u32 %v1123, %v1127
        %v1130 = vshll.u32 %v1093, 16
        %v1132 = vrot.slane %v1130, 1
        %v1133 = vsel %vm1109, %v1128, %v1132
        %v1135 = vshrl.u32 %v1077, 16
        %v1137 = vshll.u32 %v1077, 16
        %v1139 = vrot.slane %v1137, 1
        %v1140 = vor.u32 %v1135, %v1139
        %v1142 = vshll.u32 %v1094, 16
        %v1144 = vrot.slane %v1142, 1
        %v1145 = vsel %vm1109, %v1140, %v1144
        %v1147 = vshrl.u32 %v1078, 16
        %v1149 = vshll.u32 %v1078, 16
        %v1151 = vrot.slane %v1149, 1
        %v1152 = vor.u32 %v1147, %v1151
        %v1154 = vshll.u32 %v1095, 16
        %v1156 = vrot.slane %v1154, 1
        %v1157 = vsel %vm1109, %v1152, %v1156
        %v1159 = vshrl.u32 %v1079, 16
        %v1161 = vshll.u32 %v1079, 16
        %v1163 = vrot.slane %v1161, 1
        %v1164 = vor.u32 %v1159, %v1163
        %v1166 = vshll.u32 %v1096, 16
        %v1168 = vrot.slane %v1166, 1
        %v1169 = vsel %vm1109, %v1164, %v1168
        %v1171 = vshrl.u32 %v1080, 16
        %v1173 = vshll.u32 %v1080, 16
        %v1175 = vrot.slane %v1173, 1
        %v1176 = vor.u32 %v1171, %v1175
        %v1178 = vshll.u32 %v1097, 16
        %v1180 = vrot.slane %v1178, 1
        %v1181 = vsel %vm1109, %v1176, %v1180
        %v1183 = vshrl.u32 %v1081, 16
        %v1185 = vshll.u32 %v1081, 16
        %v1187 = vrot.slane %v1185, 1
        %v1188 = vor.u32 %v1183, %v1187
        %v1190 = vshll.u32 %v1098, 16
        %v1192 = vrot.slane %v1190, 1
        %v1193 = vsel %vm1109, %v1188, %v1192
        %v1195 = vshrl.u32 %v1082, 16
        %v1197 = vshll.u32 %v1082, 16
        %v1199 = vrot.slane %v1197, 1
        %v1200 = vor.u32 %v1195, %v1199
        %v1202 = vshll.u32 %v1099, 16
        %v1204 = vrot.slane %v1202, 1
        %v1205 = vsel %vm1109, %v1200, %v1204
        %v1207 = vshrl.u32 %v1083, 16
        %v1209 = vshll.u32 %v1083, 16
        %v1211 = vrot.slane %v1209, 1
        %v1212 = vor.u32 %v1207, %v1211
        %v1214 = vshll.u32 %v1100, 16
        %v1216 = vrot.slane %v1214, 1
        %v1217 = vsel %vm1109, %v1212, %v1216
        %v1219 = vshrl.u32 %v1084, 16
        %v1221 = vshll.u32 %v1084, 16
        %v1223 = vrot.slane %v1221, 1
        %v1224 = vor.u32 %v1219, %v1223
        %v1226 = vshll.u32 %v1101, 16
        %v1228 = vrot.slane %v1226, 1
        %v1229 = vsel %vm1109, %v1224, %v1228
        %v1231 = vshrl.u32 %v1085, 16
        %v1233 = vshll.u32 %v1085, 16
        %v1235 = vrot.slane %v1233, 1
        %v1236 = vor.u32 %v1231, %v1235
        %v1238 = vshll.u32 %v1102, 16
        %v1240 = vrot.slane %v1238, 1
        %v1241 = vsel %vm1109, %v1236, %v1240
        %v1243 = vshrl.u32 %v1086, 16
        %v1245 = vshll.u32 %v1086, 16
        %v1247 = vrot.slane %v1245, 1
        %v1248 = vor.u32 %v1243, %v1247
        %v1250 = vshll.u32 %v1103, 16
        %v1252 = vrot.slane %v1250, 1
        %v1253 = vsel %vm1109, %v1248, %v1252
        %v1255 = vshrl.u32 %v1087, 16
        %v1257 = vshll.u32 %v1087, 16
        %v1259 = vrot.slane %v1257, 1
        %v1260 = vor.u32 %v1255, %v1259
        %v1262 = vshll.u32 %v1104, 16
        %v1264 = vrot.slane %v1262, 1
        %v1265 = vsel %vm1109, %v1260, %v1264
        %v1267 = vshrl.u32 %v1088, 16
        %v1269 = vshll.u32 %v1088, 16
        %v1271 = vrot.slane %v1269, 1
        %v1272 = vor.u32 %v1267, %v1271
        %v1274 = vshll.u32 %v1105, 16
        %v1276 = vrot.slane %v1274, 1
        %v1277 = vsel %vm1109, %v1272, %v1276
        %v1279 = vshrl.u32 %v1089, 16
        %v1281 = vshll.u32 %v1089, 16
        %v1283 = vrot.slane %v1281, 1
        %v1284 = vor.u32 %v1279, %v1283
        %v1286 = vshll.u32 %v1106, 16
        %v1288 = vrot.slane %v1286, 1
        %v1289 = vsel %vm1109, %v1284, %v1288
        %v1291 = vshrl.u32 %v1090, 16
        %v1293 = vshll.u32 %v1090, 16
        %v1295 = vrot.slane %v1293, 1
        %v1296 = vor.u32 %v1291, %v1295
        %v1298 = vshll.u32 %v1107, 16
        %v1300 = vrot.slane %v1298, 1
        %v1301 = vsel %vm1109, %v1296, %v1300
        %1302 = vrot.lane.b32.xlu0 %v1121, 32
        %v1303 = vpop.permute.xlu0 %1302
        %1304 = vrot.lane.b32.xlu0 %v1133, 32
        %v1305 = vpop.permute.xlu0 %1304
        %1306 = vrot.lane.b32.xlu0 %v1145, 32
        %v1307 = vpop.permute.xlu0 %1306
        %1308 = vrot.lane.b32.xlu0 %v1157, 32
        %v1309 = vpop.permute.xlu0 %1308
        %1310 = vrot.lane.b32.xlu0 %v1169, 32
        %v1311 = vpop.permute.xlu0 %1310
        %1312 = vrot.lane.b32.xlu0 %v1181, 32
        %v1313 = vpop.permute.xlu0 %1312
        %1314 = vrot.lane.b32.xlu0 %v1193, 32
        %v1315 = vpop.permute.xlu0 %1314
        %1316 = vrot.lane.b32.xlu0 %v1205, 32
        %v1317 = vpop.permute.xlu0 %1316
        %1318 = vrot.lane.b32.xlu0 %v1217, 32
        %v1319 = vpop.permute.xlu0 %1318
        %1320 = vrot.lane.b32.xlu0 %v1229, 32
        %v1321 = vpop.permute.xlu0 %1320
        %1322 = vrot.lane.b32.xlu0 %v1241, 32
        %v1323 = vpop.permute.xlu0 %1322
        %1324 = vrot.lane.b32.xlu0 %v1253, 32
        %v1325 = vpop.permute.xlu0 %1324
        %1326 = vrot.lane.b32.xlu0 %v1265, 32
        %v1327 = vpop.permute.xlu0 %1326
        %1328 = vrot.lane.b32.xlu0 %v1277, 32
        %v1329 = vpop.permute.xlu0 %1328
        %1330 = vrot.lane.b32.xlu0 %v1289, 32
        %v1331 = vpop.permute.xlu0 %1330
        %1332 = vrot.lane.b32.xlu0 %v1301, 32
        %v1333 = vpop.permute.xlu0 %1332
        %vm1366 = vcmask 1046528
        %v1367 = vrot.slane %v1075, 1
        %v1368 = vrot.slane %v1092, 1
        %v1369 = vsel %vm1366, %v1367, %v1368
        %v1370 = vrot.slane %v1076, 1
        %v1371 = vrot.slane %v1093, 1
        %v1372 = vsel %vm1366, %v1370, %v1371
        %v1373 = vrot.slane %v1077, 1
        %v1374 = vrot.slane %v1094, 1
        %v1375 = vsel %vm1366, %v1373, %v1374
        %v1376 = vrot.slane %v1078, 1
        %v1377 = vrot.slane %v1095, 1
        %v1378 = vsel %vm1366, %v1376, %v1377
        %v1379 = vrot.slane %v1079, 1
        %v1380 = vrot.slane %v1096, 1
        %v1381 = vsel %vm1366, %v1379, %v1380
        %v1382 = vrot.slane %v1080, 1
        %v1383 = vrot.slane %v1097, 1
        %v1384 = vsel %vm1366, %v1382, %v1383
        %v1385 = vrot.slane %v1081, 1
        %v1386 = vrot.slane %v1098, 1
        %v1387 = vsel %vm1366, %v1385, %v1386
        %v1388 = vrot.slane %v1082, 1
        %v1389 = vrot.slane %v1099, 1
        %v1390 = vsel %vm1366, %v1388, %v1389
        %v1391 = vrot.slane %v1083, 1
        %v1392 = vrot.slane %v1100, 1
        %v1393 = vsel %vm1366, %v1391, %v1392
        %v1394 = vrot.slane %v1084, 1
        %v1395 = vrot.slane %v1101, 1
        %v1396 = vsel %vm1366, %v1394, %v1395
        %v1397 = vrot.slane %v1085, 1
        %v1398 = vrot.slane %v1102, 1
        %v1399 = vsel %vm1366, %v1397, %v1398
        %v1400 = vrot.slane %v1086, 1
        %v1401 = vrot.slane %v1103, 1
        %v1402 = vsel %vm1366, %v1400, %v1401
        %v1403 = vrot.slane %v1087, 1
        %v1404 = vrot.slane %v1104, 1
        %v1405 = vsel %vm1366, %v1403, %v1404
        %v1406 = vrot.slane %v1088, 1
        %v1407 = vrot.slane %v1105, 1
        %v1408 = vsel %vm1366, %v1406, %v1407
        %v1409 = vrot.slane %v1089, 1
        %v1410 = vrot.slane %v1106, 1
        %v1411 = vsel %vm1366, %v1409, %v1410
        %v1412 = vrot.slane %v1090, 1
        %v1413 = vrot.slane %v1107, 1
        %v1414 = vsel %vm1366, %v1412, %v1413
        %1415 = vrot.lane.b32.xlu0 %v1369, 64
        %v1416 = vpop.permute.xlu0 %1415
        %1417 = vrot.lane.b32.xlu0 %v1372, 64
        %v1418 = vpop.permute.xlu0 %1417
        %1419 = vrot.lane.b32.xlu0 %v1375, 64
        %v1420 = vpop.permute.xlu0 %1419
        %1421 = vrot.lane.b32.xlu0 %v1378, 64
        %v1422 = vpop.permute.xlu0 %1421
        %1423 = vrot.lane.b32.xlu0 %v1381, 64
        %v1424 = vpop.permute.xlu0 %1423
        %1425 = vrot.lane.b32.xlu0 %v1384, 64
        %v1426 = vpop.permute.xlu0 %1425
        %1427 = vrot.lane.b32.xlu0 %v1387, 64
        %v1428 = vpop.permute.xlu0 %1427
        %1429 = vrot.lane.b32.xlu0 %v1390, 64
        %v1430 = vpop.permute.xlu0 %1429
        %1431 = vrot.lane.b32.xlu0 %v1393, 64
        %v1432 = vpop.permute.xlu0 %1431
        %1433 = vrot.lane.b32.xlu0 %v1396, 64
        %v1434 = vpop.permute.xlu0 %1433
        %1435 = vrot.lane.b32.xlu0 %v1399, 64
        %v1436 = vpop.permute.xlu0 %1435
        %1437 = vrot.lane.b32.xlu0 %v1402, 64
        %v1438 = vpop.permute.xlu0 %1437
        %1439 = vrot.lane.b32.xlu0 %v1405, 64
        %v1440 = vpop.permute.xlu0 %1439
        %1441 = vrot.lane.b32.xlu0 %v1408, 64
        %v1442 = vpop.permute.xlu0 %1441
        %1443 = vrot.lane.b32.xlu0 %v1411, 64
        %v1444 = vpop.permute.xlu0 %1443
        %1445 = vrot.lane.b32.xlu0 %v1414, 64
        %v1446 = vpop.permute.xlu0 %1445
        %1448 = vrot.lane.b32.xlu0 %v1076, 96
        %v1449 = vpop.permute.xlu0 %1448
        %1450 = vrot.lane.b32.xlu0 %v1077, 96
        %v1451 = vpop.permute.xlu0 %1450
        %1452 = vrot.lane.b32.xlu0 %v1078, 96
        %v1453 = vpop.permute.xlu0 %1452
        %1454 = vrot.lane.b32.xlu0 %v1079, 96
        %v1455 = vpop.permute.xlu0 %1454
        %1456 = vrot.lane.b32.xlu0 %v1080, 96
        %v1457 = vpop.permute.xlu0 %1456
        %1458 = vrot.lane.b32.xlu0 %v1081, 96
        %v1459 = vpop.permute.xlu0 %1458
        %1460 = vrot.lane.b32.xlu0 %v1082, 96
        %v1461 = vpop.permute.xlu0 %1460
        %1462 = vrot.lane.b32.xlu0 %v1083, 96
        %v1463 = vpop.permute.xlu0 %1462
        %1464 = vrot.lane.b32.xlu0 %v1084, 96
        %v1465 = vpop.permute.xlu0 %1464
        %1466 = vrot.lane.b32.xlu0 %v1085, 96
        %v1467 = vpop.permute.xlu0 %1466
        %1468 = vrot.lane.b32.xlu0 %v1086, 96
        %v1469 = vpop.permute.xlu0 %1468
        %1470 = vrot.lane.b32.xlu0 %v1087, 96
        %v1471 = vpop.permute.xlu0 %1470
        %1472 = vrot.lane.b32.xlu0 %v1088, 96
        %v1473 = vpop.permute.xlu0 %1472
        %1474 = vrot.lane.b32.xlu0 %v1089, 96
        %v1475 = vpop.permute.xlu0 %1474
        %1476 = vrot.lane.b32.xlu0 %v1090, 96
        %v1477 = vpop.permute.xlu0 %1476
        %1478 = vrot.lane.b32.xlu0 %v1091, 96
        %v1479 = vpop.permute.xlu0 %1478
        %v1481 = vshrl.u32 %v1091, 16
        %v1483 = vshll.u32 %v1091, 16
        %v1485 = vrot.slane %v1483, 1
        %v1486 = vor.u32 %v1481, %v1485
        %v1488 = vshll.u32 %v1108, 16
        %v1490 = vrot.slane %v1488, 1
        %v1491 = vsel %vm1109, %v1486, %v1490
        %v1493 = vrot.slane %v1091, 1
        %v1494 = vrot.slane %v1108, 1
        %v1495 = vsel %vm1366, %v1493, %v1494
        %1496 = vrot.lane.b32.xlu0 %v1372, 32
        %v1497 = vpop.permute.xlu0 %1496
        %1498 = vrot.lane.b32.xlu0 %v1375, 32
        %v1499 = vpop.permute.xlu0 %1498
        %1500 = vrot.lane.b32.xlu0 %v1378, 32
        %v1501 = vpop.permute.xlu0 %1500
        %1502 = vrot.lane.b32.xlu0 %v1381, 32
        %v1503 = vpop.permute.xlu0 %1502
        %1504 = vrot.lane.b32.xlu0 %v1384, 32
        %v1505 = vpop.permute.xlu0 %1504
        %1506 = vrot.lane.b32.xlu0 %v1387, 32
        %v1507 = vpop.permute.xlu0 %1506
        %1508 = vrot.lane.b32.xlu0 %v1390, 32
        %v1509 = vpop.permute.xlu0 %1508
        %1510 = vrot.lane.b32.xlu0 %v1393, 32
        %v1511 = vpop.permute.xlu0 %1510
        %1512 = vrot.lane.b32.xlu0 %v1396, 32
        %v1513 = vpop.permute.xlu0 %1512
        %1514 = vrot.lane.b32.xlu0 %v1399, 32
        %v1515 = vpop.permute.xlu0 %1514
        %1516 = vrot.lane.b32.xlu0 %v1402, 32
        %v1517 = vpop.permute.xlu0 %1516
        %1518 = vrot.lane.b32.xlu0 %v1405, 32
        %v1519 = vpop.permute.xlu0 %1518
        %1520 = vrot.lane.b32.xlu0 %v1408, 32
        %v1521 = vpop.permute.xlu0 %1520
        %1522 = vrot.lane.b32.xlu0 %v1411, 32
        %v1523 = vpop.permute.xlu0 %1522
        %1524 = vrot.lane.b32.xlu0 %v1414, 32
        %v1525 = vpop.permute.xlu0 %1524
        %1526 = vrot.lane.b32.xlu0 %v1495, 32
        %v1527 = vpop.permute.xlu0 %1526
        %1528 = vrot.lane.b32.xlu0 %v1077, 64
        %v1529 = vpop.permute.xlu0 %1528
        %1530 = vrot.lane.b32.xlu0 %v1078, 64
        %v1531 = vpop.permute.xlu0 %1530
        %1532 = vrot.lane.b32.xlu0 %v1079, 64
        %v1533 = vpop.permute.xlu0 %1532
        %1534 = vrot.lane.b32.xlu0 %v1080, 64
        %v1535 = vpop.permute.xlu0 %1534
        %1536 = vrot.lane.b32.xlu0 %v1081, 64
        %v1537 = vpop.permute.xlu0 %1536
        %1538 = vrot.lane.b32.xlu0 %v1082, 64
        %v1539 = vpop.permute.xlu0 %1538
        %1540 = vrot.lane.b32.xlu0 %v1083, 64
        %v1541 = vpop.permute.xlu0 %1540
        %1542 = vrot.lane.b32.xlu0 %v1084, 64
        %v1543 = vpop.permute.xlu0 %1542
        %1544 = vrot.lane.b32.xlu0 %v1085, 64
        %v1545 = vpop.permute.xlu0 %1544
        %1546 = vrot.lane.b32.xlu0 %v1086, 64
        %v1547 = vpop.permute.xlu0 %1546
        %1548 = vrot.lane.b32.xlu0 %v1087, 64
        %v1549 = vpop.permute.xlu0 %1548
        %1550 = vrot.lane.b32.xlu0 %v1088, 64
        %v1551 = vpop.permute.xlu0 %1550
        %1552 = vrot.lane.b32.xlu0 %v1089, 64
        %v1553 = vpop.permute.xlu0 %1552
        %1554 = vrot.lane.b32.xlu0 %v1090, 64
        %v1555 = vpop.permute.xlu0 %1554
        %1556 = vrot.lane.b32.xlu0 %v1091, 64
        %v1557 = vpop.permute.xlu0 %1556
        %1558 = vrot.lane.b32.xlu0 %v1075, 64
        %v1559 = vpop.permute.xlu0 %1558
        %1560 = vrot.lane.b32.xlu0 %v1145, 96
        %v1561 = vpop.permute.xlu0 %1560
        %1562 = vrot.lane.b32.xlu0 %v1157, 96
        %v1563 = vpop.permute.xlu0 %1562
        %1564 = vrot.lane.b32.xlu0 %v1169, 96
        %v1565 = vpop.permute.xlu0 %1564
        %1566 = vrot.lane.b32.xlu0 %v1181, 96
        %v1567 = vpop.permute.xlu0 %1566
        %1568 = vrot.lane.b32.xlu0 %v1193, 96
        %v1569 = vpop.permute.xlu0 %1568
        %1570 = vrot.lane.b32.xlu0 %v1205, 96
        %v1571 = vpop.permute.xlu0 %1570
        %1572 = vrot.lane.b32.xlu0 %v1217, 96
        %v1573 = vpop.permute.xlu0 %1572
        %1574 = vrot.lane.b32.xlu0 %v1229, 96
        %v1575 = vpop.permute.xlu0 %1574
        %1576 = vrot.lane.b32.xlu0 %v1241, 96
        %v1577 = vpop.permute.xlu0 %1576
        %1578 = vrot.lane.b32.xlu0 %v1253, 96
        %v1579 = vpop.permute.xlu0 %1578
        %1580 = vrot.lane.b32.xlu0 %v1265, 96
        %v1581 = vpop.permute.xlu0 %1580
        %1582 = vrot.lane.b32.xlu0 %v1277, 96
        %v1583 = vpop.permute.xlu0 %1582
        %1584 = vrot.lane.b32.xlu0 %v1289, 96
        %v1585 = vpop.permute.xlu0 %1584
        %1586 = vrot.lane.b32.xlu0 %v1301, 96
        %v1587 = vpop.permute.xlu0 %1586
        %1588 = vrot.lane.b32.xlu0 %v1491, 96
        %v1589 = vpop.permute.xlu0 %1588
        %1590 = vrot.lane.b32.xlu0 %v1121, 96
        %v1591 = vpop.permute.xlu0 %1590
        %vm1592 = vcmask 261120
        %v1594 = vsel %vm1592, %v1075, %v1303
        %v1596 = vsel %vm1592, %v1076, %v1305
        %v1598 = vsel %vm1592, %v1077, %v1307
        %v1600 = vsel %vm1592, %v1078, %v1309
        %v1602 = vsel %vm1592, %v1079, %v1311
        %v1604 = vsel %vm1592, %v1080, %v1313
        %v1606 = vsel %vm1592, %v1081, %v1315
        %v1608 = vsel %vm1592, %v1082, %v1317
        %v1610 = vsel %vm1592, %v1083, %v1319
        %v1612 = vsel %vm1592, %v1084, %v1321
        %v1614 = vsel %vm1592, %v1085, %v1323
        %v1616 = vsel %vm1592, %v1086, %v1325
        %v1618 = vsel %vm1592, %v1087, %v1327
        %v1620 = vsel %vm1592, %v1088, %v1329
        %v1622 = vsel %vm1592, %v1089, %v1331
        %v1624 = vsel %vm1592, %v1090, %v1333
        %vm1625 = vcmask 523264
        %v1627 = vsel %vm1625, %v1594, %v1416
        %v1629 = vsel %vm1625, %v1596, %v1418
        %v1631 = vsel %vm1625, %v1598, %v1420
        %v1633 = vsel %vm1625, %v1600, %v1422
        %v1635 = vsel %vm1625, %v1602, %v1424
        %v1637 = vsel %vm1625, %v1604, %v1426
        %v1639 = vsel %vm1625, %v1606, %v1428
        %v1641 = vsel %vm1625, %v1608, %v1430
        %v1643 = vsel %vm1625, %v1610, %v1432
        %v1645 = vsel %vm1625, %v1612, %v1434
        %v1647 = vsel %vm1625, %v1614, %v1436
        %v1649 = vsel %vm1625, %v1616, %v1438
        %v1651 = vsel %vm1625, %v1618, %v1440
        %v1653 = vsel %vm1625, %v1620, %v1442
        %v1655 = vsel %vm1625, %v1622, %v1444
        %v1657 = vsel %vm1625, %v1624, %v1446
        %vm1658 = vcmask 785408
        %v1660 = vsel %vm1658, %v1627, %v1449
        %v1663 = vsel %vm1658, %v1629, %v1451
        %v1666 = vsel %vm1658, %v1631, %v1453
        %v1669 = vsel %vm1658, %v1633, %v1455
        %v1672 = vsel %vm1658, %v1635, %v1457
        %v1675 = vsel %vm1658, %v1637, %v1459
        %v1678 = vsel %vm1658, %v1639, %v1461
        %v1681 = vsel %vm1658, %v1641, %v1463
        %v1684 = vsel %vm1658, %v1643, %v1465
        %v1687 = vsel %vm1658, %v1645, %v1467
        %v1690 = vsel %vm1658, %v1647, %v1469
        %v1693 = vsel %vm1658, %v1649, %v1471
        %v1696 = vsel %vm1658, %v1651, %v1473
        %v1699 = vsel %vm1658, %v1653, %v1475
        %v1702 = vsel %vm1658, %v1655, %v1477
        %v1705 = vsel %vm1658, %v1657, %v1479
        %v1709 = vsel %vm1592, %v1133, %v1497
        %v1712 = vsel %vm1592, %v1145, %v1499
        %v1715 = vsel %vm1592, %v1157, %v1501
        %v1718 = vsel %vm1592, %v1169, %v1503
        %v1721 = vsel %vm1592, %v1181, %v1505
        %v1724 = vsel %vm1592, %v1193, %v1507
        %v1727 = vsel %vm1592, %v1205, %v1509
        %v1730 = vsel %vm1592, %v1217, %v1511
        %v1733 = vsel %vm1592, %v1229, %v1513
        %v1736 = vsel %vm1592, %v1241, %v1515
        %v1739 = vsel %vm1592, %v1253, %v1517
        %v1742 = vsel %vm1592, %v1265, %v1519
        %v1745 = vsel %vm1592, %v1277, %v1521
        %v1748 = vsel %vm1592, %v1289, %v1523
        %v1751 = vsel %vm1592, %v1301, %v1525
        %v1754 = vsel %vm1592, %v1491, %v1527
        %v1756 = vsel %vm1625, %v1709, %v1529
        %v1758 = vsel %vm1625, %v1712, %v1531
        %v1760 = vsel %vm1625, %v1715, %v1533
        %v1762 = vsel %vm1625, %v1718, %v1535
        %v1764 = vsel %vm1625, %v1721, %v1537
        %v1766 = vsel %vm1625, %v1724, %v1539
        %v1768 = vsel %vm1625, %v1727, %v1541
        %v1770 = vsel %vm1625, %v1730, %v1543
        %v1772 = vsel %vm1625, %v1733, %v1545
        %v1774 = vsel %vm1625, %v1736, %v1547
        %v1776 = vsel %vm1625, %v1739, %v1549
        %v1778 = vsel %vm1625, %v1742, %v1551
        %v1780 = vsel %vm1625, %v1745, %v1553
        %v1782 = vsel %vm1625, %v1748, %v1555
        %v1784 = vsel %vm1625, %v1751, %v1557
        %v1786 = vsel %vm1625, %v1754, %v1559
        %v1788 = vsel %vm1658, %v1756, %v1561
        %v1791 = vsel %vm1658, %v1758, %v1563
        %v1794 = vsel %vm1658, %v1760, %v1565
        %v1797 = vsel %vm1658, %v1762, %v1567
        %v1800 = vsel %vm1658, %v1764, %v1569
        %v1803 = vsel %vm1658, %v1766, %v1571
        %v1806 = vsel %vm1658, %v1768, %v1573
        %v1809 = vsel %vm1658, %v1770, %v1575
        %v1812 = vsel %vm1658, %v1772, %v1577
        %v1815 = vsel %vm1658, %v1774, %v1579
        %v1818 = vsel %vm1658, %v1776, %v1581
        %v1821 = vsel %vm1658, %v1778, %v1583
        %v1824 = vsel %vm1658, %v1780, %v1585
        %v1827 = vsel %vm1658, %v1782, %v1587
        %v1830 = vsel %vm1658, %v1784, %v1589
        %v1833 = vsel %vm1658, %v1786, %v1591
        %v1836 = vperm.slane %v806, 0
        %v1874 = vunpack.c.l.b16 %v770
        %v1875 = vunpack.c.l.b16 %v771
        %v1876 = vunpack.c.l.b16 %v772
        %v1877 = vunpack.c.l.b16 %v773
        %v1878 = vunpack.c.l.b16 %v774
        %v1879 = vunpack.c.l.b16 %v775
        %v1880 = vunpack.c.l.b16 %v776
        %v1881 = vunpack.c.l.b16 %v777
        %v1882 = vunpack.c.l.b16 %v778
        %v1883 = vunpack.c.l.b16 %v779
        %v1884 = vunpack.c.l.b16 %v780
        %v1885 = vunpack.c.l.b16 %v781
        %v1886 = vunpack.c.l.b16 %v782
        %v1887 = vunpack.c.l.b16 %v783
        %v1888 = vunpack.c.l.b16 %v784
        %v1889 = vunpack.c.l.b16 %v785
        %v1890 = vunpack.c.l.b16 %v786
        %v1891 = vunpack.c.l.b16 %v787
        %v1892 = vunpack.c.l.b16 %v788
        %v1893 = vunpack.c.l.b16 %v789
        %v1894 = vunpack.c.l.b16 %v790
        %v1895 = vunpack.c.l.b16 %v791
        %v1896 = vunpack.c.l.b16 %v792
        %v1897 = vunpack.c.l.b16 %v793
        %v1898 = vunpack.c.l.b16 %v794
        %v1899 = vunpack.c.l.b16 %v795
        %v1900 = vunpack.c.l.b16 %v796
        %v1901 = vunpack.c.l.b16 %v797
        %v1902 = vunpack.c.l.b16 %v798
        %v1903 = vunpack.c.l.b16 %v799
        %v1904 = vunpack.c.l.b16 %v800
        %v1905 = vunpack.c.l.b16 %v801
        %v1906 = vunpack.c.l.b16 %v802
        %v1907 = vunpack.c.l.b16 %v803
        %v1908 = vunpack.c.l.b16 %v804
        %v1909 = vunpack.c.l.b16 %v805
        %v1910 = vpack.c.b16 %v1875, %v1874
        %v1911 = vpack.c.b16 %v1877, %v1876
        %v1912 = vpack.c.b16 %v1879, %v1878
        %v1913 = vpack.c.b16 %v1881, %v1880
        %v1914 = vpack.c.b16 %v1883, %v1882
        %v1915 = vpack.c.b16 %v1885, %v1884
        %v1916 = vpack.c.b16 %v1887, %v1886
        %v1917 = vpack.c.b16 %v1889, %v1888
        %v1918 = vpack.c.b16 %v1891, %v1890
        %v1919 = vpack.c.b16 %v1893, %v1892
        %v1920 = vpack.c.b16 %v1895, %v1894
        %v1921 = vpack.c.b16 %v1897, %v1896
        %v1922 = vpack.c.b16 %v1899, %v1898
        %v1923 = vpack.c.b16 %v1901, %v1900
        %v1924 = vpack.c.b16 %v1903, %v1902
        %v1925 = vpack.c.b16 %v1905, %v1904
        %v1926 = vpack.c.b16 %v1907, %v1906
        %v1927 = vpack.c.b16 %v1909, %v1908
        %v1947 = vsel %vm1592, %v1375, 0
        %v1950 = vsel %vm1592, %v1378, 0
        %v1953 = vsel %vm1592, %v1381, 0
        %v1956 = vsel %vm1592, %v1384, 0
        %v1959 = vsel %vm1592, %v1387, 0
        %v1962 = vsel %vm1592, %v1390, 0
        %v1965 = vsel %vm1592, %v1393, 0
        %v1968 = vsel %vm1592, %v1396, 0
        %v1971 = vsel %vm1592, %v1399, 0
        %v1974 = vsel %vm1592, %v1402, 0
        %v1977 = vsel %vm1592, %v1405, 0
        %v1980 = vsel %vm1592, %v1408, 0
        %v1983 = vsel %vm1592, %v1411, 0
        %v1986 = vsel %vm1592, %v1414, 0
        %v1989 = vsel %vm1592, %v1495, 0
        %v1992 = vsel %vm1592, %v1369, 0
        %1994 = vmatpush.bf16.msra.mxu0 %v1917
        %1995 = vmatpush.bf16.msra.mxu0 %v1916
        %1996 = vmatpush.bf16.msra.mxu0 %v1915
        %1997 = vmatpush.bf16.msra.mxu0 %v1914
        %1998 = vmatpush.bf16.msra.mxu0 %v1913
        %1999 = vmatpush.bf16.msra.mxu0 %v1912
        %2000 = vmatpush.bf16.msra.mxu0 %v1911
        %2001 = vmatpush.bf16.msra.mxu0 %v1910
        %2002 = vmatmul.bf16.gmra.mxu0 %v1660
        %v2003 = vpop.f32.mrf.mxu0
        %v2004 = vadd.f32 %v1836, %v2003
        %v2005 = vpop.f32.mrf.mxu0
        %v2006 = vadd.f32 %v1836, %v2005
        %2007 = vmatmul.bf16.gmra.mxu0 %v1663
        %v2008 = vpop.f32.mrf.mxu0
        %v2009 = vadd.f32 %v1836, %v2008
        %v2010 = vpop.f32.mrf.mxu0
        %v2011 = vadd.f32 %v1836, %v2010
        %2012 = vmatmul.bf16.gmra.mxu0 %v1666
        %v2013 = vpop.f32.mrf.mxu0
        %v2014 = vadd.f32 %v1836, %v2013
        %v2015 = vpop.f32.mrf.mxu0
        %v2016 = vadd.f32 %v1836, %v2015
        %2017 = vmatmul.bf16.gmra.mxu0 %v1669
        %v2018 = vpop.f32.mrf.mxu0
        %v2019 = vadd.f32 %v1836, %v2018
        %v2020 = vpop.f32.mrf.mxu0
        %v2021 = vadd.f32 %v1836, %v2020
        %2022 = vmatmul.bf16.gmra.mxu0 %v1672
        %v2023 = vpop.f32.mrf.mxu0
        %v2024 = vadd.f32 %v1836, %v2023
        %v2025 = vpop.f32.mrf.mxu0
        %v2026 = vadd.f32 %v1836, %v2025
        %2027 = vmatmul.bf16.gmra.mxu0 %v1675
        %v2028 = vpop.f32.mrf.mxu0
        %v2029 = vadd.f32 %v1836, %v2028
        %v2030 = vpop.f32.mrf.mxu0
        %v2031 = vadd.f32 %v1836, %v2030
        %2032 = vmatmul.bf16.gmra.mxu0 %v1678
        %v2033 = vpop.f32.mrf.mxu0
        %v2034 = vadd.f32 %v1836, %v2033
        %v2035 = vpop.f32.mrf.mxu0
        %v2036 = vadd.f32 %v1836, %v2035
        %2037 = vmatmul.bf16.gmra.mxu0 %v1681
        %v2038 = vpop.f32.mrf.mxu0
        %v2039 = vadd.f32 %v1836, %v2038
        %v2040 = vpop.f32.mrf.mxu0
        %v2041 = vadd.f32 %v1836, %v2040
        %2042 = vmatmul.bf16.gmra.mxu0 %v1684
        %v2043 = vpop.f32.mrf.mxu0
        %v2044 = vadd.f32 %v1836, %v2043
        %v2045 = vpop.f32.mrf.mxu0
        %v2046 = vadd.f32 %v1836, %v2045
        %2047 = vmatmul.bf16.gmra.mxu0 %v1687
        %v2048 = vpop.f32.mrf.mxu0
        %v2049 = vadd.f32 %v1836, %v2048
        %v2050 = vpop.f32.mrf.mxu0
        %v2051 = vadd.f32 %v1836, %v2050
        %2052 = vmatmul.bf16.gmra.mxu0 %v1690
        %v2053 = vpop.f32.mrf.mxu0
        %v2054 = vadd.f32 %v1836, %v2053
        %v2055 = vpop.f32.mrf.mxu0
        %v2056 = vadd.f32 %v1836, %v2055
        %2057 = vmatmul.bf16.gmra.mxu0 %v1693
        %v2058 = vpop.f32.mrf.mxu0
        %v2059 = vadd.f32 %v1836, %v2058
        %v2060 = vpop.f32.mrf.mxu0
        %v2061 = vadd.f32 %v1836, %v2060
        %2062 = vmatmul.bf16.gmra.mxu0 %v1696
        %v2063 = vpop.f32.mrf.mxu0
        %v2064 = vadd.f32 %v1836, %v2063
        %v2065 = vpop.f32.mrf.mxu0
        %v2066 = vadd.f32 %v1836, %v2065
        %2067 = vmatmul.bf16.gmra.mxu0 %v1699
        %v2068 = vpop.f32.mrf.mxu0
        %v2069 = vadd.f32 %v1836, %v2068
        %v2070 = vpop.f32.mrf.mxu0
        %v2071 = vadd.f32 %v1836, %v2070
        %2072 = vmatmul.bf16.gmra.mxu0 %v1702
        %v2073 = vpop.f32.mrf.mxu0
        %v2074 = vadd.f32 %v1836, %v2073
        %v2075 = vpop.f32.mrf.mxu0
        %v2076 = vadd.f32 %v1836, %v2075
        %2077 = vmatmul.bf16.gmra.mxu0 %v1705
        %v2078 = vpop.f32.mrf.mxu0
        %v2079 = vadd.f32 %v1836, %v2078
        %v2080 = vpop.f32.mrf.mxu0
        %v2081 = vadd.f32 %v1836, %v2080
        %2082 = vdwg.mxu0
        %2083 = vmatpush.bf16.msra.mxu0 %v1925
        %2084 = vmatpush.bf16.msra.mxu0 %v1924
        %2085 = vmatpush.bf16.msra.mxu0 %v1923
        %2086 = vmatpush.bf16.msra.mxu0 %v1922
        %2087 = vmatpush.bf16.msra.mxu0 %v1921
        %2088 = vmatpush.bf16.msra.mxu0 %v1920
        %2089 = vmatpush.bf16.msra.mxu0 %v1919
        %2090 = vmatpush.bf16.msra.mxu0 %v1918
        %2091 = vmatmul.bf16.gmra.mxu0 %v1788
        %v2092 = vpop.f32.mrf.mxu0
        %v2093 = vadd.f32 %v2004, %v2092
        %v2094 = vpop.f32.mrf.mxu0
        %v2095 = vadd.f32 %v2006, %v2094
        %2096 = vmatmul.bf16.gmra.mxu0 %v1791
        %v2097 = vpop.f32.mrf.mxu0
        %v2098 = vadd.f32 %v2009, %v2097
        %v2099 = vpop.f32.mrf.mxu0
        %v2100 = vadd.f32 %v2011, %v2099
        %2101 = vmatmul.bf16.gmra.mxu0 %v1794
        %v2102 = vpop.f32.mrf.mxu0
        %v2103 = vadd.f32 %v2014, %v2102
        %v2104 = vpop.f32.mrf.mxu0
        %v2105 = vadd.f32 %v2016, %v2104
        %2106 = vmatmul.bf16.gmra.mxu0 %v1797
        %v2107 = vpop.f32.mrf.mxu0
        %v2108 = vadd.f32 %v2019, %v2107
        %v2109 = vpop.f32.mrf.mxu0
        %v2110 = vadd.f32 %v2021, %v2109
        %2111 = vmatmul.bf16.gmra.mxu0 %v1800
        %v2112 = vpop.f32.mrf.mxu0
        %v2113 = vadd.f32 %v2024, %v2112
        %v2114 = vpop.f32.mrf.mxu0
        %v2115 = vadd.f32 %v2026, %v2114
        %2116 = vmatmul.bf16.gmra.mxu0 %v1803
        %v2117 = vpop.f32.mrf.mxu0
        %v2118 = vadd.f32 %v2029, %v2117
        %v2119 = vpop.f32.mrf.mxu0
        %v2120 = vadd.f32 %v2031, %v2119
        %2121 = vmatmul.bf16.gmra.mxu0 %v1806
        %v2122 = vpop.f32.mrf.mxu0
        %v2123 = vadd.f32 %v2034, %v2122
        %v2124 = vpop.f32.mrf.mxu0
        %v2125 = vadd.f32 %v2036, %v2124
        %2126 = vmatmul.bf16.gmra.mxu0 %v1809
        %v2127 = vpop.f32.mrf.mxu0
        %v2128 = vadd.f32 %v2039, %v2127
        %v2129 = vpop.f32.mrf.mxu0
        %v2130 = vadd.f32 %v2041, %v2129
        %2131 = vmatmul.bf16.gmra.mxu0 %v1812
        %v2132 = vpop.f32.mrf.mxu0
        %v2133 = vadd.f32 %v2044, %v2132
        %v2134 = vpop.f32.mrf.mxu0
        %v2135 = vadd.f32 %v2046, %v2134
        %2136 = vmatmul.bf16.gmra.mxu0 %v1815
        %v2137 = vpop.f32.mrf.mxu0
        %v2138 = vadd.f32 %v2049, %v2137
        %v2139 = vpop.f32.mrf.mxu0
        %v2140 = vadd.f32 %v2051, %v2139
        %2141 = vmatmul.bf16.gmra.mxu0 %v1818
        %v2142 = vpop.f32.mrf.mxu0
        %v2143 = vadd.f32 %v2054, %v2142
        %v2144 = vpop.f32.mrf.mxu0
        %v2145 = vadd.f32 %v2056, %v2144
        %2146 = vmatmul.bf16.gmra.mxu0 %v1821
        %v2147 = vpop.f32.mrf.mxu0
        %v2148 = vadd.f32 %v2059, %v2147
        %v2149 = vpop.f32.mrf.mxu0
        %v2150 = vadd.f32 %v2061, %v2149
        %2151 = vmatmul.bf16.gmra.mxu0 %v1824
        %v2152 = vpop.f32.mrf.mxu0
        %v2153 = vadd.f32 %v2064, %v2152
        %v2154 = vpop.f32.mrf.mxu0
        %v2155 = vadd.f32 %v2066, %v2154
        %2156 = vmatmul.bf16.gmra.mxu0 %v1827
        %v2157 = vpop.f32.mrf.mxu0
        %v2158 = vadd.f32 %v2069, %v2157
        %v2159 = vpop.f32.mrf.mxu0
        %v2160 = vadd.f32 %v2071, %v2159
        %2161 = vmatmul.bf16.gmra.mxu0 %v1830
        %v2162 = vpop.f32.mrf.mxu0
        %v2163 = vadd.f32 %v2074, %v2162
        %v2164 = vpop.f32.mrf.mxu0
        %v2165 = vadd.f32 %v2076, %v2164
        %2166 = vmatmul.bf16.gmra.mxu0 %v1833
        %v2167 = vpop.f32.mrf.mxu0
        %v2168 = vadd.f32 %v2079, %v2167
        %v2169 = vpop.f32.mrf.mxu0
        %v2170 = vadd.f32 %v2081, %v2169
        %2171 = vdwg.mxu0
        %2172 = vmatpush.bf16.msra.mxu0 0
        %2173 = vmatpush.bf16.msra.mxu0 0
        %2174 = vmatpush.bf16.msra.mxu0 0
        %2175 = vmatpush.bf16.msra.mxu0 0
        %2176 = vmatpush.bf16.msra.mxu0 0
        %2177 = vmatpush.bf16.msra.mxu0 0
        %2178 = vmatpush.bf16.msra.mxu0 %v1927
        %2179 = vmatpush.bf16.msra.mxu0 %v1926
        %2180 = vmatmul.bf16.gmra.mxu0 %v1947
        %v2181 = vpop.f32.mrf.mxu0
        %v2182 = vadd.f32 %v2093, %v2181
        %v2183 = vpop.f32.mrf.mxu0
        %v2184 = vadd.f32 %v2095, %v2183
        %2185 = vmatmul.bf16.gmra.mxu0 %v1950
        %v2186 = vpop.f32.mrf.mxu0
        %v2187 = vadd.f32 %v2098, %v2186
        %v2188 = vpop.f32.mrf.mxu0
        %v2189 = vadd.f32 %v2100, %v2188
        %2190 = vmatmul.bf16.gmra.mxu0 %v1953
        %v2191 = vpop.f32.mrf.mxu0
        %v2192 = vadd.f32 %v2103, %v2191
        %v2193 = vpop.f32.mrf.mxu0
        %v2194 = vadd.f32 %v2105, %v2193
        %2195 = vmatmul.bf16.gmra.mxu0 %v1956
        %v2196 = vpop.f32.mrf.mxu0
        %v2197 = vadd.f32 %v2108, %v2196
        %v2198 = vpop.f32.mrf.mxu0
        %v2199 = vadd.f32 %v2110, %v2198
        %2200 = vmatmul.bf16.gmra.mxu0 %v1959
        %v2201 = vpop.f32.mrf.mxu0
        %v2202 = vadd.f32 %v2113, %v2201
        %v2203 = vpop.f32.mrf.mxu0
        %v2204 = vadd.f32 %v2115, %v2203
        %2205 = vmatmul.bf16.gmra.mxu0 %v1962
        %v2206 = vpop.f32.mrf.mxu0
        %v2207 = vadd.f32 %v2118, %v2206
        %v2208 = vpop.f32.mrf.mxu0
        %v2209 = vadd.f32 %v2120, %v2208
        %2210 = vmatmul.bf16.gmra.mxu0 %v1965
        %v2211 = vpop.f32.mrf.mxu0
        %v2212 = vadd.f32 %v2123, %v2211
        %v2213 = vpop.f32.mrf.mxu0
        %v2214 = vadd.f32 %v2125, %v2213
        %2215 = vmatmul.bf16.gmra.mxu0 %v1968
        %v2216 = vpop.f32.mrf.mxu0
        %v2217 = vadd.f32 %v2128, %v2216
        %v2218 = vpop.f32.mrf.mxu0
        %v2219 = vadd.f32 %v2130, %v2218
        %2220 = vmatmul.bf16.gmra.mxu0 %v1971
        %v2221 = vpop.f32.mrf.mxu0
        %v2222 = vadd.f32 %v2133, %v2221
        %v2223 = vpop.f32.mrf.mxu0
        %v2224 = vadd.f32 %v2135, %v2223
        %2225 = vmatmul.bf16.gmra.mxu0 %v1974
        %v2226 = vpop.f32.mrf.mxu0
        %v2227 = vadd.f32 %v2138, %v2226
        %v2228 = vpop.f32.mrf.mxu0
        %v2229 = vadd.f32 %v2140, %v2228
        %2230 = vmatmul.bf16.gmra.mxu0 %v1977
        %v2231 = vpop.f32.mrf.mxu0
        %v2232 = vadd.f32 %v2143, %v2231
        %v2233 = vpop.f32.mrf.mxu0
        %v2234 = vadd.f32 %v2145, %v2233
        %2235 = vmatmul.bf16.gmra.mxu0 %v1980
        %v2236 = vpop.f32.mrf.mxu0
        %v2237 = vadd.f32 %v2148, %v2236
        %v2238 = vpop.f32.mrf.mxu0
        %v2239 = vadd.f32 %v2150, %v2238
        %2240 = vmatmul.bf16.gmra.mxu0 %v1983
        %v2241 = vpop.f32.mrf.mxu0
        %v2242 = vadd.f32 %v2153, %v2241
        %v2243 = vpop.f32.mrf.mxu0
        %v2244 = vadd.f32 %v2155, %v2243
        %2245 = vmatmul.bf16.gmra.mxu0 %v1986
        %v2246 = vpop.f32.mrf.mxu0
        %v2247 = vadd.f32 %v2158, %v2246
        %v2248 = vpop.f32.mrf.mxu0
        %v2249 = vadd.f32 %v2160, %v2248
        %2250 = vmatmul.bf16.gmra.mxu0 %v1989
        %v2251 = vpop.f32.mrf.mxu0
        %v2252 = vadd.f32 %v2163, %v2251
        %v2253 = vpop.f32.mrf.mxu0
        %v2254 = vadd.f32 %v2165, %v2253
        %2255 = vmatmul.bf16.gmra.mxu0 %v1992
        %v2256 = vpop.f32.mrf.mxu0
        %v2257 = vadd.f32 %v2168, %v2256
        %v2258 = vpop.f32.mrf.mxu0
        %v2259 = vadd.f32 %v2170, %v2258
        %2260 = vdwg.mxu0
        %v2261 = vmax.f32 %v2182, 0.0
        %v2262 = vmax.f32 %v2184, 0.0
        %v2263 = vmax.f32 %v2187, 0.0
        %v2264 = vmax.f32 %v2189, 0.0
        %v2265 = vmax.f32 %v2192, 0.0
        %v2266 = vmax.f32 %v2194, 0.0
        %v2267 = vmax.f32 %v2197, 0.0
        %v2268 = vmax.f32 %v2199, 0.0
        %v2269 = vmax.f32 %v2202, 0.0
        %v2270 = vmax.f32 %v2204, 0.0
        %v2271 = vmax.f32 %v2207, 0.0
        %v2272 = vmax.f32 %v2209, 0.0
        %v2273 = vmax.f32 %v2212, 0.0
        %v2274 = vmax.f32 %v2214, 0.0
        %v2275 = vmax.f32 %v2217, 0.0
        %v2276 = vmax.f32 %v2219, 0.0
        %v2277 = vmax.f32 %v2222, 0.0
        %v2278 = vmax.f32 %v2224, 0.0
        %v2279 = vmax.f32 %v2227, 0.0
        %v2280 = vmax.f32 %v2229, 0.0
        %v2281 = vmax.f32 %v2232, 0.0
        %v2282 = vmax.f32 %v2234, 0.0
        %v2283 = vmax.f32 %v2237, 0.0
        %v2284 = vmax.f32 %v2239, 0.0
        %v2285 = vmax.f32 %v2242, 0.0
        %v2286 = vmax.f32 %v2244, 0.0
        %v2287 = vmax.f32 %v2247, 0.0
        %v2288 = vmax.f32 %v2249, 0.0
        %v2289 = vmax.f32 %v2252, 0.0
        %v2290 = vmax.f32 %v2254, 0.0
        %v2291 = vmax.f32 %v2257, 0.0
        %v2292 = vmax.f32 %v2259, 0.0
        %v2293 = vld [vmem:[%s6] sm:$0xf]
        %v2294 = vld [vmem:[%s6 + $0x4] sm:$0xf]
        %v2295 = vld [vmem:[%s6 + $0x8] sm:$0xf]
        %v2296 = vld [vmem:[%s6 + $0xc] sm:$0xf]
        %v2297 = vld [vmem:[%s6 + $0x10] sm:$0xf]
        %v2298 = vld [vmem:[%s6 + $0x14] sm:$0xf]
        %v2299 = vld [vmem:[%s6 + $0x18] sm:$0xf]
        %v2300 = vld [vmem:[%s6 + $0x1c] sm:$0xf]
        %v2301 = vld [vmem:[%s6 + $0x20] sm:$0xf]
        %v2302 = vld [vmem:[%s6 + $0x24] sm:$0xf]
        %v2303 = vld [vmem:[%s6 + $0x28] sm:$0xf]
        %v2304 = vld [vmem:[%s6 + $0x2c] sm:$0xf]
        %v2305 = vld [vmem:[%s6 + $0x30] sm:$0xf]
        %v2306 = vld [vmem:[%s6 + $0x34] sm:$0xf]
        %v2307 = vld [vmem:[%s6 + $0x38] sm:$0xf]
        %v2308 = vld [vmem:[%s6 + $0x3c] sm:$0xf]
        %v2309 = vld [vmem:[%s6 + $0x40] sm:$0xf]
        %v2310 = vld [vmem:[%s6 + $0x44] sm:$0xf]
        %v2311 = vld [vmem:[%s6 + $0x48] sm:$0xf]
        %v2312 = vld [vmem:[%s6 + $0x4c] sm:$0xf]
        %v2313 = vld [vmem:[%s6 + $0x50] sm:$0xf]
        %v2314 = vld [vmem:[%s6 + $0x54] sm:$0xf]
        %v2315 = vld [vmem:[%s6 + $0x58] sm:$0xf]
        %v2316 = vld [vmem:[%s6 + $0x5c] sm:$0xf]
        %v2317 = vld [vmem:[%s6 + $0x60] sm:$0xf]
        %v2318 = vld [vmem:[%s6 + $0x64] sm:$0xf]
        %v2319 = vld [vmem:[%s6 + $0x68] sm:$0xf]
        %v2320 = vld [vmem:[%s6 + $0x6c] sm:$0xf]
        %v2321 = vld [vmem:[%s6 + $0x70] sm:$0xf]
        %v2322 = vld [vmem:[%s6 + $0x74] sm:$0xf]
        %v2323 = vld [vmem:[%s6 + $0x78] sm:$0xf]
        %v2324 = vld [vmem:[%s6 + $0x7c] sm:$0xf]
        %v2325 = vld [vmem:[%s6 + $0x80] sm:$0xf]
        %v2326 = vld [vmem:[%s6 + $0x84] sm:$0xf]
        %v2327 = vld [vmem:[%s6 + $0x88] sm:$0xf]
        %v2328 = vld [vmem:[%s6 + $0x8c] sm:$0xf]
        %v2329 = vld [vmem:[%s7] sm:$0x1]
        %v2330 = vpack.c.bf16 %v2261, %v2261
        %v2331 = vpack.c.bf16 %v2262, %v2262
        %v2332 = vpack.c.bf16 %v2263, %v2263
        %v2333 = vpack.c.bf16 %v2264, %v2264
        %v2334 = vpack.c.bf16 %v2265, %v2265
        %v2335 = vpack.c.bf16 %v2266, %v2266
        %v2336 = vpack.c.bf16 %v2267, %v2267
        %v2337 = vpack.c.bf16 %v2268, %v2268
        %v2338 = vpack.c.bf16 %v2269, %v2269
        %v2339 = vpack.c.bf16 %v2270, %v2270
        %v2340 = vpack.c.bf16 %v2271, %v2271
        %v2341 = vpack.c.bf16 %v2272, %v2272
        %v2342 = vpack.c.bf16 %v2273, %v2273
        %v2343 = vpack.c.bf16 %v2274, %v2274
        %v2344 = vpack.c.bf16 %v2275, %v2275
        %v2345 = vpack.c.bf16 %v2276, %v2276
        %v2346 = vpack.c.bf16 %v2277, %v2277
        %v2347 = vpack.c.bf16 %v2278, %v2278
        %v2348 = vpack.c.bf16 %v2279, %v2279
        %v2349 = vpack.c.bf16 %v2280, %v2280
        %v2350 = vpack.c.bf16 %v2281, %v2281
        %v2351 = vpack.c.bf16 %v2282, %v2282
        %v2352 = vpack.c.bf16 %v2283, %v2283
        %v2353 = vpack.c.bf16 %v2284, %v2284
        %v2354 = vpack.c.bf16 %v2285, %v2285
        %v2355 = vpack.c.bf16 %v2286, %v2286
        %v2356 = vpack.c.bf16 %v2287, %v2287
        %v2357 = vpack.c.bf16 %v2288, %v2288
        %v2358 = vpack.c.bf16 %v2289, %v2289
        %v2359 = vpack.c.bf16 %v2290, %v2290
        %v2360 = vpack.c.bf16 %v2291, %v2291
        %v2361 = vpack.c.bf16 %v2292, %v2292
        %v2394 = vunpack.c.l.b16 %v2330
        %v2395 = vunpack.c.l.b16 %v2331
        %v2396 = vunpack.c.l.b16 %v2332
        %v2397 = vunpack.c.l.b16 %v2333
        %v2398 = vunpack.c.l.b16 %v2334
        %v2399 = vunpack.c.l.b16 %v2335
        %v2400 = vunpack.c.l.b16 %v2336
        %v2401 = vunpack.c.l.b16 %v2337
        %v2402 = vunpack.c.l.b16 %v2338
        %v2403 = vunpack.c.l.b16 %v2339
        %v2404 = vunpack.c.l.b16 %v2340
        %v2405 = vunpack.c.l.b16 %v2341
        %v2406 = vunpack.c.l.b16 %v2342
        %v2407 = vunpack.c.l.b16 %v2343
        %v2408 = vunpack.c.l.b16 %v2344
        %v2409 = vunpack.c.l.b16 %v2345
        %v2410 = vunpack.c.l.b16 %v2346
        %v2411 = vunpack.c.l.b16 %v2347
        %v2412 = vunpack.c.l.b16 %v2348
        %v2413 = vunpack.c.l.b16 %v2349
        %v2414 = vunpack.c.l.b16 %v2350
        %v2415 = vunpack.c.l.b16 %v2351
        %v2416 = vunpack.c.l.b16 %v2352
        %v2417 = vunpack.c.l.b16 %v2353
        %v2418 = vunpack.c.l.b16 %v2354
        %v2419 = vunpack.c.l.b16 %v2355
        %v2420 = vunpack.c.l.b16 %v2356
        %v2421 = vunpack.c.l.b16 %v2357
        %v2422 = vunpack.c.l.b16 %v2358
        %v2423 = vunpack.c.l.b16 %v2359
        %v2424 = vunpack.c.l.b16 %v2360
        %v2425 = vunpack.c.l.b16 %v2361
        %v2426 = vpack.c.b16 %v2395, %v2394
        %v2427 = vpack.c.b16 %v2397, %v2396
        %v2428 = vpack.c.b16 %v2399, %v2398
        %v2429 = vpack.c.b16 %v2401, %v2400
        %v2430 = vpack.c.b16 %v2403, %v2402
        %v2431 = vpack.c.b16 %v2405, %v2404
        %v2432 = vpack.c.b16 %v2407, %v2406
        %v2433 = vpack.c.b16 %v2409, %v2408
        %v2434 = vpack.c.b16 %v2411, %v2410
        %v2435 = vpack.c.b16 %v2413, %v2412
        %v2436 = vpack.c.b16 %v2415, %v2414
        %v2437 = vpack.c.b16 %v2417, %v2416
        %v2438 = vpack.c.b16 %v2419, %v2418
        %v2439 = vpack.c.b16 %v2421, %v2420
        %v2440 = vpack.c.b16 %v2423, %v2422
        %v2441 = vpack.c.b16 %v2425, %v2424
        %v2443 = vshrl.u32 %v2426, 16
        %v2445 = vrot.slane %v2443, 7
        %v2446 = vshll.u32 %v2426, 16
        %v2448 = vor.u32 %v2445, %v2446
        %v2450 = vshrl.u32 %v2427, 16
        %v2452 = vrot.slane %v2450, 7
        %v2453 = vshll.u32 %v2427, 16
        %v2455 = vor.u32 %v2452, %v2453
        %v2457 = vshrl.u32 %v2428, 16
        %v2459 = vrot.slane %v2457, 7
        %v2460 = vshll.u32 %v2428, 16
        %v2462 = vor.u32 %v2459, %v2460
        %v2464 = vshrl.u32 %v2429, 16
        %v2466 = vrot.slane %v2464, 7
        %v2467 = vshll.u32 %v2429, 16
        %v2469 = vor.u32 %v2466, %v2467
        %v2471 = vshrl.u32 %v2430, 16
        %v2473 = vrot.slane %v2471, 7
        %v2474 = vshll.u32 %v2430, 16
        %v2476 = vor.u32 %v2473, %v2474
        %v2478 = vshrl.u32 %v2431, 16
        %v2480 = vrot.slane %v2478, 7
        %v2481 = vshll.u32 %v2431, 16
        %v2483 = vor.u32 %v2480, %v2481
        %v2485 = vshrl.u32 %v2432, 16
        %v2487 = vrot.slane %v2485, 7
        %v2488 = vshll.u32 %v2432, 16
        %v2490 = vor.u32 %v2487, %v2488
        %v2492 = vshrl.u32 %v2433, 16
        %v2494 = vrot.slane %v2492, 7
        %v2495 = vshll.u32 %v2433, 16
        %v2497 = vor.u32 %v2494, %v2495
        %v2499 = vshrl.u32 %v2434, 16
        %v2501 = vrot.slane %v2499, 7
        %v2502 = vshll.u32 %v2434, 16
        %v2504 = vor.u32 %v2501, %v2502
        %v2506 = vshrl.u32 %v2435, 16
        %v2508 = vrot.slane %v2506, 7
        %v2509 = vshll.u32 %v2435, 16
        %v2511 = vor.u32 %v2508, %v2509
        %v2513 = vshrl.u32 %v2436, 16
        %v2515 = vrot.slane %v2513, 7
        %v2516 = vshll.u32 %v2436, 16
        %v2518 = vor.u32 %v2515, %v2516
        %v2520 = vshrl.u32 %v2437, 16
        %v2522 = vrot.slane %v2520, 7
        %v2523 = vshll.u32 %v2437, 16
        %v2525 = vor.u32 %v2522, %v2523
        %v2527 = vshrl.u32 %v2438, 16
        %v2529 = vrot.slane %v2527, 7
        %v2530 = vshll.u32 %v2438, 16
        %v2532 = vor.u32 %v2529, %v2530
        %v2534 = vshrl.u32 %v2439, 16
        %v2536 = vrot.slane %v2534, 7
        %v2537 = vshll.u32 %v2439, 16
        %v2539 = vor.u32 %v2536, %v2537
        %v2541 = vshrl.u32 %v2440, 16
        %v2543 = vrot.slane %v2541, 7
        %v2544 = vshll.u32 %v2440, 16
        %v2546 = vor.u32 %v2543, %v2544
        %v2548 = vshrl.u32 %v2441, 16
        %v2550 = vrot.slane %v2548, 7
        %v2551 = vshll.u32 %v2441, 16
        %v2553 = vor.u32 %v2550, %v2551
        %v2586 = vsel %vm1074, 0, %v2448
        %v2587 = vsel %vm1074, 0, %v2455
        %v2588 = vsel %vm1074, 0, %v2462
        %v2589 = vsel %vm1074, 0, %v2469
        %v2590 = vsel %vm1074, 0, %v2476
        %v2591 = vsel %vm1074, 0, %v2483
        %v2592 = vsel %vm1074, 0, %v2490
        %v2593 = vsel %vm1074, 0, %v2497
        %v2594 = vsel %vm1074, 0, %v2504
        %v2595 = vsel %vm1074, 0, %v2511
        %v2596 = vsel %vm1074, 0, %v2518
        %v2597 = vsel %vm1074, 0, %v2525
        %v2598 = vsel %vm1074, 0, %v2532
        %v2599 = vsel %vm1074, 0, %v2539
        %v2600 = vsel %vm1074, 0, %v2546
        %v2601 = vsel %vm1074, 0, %v2553
        %v2602 = vsel %vm1074, %v2445, 0
        %v2603 = vsel %vm1074, %v2452, 0
        %v2604 = vsel %vm1074, %v2459, 0
        %v2605 = vsel %vm1074, %v2466, 0
        %v2606 = vsel %vm1074, %v2473, 0
        %v2607 = vsel %vm1074, %v2480, 0
        %v2608 = vsel %vm1074, %v2487, 0
        %v2609 = vsel %vm1074, %v2494, 0
        %v2610 = vsel %vm1074, %v2501, 0
        %v2611 = vsel %vm1074, %v2508, 0
        %v2612 = vsel %vm1074, %v2515, 0
        %v2613 = vsel %vm1074, %v2522, 0
        %v2614 = vsel %vm1074, %v2529, 0
        %v2615 = vsel %vm1074, %v2536, 0
        %v2616 = vsel %vm1074, %v2543, 0
        %v2617 = vsel %vm1074, %v2550, 0
        %v2619 = vshrl.u32 %v2586, 16
        %v2621 = vshll.u32 %v2586, 16
        %v2623 = vrot.slane %v2621, 1
        %v2624 = vor.u32 %v2619, %v2623
        %v2626 = vshll.u32 %v2602, 16
        %v2628 = vrot.slane %v2626, 1
        %v2629 = vsel %vm1109, %v2624, %v2628
        %v2631 = vshrl.u32 %v2587, 16
        %v2633 = vshll.u32 %v2587, 16
        %v2635 = vrot.slane %v2633, 1
        %v2636 = vor.u32 %v2631, %v2635
        %v2638 = vshll.u32 %v2603, 16
        %v2640 = vrot.slane %v2638, 1
        %v2641 = vsel %vm1109, %v2636, %v2640
        %v2643 = vshrl.u32 %v2588, 16
        %v2645 = vshll.u32 %v2588, 16
        %v2647 = vrot.slane %v2645, 1
        %v2648 = vor.u32 %v2643, %v2647
        %v2650 = vshll.u32 %v2604, 16
        %v2652 = vrot.slane %v2650, 1
        %v2653 = vsel %vm1109, %v2648, %v2652
        %v2655 = vshrl.u32 %v2589, 16
        %v2657 = vshll.u32 %v2589, 16
        %v2659 = vrot.slane %v2657, 1
        %v2660 = vor.u32 %v2655, %v2659
        %v2662 = vshll.u32 %v2605, 16
        %v2664 = vrot.slane %v2662, 1
        %v2665 = vsel %vm1109, %v2660, %v2664
        %v2667 = vshrl.u32 %v2590, 16
        %v2669 = vshll.u32 %v2590, 16
        %v2671 = vrot.slane %v2669, 1
        %v2672 = vor.u32 %v2667, %v2671
        %v2674 = vshll.u32 %v2606, 16
        %v2676 = vrot.slane %v2674, 1
        %v2677 = vsel %vm1109, %v2672, %v2676
        %v2679 = vshrl.u32 %v2591, 16
        %v2681 = vshll.u32 %v2591, 16
        %v2683 = vrot.slane %v2681, 1
        %v2684 = vor.u32 %v2679, %v2683
        %v2686 = vshll.u32 %v2607, 16
        %v2688 = vrot.slane %v2686, 1
        %v2689 = vsel %vm1109, %v2684, %v2688
        %v2691 = vshrl.u32 %v2592, 16
        %v2693 = vshll.u32 %v2592, 16
        %v2695 = vrot.slane %v2693, 1
        %v2696 = vor.u32 %v2691, %v2695
        %v2698 = vshll.u32 %v2608, 16
        %v2700 = vrot.slane %v2698, 1
        %v2701 = vsel %vm1109, %v2696, %v2700
        %v2703 = vshrl.u32 %v2593, 16
        %v2705 = vshll.u32 %v2593, 16
        %v2707 = vrot.slane %v2705, 1
        %v2708 = vor.u32 %v2703, %v2707
        %v2710 = vshll.u32 %v2609, 16
        %v2712 = vrot.slane %v2710, 1
        %v2713 = vsel %vm1109, %v2708, %v2712
        %v2715 = vshrl.u32 %v2594, 16
        %v2717 = vshll.u32 %v2594, 16
        %v2719 = vrot.slane %v2717, 1
        %v2720 = vor.u32 %v2715, %v2719
        %v2722 = vshll.u32 %v2610, 16
        %v2724 = vrot.slane %v2722, 1
        %v2725 = vsel %vm1109, %v2720, %v2724
        %v2727 = vshrl.u32 %v2595, 16
        %v2729 = vshll.u32 %v2595, 16
        %v2731 = vrot.slane %v2729, 1
        %v2732 = vor.u32 %v2727, %v2731
        %v2734 = vshll.u32 %v2611, 16
        %v2736 = vrot.slane %v2734, 1
        %v2737 = vsel %vm1109, %v2732, %v2736
        %v2739 = vshrl.u32 %v2596, 16
        %v2741 = vshll.u32 %v2596, 16
        %v2743 = vrot.slane %v2741, 1
        %v2744 = vor.u32 %v2739, %v2743
        %v2746 = vshll.u32 %v2612, 16
        %v2748 = vrot.slane %v2746, 1
        %v2749 = vsel %vm1109, %v2744, %v2748
        %v2751 = vshrl.u32 %v2597, 16
        %v2753 = vshll.u32 %v2597, 16
        %v2755 = vrot.slane %v2753, 1
        %v2756 = vor.u32 %v2751, %v2755
        %v2758 = vshll.u32 %v2613, 16
        %v2760 = vrot.slane %v2758, 1
        %v2761 = vsel %vm1109, %v2756, %v2760
        %v2763 = vshrl.u32 %v2598, 16
        %v2765 = vshll.u32 %v2598, 16
        %v2767 = vrot.slane %v2765, 1
        %v2768 = vor.u32 %v2763, %v2767
        %v2770 = vshll.u32 %v2614, 16
        %v2772 = vrot.slane %v2770, 1
        %v2773 = vsel %vm1109, %v2768, %v2772
        %v2775 = vshrl.u32 %v2599, 16
        %v2777 = vshll.u32 %v2599, 16
        %v2779 = vrot.slane %v2777, 1
        %v2780 = vor.u32 %v2775, %v2779
        %v2782 = vshll.u32 %v2615, 16
        %v2784 = vrot.slane %v2782, 1
        %v2785 = vsel %vm1109, %v2780, %v2784
        %v2787 = vshrl.u32 %v2600, 16
        %v2789 = vshll.u32 %v2600, 16
        %v2791 = vrot.slane %v2789, 1
        %v2792 = vor.u32 %v2787, %v2791
        %v2794 = vshll.u32 %v2616, 16
        %v2796 = vrot.slane %v2794, 1
        %v2797 = vsel %vm1109, %v2792, %v2796
        %2798 = vrot.lane.b32.xlu0 %v2629, 32
        %v2799 = vpop.permute.xlu0 %2798
        %2800 = vrot.lane.b32.xlu0 %v2641, 32
        %v2801 = vpop.permute.xlu0 %2800
        %2802 = vrot.lane.b32.xlu0 %v2653, 32
        %v2803 = vpop.permute.xlu0 %2802
        %2804 = vrot.lane.b32.xlu0 %v2665, 32
        %v2805 = vpop.permute.xlu0 %2804
        %2806 = vrot.lane.b32.xlu0 %v2677, 32
        %v2807 = vpop.permute.xlu0 %2806
        %2808 = vrot.lane.b32.xlu0 %v2689, 32
        %v2809 = vpop.permute.xlu0 %2808
        %2810 = vrot.lane.b32.xlu0 %v2701, 32
        %v2811 = vpop.permute.xlu0 %2810
        %2812 = vrot.lane.b32.xlu0 %v2713, 32
        %v2813 = vpop.permute.xlu0 %2812
        %2814 = vrot.lane.b32.xlu0 %v2725, 32
        %v2815 = vpop.permute.xlu0 %2814
        %2816 = vrot.lane.b32.xlu0 %v2737, 32
        %v2817 = vpop.permute.xlu0 %2816
        %2818 = vrot.lane.b32.xlu0 %v2749, 32
        %v2819 = vpop.permute.xlu0 %2818
        %2820 = vrot.lane.b32.xlu0 %v2761, 32
        %v2821 = vpop.permute.xlu0 %2820
        %2822 = vrot.lane.b32.xlu0 %v2773, 32
        %v2823 = vpop.permute.xlu0 %2822
        %2824 = vrot.lane.b32.xlu0 %v2785, 32
        %v2825 = vpop.permute.xlu0 %2824
        %2826 = vrot.lane.b32.xlu0 %v2797, 32
        %v2827 = vpop.permute.xlu0 %2826
        %v2858 = vrot.slane %v2586, 1
        %v2859 = vrot.slane %v2602, 1
        %v2860 = vsel %vm1366, %v2858, %v2859
        %v2861 = vrot.slane %v2587, 1
        %v2862 = vrot.slane %v2603, 1
        %v2863 = vsel %vm1366, %v2861, %v2862
        %v2864 = vrot.slane %v2588, 1
        %v2865 = vrot.slane %v2604, 1
        %v2866 = vsel %vm1366, %v2864, %v2865
        %v2867 = vrot.slane %v2589, 1
        %v2868 = vrot.slane %v2605, 1
        %v2869 = vsel %vm1366, %v2867, %v2868
        %v2870 = vrot.slane %v2590, 1
        %v2871 = vrot.slane %v2606, 1
        %v2872 = vsel %vm1366, %v2870, %v2871
        %v2873 = vrot.slane %v2591, 1
        %v2874 = vrot.slane %v2607, 1
        %v2875 = vsel %vm1366, %v2873, %v2874
        %v2876 = vrot.slane %v2592, 1
        %v2877 = vrot.slane %v2608, 1
        %v2878 = vsel %vm1366, %v2876, %v2877
        %v2879 = vrot.slane %v2593, 1
        %v2880 = vrot.slane %v2609, 1
        %v2881 = vsel %vm1366, %v2879, %v2880
        %v2882 = vrot.slane %v2594, 1
        %v2883 = vrot.slane %v2610, 1
        %v2884 = vsel %vm1366, %v2882, %v2883
        %v2885 = vrot.slane %v2595, 1
        %v2886 = vrot.slane %v2611, 1
        %v2887 = vsel %vm1366, %v2885, %v2886
        %v2888 = vrot.slane %v2596, 1
        %v2889 = vrot.slane %v2612, 1
        %v2890 = vsel %vm1366, %v2888, %v2889
        %v2891 = vrot.slane %v2597, 1
        %v2892 = vrot.slane %v2613, 1
        %v2893 = vsel %vm1366, %v2891, %v2892
        %v2894 = vrot.slane %v2598, 1
        %v2895 = vrot.slane %v2614, 1
        %v2896 = vsel %vm1366, %v2894, %v2895
        %v2897 = vrot.slane %v2599, 1
        %v2898 = vrot.slane %v2615, 1
        %v2899 = vsel %vm1366, %v2897, %v2898
        %v2900 = vrot.slane %v2600, 1
        %v2901 = vrot.slane %v2616, 1
        %v2902 = vsel %vm1366, %v2900, %v2901
        %2903 = vrot.lane.b32.xlu0 %v2860, 64
        %v2904 = vpop.permute.xlu0 %2903
        %2905 = vrot.lane.b32.xlu0 %v2863, 64
        %v2906 = vpop.permute.xlu0 %2905
        %2907 = vrot.lane.b32.xlu0 %v2866, 64
        %v2908 = vpop.permute.xlu0 %2907
        %2909 = vrot.lane.b32.xlu0 %v2869, 64
        %v2910 = vpop.permute.xlu0 %2909
        %2911 = vrot.lane.b32.xlu0 %v2872, 64
        %v2912 = vpop.permute.xlu0 %2911
        %2913 = vrot.lane.b32.xlu0 %v2875, 64
        %v2914 = vpop.permute.xlu0 %2913
        %2915 = vrot.lane.b32.xlu0 %v2878, 64
        %v2916 = vpop.permute.xlu0 %2915
        %2917 = vrot.lane.b32.xlu0 %v2881, 64
        %v2918 = vpop.permute.xlu0 %2917
        %2919 = vrot.lane.b32.xlu0 %v2884, 64
        %v2920 = vpop.permute.xlu0 %2919
        %2921 = vrot.lane.b32.xlu0 %v2887, 64
        %v2922 = vpop.permute.xlu0 %2921
        %2923 = vrot.lane.b32.xlu0 %v2890, 64
        %v2924 = vpop.permute.xlu0 %2923
        %2925 = vrot.lane.b32.xlu0 %v2893, 64
        %v2926 = vpop.permute.xlu0 %2925
        %2927 = vrot.lane.b32.xlu0 %v2896, 64
        %v2928 = vpop.permute.xlu0 %2927
        %2929 = vrot.lane.b32.xlu0 %v2899, 64
        %v2930 = vpop.permute.xlu0 %2929
        %2931 = vrot.lane.b32.xlu0 %v2902, 64
        %v2932 = vpop.permute.xlu0 %2931
        %2934 = vrot.lane.b32.xlu0 %v2586, 96
        %v2935 = vpop.permute.xlu0 %2934
        %2936 = vrot.lane.b32.xlu0 %v2587, 96
        %v2937 = vpop.permute.xlu0 %2936
        %2938 = vrot.lane.b32.xlu0 %v2588, 96
        %v2939 = vpop.permute.xlu0 %2938
        %2940 = vrot.lane.b32.xlu0 %v2589, 96
        %v2941 = vpop.permute.xlu0 %2940
        %2942 = vrot.lane.b32.xlu0 %v2590, 96
        %v2943 = vpop.permute.xlu0 %2942
        %2944 = vrot.lane.b32.xlu0 %v2591, 96
        %v2945 = vpop.permute.xlu0 %2944
        %2946 = vrot.lane.b32.xlu0 %v2592, 96
        %v2947 = vpop.permute.xlu0 %2946
        %2948 = vrot.lane.b32.xlu0 %v2593, 96
        %v2949 = vpop.permute.xlu0 %2948
        %2950 = vrot.lane.b32.xlu0 %v2594, 96
        %v2951 = vpop.permute.xlu0 %2950
        %2952 = vrot.lane.b32.xlu0 %v2595, 96
        %v2953 = vpop.permute.xlu0 %2952
        %2954 = vrot.lane.b32.xlu0 %v2596, 96
        %v2955 = vpop.permute.xlu0 %2954
        %2956 = vrot.lane.b32.xlu0 %v2597, 96
        %v2957 = vpop.permute.xlu0 %2956
        %2958 = vrot.lane.b32.xlu0 %v2598, 96
        %v2959 = vpop.permute.xlu0 %2958
        %2960 = vrot.lane.b32.xlu0 %v2599, 96
        %v2961 = vpop.permute.xlu0 %2960
        %2962 = vrot.lane.b32.xlu0 %v2600, 96
        %v2963 = vpop.permute.xlu0 %2962
        %2964 = vrot.lane.b32.xlu0 %v2601, 96
        %v2965 = vpop.permute.xlu0 %2964
        %v2967 = vshrl.u32 %v2601, 16
        %v2969 = vshll.u32 %v2601, 16
        %v2971 = vrot.slane %v2969, 1
        %v2972 = vor.u32 %v2967, %v2971
        %v2974 = vshll.u32 %v2617, 16
        %v2976 = vrot.slane %v2974, 1
        %v2977 = vsel %vm1109, %v2972, %v2976
        %v2979 = vrot.slane %v2601, 1
        %v2980 = vrot.slane %v2617, 1
        %v2981 = vsel %vm1366, %v2979, %v2980
        %2982 = vrot.lane.b32.xlu0 %v2860, 32
        %v2983 = vpop.permute.xlu0 %2982
        %2984 = vrot.lane.b32.xlu0 %v2863, 32
        %v2985 = vpop.permute.xlu0 %2984
        %2986 = vrot.lane.b32.xlu0 %v2866, 32
        %v2987 = vpop.permute.xlu0 %2986
        %2988 = vrot.lane.b32.xlu0 %v2869, 32
        %v2989 = vpop.permute.xlu0 %2988
        %2990 = vrot.lane.b32.xlu0 %v2872, 32
        %v2991 = vpop.permute.xlu0 %2990
        %2992 = vrot.lane.b32.xlu0 %v2875, 32
        %v2993 = vpop.permute.xlu0 %2992
        %2994 = vrot.lane.b32.xlu0 %v2878, 32
        %v2995 = vpop.permute.xlu0 %2994
        %2996 = vrot.lane.b32.xlu0 %v2881, 32
        %v2997 = vpop.permute.xlu0 %2996
        %2998 = vrot.lane.b32.xlu0 %v2884, 32
        %v2999 = vpop.permute.xlu0 %2998
        %3000 = vrot.lane.b32.xlu0 %v2887, 32
        %v3001 = vpop.permute.xlu0 %3000
        %3002 = vrot.lane.b32.xlu0 %v2890, 32
        %v3003 = vpop.permute.xlu0 %3002
        %3004 = vrot.lane.b32.xlu0 %v2893, 32
        %v3005 = vpop.permute.xlu0 %3004
        %3006 = vrot.lane.b32.xlu0 %v2896, 32
        %v3007 = vpop.permute.xlu0 %3006
        %3008 = vrot.lane.b32.xlu0 %v2899, 32
        %v3009 = vpop.permute.xlu0 %3008
        %3010 = vrot.lane.b32.xlu0 %v2902, 32
        %v3011 = vpop.permute.xlu0 %3010
        %3012 = vrot.lane.b32.xlu0 %v2981, 32
        %v3013 = vpop.permute.xlu0 %3012
        %3014 = vrot.lane.b32.xlu0 %v2587, 64
        %v3015 = vpop.permute.xlu0 %3014
        %3016 = vrot.lane.b32.xlu0 %v2588, 64
        %v3017 = vpop.permute.xlu0 %3016
        %3018 = vrot.lane.b32.xlu0 %v2589, 64
        %v3019 = vpop.permute.xlu0 %3018
        %3020 = vrot.lane.b32.xlu0 %v2590, 64
        %v3021 = vpop.permute.xlu0 %3020
        %3022 = vrot.lane.b32.xlu0 %v2591, 64
        %v3023 = vpop.permute.xlu0 %3022
        %3024 = vrot.lane.b32.xlu0 %v2592, 64
        %v3025 = vpop.permute.xlu0 %3024
        %3026 = vrot.lane.b32.xlu0 %v2593, 64
        %v3027 = vpop.permute.xlu0 %3026
        %3028 = vrot.lane.b32.xlu0 %v2594, 64
        %v3029 = vpop.permute.xlu0 %3028
        %3030 = vrot.lane.b32.xlu0 %v2595, 64
        %v3031 = vpop.permute.xlu0 %3030
        %3032 = vrot.lane.b32.xlu0 %v2596, 64
        %v3033 = vpop.permute.xlu0 %3032
        %3034 = vrot.lane.b32.xlu0 %v2597, 64
        %v3035 = vpop.permute.xlu0 %3034
        %3036 = vrot.lane.b32.xlu0 %v2598, 64
        %v3037 = vpop.permute.xlu0 %3036
        %3038 = vrot.lane.b32.xlu0 %v2599, 64
        %v3039 = vpop.permute.xlu0 %3038
        %3040 = vrot.lane.b32.xlu0 %v2600, 64
        %v3041 = vpop.permute.xlu0 %3040
        %3042 = vrot.lane.b32.xlu0 %v2601, 64
        %v3043 = vpop.permute.xlu0 %3042
        %3044 = vrot.lane.b32.xlu0 %v2641, 96
        %v3045 = vpop.permute.xlu0 %3044
        %3046 = vrot.lane.b32.xlu0 %v2653, 96
        %v3047 = vpop.permute.xlu0 %3046
        %3048 = vrot.lane.b32.xlu0 %v2665, 96
        %v3049 = vpop.permute.xlu0 %3048
        %3050 = vrot.lane.b32.xlu0 %v2677, 96
        %v3051 = vpop.permute.xlu0 %3050
        %3052 = vrot.lane.b32.xlu0 %v2689, 96
        %v3053 = vpop.permute.xlu0 %3052
        %3054 = vrot.lane.b32.xlu0 %v2701, 96
        %v3055 = vpop.permute.xlu0 %3054
        %3056 = vrot.lane.b32.xlu0 %v2713, 96
        %v3057 = vpop.permute.xlu0 %3056
        %3058 = vrot.lane.b32.xlu0 %v2725, 96
        %v3059 = vpop.permute.xlu0 %3058
        %3060 = vrot.lane.b32.xlu0 %v2737, 96
        %v3061 = vpop.permute.xlu0 %3060
        %3062 = vrot.lane.b32.xlu0 %v2749, 96
        %v3063 = vpop.permute.xlu0 %3062
        %3064 = vrot.lane.b32.xlu0 %v2761, 96
        %v3065 = vpop.permute.xlu0 %3064
        %3066 = vrot.lane.b32.xlu0 %v2773, 96
        %v3067 = vpop.permute.xlu0 %3066
        %3068 = vrot.lane.b32.xlu0 %v2785, 96
        %v3069 = vpop.permute.xlu0 %3068
        %3070 = vrot.lane.b32.xlu0 %v2797, 96
        %v3071 = vpop.permute.xlu0 %3070
        %3072 = vrot.lane.b32.xlu0 %v2977, 96
        %v3073 = vpop.permute.xlu0 %3072
        %v3075 = vsel %vm1592, %v2586, %v2799
        %v3077 = vsel %vm1592, %v2587, %v2801
        %v3079 = vsel %vm1592, %v2588, %v2803
        %v3081 = vsel %vm1592, %v2589, %v2805
        %v3083 = vsel %vm1592, %v2590, %v2807
        %v3085 = vsel %vm1592, %v2591, %v2809
        %v3087 = vsel %vm1592, %v2592, %v2811
        %v3089 = vsel %vm1592, %v2593, %v2813
        %v3091 = vsel %vm1592, %v2594, %v2815
        %v3093 = vsel %vm1592, %v2595, %v2817
        %v3095 = vsel %vm1592, %v2596, %v2819
        %v3097 = vsel %vm1592, %v2597, %v2821
        %v3099 = vsel %vm1592, %v2598, %v2823
        %v3101 = vsel %vm1592, %v2599, %v2825
        %v3103 = vsel %vm1592, %v2600, %v2827
        %v3105 = vsel %vm1625, %v3075, %v2904
        %v3107 = vsel %vm1625, %v3077, %v2906
        %v3109 = vsel %vm1625, %v3079, %v2908
        %v3111 = vsel %vm1625, %v3081, %v2910
        %v3113 = vsel %vm1625, %v3083, %v2912
        %v3115 = vsel %vm1625, %v3085, %v2914
        %v3117 = vsel %vm1625, %v3087, %v2916
        %v3119 = vsel %vm1625, %v3089, %v2918
        %v3121 = vsel %vm1625, %v3091, %v2920
        %v3123 = vsel %vm1625, %v3093, %v2922
        %v3125 = vsel %vm1625, %v3095, %v2924
        %v3127 = vsel %vm1625, %v3097, %v2926
        %v3129 = vsel %vm1625, %v3099, %v2928
        %v3131 = vsel %vm1625, %v3101, %v2930
        %v3133 = vsel %vm1625, %v3103, %v2932
        %v3135 = vsel %vm1658, %v1627, %v2935
        %v3138 = vsel %vm1658, %v3105, %v2937
        %v3141 = vsel %vm1658, %v3107, %v2939
        %v3144 = vsel %vm1658, %v3109, %v2941
        %v3147 = vsel %vm1658, %v3111, %v2943
        %v3150 = vsel %vm1658, %v3113, %v2945
        %v3153 = vsel %vm1658, %v3115, %v2947
        %v3156 = vsel %vm1658, %v3117, %v2949
        %v3159 = vsel %vm1658, %v3119, %v2951
        %v3162 = vsel %vm1658, %v3121, %v2953
        %v3165 = vsel %vm1658, %v3123, %v2955
        %v3168 = vsel %vm1658, %v3125, %v2957
        %v3171 = vsel %vm1658, %v3127, %v2959
        %v3174 = vsel %vm1658, %v3129, %v2961
        %v3177 = vsel %vm1658, %v3131, %v2963
        %v3180 = vsel %vm1658, %v3133, %v2965
        %v3184 = vsel %vm1592, %v2629, %v2983
        %v3187 = vsel %vm1592, %v2641, %v2985
        %v3190 = vsel %vm1592, %v2653, %v2987
        %v3193 = vsel %vm1592, %v2665, %v2989
        %v3196 = vsel %vm1592, %v2677, %v2991
        %v3199 = vsel %vm1592, %v2689, %v2993
        %v3202 = vsel %vm1592, %v2701, %v2995
        %v3205 = vsel %vm1592, %v2713, %v2997
        %v3208 = vsel %vm1592, %v2725, %v2999
        %v3211 = vsel %vm1592, %v2737, %v3001
        %v3214 = vsel %vm1592, %v2749, %v3003
        %v3217 = vsel %vm1592, %v2761, %v3005
        %v3220 = vsel %vm1592, %v2773, %v3007
        %v3223 = vsel %vm1592, %v2785, %v3009
        %v3226 = vsel %vm1592, %v2797, %v3011
        %v3229 = vsel %vm1592, %v2977, %v3013
        %v3231 = vsel %vm1625, %v3184, %v3015
        %v3233 = vsel %vm1625, %v3187, %v3017
        %v3235 = vsel %vm1625, %v3190, %v3019
        %v3237 = vsel %vm1625, %v3193, %v3021
        %v3239 = vsel %vm1625, %v3196, %v3023
        %v3241 = vsel %vm1625, %v3199, %v3025
        %v3243 = vsel %vm1625, %v3202, %v3027
        %v3245 = vsel %vm1625, %v3205, %v3029
        %v3247 = vsel %vm1625, %v3208, %v3031
        %v3249 = vsel %vm1625, %v3211, %v3033
        %v3251 = vsel %vm1625, %v3214, %v3035
        %v3253 = vsel %vm1625, %v3217, %v3037
        %v3255 = vsel %vm1625, %v3220, %v3039
        %v3257 = vsel %vm1625, %v3223, %v3041
        %v3259 = vsel %vm1625, %v3226, %v3043
        %v3260 = vsel %vm1625, %v3229, %v1559
        %v3262 = vsel %vm1658, %v3231, %v3045
        %v3265 = vsel %vm1658, %v3233, %v3047
        %v3268 = vsel %vm1658, %v3235, %v3049
        %v3271 = vsel %vm1658, %v3237, %v3051
        %v3274 = vsel %vm1658, %v3239, %v3053
        %v3277 = vsel %vm1658, %v3241, %v3055
        %v3280 = vsel %vm1658, %v3243, %v3057
        %v3283 = vsel %vm1658, %v3245, %v3059
        %v3286 = vsel %vm1658, %v3247, %v3061
        %v3289 = vsel %vm1658, %v3249, %v3063
        %v3292 = vsel %vm1658, %v3251, %v3065
        %v3295 = vsel %vm1658, %v3253, %v3067
        %v3298 = vsel %vm1658, %v3255, %v3069
        %v3301 = vsel %vm1658, %v3257, %v3071
        %v3304 = vsel %vm1658, %v3259, %v3073
        %v3306 = vsel %vm1658, %v3260, %v1591
        %v3309 = vperm.slane %v2329, 0
        %v3347 = vunpack.c.l.b16 %v2293
        %v3348 = vunpack.c.l.b16 %v2294
        %v3349 = vunpack.c.l.b16 %v2295
        %v3350 = vunpack.c.l.b16 %v2296
        %v3351 = vunpack.c.l.b16 %v2297
        %v3352 = vunpack.c.l.b16 %v2298
        %v3353 = vunpack.c.l.b16 %v2299
        %v3354 = vunpack.c.l.b16 %v2300
        %v3355 = vunpack.c.l.b16 %v2301
        %v3356 = vunpack.c.l.b16 %v2302
        %v3357 = vunpack.c.l.b16 %v2303
        %v3358 = vunpack.c.l.b16 %v2304
        %v3359 = vunpack.c.l.b16 %v2305
        %v3360 = vunpack.c.l.b16 %v2306
        %v3361 = vunpack.c.l.b16 %v2307
        %v3362 = vunpack.c.l.b16 %v2308
        %v3363 = vunpack.c.l.b16 %v2309
        %v3364 = vunpack.c.l.b16 %v2310
        %v3365 = vunpack.c.l.b16 %v2311
        %v3366 = vunpack.c.l.b16 %v2312
        %v3367 = vunpack.c.l.b16 %v2313
        %v3368 = vunpack.c.l.b16 %v2314
        %v3369 = vunpack.c.l.b16 %v2315
        %v3370 = vunpack.c.l.b16 %v2316
        %v3371 = vunpack.c.l.b16 %v2317
        %v3372 = vunpack.c.l.b16 %v2318
        %v3373 = vunpack.c.l.b16 %v2319
        %v3374 = vunpack.c.l.b16 %v2320
        %v3375 = vunpack.c.l.b16 %v2321
        %v3376 = vunpack.c.l.b16 %v2322
        %v3377 = vunpack.c.l.b16 %v2323
        %v3378 = vunpack.c.l.b16 %v2324
        %v3379 = vunpack.c.l.b16 %v2325
        %v3380 = vunpack.c.l.b16 %v2326
        %v3381 = vunpack.c.l.b16 %v2327
        %v3382 = vunpack.c.l.b16 %v2328
        %v3383 = vpack.c.b16 %v3348, %v3347
        %v3384 = vpack.c.b16 %v3350, %v3349
        %v3385 = vpack.c.b16 %v3352, %v3351
        %v3386 = vpack.c.b16 %v3354, %v3353
        %v3387 = vpack.c.b16 %v3356, %v3355
        %v3388 = vpack.c.b16 %v3358, %v3357
        %v3389 = vpack.c.b16 %v3360, %v3359
        %v3390 = vpack.c.b16 %v3362, %v3361
        %v3391 = vpack.c.b16 %v3364, %v3363
        %v3392 = vpack.c.b16 %v3366, %v3365
        %v3393 = vpack.c.b16 %v3368, %v3367
        %v3394 = vpack.c.b16 %v3370, %v3369
        %v3395 = vpack.c.b16 %v3372, %v3371
        %v3396 = vpack.c.b16 %v3374, %v3373
        %v3397 = vpack.c.b16 %v3376, %v3375
        %v3398 = vpack.c.b16 %v3378, %v3377
        %v3399 = vpack.c.b16 %v3380, %v3379
        %v3400 = vpack.c.b16 %v3382, %v3381
        %v3420 = vsel %vm1592, %v2863, 0
        %v3423 = vsel %vm1592, %v2866, 0
        %v3426 = vsel %vm1592, %v2869, 0
        %v3429 = vsel %vm1592, %v2872, 0
        %v3432 = vsel %vm1592, %v2875, 0
        %v3435 = vsel %vm1592, %v2878, 0
        %v3438 = vsel %vm1592, %v2881, 0
        %v3441 = vsel %vm1592, %v2884, 0
        %v3444 = vsel %vm1592, %v2887, 0
        %v3447 = vsel %vm1592, %v2890, 0
        %v3450 = vsel %vm1592, %v2893, 0
        %v3453 = vsel %vm1592, %v2896, 0
        %v3456 = vsel %vm1592, %v2899, 0
        %v3459 = vsel %vm1592, %v2902, 0
        %v3462 = vsel %vm1592, %v2981, 0
        %3464 = vmatpush.bf16.msra.mxu0 %v3390
        %3465 = vmatpush.bf16.msra.mxu0 %v3389
        %3466 = vmatpush.bf16.msra.mxu0 %v3388
        %3467 = vmatpush.bf16.msra.mxu0 %v3387
        %3468 = vmatpush.bf16.msra.mxu0 %v3386
        %3469 = vmatpush.bf16.msra.mxu0 %v3385
        %3470 = vmatpush.bf16.msra.mxu0 %v3384
        %3471 = vmatpush.bf16.msra.mxu0 %v3383
        %3472 = vmatmul.bf16.gmra.mxu0 %v3135
        %v3473 = vpop.f32.mrf.mxu0
        %v3474 = vadd.f32 %v3309, %v3473
        %v3475 = vpop.f32.mrf.mxu0
        %v3476 = vadd.f32 %v3309, %v3475
        %3477 = vmatmul.bf16.gmra.mxu0 %v3138
        %v3478 = vpop.f32.mrf.mxu0
        %v3479 = vadd.f32 %v3309, %v3478
        %v3480 = vpop.f32.mrf.mxu0
        %v3481 = vadd.f32 %v3309, %v3480
        %3482 = vmatmul.bf16.gmra.mxu0 %v3141
        %v3483 = vpop.f32.mrf.mxu0
        %v3484 = vadd.f32 %v3309, %v3483
        %v3485 = vpop.f32.mrf.mxu0
        %v3486 = vadd.f32 %v3309, %v3485
        %3487 = vmatmul.bf16.gmra.mxu0 %v3144
        %v3488 = vpop.f32.mrf.mxu0
        %v3489 = vadd.f32 %v3309, %v3488
        %v3490 = vpop.f32.mrf.mxu0
        %v3491 = vadd.f32 %v3309, %v3490
        %3492 = vmatmul.bf16.gmra.mxu0 %v3147
        %v3493 = vpop.f32.mrf.mxu0
        %v3494 = vadd.f32 %v3309, %v3493
        %v3495 = vpop.f32.mrf.mxu0
        %v3496 = vadd.f32 %v3309, %v3495
        %3497 = vmatmul.bf16.gmra.mxu0 %v3150
        %v3498 = vpop.f32.mrf.mxu0
        %v3499 = vadd.f32 %v3309, %v3498
        %v3500 = vpop.f32.mrf.mxu0
        %v3501 = vadd.f32 %v3309, %v3500
        %3502 = vmatmul.bf16.gmra.mxu0 %v3153
        %v3503 = vpop.f32.mrf.mxu0
        %v3504 = vadd.f32 %v3309, %v3503
        %v3505 = vpop.f32.mrf.mxu0
        %v3506 = vadd.f32 %v3309, %v3505
        %3507 = vmatmul.bf16.gmra.mxu0 %v3156
        %v3508 = vpop.f32.mrf.mxu0
        %v3509 = vadd.f32 %v3309, %v3508
        %v3510 = vpop.f32.mrf.mxu0
        %v3511 = vadd.f32 %v3309, %v3510
        %3512 = vmatmul.bf16.gmra.mxu0 %v3159
        %v3513 = vpop.f32.mrf.mxu0
        %v3514 = vadd.f32 %v3309, %v3513
        %v3515 = vpop.f32.mrf.mxu0
        %v3516 = vadd.f32 %v3309, %v3515
        %3517 = vmatmul.bf16.gmra.mxu0 %v3162
        %v3518 = vpop.f32.mrf.mxu0
        %v3519 = vadd.f32 %v3309, %v3518
        %v3520 = vpop.f32.mrf.mxu0
        %v3521 = vadd.f32 %v3309, %v3520
        %3522 = vmatmul.bf16.gmra.mxu0 %v3165
        %v3523 = vpop.f32.mrf.mxu0
        %v3524 = vadd.f32 %v3309, %v3523
        %v3525 = vpop.f32.mrf.mxu0
        %v3526 = vadd.f32 %v3309, %v3525
        %3527 = vmatmul.bf16.gmra.mxu0 %v3168
        %v3528 = vpop.f32.mrf.mxu0
        %v3529 = vadd.f32 %v3309, %v3528
        %v3530 = vpop.f32.mrf.mxu0
        %v3531 = vadd.f32 %v3309, %v3530
        %3532 = vmatmul.bf16.gmra.mxu0 %v3171
        %v3533 = vpop.f32.mrf.mxu0
        %v3534 = vadd.f32 %v3309, %v3533
        %v3535 = vpop.f32.mrf.mxu0
        %v3536 = vadd.f32 %v3309, %v3535
        %3537 = vmatmul.bf16.gmra.mxu0 %v3174
        %v3538 = vpop.f32.mrf.mxu0
        %v3539 = vadd.f32 %v3309, %v3538
        %v3540 = vpop.f32.mrf.mxu0
        %v3541 = vadd.f32 %v3309, %v3540
        %3542 = vmatmul.bf16.gmra.mxu0 %v3177
        %v3543 = vpop.f32.mrf.mxu0
        %v3544 = vadd.f32 %v3309, %v3543
        %v3545 = vpop.f32.mrf.mxu0
        %v3546 = vadd.f32 %v3309, %v3545
        %3547 = vmatmul.bf16.gmra.mxu0 %v3180
        %v3548 = vpop.f32.mrf.mxu0
        %v3549 = vadd.f32 %v3309, %v3548
        %v3550 = vpop.f32.mrf.mxu0
        %v3551 = vadd.f32 %v3309, %v3550
        %3552 = vdwg.mxu0
        %3553 = vmatpush.bf16.msra.mxu0 %v3398
        %3554 = vmatpush.bf16.msra.mxu0 %v3397
        %3555 = vmatpush.bf16.msra.mxu0 %v3396
        %3556 = vmatpush.bf16.msra.mxu0 %v3395
        %3557 = vmatpush.bf16.msra.mxu0 %v3394
        %3558 = vmatpush.bf16.msra.mxu0 %v3393
        %3559 = vmatpush.bf16.msra.mxu0 %v3392
        %3560 = vmatpush.bf16.msra.mxu0 %v3391
        %3561 = vmatmul.bf16.gmra.mxu0 %v3262
        %v3562 = vpop.f32.mrf.mxu0
        %v3563 = vadd.f32 %v3474, %v3562
        %v3564 = vpop.f32.mrf.mxu0
        %v3565 = vadd.f32 %v3476, %v3564
        %3566 = vmatmul.bf16.gmra.mxu0 %v3265
        %v3567 = vpop.f32.mrf.mxu0
        %v3568 = vadd.f32 %v3479, %v3567
        %v3569 = vpop.f32.mrf.mxu0
        %v3570 = vadd.f32 %v3481, %v3569
        %3571 = vmatmul.bf16.gmra.mxu0 %v3268
        %v3572 = vpop.f32.mrf.mxu0
        %v3573 = vadd.f32 %v3484, %v3572
        %v3574 = vpop.f32.mrf.mxu0
        %v3575 = vadd.f32 %v3486, %v3574
        %3576 = vmatmul.bf16.gmra.mxu0 %v3271
        %v3577 = vpop.f32.mrf.mxu0
        %v3578 = vadd.f32 %v3489, %v3577
        %v3579 = vpop.f32.mrf.mxu0
        %v3580 = vadd.f32 %v3491, %v3579
        %3581 = vmatmul.bf16.gmra.mxu0 %v3274
        %v3582 = vpop.f32.mrf.mxu0
        %v3583 = vadd.f32 %v3494, %v3582
        %v3584 = vpop.f32.mrf.mxu0
        %v3585 = vadd.f32 %v3496, %v3584
        %3586 = vmatmul.bf16.gmra.mxu0 %v3277
        %v3587 = vpop.f32.mrf.mxu0
        %v3588 = vadd.f32 %v3499, %v3587
        %v3589 = vpop.f32.mrf.mxu0
        %v3590 = vadd.f32 %v3501, %v3589
        %3591 = vmatmul.bf16.gmra.mxu0 %v3280
        %v3592 = vpop.f32.mrf.mxu0
        %v3593 = vadd.f32 %v3504, %v3592
        %v3594 = vpop.f32.mrf.mxu0
        %v3595 = vadd.f32 %v3506, %v3594
        %3596 = vmatmul.bf16.gmra.mxu0 %v3283
        %v3597 = vpop.f32.mrf.mxu0
        %v3598 = vadd.f32 %v3509, %v3597
        %v3599 = vpop.f32.mrf.mxu0
        %v3600 = vadd.f32 %v3511, %v3599
        %3601 = vmatmul.bf16.gmra.mxu0 %v3286
        %v3602 = vpop.f32.mrf.mxu0
        %v3603 = vadd.f32 %v3514, %v3602
        %v3604 = vpop.f32.mrf.mxu0
        %v3605 = vadd.f32 %v3516, %v3604
        %3606 = vmatmul.bf16.gmra.mxu0 %v3289
        %v3607 = vpop.f32.mrf.mxu0
        %v3608 = vadd.f32 %v3519, %v3607
        %v3609 = vpop.f32.mrf.mxu0
        %v3610 = vadd.f32 %v3521, %v3609
        %3611 = vmatmul.bf16.gmra.mxu0 %v3292
        %v3612 = vpop.f32.mrf.mxu0
        %v3613 = vadd.f32 %v3524, %v3612
        %v3614 = vpop.f32.mrf.mxu0
        %v3615 = vadd.f32 %v3526, %v3614
        %3616 = vmatmul.bf16.gmra.mxu0 %v3295
        %v3617 = vpop.f32.mrf.mxu0
        %v3618 = vadd.f32 %v3529, %v3617
        %v3619 = vpop.f32.mrf.mxu0
        %v3620 = vadd.f32 %v3531, %v3619
        %3621 = vmatmul.bf16.gmra.mxu0 %v3298
        %v3622 = vpop.f32.mrf.mxu0
        %v3623 = vadd.f32 %v3534, %v3622
        %v3624 = vpop.f32.mrf.mxu0
        %v3625 = vadd.f32 %v3536, %v3624
        %3626 = vmatmul.bf16.gmra.mxu0 %v3301
        %v3627 = vpop.f32.mrf.mxu0
        %v3628 = vadd.f32 %v3539, %v3627
        %v3629 = vpop.f32.mrf.mxu0
        %v3630 = vadd.f32 %v3541, %v3629
        %3631 = vmatmul.bf16.gmra.mxu0 %v3304
        %v3632 = vpop.f32.mrf.mxu0
        %v3633 = vadd.f32 %v3544, %v3632
        %v3634 = vpop.f32.mrf.mxu0
        %v3635 = vadd.f32 %v3546, %v3634
        %3636 = vmatmul.bf16.gmra.mxu0 %v3306
        %v3637 = vpop.f32.mrf.mxu0
        %v3638 = vadd.f32 %v3549, %v3637
        %v3639 = vpop.f32.mrf.mxu0
        %v3640 = vadd.f32 %v3551, %v3639
        %3641 = vdwg.mxu0
        %3642 = vmatpush.bf16.msra.mxu0 0
        %3643 = vmatpush.bf16.msra.mxu0 0
        %3644 = vmatpush.bf16.msra.mxu0 0
        %3645 = vmatpush.bf16.msra.mxu0 0
        %3646 = vmatpush.bf16.msra.mxu0 0
        %3647 = vmatpush.bf16.msra.mxu0 0
        %3648 = vmatpush.bf16.msra.mxu0 %v3400
        %3649 = vmatpush.bf16.msra.mxu0 %v3399
        %3650 = vmatmul.bf16.gmra.mxu0 %v3420
        %v3651 = vpop.f32.mrf.mxu0
        %v3652 = vadd.f32 %v3563, %v3651
        %v3653 = vpop.f32.mrf.mxu0
        %v3654 = vadd.f32 %v3565, %v3653
        %3655 = vmatmul.bf16.gmra.mxu0 %v3423
        %v3656 = vpop.f32.mrf.mxu0
        %v3657 = vadd.f32 %v3568, %v3656
        %v3658 = vpop.f32.mrf.mxu0
        %v3659 = vadd.f32 %v3570, %v3658
        %3660 = vmatmul.bf16.gmra.mxu0 %v3426
        %v3661 = vpop.f32.mrf.mxu0
        %v3662 = vadd.f32 %v3573, %v3661
        %v3663 = vpop.f32.mrf.mxu0
        %v3664 = vadd.f32 %v3575, %v3663
        %3665 = vmatmul.bf16.gmra.mxu0 %v3429
        %v3666 = vpop.f32.mrf.mxu0
        %v3667 = vadd.f32 %v3578, %v3666
        %v3668 = vpop.f32.mrf.mxu0
        %v3669 = vadd.f32 %v3580, %v3668
        %3670 = vmatmul.bf16.gmra.mxu0 %v3432
        %v3671 = vpop.f32.mrf.mxu0
        %v3672 = vadd.f32 %v3583, %v3671
        %v3673 = vpop.f32.mrf.mxu0
        %v3674 = vadd.f32 %v3585, %v3673
        %3675 = vmatmul.bf16.gmra.mxu0 %v3435
        %v3676 = vpop.f32.mrf.mxu0
        %v3677 = vadd.f32 %v3588, %v3676
        %v3678 = vpop.f32.mrf.mxu0
        %v3679 = vadd.f32 %v3590, %v3678
        %3680 = vmatmul.bf16.gmra.mxu0 %v3438
        %v3681 = vpop.f32.mrf.mxu0
        %v3682 = vadd.f32 %v3593, %v3681
        %v3683 = vpop.f32.mrf.mxu0
        %v3684 = vadd.f32 %v3595, %v3683
        %3685 = vmatmul.bf16.gmra.mxu0 %v3441
        %v3686 = vpop.f32.mrf.mxu0
        %v3687 = vadd.f32 %v3598, %v3686
        %v3688 = vpop.f32.mrf.mxu0
        %v3689 = vadd.f32 %v3600, %v3688
        %3690 = vmatmul.bf16.gmra.mxu0 %v3444
        %v3691 = vpop.f32.mrf.mxu0
        %v3692 = vadd.f32 %v3603, %v3691
        %v3693 = vpop.f32.mrf.mxu0
        %v3694 = vadd.f32 %v3605, %v3693
        %3695 = vmatmul.bf16.gmra.mxu0 %v3447
        %v3696 = vpop.f32.mrf.mxu0
        %v3697 = vadd.f32 %v3608, %v3696
        %v3698 = vpop.f32.mrf.mxu0
        %v3699 = vadd.f32 %v3610, %v3698
        %3700 = vmatmul.bf16.gmra.mxu0 %v3450
        %v3701 = vpop.f32.mrf.mxu0
        %v3702 = vadd.f32 %v3613, %v3701
        %v3703 = vpop.f32.mrf.mxu0
        %v3704 = vadd.f32 %v3615, %v3703
        %3705 = vmatmul.bf16.gmra.mxu0 %v3453
        %v3706 = vpop.f32.mrf.mxu0
        %v3707 = vadd.f32 %v3618, %v3706
        %v3708 = vpop.f32.mrf.mxu0
        %v3709 = vadd.f32 %v3620, %v3708
        %3710 = vmatmul.bf16.gmra.mxu0 %v3456
        %v3711 = vpop.f32.mrf.mxu0
        %v3712 = vadd.f32 %v3623, %v3711
        %v3713 = vpop.f32.mrf.mxu0
        %v3714 = vadd.f32 %v3625, %v3713
        %3715 = vmatmul.bf16.gmra.mxu0 %v3459
        %v3716 = vpop.f32.mrf.mxu0
        %v3717 = vadd.f32 %v3628, %v3716
        %v3718 = vpop.f32.mrf.mxu0
        %v3719 = vadd.f32 %v3630, %v3718
        %3720 = vmatmul.bf16.gmra.mxu0 %v3462
        %v3721 = vpop.f32.mrf.mxu0
        %v3722 = vadd.f32 %v3633, %v3721
        %v3723 = vpop.f32.mrf.mxu0
        %v3724 = vadd.f32 %v3635, %v3723
        %3725 = vmatmul.bf16.gmra.mxu0 %v1992
        %v3726 = vpop.f32.mrf.mxu0
        %v3727 = vadd.f32 %v3638, %v3726
        %v3728 = vpop.f32.mrf.mxu0
        %v3729 = vadd.f32 %v3640, %v3728
        %3730 = vdwg.mxu0
        %v3731 = vmax.f32 %v3652, 0.0
        %v3732 = vmax.f32 %v3654, 0.0
        %v3733 = vmax.f32 %v3657, 0.0
        %v3734 = vmax.f32 %v3659, 0.0
        %v3735 = vmax.f32 %v3662, 0.0
        %v3736 = vmax.f32 %v3664, 0.0
        %v3737 = vmax.f32 %v3667, 0.0
        %v3738 = vmax.f32 %v3669, 0.0
        %v3739 = vmax.f32 %v3672, 0.0
        %v3740 = vmax.f32 %v3674, 0.0
        %v3741 = vmax.f32 %v3677, 0.0
        %v3742 = vmax.f32 %v3679, 0.0
        %v3743 = vmax.f32 %v3682, 0.0
        %v3744 = vmax.f32 %v3684, 0.0
        %v3745 = vmax.f32 %v3687, 0.0
        %v3746 = vmax.f32 %v3689, 0.0
        %v3747 = vmax.f32 %v3692, 0.0
        %v3748 = vmax.f32 %v3694, 0.0
        %v3749 = vmax.f32 %v3697, 0.0
        %v3750 = vmax.f32 %v3699, 0.0
        %v3751 = vmax.f32 %v3702, 0.0
        %v3752 = vmax.f32 %v3704, 0.0
        %v3753 = vmax.f32 %v3707, 0.0
        %v3754 = vmax.f32 %v3709, 0.0
        %v3755 = vmax.f32 %v3712, 0.0
        %v3756 = vmax.f32 %v3714, 0.0
        %v3757 = vmax.f32 %v3717, 0.0
        %v3758 = vmax.f32 %v3719, 0.0
        %v3759 = vmax.f32 %v3722, 0.0
        %v3760 = vmax.f32 %v3724, 0.0
        %v3761 = vmax.f32 %v3727, 0.0
        %v3762 = vmax.f32 %v3729, 0.0
        %3763 = vst.msk [vmem:[%s313] sm:$0xff] %vm1592, %v3731
        %3764 = vst.msk [vmem:[%s313 + $0x8] sm:$0xff] %vm1592, %v3732
        %3765 = vst.msk [vmem:[%s313 + $0x10] sm:$0xff] %vm1592, %v3733
        %3766 = vst.msk [vmem:[%s313 + $0x18] sm:$0xff] %vm1592, %v3734
        %3767 = vst.msk [vmem:[%s313 + $0x20] sm:$0xff] %vm1592, %v3735
        %3768 = vst.msk [vmem:[%s313 + $0x28] sm:$0xff] %vm1592, %v3736
        %3769 = vst.msk [vmem:[%s313 + $0x30] sm:$0xff] %vm1592, %v3737
        %3770 = vst.msk [vmem:[%s313 + $0x38] sm:$0xff] %vm1592, %v3738
        %3771 = vst.msk [vmem:[%s313 + $0x40] sm:$0xff] %vm1592, %v3739
        %3772 = vst.msk [vmem:[%s313 + $0x48] sm:$0xff] %vm1592, %v3740
        %3773 = vst.msk [vmem:[%s313 + $0x50] sm:$0xff] %vm1592, %v3741
        %3774 = vst.msk [vmem:[%s313 + $0x58] sm:$0xff] %vm1592, %v3742
        %3775 = vst.msk [vmem:[%s313 + $0x60] sm:$0xff] %vm1592, %v3743
        %3776 = vst.msk [vmem:[%s313 + $0x68] sm:$0xff] %vm1592, %v3744
        %3777 = vst.msk [vmem:[%s313 + $0x70] sm:$0xff] %vm1592, %v3745
        %3778 = vst.msk [vmem:[%s313 + $0x78] sm:$0xff] %vm1592, %v3746
        %3779 = vst.msk [vmem:[%s313 + $0x80] sm:$0xff] %vm1592, %v3747
        %3780 = vst.msk [vmem:[%s313 + $0x88] sm:$0xff] %vm1592, %v3748
        %3781 = vst.msk [vmem:[%s313 + $0x90] sm:$0xff] %vm1592, %v3749
        %3782 = vst.msk [vmem:[%s313 + $0x98] sm:$0xff] %vm1592, %v3750
        %3783 = vst.msk [vmem:[%s313 + $0xa0] sm:$0xff] %vm1592, %v3751
        %3784 = vst.msk [vmem:[%s313 + $0xa8] sm:$0xff] %vm1592, %v3752
        %3785 = vst.msk [vmem:[%s313 + $0xb0] sm:$0xff] %vm1592, %v3753
        %3786 = vst.msk [vmem:[%s313 + $0xb8] sm:$0xff] %vm1592, %v3754
        %3787 = vst.msk [vmem:[%s313 + $0xc0] sm:$0xff] %vm1592, %v3755
        %3788 = vst.msk [vmem:[%s313 + $0xc8] sm:$0xff] %vm1592, %v3756
        %3789 = vst.msk [vmem:[%s313 + $0xd0] sm:$0xff] %vm1592, %v3757
        %3790 = vst.msk [vmem:[%s313 + $0xd8] sm:$0xff] %vm1592, %v3758
        %3791 = vst.msk [vmem:[%s313 + $0xe0] sm:$0xff] %vm1592, %v3759
        %3792 = vst.msk [vmem:[%s313 + $0xe8] sm:$0xff] %vm1592, %v3760
        %3793 = vst.msk [vmem:[%s313 + $0xf0] sm:$0xff] %vm1592, %v3761
        %3794 = vst.msk [vmem:[%s313 + $0xf8] sm:$0xff] %vm1592, %v3762
        %s3795 = sand.u32 %s208, 1
        %s3796 = scalar_lea.sflag [#allocation3], %s3795
        %s3797 = sand.u32 %s208, 1
        %s3798 = smul.addr %s3797, 256
        %s3799 = scalar_lea.vmem [#allocation2], %s3798
        // Predicated region
        $region53: #{merge_forward.7} parent=51 // pred_check
          %p3800 = pneg %p218
        $region54: #{merge_forward.7} parent=51 // pred_check_branch
          %3802 = sbr.rel (%p3800) target = $region56
        $region55: #{merge_forward.7} parent=51 // pred_region
          %3804 = vsyncadd %s3796, 0
          %s3805 = smul.addr %s22, 32
          %s3806 = smul.addr %s3805, 8
          %s3807 = scalar_lea.hbm %s8, %s3806
          %s3808 = sshll.u32 %s3799, 4
          %s3809 = int_to_ptr.vmem [resolvable:$true] %s3808
          %s3810 = sshll.u32 %s3807, 4
          %s3811 = int_to_ptr.hbm [resolvable:$true] %s3810
          %3816 = dma.vmem_to_hbm [thread:$0]  %s3809, 4096, %s3811, %s3796, 128, 128, 8
        $region56: #{merge_forward.7} parent=51 // pred_fallthru
          _
      $region52: #{merge_forward.7} parent=5 // pred_fallthru
        _
      %p3817 = scmp.le.s32.totalorder 2, %s17
      // Predicated region
      $region57: #{merge_forward.7} parent=5 // pred_check
        %p3818 = pneg %p3817
      $region58: #{merge_forward.7} parent=5 // pred_check_branch
        %3820 = sbr.rel (%p3818) target = $region60
      $region59: #{merge_forward.7} parent=5 // pred_region
        %s3821 = ssub.s32 %s17, 2
        // Predicated region
        $region61: #{merge_forward.7} parent=59 // pred_check
          %p3822 = pneg %p224
        $region62: #{merge_forward.7} parent=59 // pred_check_branch
          %3824 = sbr.rel (%p3822) target = $region64
        $region63: #{merge_forward.7} parent=59 // pred_region
          %s3825 = sand.u32 %s209, 1
          %s3826 = scalar_lea.sflag [#allocation3], %s3825
          %s3827 = sand.u32 %s209, 1
          %s3828 = smul.addr %s3827, 256
          %s3829 = scalar_lea.vmem [#allocation2], %s3828
          %3831 = dma.done %s3826, 4096
        $region64: #{merge_forward.7} parent=59 // pred_fallthru
          _
      $region60: #{merge_forward.7} parent=5 // pred_fallthru
        _
    $region6: #{merge_forward.7} parent=1 // loop_footer
      %s21 = sadd.s32 1, %s17
    $region7: #{merge_forward.7} parent=1 // loop_footer_branch
      %16 = sbr.rel target = $region3
    $region8: #{merge_forward.7} parent=1 // loop_exit
      _
    %3832 = vsyncpa [#allocation3], 1
    %s3833 = scalar_lea.sflag [#allocation3], 1
    %3834 = vsyncpa %s3833, 1

</llo_original>
